<compile_context>
chip_gen: v7x
topology: tpu7x:2x2x1
jax: 0.10.0
libtpu: 0.0.40
codegen_flags: <defaults>
</compile_context>

<pallas_src>
import functools
import math

import jax
import jax.numpy as jnp
import numpy as np
from jax.experimental import pallas as pl
from jax.experimental.pallas import tpu as pltpu

# ---------------- configuration (small, consistent with the module) --------
DIM = 32                       # channels
H = W = 16                     # input_resolution
NUM_HEADS = 2
WINDOW_SIZE = 4
SHIFT_SIZE = 2                 # SW-MSA (shifted window)
MLP_RATIO = 4.0
B = 2
EPS = 1e-5                     # nn.LayerNorm default eps

HEAD_DIM = DIM // NUM_HEADS
SCALE = HEAD_DIM ** -0.5       # default qk_scale
N_TOK = WINDOW_SIZE * WINDOW_SIZE
NW_IMG = (H // WINDOW_SIZE) * (W // WINDOW_SIZE)   # windows per image (16)
TOK_PER_IMG = NW_IMG * N_TOK                       # 256 tokens per image
HIDDEN = int(DIM * MLP_RATIO)
INV_SQRT2 = 1.0 / math.sqrt(2.0)
NEG_INF = -1e9                 # off-window block value in the packed bias


# ---------------- window partition / reverse (glue, one pass each) ----------
def window_partition(x, ws):
    b, h, w, c = x.shape
    x = x.reshape(b, h // ws, ws, w // ws, ws, c)
    return x.transpose(0, 1, 3, 2, 4, 5).reshape(-1, ws, ws, c)


def window_reverse(windows, ws, h, w):
    b = windows.shape[0] // (h * w // ws // ws)
    x = windows.reshape(b, h // ws, w // ws, ws, ws, -1)
    return x.transpose(0, 1, 3, 2, 4, 5).reshape(b, h, w, -1)


def _np_window_partition(x, ws):
    b, h, w, c = x.shape
    x = x.reshape(b, h // ws, ws, w // ws, ws, c)
    return x.transpose(0, 1, 3, 2, 4, 5).reshape(-1, ws, ws, c)


# ---------------- fused kernel: LN1 + window-attn + proj + LN2 + MLP ---------
def _swin_kernel(x_ref, bias_ref, qkvw_ref, pw_ref, w1_ref, w2_ref, vec_ref,
                 o_ref, *, imgs_per_step):
    # x block: (imgs_per_step * 256, DIM) tokens in shifted + window-partitioned
    # order (row = image*256 + window*16 + token).
    x = x_ref[...].astype(jnp.float32)

    # packed small vectors: one (8,128) tile, sliced statically.
    g1 = vec_ref[0:1, :DIM]
    b1 = vec_ref[1:2, :DIM]
    g2 = vec_ref[2:3, :DIM]
    b2 = vec_ref[3:4, :DIM]
    qkvb = vec_ref[4:5, :3 * DIM]        # qk-scale already folded in (Q part)
    pb = vec_ref[5:6, :DIM]
    fb1 = vec_ref[6:7, :HIDDEN]
    fb2 = vec_ref[7:8, :DIM]

    # LayerNorm(norm1) — per-token, so applying it after the partition is
    # identical to the PyTorch order (norm1 then partition).
    mu = jnp.mean(x, axis=-1, keepdims=True)
    var = jnp.mean((x - mu) ** 2, axis=-1, keepdims=True)
    xn = (x - mu) * jax.lax.rsqrt(var + EPS) * g1 + b1

    # Fused QKV projection: one (M,32) x (32,96) MXU matmul.
    qkv = jnp.dot(xn, qkvw_ref[...],
                  preferred_element_type=jnp.float32) + qkvb

    # Block-diagonal window attention, lane-dense per image & head:
    #   S = (256,16)@(16,256) + packed (256,256) bias (rel-pos + shift mask on
    #   the 16x16 diagonal blocks, -1e9 elsewhere), softmax over 256 lanes,
    #   then (256,256)@(256,16).
    per_img = []
    for img in range(imgs_per_step):                    # static (1 or 2)
        r0 = img * TOK_PER_IMG
        qkv_i = qkv[r0:r0 + TOK_PER_IMG, :]
        head_outs = []
        for h in range(NUM_HEADS):                      # static (2)
            q = qkv_i[:, h * HEAD_DIM:(h + 1) * HEAD_DIM]
            k = qkv_i[:, DIM + h * HEAD_DIM: DIM + (h + 1) * HEAD_DIM]
            v = qkv_i[:, 2 * DIM + h * HEAD_DIM: 2 * DIM + (h + 1) * HEAD_DIM]
            s = jax.lax.dot_general(
                q, k, (((1,), (1,)), ((), ())),
                preferred_element_type=jnp.float32)     # (256,256)
            s = s + bias_ref[h]                         # lane-dense bias add
            s = s - jnp.max(s, axis=-1, keepdims=True)
            p = jnp.exp(s)
            denom = jnp.sum(p, axis=-1, keepdims=True)
            p = p * pl.reciprocal(denom, approx=True)   # softmax (EUP recip)
            head_outs.append(jnp.dot(p, v,
                                     preferred_element_type=jnp.float32))
        per_img.append(jnp.concatenate(head_outs, axis=-1))   # (256, DIM)
    attn_out = per_img[0] if imgs_per_step == 1 else jnp.concatenate(per_img, 0)

    # output projection (concat-heads @ proj_w.T) + residual 1
    proj = jnp.dot(attn_out, pw_ref[...],
                   preferred_element_type=jnp.float32) + pb
    x1 = x + proj

    # LayerNorm(norm2) + MLP + residual 2 — all per-token, done in the same
    # (permuted) token order; un-permuting happens once outside the kernel.
    mu2 = jnp.mean(x1, axis=-1, keepdims=True)
    var2 = jnp.mean((x1 - mu2) ** 2, axis=-1, keepdims=True)
    x2 = (x1 - mu2) * jax.lax.rsqrt(var2 + EPS) * g2 + b2
    h1 = jnp.dot(x2, w1_ref[...],
                 preferred_element_type=jnp.float32) + fb1
    h1 = 0.5 * h1 * (1.0 + jax.lax.erf(h1 * INV_SQRT2))   # exact GELU (nn.GELU)
    h2 = jnp.dot(h1, w2_ref[...],
                 preferred_element_type=jnp.float32) + fb2
    o_ref[...] = (x1 + h2).astype(o_ref.dtype)


def swin_fused_pallas(xw_flat, bias, kp, imgs_per_step):
    m_block = imgs_per_step * TOK_PER_IMG
    n_rows = xw_flat.shape[0]                 # B * 256
    assert n_rows % m_block == 0
    n_steps = n_rows // m_block
    kernel = functools.partial(_swin_kernel, imgs_per_step=imgs_per_step)
    return pl.pallas_call(
        kernel,
        out_shape=jax.ShapeDtypeStruct((n_rows, DIM), xw_flat.dtype),
        grid=(n_steps,),
        in_specs=[
            pl.BlockSpec((m_block, DIM), lambda s: (s, 0)),
            # packed block-diagonal bias, per-image (identical every step)
            pl.BlockSpec((NUM_HEADS, TOK_PER_IMG, TOK_PER_IMG),
                         lambda s: (0, 0, 0)),
            pl.BlockSpec((DIM, 3 * DIM), lambda s: (0, 0)),
            pl.BlockSpec((DIM, DIM), lambda s: (0, 0)),
            pl.BlockSpec((DIM, HIDDEN), lambda s: (0, 0)),
            pl.BlockSpec((HIDDEN, DIM), lambda s: (0, 0)),
            pl.BlockSpec((8, 128), lambda s: (0, 0)),     # packed vectors
        ],
        out_specs=pl.BlockSpec((m_block, DIM), lambda s: (s, 0)),
        input_output_aliases={0: 0},          # reuse the permuted-x buffer
        compiler_params=pltpu.CompilerParams(
            dimension_semantics=("parallel",)),
    )(xw_flat, bias, kp["qkv_w_t"], kp["pw"], kp["fc1_w_t"], kp["fc2_w_t"],
      kp["vecs"])


def _imgs_per_step():
    """Dual-TC chips (v7x): one image per parallel grid step.
    Single-TC chips (v5e/v6e): fold both images into one 512-token step."""
    kind = ""
    try:
        kind = jax.devices()[0].device_kind.lower()
    except Exception:
        pass
    if "v7" in kind:
        return 1
    return min(B, 2)


# ---------------- constants: relative position bias & shift mask ------------
def build_rel_pos_bias(rel_table):
    ws = WINDOW_SIZE
    coords = np.stack(np.meshgrid(np.arange(ws), np.arange(ws), indexing="ij"))
    coords_flat = coords.reshape(2, -1)
    rel = coords_flat[:, :, None] - coords_flat[:, None, :]
    rel = rel.transpose(1, 2, 0).astype(np.int64)
    rel[:, :, 0] += ws - 1
    rel[:, :, 1] += ws - 1
    rel[:, :, 0] *= 2 * ws - 1
    rel_index = rel.sum(-1)                                  # (N, N)
    bias = rel_table[rel_index.reshape(-1)]                  # (N*N, nh)
    return bias.reshape(N_TOK, N_TOK, NUM_HEADS).transpose(2, 0, 1)  # (nh,N,N)


def build_attn_mask():
    if SHIFT_SIZE == 0:
        return None
    img_mask = np.zeros((1, H, W, 1), np.float32)
    slices = (slice(0, -WINDOW_SIZE), slice(-WINDOW_SIZE, -SHIFT_SIZE),
              slice(-SHIFT_SIZE, None))
    cnt = 0
    for hs in slices:
        for wsl in slices:
            img_mask[:, hs, wsl, :] = cnt
            cnt += 1
    mw = _np_window_partition(img_mask, WINDOW_SIZE).reshape(-1, N_TOK)
    am = mw[:, None, :] - mw[:, :, None]
    am = np.where(am != 0, -100.0, 0.0).astype(np.float32)   # (nW_img, N, N)
    return jnp.asarray(am)


def build_block_bias(rel_bias, attn_mask):
    """Lane-dense (NUM_HEADS, 256, 256) block-diagonal attention bias.

    Diagonal 16x16 blocks: rel-pos bias (+ shift mask); off-diagonal: -1e9 so
    cross-window scores vanish after softmax (block-diagonal attention)."""
    rb = np.asarray(rel_bias, np.float32)                    # (nh, N, N)
    if attn_mask is None:
        am = np.zeros((NW_IMG, N_TOK, N_TOK), np.float32)
    else:
        am = np.asarray(attn_mask, np.float32)               # (nW_img, N, N)
    bias = np.full((NUM_HEADS, TOK_PER_IMG, TOK_PER_IMG), NEG_INF, np.float32)
    for w in range(NW_IMG):
        lo, hi = w * N_TOK, (w + 1) * N_TOK
        bias[:, lo:hi, lo:hi] = rb + am[w][None]
    return jnp.asarray(bias)


# ---------------- parameter preparation for the kernel ----------------------
def prepare_kernel_params(P):
    # fold the qk scale into the Q columns of the fused QKV projection
    scale_col = jnp.concatenate([jnp.full((DIM,), SCALE, jnp.float32),
                                 jnp.ones((2 * DIM,), jnp.float32)])
    qkv_w_t = P["qkv_w"].T * scale_col[None, :]              # (C, 3C)
    qkv_b = P["qkv_b"] * scale_col                           # (3C,)

    # pack all small vectors into one (8,128) tile -> single DMA stream
    vecs = jnp.zeros((8, 128), jnp.float32)
    vecs = vecs.at[0, :DIM].set(P["g1"])
    vecs = vecs.at[1, :DIM].set(P["b1"])
    vecs = vecs.at[2, :DIM].set(P["g2"])
    vecs = vecs.at[3, :DIM].set(P["b2"])
    vecs = vecs.at[4, :3 * DIM].set(qkv_b)
    vecs = vecs.at[5, :DIM].set(P["proj_b"])
    vecs = vecs.at[6, :HIDDEN].set(P["fc1_b"])
    vecs = vecs.at[7, :DIM].set(P["fc2_b"])

    return {
        "qkv_w_t": qkv_w_t,
        "pw": P["proj_w"].T,                                 # (C, C)
        "fc1_w_t": P["fc1_w"].T,                             # (C, HIDDEN)
        "fc2_w_t": P["fc2_w"].T,                             # (HIDDEN, C)
        "vecs": vecs,
    }


# ---------------- full forward (Pallas) --------------------------------------
@functools.partial(jax.jit, static_argnames=("imgs_per_step",))
def swin_block_pallas(x, P, bias, imgs_per_step):
    b, l, c = x.shape
    kp = prepare_kernel_params(P)

    # single input permutation: cyclic shift + window partition (token order:
    # image outer, window, token-in-window)
    # TODO(synk): if xprof shows the wrapper permutations dominating wall time,
    # fold this static row permutation into the kernel and donate x.
    xs = x.reshape(b, H, W, c)
    if SHIFT_SIZE > 0:
        xs = jnp.roll(xs, shift=(-SHIFT_SIZE, -SHIFT_SIZE), axis=(1, 2))
    xw_flat = window_partition(xs, WINDOW_SIZE).reshape(-1, c)   # (B*L, C)

    out_flat = swin_fused_pallas(xw_flat, bias, kp, imgs_per_step)

    # single output (inverse) permutation: window reverse + reverse shift
    out = out_flat.reshape(-1, WINDOW_SIZE, WINDOW_SIZE, c)
    out = window_reverse(out, WINDOW_SIZE, H, W)
    if SHIFT_SIZE > 0:
        out = jnp.roll(out, shift=(SHIFT_SIZE, SHIFT_SIZE), axis=(1, 2))
    return out.reshape(b, l, c)


# ---------------- pure-JAX reference (same math, XLA) ------------------------
def swin_block_reference(x, P, rel_bias, attn_mask):
    b, l, c = x.shape

    def ln(v, g, be):
        mu = v.mean(-1, keepdims=True)
        var = ((v - mu) ** 2).mean(-1, keepdims=True)
        return (v - mu) / jnp.sqrt(var + EPS) * g + be

    shortcut = x
    xn = ln(x, P["g1"], P["b1"]).reshape(b, H, W, c)
    if SHIFT_SIZE > 0:
        xn = jnp.roll(xn, (-SHIFT_SIZE, -SHIFT_SIZE), (1, 2))
    xw = window_partition(xn, WINDOW_SIZE).reshape(-1, N_TOK, c)
    n_w = xw.shape[0]
    qkv = xw @ P["qkv_w"].T + P["qkv_b"]
    qkv = qkv.reshape(n_w, N_TOK, 3, NUM_HEADS, HEAD_DIM).transpose(2, 0, 3, 1, 4)
    q, k, v = qkv[0] * SCALE, qkv[1], qkv[2]
    attn = jnp.einsum("whnd,whmd->whnm", q, k) + rel_bias[None]
    if attn_mask is not None:
        nw_img = attn_mask.shape[0]
        attn = attn.reshape(b, nw_img, NUM_HEADS, N_TOK, N_TOK) \
            + attn_mask[None, :, None]
        attn = attn.reshape(-1, NUM_HEADS, N_TOK, N_TOK)
    attn = jax.nn.softmax(attn, axis=-1)
    out = jnp.einsum("whnm,whmd->whnd", attn, v)
    out = out.transpose(0, 2, 1, 3).reshape(n_w, N_TOK, c)
    out = out @ P["proj_w"].T + P["proj_b"]
    out = window_reverse(out.reshape(-1, WINDOW_SIZE, WINDOW_SIZE, c),
                         WINDOW_SIZE, H, W)
    if SHIFT_SIZE > 0:
        out = jnp.roll(out, (SHIFT_SIZE, SHIFT_SIZE), (1, 2))
    x1 = shortcut + out.reshape(b, l, c)
    hdn = ln(x1, P["g2"], P["b2"]) @ P["fc1_w"].T + P["fc1_b"]
    hdn = jax.nn.gelu(hdn, approximate=False)
    hdn = hdn @ P["fc2_w"].T + P["fc2_b"]
    return x1 + hdn


# ---------------- main --------------------------------------------------------
if __name__ == "__main__":
    key = jax.random.PRNGKey(0)
    ks = jax.random.split(key, 10)

    def init(k, shape):
        return 0.02 * jax.random.normal(k, shape, jnp.float32)

    P = {
        "g1": jnp.ones((DIM,), jnp.float32), "b1": jnp.zeros((DIM,), jnp.float32),
        "g2": jnp.ones((DIM,), jnp.float32), "b2": jnp.zeros((DIM,), jnp.float32),
        "qkv_w": init(ks[0], (3 * DIM, DIM)),
        "qkv_b": init(ks[1], (3 * DIM,)),
        "proj_w": init(ks[2], (DIM, DIM)),
        "proj_b": init(ks[3], (DIM,)),
        "fc1_w": init(ks[4], (HIDDEN, DIM)),
        "fc1_b": init(ks[5], (HIDDEN,)),
        "fc2_w": init(ks[6], (DIM, HIDDEN)),
        "fc2_b": init(ks[7], (DIM,)),
    }
    rel_table = init(ks[8], ((2 * WINDOW_SIZE - 1) ** 2, NUM_HEADS))
    rel_bias = build_rel_pos_bias(rel_table)                 # (nh, N, N)
    attn_mask = build_attn_mask()                            # (nW_img, N, N) or None
    bias = build_block_bias(rel_bias, attn_mask)             # (nh, 256, 256)

    x = jax.random.normal(ks[9], (B, H * W, DIM), jnp.float32)

    imgs_per_step = _imgs_per_step()                         # 1 (v7x) or 2 (v5e/v6e)
    out = swin_block_pallas(x, P, bias, imgs_per_step)
    out = jax.block_until_ready(out)

    ref = swin_block_reference(x, P, rel_bias, attn_mask)
    np.testing.assert_allclose(np.asarray(out), np.asarray(ref),
                               rtol=2e-2, atol=2e-3)
    print("KERNEL_OK")
</pallas_src>

<mosaic_0001>
module attributes {stable_mosaic.version = 11 : i64} {
  func.func @_swin_kernel(%arg0: i32, %arg1: memref<512x32xf32, #tpu.memory_space<vmem>>, %arg2: memref<2x256x256xf32, #tpu.memory_space<vmem>>, %arg3: memref<32x96xf32, #tpu.memory_space<vmem>>, %arg4: memref<32x32xf32, #tpu.memory_space<vmem>>, %arg5: memref<32x128xf32, #tpu.memory_space<vmem>>, %arg6: memref<128x32xf32, #tpu.memory_space<vmem>>, %arg7: memref<8x128xf32, #tpu.memory_space<vmem>>, %arg8: memref<512x32xf32, #tpu.memory_space<vmem>>) attributes {dimension_semantics = [#tpu.dimension_semantics<parallel>], iteration_bounds = array<i64: 1>, scalar_prefetch = 0 : i64, scratch_operands = 0 : i64, tpu.core_type = #tpu.core_type<tc>, window_params = [{transform_indices = @transform_0, window_bounds = array<i64: 512, 32>}, {pipeline_mode = #tpu.pipeline_mode<synchronous>, transform_indices = @transform_1, window_bounds = array<i64: 2, 256, 256>}, {pipeline_mode = #tpu.pipeline_mode<synchronous>, transform_indices = @transform_2, window_bounds = array<i64: 32, 96>}, {pipeline_mode = #tpu.pipeline_mode<synchronous>, transform_indices = @transform_3, window_bounds = array<i64: 32, 32>}, {pipeline_mode = #tpu.pipeline_mode<synchronous>, transform_indices = @transform_4, window_bounds = array<i64: 32, 128>}, {pipeline_mode = #tpu.pipeline_mode<synchronous>, transform_indices = @transform_5, window_bounds = array<i64: 128, 32>}, {pipeline_mode = #tpu.pipeline_mode<synchronous>, transform_indices = @transform_6, window_bounds = array<i64: 8, 128>}, {transform_indices = @transform_7, window_bounds = array<i64: 512, 32>}]} {
    %c0 = arith.constant 0 : index
    %c0_0 = arith.constant 0 : index
    %0 = vector.load %arg1[%c0, %c0_0] : memref<512x32xf32, #tpu.memory_space<vmem>>, vector<512x32xf32>
    %c0_1 = arith.constant 0 : index
    %c0_2 = arith.constant 0 : index
    %1 = vector.load %arg7[%c0_1, %c0_2] : memref<8x128xf32, #tpu.memory_space<vmem>>, vector<1x32xf32>
    %c1 = arith.constant 1 : index
    %c0_3 = arith.constant 0 : index
    %2 = vector.load %arg7[%c1, %c0_3] : memref<8x128xf32, #tpu.memory_space<vmem>>, vector<1x32xf32>
    %c2 = arith.constant 2 : index
    %c0_4 = arith.constant 0 : index
    %3 = vector.load %arg7[%c2, %c0_4] : memref<8x128xf32, #tpu.memory_space<vmem>>, vector<1x32xf32>
    %c3 = arith.constant 3 : index
    %c0_5 = arith.constant 0 : index
    %4 = vector.load %arg7[%c3, %c0_5] : memref<8x128xf32, #tpu.memory_space<vmem>>, vector<1x32xf32>
    %c4 = arith.constant 4 : index
    %c0_6 = arith.constant 0 : index
    %5 = vector.load %arg7[%c4, %c0_6] : memref<8x128xf32, #tpu.memory_space<vmem>>, vector<1x96xf32>
    %c5 = arith.constant 5 : index
    %c0_7 = arith.constant 0 : index
    %6 = vector.load %arg7[%c5, %c0_7] : memref<8x128xf32, #tpu.memory_space<vmem>>, vector<1x32xf32>
    %c6 = arith.constant 6 : index
    %c0_8 = arith.constant 0 : index
    %7 = vector.load %arg7[%c6, %c0_8] : memref<8x128xf32, #tpu.memory_space<vmem>>, vector<1x128xf32>
    %c7 = arith.constant 7 : index
    %c0_9 = arith.constant 0 : index
    %8 = vector.load %arg7[%c7, %c0_9] : memref<8x128xf32, #tpu.memory_space<vmem>>, vector<1x32xf32>
    %cst = arith.constant dense<0.000000e+00> : vector<512xf32>
    %9 = vector.multi_reduction <add>, %0, %cst [1] : vector<512x32xf32> to vector<512xf32>
    %10 = vector.shape_cast %9 : vector<512xf32> to vector<512x1xf32>
    %cst_10 = arith.constant 3.200000e+01 : f32
    %11 = vector.broadcast %cst_10 : f32 to vector<512x1xf32>
    %12 = arith.divf %10, %11 : vector<512x1xf32>
    %13 = vector.broadcast %12 : vector<512x1xf32> to vector<512x32xf32>
    %14 = arith.subf %0, %13 : vector<512x32xf32>
    %15 = arith.mulf %14, %14 : vector<512x32xf32>
    %cst_11 = arith.constant dense<0.000000e+00> : vector<512xf32>
    %16 = vector.multi_reduction <add>, %15, %cst_11 [1] : vector<512x32xf32> to vector<512xf32>
    %17 = vector.shape_cast %16 : vector<512xf32> to vector<512x1xf32>
    %cst_12 = arith.constant 3.200000e+01 : f32
    %18 = vector.broadcast %cst_12 : f32 to vector<512x1xf32>
    %19 = arith.divf %17, %18 : vector<512x1xf32>
    %20 = vector.broadcast %12 : vector<512x1xf32> to vector<512x32xf32>
    %21 = arith.subf %0, %20 : vector<512x32xf32>
    %cst_13 = arith.constant 9.99999974E-6 : f32
    %22 = vector.broadcast %cst_13 : f32 to vector<512x1xf32>
    %23 = arith.addf %19, %22 : vector<512x1xf32>
    %24 = math.rsqrt %23 : vector<512x1xf32>
    %25 = vector.broadcast %24 : vector<512x1xf32> to vector<512x32xf32>
    %26 = arith.mulf %21, %25 : vector<512x32xf32>
    %27 = vector.broadcast %1 : vector<1x32xf32> to vector<512x32xf32>
    %28 = arith.mulf %26, %27 : vector<512x32xf32>
    %29 = vector.broadcast %2 : vector<1x32xf32> to vector<512x32xf32>
    %30 = arith.addf %28, %29 : vector<512x32xf32>
    %c0_14 = arith.constant 0 : index
    %c0_15 = arith.constant 0 : index
    %31 = vector.load %arg3[%c0_14, %c0_15] : memref<32x96xf32, #tpu.memory_space<vmem>>, vector<32x96xf32>
    %cst_16 = arith.constant dense<0.000000e+00> : vector<512x96xf32>
    %32 = tpu.matmul %30, %31, %cst_16 {dimension_numbers = #tpu.dot_dimension_numbers<[1], [0], [0], [1], [0, 0, 1, 1], [], []>} : vector<512x32xf32>, vector<32x96xf32>, vector<512x96xf32> -> vector<512x96xf32>
    %33 = vector.broadcast %5 : vector<1x96xf32> to vector<512x96xf32>
    %34 = arith.addf %32, %33 : vector<512x96xf32>
    %35 = vector.extract_strided_slice %34 {offsets = [0, 0], sizes = [256, 96], strides = [1, 1]} : vector<512x96xf32> to vector<256x96xf32>
    %36 = vector.extract_strided_slice %35 {offsets = [0, 0], sizes = [256, 16], strides = [1, 1]} : vector<256x96xf32> to vector<256x16xf32>
    %37 = vector.extract_strided_slice %35 {offsets = [0, 32], sizes = [256, 16], strides = [1, 1]} : vector<256x96xf32> to vector<256x16xf32>
    %38 = vector.extract_strided_slice %35 {offsets = [0, 64], sizes = [256, 16], strides = [1, 1]} : vector<256x96xf32> to vector<256x16xf32>
    %cst_17 = arith.constant dense<0.000000e+00> : vector<256x256xf32>
    %39 = tpu.matmul %36, %37, %cst_17 {dimension_numbers = #tpu.dot_dimension_numbers<[1], [1], [0], [0], [0, 0, 1, 0], [], []>} : vector<256x16xf32>, vector<256x16xf32>, vector<256x256xf32> -> vector<256x256xf32>
    %c0_18 = arith.constant 0 : index
    %c0_19 = arith.constant 0 : index
    %c0_20 = arith.constant 0 : index
    %40 = vector.load %arg2[%c0_18, %c0_19, %c0_20] : memref<2x256x256xf32, #tpu.memory_space<vmem>>, vector<1x256x256xf32>
    %41 = vector.shape_cast %40 : vector<1x256x256xf32> to vector<256x256xf32>
    %42 = arith.addf %39, %41 : vector<256x256xf32>
    %cst_21 = arith.constant dense<0xFF800000> : vector<256xf32>
    %43 = vector.multi_reduction <maximumf>, %42, %cst_21 [1] : vector<256x256xf32> to vector<256xf32>
    %44 = vector.shape_cast %43 : vector<256xf32> to vector<256x1xf32>
    %45 = vector.broadcast %44 : vector<256x1xf32> to vector<256x256xf32>
    %46 = arith.subf %42, %45 : vector<256x256xf32>
    %47 = math.exp %46 : vector<256x256xf32>
    %cst_22 = arith.constant dense<0.000000e+00> : vector<256xf32>
    %48 = vector.multi_reduction <add>, %47, %cst_22 [1] : vector<256x256xf32> to vector<256xf32>
    %49 = vector.shape_cast %48 : vector<256xf32> to vector<256x1xf32>
    %50 = tpu.reciprocal %49 {approx = true} : vector<256x1xf32> -> vector<256x1xf32>
    %51 = vector.broadcast %50 : vector<256x1xf32> to vector<256x256xf32>
    %52 = arith.mulf %47, %51 : vector<256x256xf32>
    %cst_23 = arith.constant dense<0.000000e+00> : vector<256x16xf32>
    %53 = tpu.matmul %52, %38, %cst_23 {dimension_numbers = #tpu.dot_dimension_numbers<[1], [0], [0], [1], [0, 0, 1, 1], [], []>} : vector<256x256xf32>, vector<256x16xf32>, vector<256x16xf32> -> vector<256x16xf32>
    %54 = vector.extract_strided_slice %35 {offsets = [0, 16], sizes = [256, 16], strides = [1, 1]} : vector<256x96xf32> to vector<256x16xf32>
    %55 = vector.extract_strided_slice %35 {offsets = [0, 48], sizes = [256, 16], strides = [1, 1]} : vector<256x96xf32> to vector<256x16xf32>
    %56 = vector.extract_strided_slice %35 {offsets = [0, 80], sizes = [256, 16], strides = [1, 1]} : vector<256x96xf32> to vector<256x16xf32>
    %cst_24 = arith.constant dense<0.000000e+00> : vector<256x256xf32>
    %57 = tpu.matmul %54, %55, %cst_24 {dimension_numbers = #tpu.dot_dimension_numbers<[1], [1], [0], [0], [0, 0, 1, 0], [], []>} : vector<256x16xf32>, vector<256x16xf32>, vector<256x256xf32> -> vector<256x256xf32>
    %c1_25 = arith.constant 1 : index
    %c0_26 = arith.constant 0 : index
    %c0_27 = arith.constant 0 : index
    %58 = vector.load %arg2[%c1_25, %c0_26, %c0_27] : memref<2x256x256xf32, #tpu.memory_space<vmem>>, vector<1x256x256xf32>
    %59 = vector.shape_cast %58 : vector<1x256x256xf32> to vector<256x256xf32>
    %60 = arith.addf %57, %59 : vector<256x256xf32>
    %cst_28 = arith.constant dense<0xFF800000> : vector<256xf32>
    %61 = vector.multi_reduction <maximumf>, %60, %cst_28 [1] : vector<256x256xf32> to vector<256xf32>
    %62 = vector.shape_cast %61 : vector<256xf32> to vector<256x1xf32>
    %63 = vector.broadcast %62 : vector<256x1xf32> to vector<256x256xf32>
    %64 = arith.subf %60, %63 : vector<256x256xf32>
    %65 = math.exp %64 : vector<256x256xf32>
    %cst_29 = arith.constant dense<0.000000e+00> : vector<256xf32>
    %66 = vector.multi_reduction <add>, %65, %cst_29 [1] : vector<256x256xf32> to vector<256xf32>
    %67 = vector.shape_cast %66 : vector<256xf32> to vector<256x1xf32>
    %68 = tpu.reciprocal %67 {approx = true} : vector<256x1xf32> -> vector<256x1xf32>
    %69 = vector.broadcast %68 : vector<256x1xf32> to vector<256x256xf32>
    %70 = arith.mulf %65, %69 : vector<256x256xf32>
    %cst_30 = arith.constant dense<0.000000e+00> : vector<256x16xf32>
    %71 = tpu.matmul %70, %56, %cst_30 {dimension_numbers = #tpu.dot_dimension_numbers<[1], [0], [0], [1], [0, 0, 1, 1], [], []>} : vector<256x256xf32>, vector<256x16xf32>, vector<256x16xf32> -> vector<256x16xf32>
    %72 = tpu.concatenate %53, %71 in 1 : vector<256x16xf32>, vector<256x16xf32> -> vector<256x32xf32>
    %73 = vector.extract_strided_slice %34 {offsets = [256, 0], sizes = [256, 96], strides = [1, 1]} : vector<512x96xf32> to vector<256x96xf32>
    %74 = vector.extract_strided_slice %73 {offsets = [0, 0], sizes = [256, 16], strides = [1, 1]} : vector<256x96xf32> to vector<256x16xf32>
    %75 = vector.extract_strided_slice %73 {offsets = [0, 32], sizes = [256, 16], strides = [1, 1]} : vector<256x96xf32> to vector<256x16xf32>
    %76 = vector.extract_strided_slice %73 {offsets = [0, 64], sizes = [256, 16], strides = [1, 1]} : vector<256x96xf32> to vector<256x16xf32>
    %cst_31 = arith.constant dense<0.000000e+00> : vector<256x256xf32>
    %77 = tpu.matmul %74, %75, %cst_31 {dimension_numbers = #tpu.dot_dimension_numbers<[1], [1], [0], [0], [0, 0, 1, 0], [], []>} : vector<256x16xf32>, vector<256x16xf32>, vector<256x256xf32> -> vector<256x256xf32>
    %c0_32 = arith.constant 0 : index
    %c0_33 = arith.constant 0 : index
    %c0_34 = arith.constant 0 : index
    %78 = vector.load %arg2[%c0_32, %c0_33, %c0_34] : memref<2x256x256xf32, #tpu.memory_space<vmem>>, vector<1x256x256xf32>
    %79 = vector.shape_cast %78 : vector<1x256x256xf32> to vector<256x256xf32>
    %80 = arith.addf %77, %79 : vector<256x256xf32>
    %cst_35 = arith.constant dense<0xFF800000> : vector<256xf32>
    %81 = vector.multi_reduction <maximumf>, %80, %cst_35 [1] : vector<256x256xf32> to vector<256xf32>
    %82 = vector.shape_cast %81 : vector<256xf32> to vector<256x1xf32>
    %83 = vector.broadcast %82 : vector<256x1xf32> to vector<256x256xf32>
    %84 = arith.subf %80, %83 : vector<256x256xf32>
    %85 = math.exp %84 : vector<256x256xf32>
    %cst_36 = arith.constant dense<0.000000e+00> : vector<256xf32>
    %86 = vector.multi_reduction <add>, %85, %cst_36 [1] : vector<256x256xf32> to vector<256xf32>
    %87 = vector.shape_cast %86 : vector<256xf32> to vector<256x1xf32>
    %88 = tpu.reciprocal %87 {approx = true} : vector<256x1xf32> -> vector<256x1xf32>
    %89 = vector.broadcast %88 : vector<256x1xf32> to vector<256x256xf32>
    %90 = arith.mulf %85, %89 : vector<256x256xf32>
    %cst_37 = arith.constant dense<0.000000e+00> : vector<256x16xf32>
    %91 = tpu.matmul %90, %76, %cst_37 {dimension_numbers = #tpu.dot_dimension_numbers<[1], [0], [0], [1], [0, 0, 1, 1], [], []>} : vector<256x256xf32>, vector<256x16xf32>, vector<256x16xf32> -> vector<256x16xf32>
    %92 = vector.extract_strided_slice %73 {offsets = [0, 16], sizes = [256, 16], strides = [1, 1]} : vector<256x96xf32> to vector<256x16xf32>
    %93 = vector.extract_strided_slice %73 {offsets = [0, 48], sizes = [256, 16], strides = [1, 1]} : vector<256x96xf32> to vector<256x16xf32>
    %94 = vector.extract_strided_slice %73 {offsets = [0, 80], sizes = [256, 16], strides = [1, 1]} : vector<256x96xf32> to vector<256x16xf32>
    %cst_38 = arith.constant dense<0.000000e+00> : vector<256x256xf32>
    %95 = tpu.matmul %92, %93, %cst_38 {dimension_numbers = #tpu.dot_dimension_numbers<[1], [1], [0], [0], [0, 0, 1, 0], [], []>} : vector<256x16xf32>, vector<256x16xf32>, vector<256x256xf32> -> vector<256x256xf32>
    %c1_39 = arith.constant 1 : index
    %c0_40 = arith.constant 0 : index
    %c0_41 = arith.constant 0 : index
    %96 = vector.load %arg2[%c1_39, %c0_40, %c0_41] : memref<2x256x256xf32, #tpu.memory_space<vmem>>, vector<1x256x256xf32>
    %97 = vector.shape_cast %96 : vector<1x256x256xf32> to vector<256x256xf32>
    %98 = arith.addf %95, %97 : vector<256x256xf32>
    %cst_42 = arith.constant dense<0xFF800000> : vector<256xf32>
    %99 = vector.multi_reduction <maximumf>, %98, %cst_42 [1] : vector<256x256xf32> to vector<256xf32>
    %100 = vector.shape_cast %99 : vector<256xf32> to vector<256x1xf32>
    %101 = vector.broadcast %100 : vector<256x1xf32> to vector<256x256xf32>
    %102 = arith.subf %98, %101 : vector<256x256xf32>
    %103 = math.exp %102 : vector<256x256xf32>
    %cst_43 = arith.constant dense<0.000000e+00> : vector<256xf32>
    %104 = vector.multi_reduction <add>, %103, %cst_43 [1] : vector<256x256xf32> to vector<256xf32>
    %105 = vector.shape_cast %104 : vector<256xf32> to vector<256x1xf32>
    %106 = tpu.reciprocal %105 {approx = true} : vector<256x1xf32> -> vector<256x1xf32>
    %107 = vector.broadcast %106 : vector<256x1xf32> to vector<256x256xf32>
    %108 = arith.mulf %103, %107 : vector<256x256xf32>
    %cst_44 = arith.constant dense<0.000000e+00> : vector<256x16xf32>
    %109 = tpu.matmul %108, %94, %cst_44 {dimension_numbers = #tpu.dot_dimension_numbers<[1], [0], [0], [1], [0, 0, 1, 1], [], []>} : vector<256x256xf32>, vector<256x16xf32>, vector<256x16xf32> -> vector<256x16xf32>
    %110 = tpu.concatenate %91, %109 in 1 : vector<256x16xf32>, vector<256x16xf32> -> vector<256x32xf32>
    %111 = tpu.concatenate %72, %110 in 0 : vector<256x32xf32>, vector<256x32xf32> -> vector<512x32xf32>
    %c0_45 = arith.constant 0 : index
    %c0_46 = arith.constant 0 : index
    %112 = vector.load %arg4[%c0_45, %c0_46] : memref<32x32xf32, #tpu.memory_space<vmem>>, vector<32x32xf32>
    %cst_47 = arith.constant dense<0.000000e+00> : vector<512x32xf32>
    %113 = tpu.matmul %111, %112, %cst_47 {dimension_numbers = #tpu.dot_dimension_numbers<[1], [0], [0], [1], [0, 0, 1, 1], [], []>} : vector<512x32xf32>, vector<32x32xf32>, vector<512x32xf32> -> vector<512x32xf32>
    %114 = vector.broadcast %6 : vector<1x32xf32> to vector<512x32xf32>
    %115 = arith.addf %113, %114 : vector<512x32xf32>
    %116 = arith.addf %0, %115 : vector<512x32xf32>
    %cst_48 = arith.constant dense<0.000000e+00> : vector<512xf32>
    %117 = vector.multi_reduction <add>, %116, %cst_48 [1] : vector<512x32xf32> to vector<512xf32>
    %118 = vector.shape_cast %117 : vector<512xf32> to vector<512x1xf32>
    %cst_49 = arith.constant 3.200000e+01 : f32
    %119 = vector.broadcast %cst_49 : f32 to vector<512x1xf32>
    %120 = arith.divf %118, %119 : vector<512x1xf32>
    %121 = vector.broadcast %120 : vector<512x1xf32> to vector<512x32xf32>
    %122 = arith.subf %116, %121 : vector<512x32xf32>
    %123 = arith.mulf %122, %122 : vector<512x32xf32>
    %cst_50 = arith.constant dense<0.000000e+00> : vector<512xf32>
    %124 = vector.multi_reduction <add>, %123, %cst_50 [1] : vector<512x32xf32> to vector<512xf32>
    %125 = vector.shape_cast %124 : vector<512xf32> to vector<512x1xf32>
    %cst_51 = arith.constant 3.200000e+01 : f32
    %126 = vector.broadcast %cst_51 : f32 to vector<512x1xf32>
    %127 = arith.divf %125, %126 : vector<512x1xf32>
    %128 = vector.broadcast %120 : vector<512x1xf32> to vector<512x32xf32>
    %129 = arith.subf %116, %128 : vector<512x32xf32>
    %cst_52 = arith.constant 9.99999974E-6 : f32
    %130 = vector.broadcast %cst_52 : f32 to vector<512x1xf32>
    %131 = arith.addf %127, %130 : vector<512x1xf32>
    %132 = math.rsqrt %131 : vector<512x1xf32>
    %133 = vector.broadcast %132 : vector<512x1xf32> to vector<512x32xf32>
    %134 = arith.mulf %129, %133 : vector<512x32xf32>
    %135 = vector.broadcast %3 : vector<1x32xf32> to vector<512x32xf32>
    %136 = arith.mulf %134, %135 : vector<512x32xf32>
    %137 = vector.broadcast %4 : vector<1x32xf32> to vector<512x32xf32>
    %138 = arith.addf %136, %137 : vector<512x32xf32>
    %c0_53 = arith.constant 0 : index
    %c0_54 = arith.constant 0 : index
    %139 = vector.load %arg5[%c0_53, %c0_54] : memref<32x128xf32, #tpu.memory_space<vmem>>, vector<32x128xf32>
    %cst_55 = arith.constant dense<0.000000e+00> : vector<512x128xf32>
    %140 = tpu.matmul %138, %139, %cst_55 {dimension_numbers = #tpu.dot_dimension_numbers<[1], [0], [0], [1], [0, 0, 1, 1], [], []>} : vector<512x32xf32>, vector<32x128xf32>, vector<512x128xf32> -> vector<512x128xf32>
    %141 = vector.broadcast %7 : vector<1x128xf32> to vector<512x128xf32>
    %142 = arith.addf %140, %141 : vector<512x128xf32>
    %cst_56 = arith.constant 5.000000e-01 : f32
    %143 = vector.broadcast %cst_56 : f32 to vector<512x128xf32>
    %144 = arith.mulf %143, %142 : vector<512x128xf32>
    %cst_57 = arith.constant 0.707106769 : f32
    %145 = vector.broadcast %cst_57 : f32 to vector<512x128xf32>
    %146 = arith.mulf %142, %145 : vector<512x128xf32>
    %147 = math.erf %146 : vector<512x128xf32>
    %cst_58 = arith.constant 1.000000e+00 : f32
    %148 = vector.broadcast %cst_58 : f32 to vector<512x128xf32>
    %149 = arith.addf %148, %147 : vector<512x128xf32>
    %150 = arith.mulf %144, %149 : vector<512x128xf32>
    %c0_59 = arith.constant 0 : index
    %c0_60 = arith.constant 0 : index
    %151 = vector.load %arg6[%c0_59, %c0_60] : memref<128x32xf32, #tpu.memory_space<vmem>>, vector<128x32xf32>
    %cst_61 = arith.constant dense<0.000000e+00> : vector<512x32xf32>
    %152 = tpu.matmul %150, %151, %cst_61 {dimension_numbers = #tpu.dot_dimension_numbers<[1], [0], [0], [1], [0, 0, 1, 1], [], []>} : vector<512x128xf32>, vector<128x32xf32>, vector<512x32xf32> -> vector<512x32xf32>
    %153 = vector.broadcast %8 : vector<1x32xf32> to vector<512x32xf32>
    %154 = arith.addf %152, %153 : vector<512x32xf32>
    %155 = arith.addf %116, %154 : vector<512x32xf32>
    %c0_62 = arith.constant 0 : index
    %c0_63 = arith.constant 0 : index
    %156 = vector.load %arg8[%c0_62, %c0_63] : memref<512x32xf32, #tpu.memory_space<vmem>>, vector<512x32xf32>
    tpu.vector_store %arg8[%c0_62, %c0_63], %155 {strides = array<i32>} : memref<512x32xf32, #tpu.memory_space<vmem>>, vector<512x32xf32>,
    return
  }
  func.func @transform_0(%arg0: i32) -> (i32, i32) {
    %c0_i32 = arith.constant 0 : i32
    %c0_i32_0 = arith.constant 0 : i32
    return %arg0, %c0_i32 : i32, i32
  }
  func.func @transform_1(%arg0: i32) -> (i32, i32, i32) {
    %c0_i32 = arith.constant 0 : i32
    %c0_i32_0 = arith.constant 0 : i32
    %c0_i32_1 = arith.constant 0 : i32
    %c0_i32_2 = arith.constant 0 : i32
    return %c0_i32, %c0_i32_0, %c0_i32_1 : i32, i32, i32
  }
  func.func @transform_2(%arg0: i32) -> (i32, i32) {
    %c0_i32 = arith.constant 0 : i32
    %c0_i32_0 = arith.constant 0 : i32
    %c0_i32_1 = arith.constant 0 : i32
    return %c0_i32, %c0_i32_0 : i32, i32
  }
  func.func @transform_3(%arg0: i32) -> (i32, i32) {
    %c0_i32 = arith.constant 0 : i32
    %c0_i32_0 = arith.constant 0 : i32
    %c0_i32_1 = arith.constant 0 : i32
    return %c0_i32, %c0_i32_0 : i32, i32
  }
  func.func @transform_4(%arg0: i32) -> (i32, i32) {
    %c0_i32 = arith.constant 0 : i32
    %c0_i32_0 = arith.constant 0 : i32
    %c0_i32_1 = arith.constant 0 : i32
    return %c0_i32, %c0_i32_0 : i32, i32
  }
  func.func @transform_5(%arg0: i32) -> (i32, i32) {
    %c0_i32 = arith.constant 0 : i32
    %c0_i32_0 = arith.constant 0 : i32
    %c0_i32_1 = arith.constant 0 : i32
    return %c0_i32, %c0_i32_0 : i32, i32
  }
  func.func @transform_6(%arg0: i32) -> (i32, i32) {
    %c0_i32 = arith.constant 0 : i32
    %c0_i32_0 = arith.constant 0 : i32
    %c0_i32_1 = arith.constant 0 : i32
    return %c0_i32, %c0_i32_0 : i32, i32
  }
  func.func @transform_7(%arg0: i32) -> (i32, i32) {
    %c0_i32 = arith.constant 0 : i32
    %c0_i32_0 = arith.constant 0 : i32
    return %arg0, %c0_i32 : i32, i32
  }
}

</mosaic_0001>

<llo_original>
// kernel: swin_block_pallas.1
$region0: #{swin_block_pallas.1}
  #allocation0 [shape = 'u32[]', space=smem, size = 0x4, offset = 0x4, fixed_abs, tag = 'smem constant byte address 0x4 - core index']
  #allocation1 [shape = 'u32[144,128]{1,0:T(1,128)}', space=vmem, size = 0x12000, scoped, tag = 'internal scratch']
  %s0 = inlined_call_operand.vmem [shape: f32[512,32], index: 0, kind: input, shape index: {}, may-alias: {0,7}]
  %s1 = inlined_call_operand.vmem [shape: f32[2,256,256], index: 1, kind: input, shape index: {}]
  %s2 = inlined_call_operand.vmem [shape: f32[32,96], index: 2, kind: input, shape index: {}]
  %s3 = inlined_call_operand.vmem [shape: f32[32,32], index: 3, kind: input, shape index: {}]
  %s4 = inlined_call_operand.vmem [shape: f32[32,128], index: 4, kind: input, shape index: {}]
  %s5 = inlined_call_operand.vmem [shape: f32[128,32], index: 5, kind: input, shape index: {}]
  %s6 = inlined_call_operand.vmem [shape: f32[8,128], index: 6, kind: input, shape index: {}]
  %s7 = inlined_call_operand.vmem [shape: f32[512,32], index: 7, kind: output, shape index: {}, may-alias: {0,7}]
  %s8 = sld [smem:[#allocation0]]
  $region38: #{swin_block_pallas.1} parent=0
    _
  %s10 = ssub.s32 1, %s8
  %s11 = scalar_select 0, %s10, %s8
  // Predicated region
  $region2: #{swin_block_pallas.1} parent=0 // pred_check
    _
  $region3: #{swin_block_pallas.1} parent=0 // pred_check_branch
    %13 = sbr.rel (0) target = $region5
  $region4: #{swin_block_pallas.1} parent=0 // pred_region
    _
  $region5: #{swin_block_pallas.1} parent=0 // pred_fallthru
    _
  // Predicated region
  $region6: #{swin_block_pallas.1} parent=0 // pred_check
    _
  $region7: #{swin_block_pallas.1} parent=0 // pred_check_branch
    %15 = sbr.rel (0) target = $region9
  $region8: #{swin_block_pallas.1} parent=0 // pred_region
    _
  $region9: #{swin_block_pallas.1} parent=0 // pred_fallthru
    _
  // Predicated region
  $region10: #{swin_block_pallas.1} parent=0 // pred_check
    _
  $region11: #{swin_block_pallas.1} parent=0 // pred_check_branch
    %17 = sbr.rel (0) target = $region13
  $region12: #{swin_block_pallas.1} parent=0 // pred_region
    _
  $region13: #{swin_block_pallas.1} parent=0 // pred_fallthru
    _
  // Predicated region
  $region14: #{swin_block_pallas.1} parent=0 // pred_check
    _
  $region15: #{swin_block_pallas.1} parent=0 // pred_check_branch
    %19 = sbr.rel (0) target = $region17
  $region16: #{swin_block_pallas.1} parent=0 // pred_region
    _
  $region17: #{swin_block_pallas.1} parent=0 // pred_fallthru
    _
  // Predicated region
  $region18: #{swin_block_pallas.1} parent=0 // pred_check
    _
  $region19: #{swin_block_pallas.1} parent=0 // pred_check_branch
    %21 = sbr.rel (0) target = $region21
  $region20: #{swin_block_pallas.1} parent=0 // pred_region
    _
  $region21: #{swin_block_pallas.1} parent=0 // pred_fallthru
    _
  // Predicated region
  $region22: #{swin_block_pallas.1} parent=0 // pred_check
    _
  $region23: #{swin_block_pallas.1} parent=0 // pred_check_branch
    %23 = sbr.rel (0) target = $region25
  $region24: #{swin_block_pallas.1} parent=0 // pred_region
    _
  $region25: #{swin_block_pallas.1} parent=0 // pred_fallthru
    _
  // Predicated region
  $region26: #{swin_block_pallas.1} parent=0 // pred_check
    _
  $region27: #{swin_block_pallas.1} parent=0 // pred_check_branch
    %25 = sbr.rel (0) target = $region29
  $region28: #{swin_block_pallas.1} parent=0 // pred_region
    _
  $region29: #{swin_block_pallas.1} parent=0 // pred_fallthru
    _
  %v26 = vld [vmem:[%s0] sm:$0xff]
  %v27 = vld [vmem:[%s0 + $0x8] sm:$0xff]
  %v28 = vld [vmem:[%s0 + $0x10] sm:$0xff]
  %v29 = vld [vmem:[%s0 + $0x18] sm:$0xff]
  %v30 = vld [vmem:[%s0 + $0x20] sm:$0xff]
  %v31 = vld [vmem:[%s0 + $0x28] sm:$0xff]
  %v32 = vld [vmem:[%s0 + $0x30] sm:$0xff]
  %v33 = vld [vmem:[%s0 + $0x38] sm:$0xff]
  %v34 = vld [vmem:[%s0 + $0x40] sm:$0xff]
  %v35 = vld [vmem:[%s0 + $0x48] sm:$0xff]
  %v36 = vld [vmem:[%s0 + $0x50] sm:$0xff]
  %v37 = vld [vmem:[%s0 + $0x58] sm:$0xff]
  %v38 = vld [vmem:[%s0 + $0x60] sm:$0xff]
  %v39 = vld [vmem:[%s0 + $0x68] sm:$0xff]
  %v40 = vld [vmem:[%s0 + $0x70] sm:$0xff]
  %v41 = vld [vmem:[%s0 + $0x78] sm:$0xff]
  %v42 = vld [vmem:[%s0 + $0x80] sm:$0xff]
  %v43 = vld [vmem:[%s0 + $0x88] sm:$0xff]
  %v44 = vld [vmem:[%s0 + $0x90] sm:$0xff]
  %v45 = vld [vmem:[%s0 + $0x98] sm:$0xff]
  %v46 = vld [vmem:[%s0 + $0xa0] sm:$0xff]
  %v47 = vld [vmem:[%s0 + $0xa8] sm:$0xff]
  %v48 = vld [vmem:[%s0 + $0xb0] sm:$0xff]
  %v49 = vld [vmem:[%s0 + $0xb8] sm:$0xff]
  %v50 = vld [vmem:[%s0 + $0xc0] sm:$0xff]
  %v51 = vld [vmem:[%s0 + $0xc8] sm:$0xff]
  %v52 = vld [vmem:[%s0 + $0xd0] sm:$0xff]
  %v53 = vld [vmem:[%s0 + $0xd8] sm:$0xff]
  %v54 = vld [vmem:[%s0 + $0xe0] sm:$0xff]
  %v55 = vld [vmem:[%s0 + $0xe8] sm:$0xff]
  %v56 = vld [vmem:[%s0 + $0xf0] sm:$0xff]
  %v57 = vld [vmem:[%s0 + $0xf8] sm:$0xff]
  %v58 = vld [vmem:[%s0 + $0x100] sm:$0xff]
  %v59 = vld [vmem:[%s0 + $0x108] sm:$0xff]
  %v60 = vld [vmem:[%s0 + $0x110] sm:$0xff]
  %v61 = vld [vmem:[%s0 + $0x118] sm:$0xff]
  %v62 = vld [vmem:[%s0 + $0x120] sm:$0xff]
  %v63 = vld [vmem:[%s0 + $0x128] sm:$0xff]
  %v64 = vld [vmem:[%s0 + $0x130] sm:$0xff]
  %v65 = vld [vmem:[%s0 + $0x138] sm:$0xff]
  %v66 = vld [vmem:[%s0 + $0x140] sm:$0xff]
  %v67 = vld [vmem:[%s0 + $0x148] sm:$0xff]
  %v68 = vld [vmem:[%s0 + $0x150] sm:$0xff]
  %v69 = vld [vmem:[%s0 + $0x158] sm:$0xff]
  %v70 = vld [vmem:[%s0 + $0x160] sm:$0xff]
  %v71 = vld [vmem:[%s0 + $0x168] sm:$0xff]
  %v72 = vld [vmem:[%s0 + $0x170] sm:$0xff]
  %v73 = vld [vmem:[%s0 + $0x178] sm:$0xff]
  %v74 = vld [vmem:[%s0 + $0x180] sm:$0xff]
  %v75 = vld [vmem:[%s0 + $0x188] sm:$0xff]
  %v76 = vld [vmem:[%s0 + $0x190] sm:$0xff]
  %v77 = vld [vmem:[%s0 + $0x198] sm:$0xff]
  %v78 = vld [vmem:[%s0 + $0x1a0] sm:$0xff]
  %v79 = vld [vmem:[%s0 + $0x1a8] sm:$0xff]
  %v80 = vld [vmem:[%s0 + $0x1b0] sm:$0xff]
  %v81 = vld [vmem:[%s0 + $0x1b8] sm:$0xff]
  %v82 = vld [vmem:[%s0 + $0x1c0] sm:$0xff]
  %v83 = vld [vmem:[%s0 + $0x1c8] sm:$0xff]
  %v84 = vld [vmem:[%s0 + $0x1d0] sm:$0xff]
  %v85 = vld [vmem:[%s0 + $0x1d8] sm:$0xff]
  %v86 = vld [vmem:[%s0 + $0x1e0] sm:$0xff]
  %v87 = vld [vmem:[%s0 + $0x1e8] sm:$0xff]
  %v88 = vld [vmem:[%s0 + $0x1f0] sm:$0xff]
  %v89 = vld [vmem:[%s0 + $0x1f8] sm:$0xff]
  %v90 = vld [vmem:[%s6] sm:$0x1]
  %v91 = vld [vmem:[%s6 + $0x1] sm:$0x1]
  %v92 = vld [vmem:[%s6 + $0x2] sm:$0x1]
  %v93 = vld [vmem:[%s6 + $0x3] sm:$0x1]
  %v94 = vld [vmem:[%s6 + $0x4] sm:$0x1]
  %v95 = vld [vmem:[%s6 + $0x5] sm:$0x1]
  %v96 = vld [vmem:[%s6 + $0x6] sm:$0x1]
  %v97 = vld [vmem:[%s6 + $0x7] sm:$0x1]
  %vm98 = vcmask 261120
  %v99 = vsel %vm98, %v26, 0.0
  %100 = vadd.xlane.f32.xlu0 %v99
  %v101 = vpop.xlane.xlu0 %100
  %v102 = vsel %vm98, %v27, 0.0
  %103 = vadd.xlane.f32.xlu0 %v102
  %v104 = vpop.xlane.xlu0 %103
  %v105 = vsel %vm98, %v28, 0.0
  %106 = vadd.xlane.f32.xlu0 %v105
  %v107 = vpop.xlane.xlu0 %106
  %v108 = vsel %vm98, %v29, 0.0
  %109 = vadd.xlane.f32.xlu0 %v108
  %v110 = vpop.xlane.xlu0 %109
  %v111 = vsel %vm98, %v30, 0.0
  %112 = vadd.xlane.f32.xlu0 %v111
  %v113 = vpop.xlane.xlu0 %112
  %v114 = vsel %vm98, %v31, 0.0
  %115 = vadd.xlane.f32.xlu0 %v114
  %v116 = vpop.xlane.xlu0 %115
  %v117 = vsel %vm98, %v32, 0.0
  %118 = vadd.xlane.f32.xlu0 %v117
  %v119 = vpop.xlane.xlu0 %118
  %v120 = vsel %vm98, %v33, 0.0
  %121 = vadd.xlane.f32.xlu0 %v120
  %v122 = vpop.xlane.xlu0 %121
  %v123 = vsel %vm98, %v34, 0.0
  %124 = vadd.xlane.f32.xlu0 %v123
  %v125 = vpop.xlane.xlu0 %124
  %v126 = vsel %vm98, %v35, 0.0
  %127 = vadd.xlane.f32.xlu0 %v126
  %v128 = vpop.xlane.xlu0 %127
  %v129 = vsel %vm98, %v36, 0.0
  %130 = vadd.xlane.f32.xlu0 %v129
  %v131 = vpop.xlane.xlu0 %130
  %v132 = vsel %vm98, %v37, 0.0
  %133 = vadd.xlane.f32.xlu0 %v132
  %v134 = vpop.xlane.xlu0 %133
  %v135 = vsel %vm98, %v38, 0.0
  %136 = vadd.xlane.f32.xlu0 %v135
  %v137 = vpop.xlane.xlu0 %136
  %v138 = vsel %vm98, %v39, 0.0
  %139 = vadd.xlane.f32.xlu0 %v138
  %v140 = vpop.xlane.xlu0 %139
  %v141 = vsel %vm98, %v40, 0.0
  %142 = vadd.xlane.f32.xlu0 %v141
  %v143 = vpop.xlane.xlu0 %142
  %v144 = vsel %vm98, %v41, 0.0
  %145 = vadd.xlane.f32.xlu0 %v144
  %v146 = vpop.xlane.xlu0 %145
  %v147 = vsel %vm98, %v42, 0.0
  %148 = vadd.xlane.f32.xlu0 %v147
  %v149 = vpop.xlane.xlu0 %148
  %v150 = vsel %vm98, %v43, 0.0
  %151 = vadd.xlane.f32.xlu0 %v150
  %v152 = vpop.xlane.xlu0 %151
  %v153 = vsel %vm98, %v44, 0.0
  %154 = vadd.xlane.f32.xlu0 %v153
  %v155 = vpop.xlane.xlu0 %154
  %v156 = vsel %vm98, %v45, 0.0
  %157 = vadd.xlane.f32.xlu0 %v156
  %v158 = vpop.xlane.xlu0 %157
  %v159 = vsel %vm98, %v46, 0.0
  %160 = vadd.xlane.f32.xlu0 %v159
  %v161 = vpop.xlane.xlu0 %160
  %v162 = vsel %vm98, %v47, 0.0
  %163 = vadd.xlane.f32.xlu0 %v162
  %v164 = vpop.xlane.xlu0 %163
  %v165 = vsel %vm98, %v48, 0.0
  %166 = vadd.xlane.f32.xlu0 %v165
  %v167 = vpop.xlane.xlu0 %166
  %v168 = vsel %vm98, %v49, 0.0
  %169 = vadd.xlane.f32.xlu0 %v168
  %v170 = vpop.xlane.xlu0 %169
  %v171 = vsel %vm98, %v50, 0.0
  %172 = vadd.xlane.f32.xlu0 %v171
  %v173 = vpop.xlane.xlu0 %172
  %v174 = vsel %vm98, %v51, 0.0
  %175 = vadd.xlane.f32.xlu0 %v174
  %v176 = vpop.xlane.xlu0 %175
  %v177 = vsel %vm98, %v52, 0.0
  %178 = vadd.xlane.f32.xlu0 %v177
  %v179 = vpop.xlane.xlu0 %178
  %v180 = vsel %vm98, %v53, 0.0
  %181 = vadd.xlane.f32.xlu0 %v180
  %v182 = vpop.xlane.xlu0 %181
  %v183 = vsel %vm98, %v54, 0.0
  %184 = vadd.xlane.f32.xlu0 %v183
  %v185 = vpop.xlane.xlu0 %184
  %v186 = vsel %vm98, %v55, 0.0
  %187 = vadd.xlane.f32.xlu0 %v186
  %v188 = vpop.xlane.xlu0 %187
  %v189 = vsel %vm98, %v56, 0.0
  %190 = vadd.xlane.f32.xlu0 %v189
  %v191 = vpop.xlane.xlu0 %190
  %v192 = vsel %vm98, %v57, 0.0
  %193 = vadd.xlane.f32.xlu0 %v192
  %v194 = vpop.xlane.xlu0 %193
  %v195 = vsel %vm98, %v58, 0.0
  %196 = vadd.xlane.f32.xlu0 %v195
  %v197 = vpop.xlane.xlu0 %196
  %v198 = vsel %vm98, %v59, 0.0
  %199 = vadd.xlane.f32.xlu0 %v198
  %v200 = vpop.xlane.xlu0 %199
  %v201 = vsel %vm98, %v60, 0.0
  %202 = vadd.xlane.f32.xlu0 %v201
  %v203 = vpop.xlane.xlu0 %202
  %v204 = vsel %vm98, %v61, 0.0
  %205 = vadd.xlane.f32.xlu0 %v204
  %v206 = vpop.xlane.xlu0 %205
  %v207 = vsel %vm98, %v62, 0.0
  %208 = vadd.xlane.f32.xlu0 %v207
  %v209 = vpop.xlane.xlu0 %208
  %v210 = vsel %vm98, %v63, 0.0
  %211 = vadd.xlane.f32.xlu0 %v210
  %v212 = vpop.xlane.xlu0 %211
  %v213 = vsel %vm98, %v64, 0.0
  %214 = vadd.xlane.f32.xlu0 %v213
  %v215 = vpop.xlane.xlu0 %214
  %v216 = vsel %vm98, %v65, 0.0
  %217 = vadd.xlane.f32.xlu0 %v216
  %v218 = vpop.xlane.xlu0 %217
  %v219 = vsel %vm98, %v66, 0.0
  %220 = vadd.xlane.f32.xlu0 %v219
  %v221 = vpop.xlane.xlu0 %220
  %v222 = vsel %vm98, %v67, 0.0
  %223 = vadd.xlane.f32.xlu0 %v222
  %v224 = vpop.xlane.xlu0 %223
  %v225 = vsel %vm98, %v68, 0.0
  %226 = vadd.xlane.f32.xlu0 %v225
  %v227 = vpop.xlane.xlu0 %226
  %v228 = vsel %vm98, %v69, 0.0
  %229 = vadd.xlane.f32.xlu0 %v228
  %v230 = vpop.xlane.xlu0 %229
  %v231 = vsel %vm98, %v70, 0.0
  %232 = vadd.xlane.f32.xlu0 %v231
  %v233 = vpop.xlane.xlu0 %232
  %v234 = vsel %vm98, %v71, 0.0
  %235 = vadd.xlane.f32.xlu0 %v234
  %v236 = vpop.xlane.xlu0 %235
  %v237 = vsel %vm98, %v72, 0.0
  %238 = vadd.xlane.f32.xlu0 %v237
  %v239 = vpop.xlane.xlu0 %238
  %v240 = vsel %vm98, %v73, 0.0
  %241 = vadd.xlane.f32.xlu0 %v240
  %v242 = vpop.xlane.xlu0 %241
  %v243 = vsel %vm98, %v74, 0.0
  %244 = vadd.xlane.f32.xlu0 %v243
  %v245 = vpop.xlane.xlu0 %244
  %v246 = vsel %vm98, %v75, 0.0
  %247 = vadd.xlane.f32.xlu0 %v246
  %v248 = vpop.xlane.xlu0 %247
  %v249 = vsel %vm98, %v76, 0.0
  %250 = vadd.xlane.f32.xlu0 %v249
  %v251 = vpop.xlane.xlu0 %250
  %v252 = vsel %vm98, %v77, 0.0
  %253 = vadd.xlane.f32.xlu0 %v252
  %v254 = vpop.xlane.xlu0 %253
  %v255 = vsel %vm98, %v78, 0.0
  %256 = vadd.xlane.f32.xlu0 %v255
  %v257 = vpop.xlane.xlu0 %256
  %v258 = vsel %vm98, %v79, 0.0
  %259 = vadd.xlane.f32.xlu0 %v258
  %v260 = vpop.xlane.xlu0 %259
  %v261 = vsel %vm98, %v80, 0.0
  %262 = vadd.xlane.f32.xlu0 %v261
  %v263 = vpop.xlane.xlu0 %262
  %v264 = vsel %vm98, %v81, 0.0
  %265 = vadd.xlane.f32.xlu0 %v264
  %v266 = vpop.xlane.xlu0 %265
  %v267 = vsel %vm98, %v82, 0.0
  %268 = vadd.xlane.f32.xlu0 %v267
  %v269 = vpop.xlane.xlu0 %268
  %v270 = vsel %vm98, %v83, 0.0
  %271 = vadd.xlane.f32.xlu0 %v270
  %v272 = vpop.xlane.xlu0 %271
  %v273 = vsel %vm98, %v84, 0.0
  %274 = vadd.xlane.f32.xlu0 %v273
  %v275 = vpop.xlane.xlu0 %274
  %v276 = vsel %vm98, %v85, 0.0
  %277 = vadd.xlane.f32.xlu0 %v276
  %v278 = vpop.xlane.xlu0 %277
  %v279 = vsel %vm98, %v86, 0.0
  %280 = vadd.xlane.f32.xlu0 %v279
  %v281 = vpop.xlane.xlu0 %280
  %v282 = vsel %vm98, %v87, 0.0
  %283 = vadd.xlane.f32.xlu0 %v282
  %v284 = vpop.xlane.xlu0 %283
  %v285 = vsel %vm98, %v88, 0.0
  %286 = vadd.xlane.f32.xlu0 %v285
  %v287 = vpop.xlane.xlu0 %286
  %v288 = vsel %vm98, %v89, 0.0
  %289 = vadd.xlane.f32.xlu0 %v288
  %v290 = vpop.xlane.xlu0 %289
  %v291 = vrcp.pop 32.0
  %v292 = vmul.f32 %v101, %v291
  %v293 = vmul.f32 %v104, %v291
  %v294 = vmul.f32 %v107, %v291
  %v295 = vmul.f32 %v110, %v291
  %v296 = vmul.f32 %v113, %v291
  %v297 = vmul.f32 %v116, %v291
  %v298 = vmul.f32 %v119, %v291
  %v299 = vmul.f32 %v122, %v291
  %v300 = vmul.f32 %v125, %v291
  %v301 = vmul.f32 %v128, %v291
  %v302 = vmul.f32 %v131, %v291
  %v303 = vmul.f32 %v134, %v291
  %v304 = vmul.f32 %v137, %v291
  %v305 = vmul.f32 %v140, %v291
  %v306 = vmul.f32 %v143, %v291
  %v307 = vmul.f32 %v146, %v291
  %v308 = vmul.f32 %v149, %v291
  %v309 = vmul.f32 %v152, %v291
  %v310 = vmul.f32 %v155, %v291
  %v311 = vmul.f32 %v158, %v291
  %v312 = vmul.f32 %v161, %v291
  %v313 = vmul.f32 %v164, %v291
  %v314 = vmul.f32 %v167, %v291
  %v315 = vmul.f32 %v170, %v291
  %v316 = vmul.f32 %v173, %v291
  %v317 = vmul.f32 %v176, %v291
  %v318 = vmul.f32 %v179, %v291
  %v319 = vmul.f32 %v182, %v291
  %v320 = vmul.f32 %v185, %v291
  %v321 = vmul.f32 %v188, %v291
  %v322 = vmul.f32 %v191, %v291
  %v323 = vmul.f32 %v194, %v291
  %v324 = vmul.f32 %v197, %v291
  %v325 = vmul.f32 %v200, %v291
  %v326 = vmul.f32 %v203, %v291
  %v327 = vmul.f32 %v206, %v291
  %v328 = vmul.f32 %v209, %v291
  %v329 = vmul.f32 %v212, %v291
  %v330 = vmul.f32 %v215, %v291
  %v331 = vmul.f32 %v218, %v291
  %v332 = vmul.f32 %v221, %v291
  %v333 = vmul.f32 %v224, %v291
  %v334 = vmul.f32 %v227, %v291
  %v335 = vmul.f32 %v230, %v291
  %v336 = vmul.f32 %v233, %v291
  %v337 = vmul.f32 %v236, %v291
  %v338 = vmul.f32 %v239, %v291
  %v339 = vmul.f32 %v242, %v291
  %v340 = vmul.f32 %v245, %v291
  %v341 = vmul.f32 %v248, %v291
  %v342 = vmul.f32 %v251, %v291
  %v343 = vmul.f32 %v254, %v291
  %v344 = vmul.f32 %v257, %v291
  %v345 = vmul.f32 %v260, %v291
  %v346 = vmul.f32 %v263, %v291
  %v347 = vmul.f32 %v266, %v291
  %v348 = vmul.f32 %v269, %v291
  %v349 = vmul.f32 %v272, %v291
  %v350 = vmul.f32 %v275, %v291
  %v351 = vmul.f32 %v278, %v291
  %v352 = vmul.f32 %v281, %v291
  %v353 = vmul.f32 %v284, %v291
  %v354 = vmul.f32 %v287, %v291
  %v355 = vmul.f32 %v290, %v291
  %v356 = vsub.f32 %v26, %v292
  %v357 = vsub.f32 %v27, %v293
  %v358 = vsub.f32 %v28, %v294
  %v359 = vsub.f32 %v29, %v295
  %v360 = vsub.f32 %v30, %v296
  %v361 = vsub.f32 %v31, %v297
  %v362 = vsub.f32 %v32, %v298
  %v363 = vsub.f32 %v33, %v299
  %v364 = vsub.f32 %v34, %v300
  %v365 = vsub.f32 %v35, %v301
  %v366 = vsub.f32 %v36, %v302
  %v367 = vsub.f32 %v37, %v303
  %v368 = vsub.f32 %v38, %v304
  %v369 = vsub.f32 %v39, %v305
  %v370 = vsub.f32 %v40, %v306
  %v371 = vsub.f32 %v41, %v307
  %v372 = vsub.f32 %v42, %v308
  %v373 = vsub.f32 %v43, %v309
  %v374 = vsub.f32 %v44, %v310
  %v375 = vsub.f32 %v45, %v311
  %v376 = vsub.f32 %v46, %v312
  %v377 = vsub.f32 %v47, %v313
  %v378 = vsub.f32 %v48, %v314
  %v379 = vsub.f32 %v49, %v315
  %v380 = vsub.f32 %v50, %v316
  %v381 = vsub.f32 %v51, %v317
  %v382 = vsub.f32 %v52, %v318
  %v383 = vsub.f32 %v53, %v319
  %v384 = vsub.f32 %v54, %v320
  %v385 = vsub.f32 %v55, %v321
  %v386 = vsub.f32 %v56, %v322
  %v387 = vsub.f32 %v57, %v323
  %v388 = vsub.f32 %v58, %v324
  %v389 = vsub.f32 %v59, %v325
  %v390 = vsub.f32 %v60, %v326
  %v391 = vsub.f32 %v61, %v327
  %v392 = vsub.f32 %v62, %v328
  %v393 = vsub.f32 %v63, %v329
  %v394 = vsub.f32 %v64, %v330
  %v395 = vsub.f32 %v65, %v331
  %v396 = vsub.f32 %v66, %v332
  %v397 = vsub.f32 %v67, %v333
  %v398 = vsub.f32 %v68, %v334
  %v399 = vsub.f32 %v69, %v335
  %v400 = vsub.f32 %v70, %v336
  %v401 = vsub.f32 %v71, %v337
  %v402 = vsub.f32 %v72, %v338
  %v403 = vsub.f32 %v73, %v339
  %v404 = vsub.f32 %v74, %v340
  %v405 = vsub.f32 %v75, %v341
  %v406 = vsub.f32 %v76, %v342
  %v407 = vsub.f32 %v77, %v343
  %v408 = vsub.f32 %v78, %v344
  %v409 = vsub.f32 %v79, %v345
  %v410 = vsub.f32 %v80, %v346
  %v411 = vsub.f32 %v81, %v347
  %v412 = vsub.f32 %v82, %v348
  %v413 = vsub.f32 %v83, %v349
  %v414 = vsub.f32 %v84, %v350
  %v415 = vsub.f32 %v85, %v351
  %v416 = vsub.f32 %v86, %v352
  %v417 = vsub.f32 %v87, %v353
  %v418 = vsub.f32 %v88, %v354
  %v419 = vsub.f32 %v89, %v355
  %v420 = vmul.f32 %v356, %v356
  %v421 = vmul.f32 %v357, %v357
  %v422 = vmul.f32 %v358, %v358
  %v423 = vmul.f32 %v359, %v359
  %v424 = vmul.f32 %v360, %v360
  %v425 = vmul.f32 %v361, %v361
  %v426 = vmul.f32 %v362, %v362
  %v427 = vmul.f32 %v363, %v363
  %v428 = vmul.f32 %v364, %v364
  %v429 = vmul.f32 %v365, %v365
  %v430 = vmul.f32 %v366, %v366
  %v431 = vmul.f32 %v367, %v367
  %v432 = vmul.f32 %v368, %v368
  %v433 = vmul.f32 %v369, %v369
  %v434 = vmul.f32 %v370, %v370
  %v435 = vmul.f32 %v371, %v371
  %v436 = vmul.f32 %v372, %v372
  %v437 = vmul.f32 %v373, %v373
  %v438 = vmul.f32 %v374, %v374
  %v439 = vmul.f32 %v375, %v375
  %v440 = vmul.f32 %v376, %v376
  %v441 = vmul.f32 %v377, %v377
  %v442 = vmul.f32 %v378, %v378
  %v443 = vmul.f32 %v379, %v379
  %v444 = vmul.f32 %v380, %v380
  %v445 = vmul.f32 %v381, %v381
  %v446 = vmul.f32 %v382, %v382
  %v447 = vmul.f32 %v383, %v383
  %v448 = vmul.f32 %v384, %v384
  %v449 = vmul.f32 %v385, %v385
  %v450 = vmul.f32 %v386, %v386
  %v451 = vmul.f32 %v387, %v387
  %v452 = vmul.f32 %v388, %v388
  %v453 = vmul.f32 %v389, %v389
  %v454 = vmul.f32 %v390, %v390
  %v455 = vmul.f32 %v391, %v391
  %v456 = vmul.f32 %v392, %v392
  %v457 = vmul.f32 %v393, %v393
  %v458 = vmul.f32 %v394, %v394
  %v459 = vmul.f32 %v395, %v395
  %v460 = vmul.f32 %v396, %v396
  %v461 = vmul.f32 %v397, %v397
  %v462 = vmul.f32 %v398, %v398
  %v463 = vmul.f32 %v399, %v399
  %v464 = vmul.f32 %v400, %v400
  %v465 = vmul.f32 %v401, %v401
  %v466 = vmul.f32 %v402, %v402
  %v467 = vmul.f32 %v403, %v403
  %v468 = vmul.f32 %v404, %v404
  %v469 = vmul.f32 %v405, %v405
  %v470 = vmul.f32 %v406, %v406
  %v471 = vmul.f32 %v407, %v407
  %v472 = vmul.f32 %v408, %v408
  %v473 = vmul.f32 %v409, %v409
  %v474 = vmul.f32 %v410, %v410
  %v475 = vmul.f32 %v411, %v411
  %v476 = vmul.f32 %v412, %v412
  %v477 = vmul.f32 %v413, %v413
  %v478 = vmul.f32 %v414, %v414
  %v479 = vmul.f32 %v415, %v415
  %v480 = vmul.f32 %v416, %v416
  %v481 = vmul.f32 %v417, %v417
  %v482 = vmul.f32 %v418, %v418
  %v483 = vmul.f32 %v419, %v419
  %v484 = vsel %vm98, %v420, 0.0
  %485 = vadd.xlane.f32.xlu0 %v484
  %v486 = vpop.xlane.xlu0 %485
  %v487 = vsel %vm98, %v421, 0.0
  %488 = vadd.xlane.f32.xlu0 %v487
  %v489 = vpop.xlane.xlu0 %488
  %v490 = vsel %vm98, %v422, 0.0
  %491 = vadd.xlane.f32.xlu0 %v490
  %v492 = vpop.xlane.xlu0 %491
  %v493 = vsel %vm98, %v423, 0.0
  %494 = vadd.xlane.f32.xlu0 %v493
  %v495 = vpop.xlane.xlu0 %494
  %v496 = vsel %vm98, %v424, 0.0
  %497 = vadd.xlane.f32.xlu0 %v496
  %v498 = vpop.xlane.xlu0 %497
  %v499 = vsel %vm98, %v425, 0.0
  %500 = vadd.xlane.f32.xlu0 %v499
  %v501 = vpop.xlane.xlu0 %500
  %v502 = vsel %vm98, %v426, 0.0
  %503 = vadd.xlane.f32.xlu0 %v502
  %v504 = vpop.xlane.xlu0 %503
  %v505 = vsel %vm98, %v427, 0.0
  %506 = vadd.xlane.f32.xlu0 %v505
  %v507 = vpop.xlane.xlu0 %506
  %v508 = vsel %vm98, %v428, 0.0
  %509 = vadd.xlane.f32.xlu0 %v508
  %v510 = vpop.xlane.xlu0 %509
  %v511 = vsel %vm98, %v429, 0.0
  %512 = vadd.xlane.f32.xlu0 %v511
  %v513 = vpop.xlane.xlu0 %512
  %v514 = vsel %vm98, %v430, 0.0
  %515 = vadd.xlane.f32.xlu0 %v514
  %v516 = vpop.xlane.xlu0 %515
  %v517 = vsel %vm98, %v431, 0.0
  %518 = vadd.xlane.f32.xlu0 %v517
  %v519 = vpop.xlane.xlu0 %518
  %v520 = vsel %vm98, %v432, 0.0
  %521 = vadd.xlane.f32.xlu0 %v520
  %v522 = vpop.xlane.xlu0 %521
  %v523 = vsel %vm98, %v433, 0.0
  %524 = vadd.xlane.f32.xlu0 %v523
  %v525 = vpop.xlane.xlu0 %524
  %v526 = vsel %vm98, %v434, 0.0
  %527 = vadd.xlane.f32.xlu0 %v526
  %v528 = vpop.xlane.xlu0 %527
  %v529 = vsel %vm98, %v435, 0.0
  %530 = vadd.xlane.f32.xlu0 %v529
  %v531 = vpop.xlane.xlu0 %530
  %v532 = vsel %vm98, %v436, 0.0
  %533 = vadd.xlane.f32.xlu0 %v532
  %v534 = vpop.xlane.xlu0 %533
  %v535 = vsel %vm98, %v437, 0.0
  %536 = vadd.xlane.f32.xlu0 %v535
  %v537 = vpop.xlane.xlu0 %536
  %v538 = vsel %vm98, %v438, 0.0
  %539 = vadd.xlane.f32.xlu0 %v538
  %v540 = vpop.xlane.xlu0 %539
  %v541 = vsel %vm98, %v439, 0.0
  %542 = vadd.xlane.f32.xlu0 %v541
  %v543 = vpop.xlane.xlu0 %542
  %v544 = vsel %vm98, %v440, 0.0
  %545 = vadd.xlane.f32.xlu0 %v544
  %v546 = vpop.xlane.xlu0 %545
  %v547 = vsel %vm98, %v441, 0.0
  %548 = vadd.xlane.f32.xlu0 %v547
  %v549 = vpop.xlane.xlu0 %548
  %v550 = vsel %vm98, %v442, 0.0
  %551 = vadd.xlane.f32.xlu0 %v550
  %v552 = vpop.xlane.xlu0 %551
  %v553 = vsel %vm98, %v443, 0.0
  %554 = vadd.xlane.f32.xlu0 %v553
  %v555 = vpop.xlane.xlu0 %554
  %v556 = vsel %vm98, %v444, 0.0
  %557 = vadd.xlane.f32.xlu0 %v556
  %v558 = vpop.xlane.xlu0 %557
  %v559 = vsel %vm98, %v445, 0.0
  %560 = vadd.xlane.f32.xlu0 %v559
  %v561 = vpop.xlane.xlu0 %560
  %v562 = vsel %vm98, %v446, 0.0
  %563 = vadd.xlane.f32.xlu0 %v562
  %v564 = vpop.xlane.xlu0 %563
  %v565 = vsel %vm98, %v447, 0.0
  %566 = vadd.xlane.f32.xlu0 %v565
  %v567 = vpop.xlane.xlu0 %566
  %v568 = vsel %vm98, %v448, 0.0
  %569 = vadd.xlane.f32.xlu0 %v568
  %v570 = vpop.xlane.xlu0 %569
  %v571 = vsel %vm98, %v449, 0.0
  %572 = vadd.xlane.f32.xlu0 %v571
  %v573 = vpop.xlane.xlu0 %572
  %v574 = vsel %vm98, %v450, 0.0
  %575 = vadd.xlane.f32.xlu0 %v574
  %v576 = vpop.xlane.xlu0 %575
  %v577 = vsel %vm98, %v451, 0.0
  %578 = vadd.xlane.f32.xlu0 %v577
  %v579 = vpop.xlane.xlu0 %578
  %v580 = vsel %vm98, %v452, 0.0
  %581 = vadd.xlane.f32.xlu0 %v580
  %v582 = vpop.xlane.xlu0 %581
  %v583 = vsel %vm98, %v453, 0.0
  %584 = vadd.xlane.f32.xlu0 %v583
  %v585 = vpop.xlane.xlu0 %584
  %v586 = vsel %vm98, %v454, 0.0
  %587 = vadd.xlane.f32.xlu0 %v586
  %v588 = vpop.xlane.xlu0 %587
  %v589 = vsel %vm98, %v455, 0.0
  %590 = vadd.xlane.f32.xlu0 %v589
  %v591 = vpop.xlane.xlu0 %590
  %v592 = vsel %vm98, %v456, 0.0
  %593 = vadd.xlane.f32.xlu0 %v592
  %v594 = vpop.xlane.xlu0 %593
  %v595 = vsel %vm98, %v457, 0.0
  %596 = vadd.xlane.f32.xlu0 %v595
  %v597 = vpop.xlane.xlu0 %596
  %v598 = vsel %vm98, %v458, 0.0
  %599 = vadd.xlane.f32.xlu0 %v598
  %v600 = vpop.xlane.xlu0 %599
  %v601 = vsel %vm98, %v459, 0.0
  %602 = vadd.xlane.f32.xlu0 %v601
  %v603 = vpop.xlane.xlu0 %602
  %v604 = vsel %vm98, %v460, 0.0
  %605 = vadd.xlane.f32.xlu0 %v604
  %v606 = vpop.xlane.xlu0 %605
  %v607 = vsel %vm98, %v461, 0.0
  %608 = vadd.xlane.f32.xlu0 %v607
  %v609 = vpop.xlane.xlu0 %608
  %v610 = vsel %vm98, %v462, 0.0
  %611 = vadd.xlane.f32.xlu0 %v610
  %v612 = vpop.xlane.xlu0 %611
  %v613 = vsel %vm98, %v463, 0.0
  %614 = vadd.xlane.f32.xlu0 %v613
  %v615 = vpop.xlane.xlu0 %614
  %v616 = vsel %vm98, %v464, 0.0
  %617 = vadd.xlane.f32.xlu0 %v616
  %v618 = vpop.xlane.xlu0 %617
  %v619 = vsel %vm98, %v465, 0.0
  %620 = vadd.xlane.f32.xlu0 %v619
  %v621 = vpop.xlane.xlu0 %620
  %v622 = vsel %vm98, %v466, 0.0
  %623 = vadd.xlane.f32.xlu0 %v622
  %v624 = vpop.xlane.xlu0 %623
  %v625 = vsel %vm98, %v467, 0.0
  %626 = vadd.xlane.f32.xlu0 %v625
  %v627 = vpop.xlane.xlu0 %626
  %v628 = vsel %vm98, %v468, 0.0
  %629 = vadd.xlane.f32.xlu0 %v628
  %v630 = vpop.xlane.xlu0 %629
  %v631 = vsel %vm98, %v469, 0.0
  %632 = vadd.xlane.f32.xlu0 %v631
  %v633 = vpop.xlane.xlu0 %632
  %v634 = vsel %vm98, %v470, 0.0
  %635 = vadd.xlane.f32.xlu0 %v634
  %v636 = vpop.xlane.xlu0 %635
  %v637 = vsel %vm98, %v471, 0.0
  %638 = vadd.xlane.f32.xlu0 %v637
  %v639 = vpop.xlane.xlu0 %638
  %v640 = vsel %vm98, %v472, 0.0
  %641 = vadd.xlane.f32.xlu0 %v640
  %v642 = vpop.xlane.xlu0 %641
  %v643 = vsel %vm98, %v473, 0.0
  %644 = vadd.xlane.f32.xlu0 %v643
  %v645 = vpop.xlane.xlu0 %644
  %v646 = vsel %vm98, %v474, 0.0
  %647 = vadd.xlane.f32.xlu0 %v646
  %v648 = vpop.xlane.xlu0 %647
  %v649 = vsel %vm98, %v475, 0.0
  %650 = vadd.xlane.f32.xlu0 %v649
  %v651 = vpop.xlane.xlu0 %650
  %v652 = vsel %vm98, %v476, 0.0
  %653 = vadd.xlane.f32.xlu0 %v652
  %v654 = vpop.xlane.xlu0 %653
  %v655 = vsel %vm98, %v477, 0.0
  %656 = vadd.xlane.f32.xlu0 %v655
  %v657 = vpop.xlane.xlu0 %656
  %v658 = vsel %vm98, %v478, 0.0
  %659 = vadd.xlane.f32.xlu0 %v658
  %v660 = vpop.xlane.xlu0 %659
  %v661 = vsel %vm98, %v479, 0.0
  %662 = vadd.xlane.f32.xlu0 %v661
  %v663 = vpop.xlane.xlu0 %662
  %v664 = vsel %vm98, %v480, 0.0
  %665 = vadd.xlane.f32.xlu0 %v664
  %v666 = vpop.xlane.xlu0 %665
  %v667 = vsel %vm98, %v481, 0.0
  %668 = vadd.xlane.f32.xlu0 %v667
  %v669 = vpop.xlane.xlu0 %668
  %v670 = vsel %vm98, %v482, 0.0
  %671 = vadd.xlane.f32.xlu0 %v670
  %v672 = vpop.xlane.xlu0 %671
  %v673 = vsel %vm98, %v483, 0.0
  %674 = vadd.xlane.f32.xlu0 %v673
  %v675 = vpop.xlane.xlu0 %674
  %v676 = vmul.f32 %v486, %v291
  %v677 = vmul.f32 %v489, %v291
  %v678 = vmul.f32 %v492, %v291
  %v679 = vmul.f32 %v495, %v291
  %v680 = vmul.f32 %v498, %v291
  %v681 = vmul.f32 %v501, %v291
  %v682 = vmul.f32 %v504, %v291
  %v683 = vmul.f32 %v507, %v291
  %v684 = vmul.f32 %v510, %v291
  %v685 = vmul.f32 %v513, %v291
  %v686 = vmul.f32 %v516, %v291
  %v687 = vmul.f32 %v519, %v291
  %v688 = vmul.f32 %v522, %v291
  %v689 = vmul.f32 %v525, %v291
  %v690 = vmul.f32 %v528, %v291
  %v691 = vmul.f32 %v531, %v291
  %v692 = vmul.f32 %v534, %v291
  %v693 = vmul.f32 %v537, %v291
  %v694 = vmul.f32 %v540, %v291
  %v695 = vmul.f32 %v543, %v291
  %v696 = vmul.f32 %v546, %v291
  %v697 = vmul.f32 %v549, %v291
  %v698 = vmul.f32 %v552, %v291
  %v699 = vmul.f32 %v555, %v291
  %v700 = vmul.f32 %v558, %v291
  %v701 = vmul.f32 %v561, %v291
  %v702 = vmul.f32 %v564, %v291
  %v703 = vmul.f32 %v567, %v291
  %v704 = vmul.f32 %v570, %v291
  %v705 = vmul.f32 %v573, %v291
  %v706 = vmul.f32 %v576, %v291
  %v707 = vmul.f32 %v579, %v291
  %v708 = vmul.f32 %v582, %v291
  %v709 = vmul.f32 %v585, %v291
  %v710 = vmul.f32 %v588, %v291
  %v711 = vmul.f32 %v591, %v291
  %v712 = vmul.f32 %v594, %v291
  %v713 = vmul.f32 %v597, %v291
  %v714 = vmul.f32 %v600, %v291
  %v715 = vmul.f32 %v603, %v291
  %v716 = vmul.f32 %v606, %v291
  %v717 = vmul.f32 %v609, %v291
  %v718 = vmul.f32 %v612, %v291
  %v719 = vmul.f32 %v615, %v291
  %v720 = vmul.f32 %v618, %v291
  %v721 = vmul.f32 %v621, %v291
  %v722 = vmul.f32 %v624, %v291
  %v723 = vmul.f32 %v627, %v291
  %v724 = vmul.f32 %v630, %v291
  %v725 = vmul.f32 %v633, %v291
  %v726 = vmul.f32 %v636, %v291
  %v727 = vmul.f32 %v639, %v291
  %v728 = vmul.f32 %v642, %v291
  %v729 = vmul.f32 %v645, %v291
  %v730 = vmul.f32 %v648, %v291
  %v731 = vmul.f32 %v651, %v291
  %v732 = vmul.f32 %v654, %v291
  %v733 = vmul.f32 %v657, %v291
  %v734 = vmul.f32 %v660, %v291
  %v735 = vmul.f32 %v663, %v291
  %v736 = vmul.f32 %v666, %v291
  %v737 = vmul.f32 %v669, %v291
  %v738 = vmul.f32 %v672, %v291
  %v739 = vmul.f32 %v675, %v291
  %v740 = vadd.f32 %v676, 1e-05
  %v741 = vadd.f32 %v677, 1e-05
  %v742 = vadd.f32 %v678, 1e-05
  %v743 = vadd.f32 %v679, 1e-05
  %v744 = vadd.f32 %v680, 1e-05
  %v745 = vadd.f32 %v681, 1e-05
  %v746 = vadd.f32 %v682, 1e-05
  %v747 = vadd.f32 %v683, 1e-05
  %v748 = vadd.f32 %v684, 1e-05
  %v749 = vadd.f32 %v685, 1e-05
  %v750 = vadd.f32 %v686, 1e-05
  %v751 = vadd.f32 %v687, 1e-05
  %v752 = vadd.f32 %v688, 1e-05
  %v753 = vadd.f32 %v689, 1e-05
  %v754 = vadd.f32 %v690, 1e-05
  %v755 = vadd.f32 %v691, 1e-05
  %v756 = vadd.f32 %v692, 1e-05
  %v757 = vadd.f32 %v693, 1e-05
  %v758 = vadd.f32 %v694, 1e-05
  %v759 = vadd.f32 %v695, 1e-05
  %v760 = vadd.f32 %v696, 1e-05
  %v761 = vadd.f32 %v697, 1e-05
  %v762 = vadd.f32 %v698, 1e-05
  %v763 = vadd.f32 %v699, 1e-05
  %v764 = vadd.f32 %v700, 1e-05
  %v765 = vadd.f32 %v701, 1e-05
  %v766 = vadd.f32 %v702, 1e-05
  %v767 = vadd.f32 %v703, 1e-05
  %v768 = vadd.f32 %v704, 1e-05
  %v769 = vadd.f32 %v705, 1e-05
  %v770 = vadd.f32 %v706, 1e-05
  %v771 = vadd.f32 %v707, 1e-05
  %v772 = vadd.f32 %v708, 1e-05
  %v773 = vadd.f32 %v709, 1e-05
  %v774 = vadd.f32 %v710, 1e-05
  %v775 = vadd.f32 %v711, 1e-05
  %v776 = vadd.f32 %v712, 1e-05
  %v777 = vadd.f32 %v713, 1e-05
  %v778 = vadd.f32 %v714, 1e-05
  %v779 = vadd.f32 %v715, 1e-05
  %v780 = vadd.f32 %v716, 1e-05
  %v781 = vadd.f32 %v717, 1e-05
  %v782 = vadd.f32 %v718, 1e-05
  %v783 = vadd.f32 %v719, 1e-05
  %v784 = vadd.f32 %v720, 1e-05
  %v785 = vadd.f32 %v721, 1e-05
  %v786 = vadd.f32 %v722, 1e-05
  %v787 = vadd.f32 %v723, 1e-05
  %v788 = vadd.f32 %v724, 1e-05
  %v789 = vadd.f32 %v725, 1e-05
  %v790 = vadd.f32 %v726, 1e-05
  %v791 = vadd.f32 %v727, 1e-05
  %v792 = vadd.f32 %v728, 1e-05
  %v793 = vadd.f32 %v729, 1e-05
  %v794 = vadd.f32 %v730, 1e-05
  %v795 = vadd.f32 %v731, 1e-05
  %v796 = vadd.f32 %v732, 1e-05
  %v797 = vadd.f32 %v733, 1e-05
  %v798 = vadd.f32 %v734, 1e-05
  %v799 = vadd.f32 %v735, 1e-05
  %v800 = vadd.f32 %v736, 1e-05
  %v801 = vadd.f32 %v737, 1e-05
  %v802 = vadd.f32 %v738, 1e-05
  %v803 = vadd.f32 %v739, 1e-05
  %v804 = vrsqrt.pop %v740
  %v805 = vrsqrt.pop %v741
  %v806 = vrsqrt.pop %v742
  %v807 = vrsqrt.pop %v743
  %v808 = vrsqrt.pop %v744
  %v809 = vrsqrt.pop %v745
  %v810 = vrsqrt.pop %v746
  %v811 = vrsqrt.pop %v747
  %v812 = vrsqrt.pop %v748
  %v813 = vrsqrt.pop %v749
  %v814 = vrsqrt.pop %v750
  %v815 = vrsqrt.pop %v751
  %v816 = vrsqrt.pop %v752
  %v817 = vrsqrt.pop %v753
  %v818 = vrsqrt.pop %v754
  %v819 = vrsqrt.pop %v755
  %v820 = vrsqrt.pop %v756
  %v821 = vrsqrt.pop %v757
  %v822 = vrsqrt.pop %v758
  %v823 = vrsqrt.pop %v759
  %v824 = vrsqrt.pop %v760
  %v825 = vrsqrt.pop %v761
  %v826 = vrsqrt.pop %v762
  %v827 = vrsqrt.pop %v763
  %v828 = vrsqrt.pop %v764
  %v829 = vrsqrt.pop %v765
  %v830 = vrsqrt.pop %v766
  %v831 = vrsqrt.pop %v767
  %v832 = vrsqrt.pop %v768
  %v833 = vrsqrt.pop %v769
  %v834 = vrsqrt.pop %v770
  %v835 = vrsqrt.pop %v771
  %v836 = vrsqrt.pop %v772
  %v837 = vrsqrt.pop %v773
  %v838 = vrsqrt.pop %v774
  %v839 = vrsqrt.pop %v775
  %v840 = vrsqrt.pop %v776
  %v841 = vrsqrt.pop %v777
  %v842 = vrsqrt.pop %v778
  %v843 = vrsqrt.pop %v779
  %v844 = vrsqrt.pop %v780
  %v845 = vrsqrt.pop %v781
  %v846 = vrsqrt.pop %v782
  %v847 = vrsqrt.pop %v783
  %v848 = vrsqrt.pop %v784
  %v849 = vrsqrt.pop %v785
  %v850 = vrsqrt.pop %v786
  %v851 = vrsqrt.pop %v787
  %v852 = vrsqrt.pop %v788
  %v853 = vrsqrt.pop %v789
  %v854 = vrsqrt.pop %v790
  %v855 = vrsqrt.pop %v791
  %v856 = vrsqrt.pop %v792
  %v857 = vrsqrt.pop %v793
  %v858 = vrsqrt.pop %v794
  %v859 = vrsqrt.pop %v795
  %v860 = vrsqrt.pop %v796
  %v861 = vrsqrt.pop %v797
  %v862 = vrsqrt.pop %v798
  %v863 = vrsqrt.pop %v799
  %v864 = vrsqrt.pop %v800
  %v865 = vrsqrt.pop %v801
  %v866 = vrsqrt.pop %v802
  %v867 = vrsqrt.pop %v803
  %v868 = vmul.f32 %v356, %v804
  %v869 = vmul.f32 %v357, %v805
  %v870 = vmul.f32 %v358, %v806
  %v871 = vmul.f32 %v359, %v807
  %v872 = vmul.f32 %v360, %v808
  %v873 = vmul.f32 %v361, %v809
  %v874 = vmul.f32 %v362, %v810
  %v875 = vmul.f32 %v363, %v811
  %v876 = vmul.f32 %v364, %v812
  %v877 = vmul.f32 %v365, %v813
  %v878 = vmul.f32 %v366, %v814
  %v879 = vmul.f32 %v367, %v815
  %v880 = vmul.f32 %v368, %v816
  %v881 = vmul.f32 %v369, %v817
  %v882 = vmul.f32 %v370, %v818
  %v883 = vmul.f32 %v371, %v819
  %v884 = vmul.f32 %v372, %v820
  %v885 = vmul.f32 %v373, %v821
  %v886 = vmul.f32 %v374, %v822
  %v887 = vmul.f32 %v375, %v823
  %v888 = vmul.f32 %v376, %v824
  %v889 = vmul.f32 %v377, %v825
  %v890 = vmul.f32 %v378, %v826
  %v891 = vmul.f32 %v379, %v827
  %v892 = vmul.f32 %v380, %v828
  %v893 = vmul.f32 %v381, %v829
  %v894 = vmul.f32 %v382, %v830
  %v895 = vmul.f32 %v383, %v831
  %v896 = vmul.f32 %v384, %v832
  %v897 = vmul.f32 %v385, %v833
  %v898 = vmul.f32 %v386, %v834
  %v899 = vmul.f32 %v387, %v835
  %v900 = vmul.f32 %v388, %v836
  %v901 = vmul.f32 %v389, %v837
  %v902 = vmul.f32 %v390, %v838
  %v903 = vmul.f32 %v391, %v839
  %v904 = vmul.f32 %v392, %v840
  %v905 = vmul.f32 %v393, %v841
  %v906 = vmul.f32 %v394, %v842
  %v907 = vmul.f32 %v395, %v843
  %v908 = vmul.f32 %v396, %v844
  %v909 = vmul.f32 %v397, %v845
  %v910 = vmul.f32 %v398, %v846
  %v911 = vmul.f32 %v399, %v847
  %v912 = vmul.f32 %v400, %v848
  %v913 = vmul.f32 %v401, %v849
  %v914 = vmul.f32 %v402, %v850
  %v915 = vmul.f32 %v403, %v851
  %v916 = vmul.f32 %v404, %v852
  %v917 = vmul.f32 %v405, %v853
  %v918 = vmul.f32 %v406, %v854
  %v919 = vmul.f32 %v407, %v855
  %v920 = vmul.f32 %v408, %v856
  %v921 = vmul.f32 %v409, %v857
  %v922 = vmul.f32 %v410, %v858
  %v923 = vmul.f32 %v411, %v859
  %v924 = vmul.f32 %v412, %v860
  %v925 = vmul.f32 %v413, %v861
  %v926 = vmul.f32 %v414, %v862
  %v927 = vmul.f32 %v415, %v863
  %v928 = vmul.f32 %v416, %v864
  %v929 = vmul.f32 %v417, %v865
  %v930 = vmul.f32 %v418, %v866
  %v931 = vmul.f32 %v419, %v867
  %v932 = vlaneseq
  %v933 = vshrl.u32 %v932, 7
  %v934 = vsub.s32 0, %v933
  %v935 = vrot.slane %v90, %v934
  %v936 = vmul.f32 %v868, %v935
  %v937 = vmul.f32 %v869, %v935
  %v938 = vmul.f32 %v870, %v935
  %v939 = vmul.f32 %v871, %v935
  %v940 = vmul.f32 %v872, %v935
  %v941 = vmul.f32 %v873, %v935
  %v942 = vmul.f32 %v874, %v935
  %v943 = vmul.f32 %v875, %v935
  %v944 = vmul.f32 %v876, %v935
  %v945 = vmul.f32 %v877, %v935
  %v946 = vmul.f32 %v878, %v935
  %v947 = vmul.f32 %v879, %v935
  %v948 = vmul.f32 %v880, %v935
  %v949 = vmul.f32 %v881, %v935
  %v950 = vmul.f32 %v882, %v935
  %v951 = vmul.f32 %v883, %v935
  %v952 = vmul.f32 %v884, %v935
  %v953 = vmul.f32 %v885, %v935
  %v954 = vmul.f32 %v886, %v935
  %v955 = vmul.f32 %v887, %v935
  %v956 = vmul.f32 %v888, %v935
  %v957 = vmul.f32 %v889, %v935
  %v958 = vmul.f32 %v890, %v935
  %v959 = vmul.f32 %v891, %v935
  %v960 = vmul.f32 %v892, %v935
  %v961 = vmul.f32 %v893, %v935
  %v962 = vmul.f32 %v894, %v935
  %v963 = vmul.f32 %v895, %v935
  %v964 = vmul.f32 %v896, %v935
  %v965 = vmul.f32 %v897, %v935
  %v966 = vmul.f32 %v898, %v935
  %v967 = vmul.f32 %v899, %v935
  %v968 = vmul.f32 %v900, %v935
  %v969 = vmul.f32 %v901, %v935
  %v970 = vmul.f32 %v902, %v935
  %v971 = vmul.f32 %v903, %v935
  %v972 = vmul.f32 %v904, %v935
  %v973 = vmul.f32 %v905, %v935
  %v974 = vmul.f32 %v906, %v935
  %v975 = vmul.f32 %v907, %v935
  %v976 = vmul.f32 %v908, %v935
  %v977 = vmul.f32 %v909, %v935
  %v978 = vmul.f32 %v910, %v935
  %v979 = vmul.f32 %v911, %v935
  %v980 = vmul.f32 %v912, %v935
  %v981 = vmul.f32 %v913, %v935
  %v982 = vmul.f32 %v914, %v935
  %v983 = vmul.f32 %v915, %v935
  %v984 = vmul.f32 %v916, %v935
  %v985 = vmul.f32 %v917, %v935
  %v986 = vmul.f32 %v918, %v935
  %v987 = vmul.f32 %v919, %v935
  %v988 = vmul.f32 %v920, %v935
  %v989 = vmul.f32 %v921, %v935
  %v990 = vmul.f32 %v922, %v935
  %v991 = vmul.f32 %v923, %v935
  %v992 = vmul.f32 %v924, %v935
  %v993 = vmul.f32 %v925, %v935
  %v994 = vmul.f32 %v926, %v935
  %v995 = vmul.f32 %v927, %v935
  %v996 = vmul.f32 %v928, %v935
  %v997 = vmul.f32 %v929, %v935
  %v998 = vmul.f32 %v930, %v935
  %v999 = vmul.f32 %v931, %v935
  %v1000 = vlaneseq
  %v1001 = vshrl.u32 %v1000, 7
  %v1002 = vsub.s32 0, %v1001
  %v1003 = vrot.slane %v91, %v1002
  %v1004 = vadd.f32 %v936, %v1003
  %v1005 = vadd.f32 %v937, %v1003
  %v1006 = vadd.f32 %v938, %v1003
  %v1007 = vadd.f32 %v939, %v1003
  %v1008 = vadd.f32 %v940, %v1003
  %v1009 = vadd.f32 %v941, %v1003
  %v1010 = vadd.f32 %v942, %v1003
  %v1011 = vadd.f32 %v943, %v1003
  %v1012 = vadd.f32 %v944, %v1003
  %v1013 = vadd.f32 %v945, %v1003
  %v1014 = vadd.f32 %v946, %v1003
  %v1015 = vadd.f32 %v947, %v1003
  %v1016 = vadd.f32 %v948, %v1003
  %v1017 = vadd.f32 %v949, %v1003
  %v1018 = vadd.f32 %v950, %v1003
  %v1019 = vadd.f32 %v951, %v1003
  %v1020 = vadd.f32 %v952, %v1003
  %v1021 = vadd.f32 %v953, %v1003
  %v1022 = vadd.f32 %v954, %v1003
  %v1023 = vadd.f32 %v955, %v1003
  %v1024 = vadd.f32 %v956, %v1003
  %v1025 = vadd.f32 %v957, %v1003
  %v1026 = vadd.f32 %v958, %v1003
  %v1027 = vadd.f32 %v959, %v1003
  %v1028 = vadd.f32 %v960, %v1003
  %v1029 = vadd.f32 %v961, %v1003
  %v1030 = vadd.f32 %v962, %v1003
  %v1031 = vadd.f32 %v963, %v1003
  %v1032 = vadd.f32 %v964, %v1003
  %v1033 = vadd.f32 %v965, %v1003
  %v1034 = vadd.f32 %v966, %v1003
  %v1035 = vadd.f32 %v967, %v1003
  %v1036 = vadd.f32 %v968, %v1003
  %v1037 = vadd.f32 %v969, %v1003
  %v1038 = vadd.f32 %v970, %v1003
  %v1039 = vadd.f32 %v971, %v1003
  %v1040 = vadd.f32 %v972, %v1003
  %v1041 = vadd.f32 %v973, %v1003
  %v1042 = vadd.f32 %v974, %v1003
  %v1043 = vadd.f32 %v975, %v1003
  %v1044 = vadd.f32 %v976, %v1003
  %v1045 = vadd.f32 %v977, %v1003
  %v1046 = vadd.f32 %v978, %v1003
  %v1047 = vadd.f32 %v979, %v1003
  %v1048 = vadd.f32 %v980, %v1003
  %v1049 = vadd.f32 %v981, %v1003
  %v1050 = vadd.f32 %v982, %v1003
  %v1051 = vadd.f32 %v983, %v1003
  %v1052 = vadd.f32 %v984, %v1003
  %v1053 = vadd.f32 %v985, %v1003
  %v1054 = vadd.f32 %v986, %v1003
  %v1055 = vadd.f32 %v987, %v1003
  %v1056 = vadd.f32 %v988, %v1003
  %v1057 = vadd.f32 %v989, %v1003
  %v1058 = vadd.f32 %v990, %v1003
  %v1059 = vadd.f32 %v991, %v1003
  %v1060 = vadd.f32 %v992, %v1003
  %v1061 = vadd.f32 %v993, %v1003
  %v1062 = vadd.f32 %v994, %v1003
  %v1063 = vadd.f32 %v995, %v1003
  %v1064 = vadd.f32 %v996, %v1003
  %v1065 = vadd.f32 %v997, %v1003
  %v1066 = vadd.f32 %v998, %v1003
  %v1067 = vadd.f32 %v999, %v1003
  %v1068 = vld [vmem:[%s2] sm:$0xff]
  %v1069 = vld [vmem:[%s2 + $0x8] sm:$0xff]
  %v1070 = vld [vmem:[%s2 + $0x10] sm:$0xff]
  %v1071 = vld [vmem:[%s2 + $0x18] sm:$0xff]
  %v1072 = vlaneseq
  %v1073 = vshrl.u32 %v1072, 7
  %v1074 = vsub.s32 0, %v1073
  %v1075 = vrot.slane %v94, %v1074
  %v1077 = vsel %vm98, %v1004, 0
  %v1080 = vsel %vm98, %v1005, 0
  %v1083 = vsel %vm98, %v1006, 0
  %v1086 = vsel %vm98, %v1007, 0
  %v1089 = vsel %vm98, %v1008, 0
  %v1092 = vsel %vm98, %v1009, 0
  %v1095 = vsel %vm98, %v1010, 0
  %v1098 = vsel %vm98, %v1011, 0
  %v1101 = vsel %vm98, %v1012, 0
  %v1104 = vsel %vm98, %v1013, 0
  %v1107 = vsel %vm98, %v1014, 0
  %v1110 = vsel %vm98, %v1015, 0
  %v1113 = vsel %vm98, %v1016, 0
  %v1116 = vsel %vm98, %v1017, 0
  %v1119 = vsel %vm98, %v1018, 0
  %v1122 = vsel %vm98, %v1019, 0
  %v1125 = vsel %vm98, %v1020, 0
  %v1128 = vsel %vm98, %v1021, 0
  %v1131 = vsel %vm98, %v1022, 0
  %v1134 = vsel %vm98, %v1023, 0
  %v1137 = vsel %vm98, %v1024, 0
  %v1140 = vsel %vm98, %v1025, 0
  %v1143 = vsel %vm98, %v1026, 0
  %v1146 = vsel %vm98, %v1027, 0
  %v1149 = vsel %vm98, %v1028, 0
  %v1152 = vsel %vm98, %v1029, 0
  %v1155 = vsel %vm98, %v1030, 0
  %v1158 = vsel %vm98, %v1031, 0
  %v1161 = vsel %vm98, %v1032, 0
  %v1164 = vsel %vm98, %v1033, 0
  %v1167 = vsel %vm98, %v1034, 0
  %v1170 = vsel %vm98, %v1035, 0
  %v1173 = vsel %vm98, %v1036, 0
  %v1176 = vsel %vm98, %v1037, 0
  %v1179 = vsel %vm98, %v1038, 0
  %v1182 = vsel %vm98, %v1039, 0
  %v1185 = vsel %vm98, %v1040, 0
  %v1188 = vsel %vm98, %v1041, 0
  %v1191 = vsel %vm98, %v1042, 0
  %v1194 = vsel %vm98, %v1043, 0
  %v1197 = vsel %vm98, %v1044, 0
  %v1200 = vsel %vm98, %v1045, 0
  %v1203 = vsel %vm98, %v1046, 0
  %v1206 = vsel %vm98, %v1047, 0
  %v1209 = vsel %vm98, %v1048, 0
  %v1212 = vsel %vm98, %v1049, 0
  %v1215 = vsel %vm98, %v1050, 0
  %v1218 = vsel %vm98, %v1051, 0
  %v1221 = vsel %vm98, %v1052, 0
  %v1224 = vsel %vm98, %v1053, 0
  %v1227 = vsel %vm98, %v1054, 0
  %v1230 = vsel %vm98, %v1055, 0
  %v1233 = vsel %vm98, %v1056, 0
  %v1236 = vsel %vm98, %v1057, 0
  %v1239 = vsel %vm98, %v1058, 0
  %v1242 = vsel %vm98, %v1059, 0
  %v1245 = vsel %vm98, %v1060, 0
  %v1248 = vsel %vm98, %v1061, 0
  %v1251 = vsel %vm98, %v1062, 0
  %v1254 = vsel %vm98, %v1063, 0
  %v1257 = vsel %vm98, %v1064, 0
  %v1260 = vsel %vm98, %v1065, 0
  %v1263 = vsel %vm98, %v1066, 0
  %v1266 = vsel %vm98, %v1067, 0
  %1268 = vmatprep.subr.mxu0 0.0
  %1269 = vmatpush1.msra.mxu0 %v1068
  %1270 = vmatprep.subr.mxu0 0.0
  %1271 = vmatpush1.msra.mxu0 %v1069
  %1272 = vmatprep.subr.mxu0 0.0
  %1273 = vmatpush1.msra.mxu0 %v1070
  %1274 = vmatprep.subr.mxu0 0.0
  %1275 = vmatpush1.msra.mxu0 %v1071
  %1276 = vmatprep.subr.mxu0 0.0
  %1277 = vmatpush1.msra.mxu0 0.0
  %1278 = vmatprep.subr.mxu0 0.0
  %1279 = vmatpush1.msra.mxu0 0.0
  %1280 = vmatprep.subr.mxu0 0.0
  %1281 = vmatpush1.msra.mxu0 0.0
  %1282 = vmatprep.subr.mxu0 0.0
  %1283 = vmatpush1.msra.mxu0 0.0
  %1284 = vmatprep.subr.mxu0 0.0
  %1285 = vmatpush1.msra.mxu0 0.0
  %1286 = vmatprep.subr.mxu0 0.0
  %1287 = vmatpush1.msra.mxu0 0.0
  %1288 = vmatprep.subr.mxu0 0.0
  %1289 = vmatpush1.msra.mxu0 0.0
  %1290 = vmatprep.subr.mxu0 0.0
  %1291 = vmatpush1.msra.mxu0 0.0
  %1292 = vmatprep.subr.mxu0 0.0
  %1293 = vmatpush1.msra.mxu0 0.0
  %1294 = vmatprep.subr.mxu0 0.0
  %1295 = vmatpush1.msra.mxu0 0.0
  %1296 = vmatprep.subr.mxu0 0.0
  %1297 = vmatpush1.msra.mxu0 0.0
  %1298 = vmatprep.subr.mxu0 0.0
  %1299 = vmatpush1.msra.mxu0 0.0
  %1300 = vmatprep.subr.mxu0 0.0
  %1301 = vmatpush1.msra.mxu0 0.0
  %1302 = vmatprep.subr.mxu0 0.0
  %1303 = vmatpush1.msra.mxu0 0.0
  %1304 = vmatprep.subr.mxu0 0.0
  %1305 = vmatpush1.msra.mxu0 0.0
  %1306 = vmatprep.subr.mxu0 0.0
  %1307 = vmatpush1.msra.mxu0 0.0
  %1308 = vmatprep.subr.mxu0 0.0
  %1309 = vmatpush1.msra.mxu0 0.0
  %1310 = vmatprep.subr.mxu0 0.0
  %1311 = vmatpush1.msra.mxu0 0.0
  %1312 = vmatprep.subr.mxu0 0.0
  %1313 = vmatpush1.msra.mxu0 0.0
  %1314 = vmatprep.subr.mxu0 0.0
  %1315 = vmatpush1.msra.mxu0 0.0
  %1316 = vmatprep.subr.mxu0 0.0
  %1317 = vmatpush1.msra.mxu0 0.0
  %1318 = vmatprep.subr.mxu0 0.0
  %1319 = vmatpush1.msra.mxu0 0.0
  %1320 = vmatprep.subr.mxu0 0.0
  %1321 = vmatpush1.msra.mxu0 0.0
  %1322 = vmatprep.subr.mxu0 0.0
  %1323 = vmatpush1.msra.mxu0 0.0
  %1324 = vmatprep.subr.mxu0 0.0
  %1325 = vmatpush1.msra.mxu0 0.0
  %1326 = vmatprep.subr.mxu0 0.0
  %1327 = vmatpush1.msra.mxu0 0.0
  %1328 = vmatprep.subr.mxu0 0.0
  %1329 = vmatpush1.msra.mxu0 0.0
  %1330 = vmatprep.subr.mxu0 0.0
  %1331 = vmatpush1.msra.mxu0 0.0
  %1332 = vmatprep.mubr.f32.mxu0 0.0
  %1333 = vmatmul.mubr.f32.gmra.mrb[0].mxu0 %v1077
  %v1334 = vpop.f32.mrb[0].mxu0
  %v1335 = vadd.f32 %v1075, %v1334
  %v1336 = vpop.f32.mrb[0].mxu0
  %1337 = vmatprep.mubr.f32.mxu0 0.0
  %1338 = vmatmul.mubr.f32.gmra.mrb[0].mxu0 %v1080
  %v1339 = vpop.f32.mrb[0].mxu0
  %v1340 = vadd.f32 %v1075, %v1339
  %v1341 = vpop.f32.mrb[0].mxu0
  %1342 = vmatprep.mubr.f32.mxu0 0.0
  %1343 = vmatmul.mubr.f32.gmra.mrb[0].mxu0 %v1083
  %v1344 = vpop.f32.mrb[0].mxu0
  %v1345 = vadd.f32 %v1075, %v1344
  %v1346 = vpop.f32.mrb[0].mxu0
  %1347 = vmatprep.mubr.f32.mxu0 0.0
  %1348 = vmatmul.mubr.f32.gmra.mrb[0].mxu0 %v1086
  %v1349 = vpop.f32.mrb[0].mxu0
  %v1350 = vadd.f32 %v1075, %v1349
  %v1351 = vpop.f32.mrb[0].mxu0
  %1352 = vmatprep.mubr.f32.mxu0 0.0
  %1353 = vmatmul.mubr.f32.gmra.mrb[0].mxu0 %v1089
  %v1354 = vpop.f32.mrb[0].mxu0
  %v1355 = vadd.f32 %v1075, %v1354
  %v1356 = vpop.f32.mrb[0].mxu0
  %1357 = vmatprep.mubr.f32.mxu0 0.0
  %1358 = vmatmul.mubr.f32.gmra.mrb[0].mxu0 %v1092
  %v1359 = vpop.f32.mrb[0].mxu0
  %v1360 = vadd.f32 %v1075, %v1359
  %v1361 = vpop.f32.mrb[0].mxu0
  %1362 = vmatprep.mubr.f32.mxu0 0.0
  %1363 = vmatmul.mubr.f32.gmra.mrb[0].mxu0 %v1095
  %v1364 = vpop.f32.mrb[0].mxu0
  %v1365 = vadd.f32 %v1075, %v1364
  %v1366 = vpop.f32.mrb[0].mxu0
  %1367 = vmatprep.mubr.f32.mxu0 0.0
  %1368 = vmatmul.mubr.f32.gmra.mrb[0].mxu0 %v1098
  %v1369 = vpop.f32.mrb[0].mxu0
  %v1370 = vadd.f32 %v1075, %v1369
  %v1371 = vpop.f32.mrb[0].mxu0
  %1372 = vmatprep.mubr.f32.mxu0 0.0
  %1373 = vmatmul.mubr.f32.gmra.mrb[0].mxu0 %v1101
  %v1374 = vpop.f32.mrb[0].mxu0
  %v1375 = vadd.f32 %v1075, %v1374
  %v1376 = vpop.f32.mrb[0].mxu0
  %1377 = vmatprep.mubr.f32.mxu0 0.0
  %1378 = vmatmul.mubr.f32.gmra.mrb[0].mxu0 %v1104
  %v1379 = vpop.f32.mrb[0].mxu0
  %v1380 = vadd.f32 %v1075, %v1379
  %v1381 = vpop.f32.mrb[0].mxu0
  %1382 = vmatprep.mubr.f32.mxu0 0.0
  %1383 = vmatmul.mubr.f32.gmra.mrb[0].mxu0 %v1107
  %v1384 = vpop.f32.mrb[0].mxu0
  %v1385 = vadd.f32 %v1075, %v1384
  %v1386 = vpop.f32.mrb[0].mxu0
  %1387 = vmatprep.mubr.f32.mxu0 0.0
  %1388 = vmatmul.mubr.f32.gmra.mrb[0].mxu0 %v1110
  %v1389 = vpop.f32.mrb[0].mxu0
  %v1390 = vadd.f32 %v1075, %v1389
  %v1391 = vpop.f32.mrb[0].mxu0
  %1392 = vmatprep.mubr.f32.mxu0 0.0
  %1393 = vmatmul.mubr.f32.gmra.mrb[0].mxu0 %v1113
  %v1394 = vpop.f32.mrb[0].mxu0
  %v1395 = vadd.f32 %v1075, %v1394
  %v1396 = vpop.f32.mrb[0].mxu0
  %1397 = vmatprep.mubr.f32.mxu0 0.0
  %1398 = vmatmul.mubr.f32.gmra.mrb[0].mxu0 %v1116
  %v1399 = vpop.f32.mrb[0].mxu0
  %v1400 = vadd.f32 %v1075, %v1399
  %v1401 = vpop.f32.mrb[0].mxu0
  %1402 = vmatprep.mubr.f32.mxu0 0.0
  %1403 = vmatmul.mubr.f32.gmra.mrb[0].mxu0 %v1119
  %v1404 = vpop.f32.mrb[0].mxu0
  %v1405 = vadd.f32 %v1075, %v1404
  %v1406 = vpop.f32.mrb[0].mxu0
  %1407 = vmatprep.mubr.f32.mxu0 0.0
  %1408 = vmatmul.mubr.f32.gmra.mrb[0].mxu0 %v1122
  %v1409 = vpop.f32.mrb[0].mxu0
  %v1410 = vadd.f32 %v1075, %v1409
  %v1411 = vpop.f32.mrb[0].mxu0
  %1412 = vmatprep.mubr.f32.mxu0 0.0
  %1413 = vmatmul.mubr.f32.gmra.mrb[0].mxu0 %v1125
  %v1414 = vpop.f32.mrb[0].mxu0
  %v1415 = vadd.f32 %v1075, %v1414
  %v1416 = vpop.f32.mrb[0].mxu0
  %1417 = vmatprep.mubr.f32.mxu0 0.0
  %1418 = vmatmul.mubr.f32.gmra.mrb[0].mxu0 %v1128
  %v1419 = vpop.f32.mrb[0].mxu0
  %v1420 = vadd.f32 %v1075, %v1419
  %v1421 = vpop.f32.mrb[0].mxu0
  %1422 = vmatprep.mubr.f32.mxu0 0.0
  %1423 = vmatmul.mubr.f32.gmra.mrb[0].mxu0 %v1131
  %v1424 = vpop.f32.mrb[0].mxu0
  %v1425 = vadd.f32 %v1075, %v1424
  %v1426 = vpop.f32.mrb[0].mxu0
  %1427 = vmatprep.mubr.f32.mxu0 0.0
  %1428 = vmatmul.mubr.f32.gmra.mrb[0].mxu0 %v1134
  %v1429 = vpop.f32.mrb[0].mxu0
  %v1430 = vadd.f32 %v1075, %v1429
  %v1431 = vpop.f32.mrb[0].mxu0
  %1432 = vmatprep.mubr.f32.mxu0 0.0
  %1433 = vmatmul.mubr.f32.gmra.mrb[0].mxu0 %v1137
  %v1434 = vpop.f32.mrb[0].mxu0
  %v1435 = vadd.f32 %v1075, %v1434
  %v1436 = vpop.f32.mrb[0].mxu0
  %1437 = vmatprep.mubr.f32.mxu0 0.0
  %1438 = vmatmul.mubr.f32.gmra.mrb[0].mxu0 %v1140
  %v1439 = vpop.f32.mrb[0].mxu0
  %v1440 = vadd.f32 %v1075, %v1439
  %v1441 = vpop.f32.mrb[0].mxu0
  %1442 = vmatprep.mubr.f32.mxu0 0.0
  %1443 = vmatmul.mubr.f32.gmra.mrb[0].mxu0 %v1143
  %v1444 = vpop.f32.mrb[0].mxu0
  %v1445 = vadd.f32 %v1075, %v1444
  %v1446 = vpop.f32.mrb[0].mxu0
  %1447 = vmatprep.mubr.f32.mxu0 0.0
  %1448 = vmatmul.mubr.f32.gmra.mrb[0].mxu0 %v1146
  %v1449 = vpop.f32.mrb[0].mxu0
  %v1450 = vadd.f32 %v1075, %v1449
  %v1451 = vpop.f32.mrb[0].mxu0
  %1452 = vmatprep.mubr.f32.mxu0 0.0
  %1453 = vmatmul.mubr.f32.gmra.mrb[0].mxu0 %v1149
  %v1454 = vpop.f32.mrb[0].mxu0
  %v1455 = vadd.f32 %v1075, %v1454
  %v1456 = vpop.f32.mrb[0].mxu0
  %1457 = vmatprep.mubr.f32.mxu0 0.0
  %1458 = vmatmul.mubr.f32.gmra.mrb[0].mxu0 %v1152
  %v1459 = vpop.f32.mrb[0].mxu0
  %v1460 = vadd.f32 %v1075, %v1459
  %v1461 = vpop.f32.mrb[0].mxu0
  %1462 = vmatprep.mubr.f32.mxu0 0.0
  %1463 = vmatmul.mubr.f32.gmra.mrb[0].mxu0 %v1155
  %v1464 = vpop.f32.mrb[0].mxu0
  %v1465 = vadd.f32 %v1075, %v1464
  %v1466 = vpop.f32.mrb[0].mxu0
  %1467 = vmatprep.mubr.f32.mxu0 0.0
  %1468 = vmatmul.mubr.f32.gmra.mrb[0].mxu0 %v1158
  %v1469 = vpop.f32.mrb[0].mxu0
  %v1470 = vadd.f32 %v1075, %v1469
  %v1471 = vpop.f32.mrb[0].mxu0
  %1472 = vmatprep.mubr.f32.mxu0 0.0
  %1473 = vmatmul.mubr.f32.gmra.mrb[0].mxu0 %v1161
  %v1474 = vpop.f32.mrb[0].mxu0
  %v1475 = vadd.f32 %v1075, %v1474
  %v1476 = vpop.f32.mrb[0].mxu0
  %1477 = vmatprep.mubr.f32.mxu0 0.0
  %1478 = vmatmul.mubr.f32.gmra.mrb[0].mxu0 %v1164
  %v1479 = vpop.f32.mrb[0].mxu0
  %v1480 = vadd.f32 %v1075, %v1479
  %v1481 = vpop.f32.mrb[0].mxu0
  %1482 = vmatprep.mubr.f32.mxu0 0.0
  %1483 = vmatmul.mubr.f32.gmra.mrb[0].mxu0 %v1167
  %v1484 = vpop.f32.mrb[0].mxu0
  %v1485 = vadd.f32 %v1075, %v1484
  %v1486 = vpop.f32.mrb[0].mxu0
  %1487 = vmatprep.mubr.f32.mxu0 0.0
  %1488 = vmatmul.mubr.f32.gmra.mrb[0].mxu0 %v1170
  %v1489 = vpop.f32.mrb[0].mxu0
  %v1490 = vadd.f32 %v1075, %v1489
  %v1491 = vpop.f32.mrb[0].mxu0
  %1492 = vmatprep.mubr.f32.mxu0 0.0
  %1493 = vmatmul.mubr.f32.gmra.mrb[0].mxu0 %v1173
  %v1494 = vpop.f32.mrb[0].mxu0
  %v1495 = vadd.f32 %v1075, %v1494
  %v1496 = vpop.f32.mrb[0].mxu0
  %1497 = vmatprep.mubr.f32.mxu0 0.0
  %1498 = vmatmul.mubr.f32.gmra.mrb[0].mxu0 %v1176
  %v1499 = vpop.f32.mrb[0].mxu0
  %v1500 = vadd.f32 %v1075, %v1499
  %v1501 = vpop.f32.mrb[0].mxu0
  %1502 = vmatprep.mubr.f32.mxu0 0.0
  %1503 = vmatmul.mubr.f32.gmra.mrb[0].mxu0 %v1179
  %v1504 = vpop.f32.mrb[0].mxu0
  %v1505 = vadd.f32 %v1075, %v1504
  %v1506 = vpop.f32.mrb[0].mxu0
  %1507 = vmatprep.mubr.f32.mxu0 0.0
  %1508 = vmatmul.mubr.f32.gmra.mrb[0].mxu0 %v1182
  %v1509 = vpop.f32.mrb[0].mxu0
  %v1510 = vadd.f32 %v1075, %v1509
  %v1511 = vpop.f32.mrb[0].mxu0
  %1512 = vmatprep.mubr.f32.mxu0 0.0
  %1513 = vmatmul.mubr.f32.gmra.mrb[0].mxu0 %v1185
  %v1514 = vpop.f32.mrb[0].mxu0
  %v1515 = vadd.f32 %v1075, %v1514
  %v1516 = vpop.f32.mrb[0].mxu0
  %1517 = vmatprep.mubr.f32.mxu0 0.0
  %1518 = vmatmul.mubr.f32.gmra.mrb[0].mxu0 %v1188
  %v1519 = vpop.f32.mrb[0].mxu0
  %v1520 = vadd.f32 %v1075, %v1519
  %v1521 = vpop.f32.mrb[0].mxu0
  %1522 = vmatprep.mubr.f32.mxu0 0.0
  %1523 = vmatmul.mubr.f32.gmra.mrb[0].mxu0 %v1191
  %v1524 = vpop.f32.mrb[0].mxu0
  %v1525 = vadd.f32 %v1075, %v1524
  %v1526 = vpop.f32.mrb[0].mxu0
  %1527 = vmatprep.mubr.f32.mxu0 0.0
  %1528 = vmatmul.mubr.f32.gmra.mrb[0].mxu0 %v1194
  %v1529 = vpop.f32.mrb[0].mxu0
  %v1530 = vadd.f32 %v1075, %v1529
  %v1531 = vpop.f32.mrb[0].mxu0
  %1532 = vmatprep.mubr.f32.mxu0 0.0
  %1533 = vmatmul.mubr.f32.gmra.mrb[0].mxu0 %v1197
  %v1534 = vpop.f32.mrb[0].mxu0
  %v1535 = vadd.f32 %v1075, %v1534
  %v1536 = vpop.f32.mrb[0].mxu0
  %1537 = vmatprep.mubr.f32.mxu0 0.0
  %1538 = vmatmul.mubr.f32.gmra.mrb[0].mxu0 %v1200
  %v1539 = vpop.f32.mrb[0].mxu0
  %v1540 = vadd.f32 %v1075, %v1539
  %v1541 = vpop.f32.mrb[0].mxu0
  %1542 = vmatprep.mubr.f32.mxu0 0.0
  %1543 = vmatmul.mubr.f32.gmra.mrb[0].mxu0 %v1203
  %v1544 = vpop.f32.mrb[0].mxu0
  %v1545 = vadd.f32 %v1075, %v1544
  %v1546 = vpop.f32.mrb[0].mxu0
  %1547 = vmatprep.mubr.f32.mxu0 0.0
  %1548 = vmatmul.mubr.f32.gmra.mrb[0].mxu0 %v1206
  %v1549 = vpop.f32.mrb[0].mxu0
  %v1550 = vadd.f32 %v1075, %v1549
  %v1551 = vpop.f32.mrb[0].mxu0
  %1552 = vmatprep.mubr.f32.mxu0 0.0
  %1553 = vmatmul.mubr.f32.gmra.mrb[0].mxu0 %v1209
  %v1554 = vpop.f32.mrb[0].mxu0
  %v1555 = vadd.f32 %v1075, %v1554
  %v1556 = vpop.f32.mrb[0].mxu0
  %1557 = vmatprep.mubr.f32.mxu0 0.0
  %1558 = vmatmul.mubr.f32.gmra.mrb[0].mxu0 %v1212
  %v1559 = vpop.f32.mrb[0].mxu0
  %v1560 = vadd.f32 %v1075, %v1559
  %v1561 = vpop.f32.mrb[0].mxu0
  %1562 = vmatprep.mubr.f32.mxu0 0.0
  %1563 = vmatmul.mubr.f32.gmra.mrb[0].mxu0 %v1215
  %v1564 = vpop.f32.mrb[0].mxu0
  %v1565 = vadd.f32 %v1075, %v1564
  %v1566 = vpop.f32.mrb[0].mxu0
  %1567 = vmatprep.mubr.f32.mxu0 0.0
  %1568 = vmatmul.mubr.f32.gmra.mrb[0].mxu0 %v1218
  %v1569 = vpop.f32.mrb[0].mxu0
  %v1570 = vadd.f32 %v1075, %v1569
  %v1571 = vpop.f32.mrb[0].mxu0
  %1572 = vmatprep.mubr.f32.mxu0 0.0
  %1573 = vmatmul.mubr.f32.gmra.mrb[0].mxu0 %v1221
  %v1574 = vpop.f32.mrb[0].mxu0
  %v1575 = vadd.f32 %v1075, %v1574
  %v1576 = vpop.f32.mrb[0].mxu0
  %1577 = vmatprep.mubr.f32.mxu0 0.0
  %1578 = vmatmul.mubr.f32.gmra.mrb[0].mxu0 %v1224
  %v1579 = vpop.f32.mrb[0].mxu0
  %v1580 = vadd.f32 %v1075, %v1579
  %v1581 = vpop.f32.mrb[0].mxu0
  %1582 = vmatprep.mubr.f32.mxu0 0.0
  %1583 = vmatmul.mubr.f32.gmra.mrb[0].mxu0 %v1227
  %v1584 = vpop.f32.mrb[0].mxu0
  %v1585 = vadd.f32 %v1075, %v1584
  %v1586 = vpop.f32.mrb[0].mxu0
  %1587 = vmatprep.mubr.f32.mxu0 0.0
  %1588 = vmatmul.mubr.f32.gmra.mrb[0].mxu0 %v1230
  %v1589 = vpop.f32.mrb[0].mxu0
  %v1590 = vadd.f32 %v1075, %v1589
  %v1591 = vpop.f32.mrb[0].mxu0
  %1592 = vmatprep.mubr.f32.mxu0 0.0
  %1593 = vmatmul.mubr.f32.gmra.mrb[0].mxu0 %v1233
  %v1594 = vpop.f32.mrb[0].mxu0
  %v1595 = vadd.f32 %v1075, %v1594
  %v1596 = vpop.f32.mrb[0].mxu0
  %1597 = vmatprep.mubr.f32.mxu0 0.0
  %1598 = vmatmul.mubr.f32.gmra.mrb[0].mxu0 %v1236
  %v1599 = vpop.f32.mrb[0].mxu0
  %v1600 = vadd.f32 %v1075, %v1599
  %v1601 = vpop.f32.mrb[0].mxu0
  %1602 = vmatprep.mubr.f32.mxu0 0.0
  %1603 = vmatmul.mubr.f32.gmra.mrb[0].mxu0 %v1239
  %v1604 = vpop.f32.mrb[0].mxu0
  %v1605 = vadd.f32 %v1075, %v1604
  %v1606 = vpop.f32.mrb[0].mxu0
  %1607 = vmatprep.mubr.f32.mxu0 0.0
  %1608 = vmatmul.mubr.f32.gmra.mrb[0].mxu0 %v1242
  %v1609 = vpop.f32.mrb[0].mxu0
  %v1610 = vadd.f32 %v1075, %v1609
  %v1611 = vpop.f32.mrb[0].mxu0
  %1612 = vmatprep.mubr.f32.mxu0 0.0
  %1613 = vmatmul.mubr.f32.gmra.mrb[0].mxu0 %v1245
  %v1614 = vpop.f32.mrb[0].mxu0
  %v1615 = vadd.f32 %v1075, %v1614
  %v1616 = vpop.f32.mrb[0].mxu0
  %1617 = vmatprep.mubr.f32.mxu0 0.0
  %1618 = vmatmul.mubr.f32.gmra.mrb[0].mxu0 %v1248
  %v1619 = vpop.f32.mrb[0].mxu0
  %v1620 = vadd.f32 %v1075, %v1619
  %v1621 = vpop.f32.mrb[0].mxu0
  %1622 = vmatprep.mubr.f32.mxu0 0.0
  %1623 = vmatmul.mubr.f32.gmra.mrb[0].mxu0 %v1251
  %v1624 = vpop.f32.mrb[0].mxu0
  %v1625 = vadd.f32 %v1075, %v1624
  %v1626 = vpop.f32.mrb[0].mxu0
  %1627 = vmatprep.mubr.f32.mxu0 0.0
  %1628 = vmatmul.mubr.f32.gmra.mrb[0].mxu0 %v1254
  %v1629 = vpop.f32.mrb[0].mxu0
  %v1630 = vadd.f32 %v1075, %v1629
  %v1631 = vpop.f32.mrb[0].mxu0
  %1632 = vmatprep.mubr.f32.mxu0 0.0
  %1633 = vmatmul.mubr.f32.gmra.mrb[0].mxu0 %v1257
  %v1634 = vpop.f32.mrb[0].mxu0
  %v1635 = vadd.f32 %v1075, %v1634
  %v1636 = vpop.f32.mrb[0].mxu0
  %1637 = vmatprep.mubr.f32.mxu0 0.0
  %1638 = vmatmul.mubr.f32.gmra.mrb[0].mxu0 %v1260
  %v1639 = vpop.f32.mrb[0].mxu0
  %v1640 = vadd.f32 %v1075, %v1639
  %v1641 = vpop.f32.mrb[0].mxu0
  %1642 = vmatprep.mubr.f32.mxu0 0.0
  %1643 = vmatmul.mubr.f32.gmra.mrb[0].mxu0 %v1263
  %v1644 = vpop.f32.mrb[0].mxu0
  %v1645 = vadd.f32 %v1075, %v1644
  %v1646 = vpop.f32.mrb[0].mxu0
  %1647 = vmatprep.mubr.f32.mxu0 0.0
  %1648 = vmatmul.mubr.f32.gmra.mrb[0].mxu0 %v1266
  %v1649 = vpop.f32.mrb[0].mxu0
  %v1650 = vadd.f32 %v1075, %v1649
  %v1651 = vpop.f32.mrb[0].mxu0
  %1652 = vdwg.mxu0
  %v1653 = vld [vmem:[%s1] sm:$0xff]
  %v1654 = vld [vmem:[%s1 + $0x8] sm:$0xff]
  %v1655 = vld [vmem:[%s1 + $0x10] sm:$0xff]
  %v1656 = vld [vmem:[%s1 + $0x18] sm:$0xff]
  %v1657 = vld [vmem:[%s1 + $0x20] sm:$0xff]
  %v1658 = vld [vmem:[%s1 + $0x28] sm:$0xff]
  %v1659 = vld [vmem:[%s1 + $0x30] sm:$0xff]
  %v1660 = vld [vmem:[%s1 + $0x38] sm:$0xff]
  %v1661 = vld [vmem:[%s1 + $0x40] sm:$0xff]
  %v1662 = vld [vmem:[%s1 + $0x48] sm:$0xff]
  %v1663 = vld [vmem:[%s1 + $0x50] sm:$0xff]
  %v1664 = vld [vmem:[%s1 + $0x58] sm:$0xff]
  %v1665 = vld [vmem:[%s1 + $0x60] sm:$0xff]
  %v1666 = vld [vmem:[%s1 + $0x68] sm:$0xff]
  %v1667 = vld [vmem:[%s1 + $0x70] sm:$0xff]
  %v1668 = vld [vmem:[%s1 + $0x78] sm:$0xff]
  %v1669 = vld [vmem:[%s1 + $0x80] sm:$0xff]
  %v1670 = vld [vmem:[%s1 + $0x88] sm:$0xff]
  %v1671 = vld [vmem:[%s1 + $0x90] sm:$0xff]
  %v1672 = vld [vmem:[%s1 + $0x98] sm:$0xff]
  %v1673 = vld [vmem:[%s1 + $0xa0] sm:$0xff]
  %v1674 = vld [vmem:[%s1 + $0xa8] sm:$0xff]
  %v1675 = vld [vmem:[%s1 + $0xb0] sm:$0xff]
  %v1676 = vld [vmem:[%s1 + $0xb8] sm:$0xff]
  %v1677 = vld [vmem:[%s1 + $0xc0] sm:$0xff]
  %v1678 = vld [vmem:[%s1 + $0xc8] sm:$0xff]
  %v1679 = vld [vmem:[%s1 + $0xd0] sm:$0xff]
  %v1680 = vld [vmem:[%s1 + $0xd8] sm:$0xff]
  %v1681 = vld [vmem:[%s1 + $0xe0] sm:$0xff]
  %v1682 = vld [vmem:[%s1 + $0xe8] sm:$0xff]
  %v1683 = vld [vmem:[%s1 + $0xf0] sm:$0xff]
  %v1684 = vld [vmem:[%s1 + $0xf8] sm:$0xff]
  %v1685 = vld [vmem:[%s1 + $0x100] sm:$0xff]
  %v1686 = vld [vmem:[%s1 + $0x108] sm:$0xff]
  %v1687 = vld [vmem:[%s1 + $0x110] sm:$0xff]
  %v1688 = vld [vmem:[%s1 + $0x118] sm:$0xff]
  %v1689 = vld [vmem:[%s1 + $0x120] sm:$0xff]
  %v1690 = vld [vmem:[%s1 + $0x128] sm:$0xff]
  %v1691 = vld [vmem:[%s1 + $0x130] sm:$0xff]
  %v1692 = vld [vmem:[%s1 + $0x138] sm:$0xff]
  %v1693 = vld [vmem:[%s1 + $0x140] sm:$0xff]
  %v1694 = vld [vmem:[%s1 + $0x148] sm:$0xff]
  %v1695 = vld [vmem:[%s1 + $0x150] sm:$0xff]
  %v1696 = vld [vmem:[%s1 + $0x158] sm:$0xff]
  %v1697 = vld [vmem:[%s1 + $0x160] sm:$0xff]
  %v1698 = vld [vmem:[%s1 + $0x168] sm:$0xff]
  %v1699 = vld [vmem:[%s1 + $0x170] sm:$0xff]
  %v1700 = vld [vmem:[%s1 + $0x178] sm:$0xff]
  %v1701 = vld [vmem:[%s1 + $0x180] sm:$0xff]
  %v1702 = vld [vmem:[%s1 + $0x188] sm:$0xff]
  %v1703 = vld [vmem:[%s1 + $0x190] sm:$0xff]
  %v1704 = vld [vmem:[%s1 + $0x198] sm:$0xff]
  %v1705 = vld [vmem:[%s1 + $0x1a0] sm:$0xff]
  %v1706 = vld [vmem:[%s1 + $0x1a8] sm:$0xff]
  %v1707 = vld [vmem:[%s1 + $0x1b0] sm:$0xff]
  %v1708 = vld [vmem:[%s1 + $0x1b8] sm:$0xff]
  %v1709 = vld [vmem:[%s1 + $0x1c0] sm:$0xff]
  %v1710 = vld [vmem:[%s1 + $0x1c8] sm:$0xff]
  %v1711 = vld [vmem:[%s1 + $0x1d0] sm:$0xff]
  %v1712 = vld [vmem:[%s1 + $0x1d8] sm:$0xff]
  %v1713 = vld [vmem:[%s1 + $0x1e0] sm:$0xff]
  %v1714 = vld [vmem:[%s1 + $0x1e8] sm:$0xff]
  %v1715 = vld [vmem:[%s1 + $0x1f0] sm:$0xff]
  %v1716 = vld [vmem:[%s1 + $0x1f8] sm:$0xff]
  %1749 = vrot.lane.b32.xlu0 %v1335, 96
  %v1750 = vpop.permute.xlu0 %1749
  %1751 = vrot.lane.b32.xlu0 %v1340, 96
  %v1752 = vpop.permute.xlu0 %1751
  %1753 = vrot.lane.b32.xlu0 %v1345, 96
  %v1754 = vpop.permute.xlu0 %1753
  %1755 = vrot.lane.b32.xlu0 %v1350, 96
  %v1756 = vpop.permute.xlu0 %1755
  %1757 = vrot.lane.b32.xlu0 %v1355, 96
  %v1758 = vpop.permute.xlu0 %1757
  %1759 = vrot.lane.b32.xlu0 %v1360, 96
  %v1760 = vpop.permute.xlu0 %1759
  %1761 = vrot.lane.b32.xlu0 %v1365, 96
  %v1762 = vpop.permute.xlu0 %1761
  %1763 = vrot.lane.b32.xlu0 %v1370, 96
  %v1764 = vpop.permute.xlu0 %1763
  %1765 = vrot.lane.b32.xlu0 %v1375, 96
  %v1766 = vpop.permute.xlu0 %1765
  %1767 = vrot.lane.b32.xlu0 %v1380, 96
  %v1768 = vpop.permute.xlu0 %1767
  %1769 = vrot.lane.b32.xlu0 %v1385, 96
  %v1770 = vpop.permute.xlu0 %1769
  %1771 = vrot.lane.b32.xlu0 %v1390, 96
  %v1772 = vpop.permute.xlu0 %1771
  %1773 = vrot.lane.b32.xlu0 %v1395, 96
  %v1774 = vpop.permute.xlu0 %1773
  %1775 = vrot.lane.b32.xlu0 %v1400, 96
  %v1776 = vpop.permute.xlu0 %1775
  %1777 = vrot.lane.b32.xlu0 %v1405, 96
  %v1778 = vpop.permute.xlu0 %1777
  %1779 = vrot.lane.b32.xlu0 %v1410, 96
  %v1780 = vpop.permute.xlu0 %1779
  %1781 = vrot.lane.b32.xlu0 %v1415, 96
  %v1782 = vpop.permute.xlu0 %1781
  %1783 = vrot.lane.b32.xlu0 %v1420, 96
  %v1784 = vpop.permute.xlu0 %1783
  %1785 = vrot.lane.b32.xlu0 %v1425, 96
  %v1786 = vpop.permute.xlu0 %1785
  %1787 = vrot.lane.b32.xlu0 %v1430, 96
  %v1788 = vpop.permute.xlu0 %1787
  %1789 = vrot.lane.b32.xlu0 %v1435, 96
  %v1790 = vpop.permute.xlu0 %1789
  %1791 = vrot.lane.b32.xlu0 %v1440, 96
  %v1792 = vpop.permute.xlu0 %1791
  %1793 = vrot.lane.b32.xlu0 %v1445, 96
  %v1794 = vpop.permute.xlu0 %1793
  %1795 = vrot.lane.b32.xlu0 %v1450, 96
  %v1796 = vpop.permute.xlu0 %1795
  %1797 = vrot.lane.b32.xlu0 %v1455, 96
  %v1798 = vpop.permute.xlu0 %1797
  %1799 = vrot.lane.b32.xlu0 %v1460, 96
  %v1800 = vpop.permute.xlu0 %1799
  %1801 = vrot.lane.b32.xlu0 %v1465, 96
  %v1802 = vpop.permute.xlu0 %1801
  %1803 = vrot.lane.b32.xlu0 %v1470, 96
  %v1804 = vpop.permute.xlu0 %1803
  %1805 = vrot.lane.b32.xlu0 %v1475, 96
  %v1806 = vpop.permute.xlu0 %1805
  %1807 = vrot.lane.b32.xlu0 %v1480, 96
  %v1808 = vpop.permute.xlu0 %1807
  %1809 = vrot.lane.b32.xlu0 %v1485, 96
  %v1810 = vpop.permute.xlu0 %1809
  %1811 = vrot.lane.b32.xlu0 %v1490, 96
  %v1812 = vpop.permute.xlu0 %1811
  %vm1813 = vcmask 130048
  %v1814 = vsel %vm1813, %v1335, 0
  %v1816 = vsel %vm1813, %v1340, 0
  %v1818 = vsel %vm1813, %v1345, 0
  %v1820 = vsel %vm1813, %v1350, 0
  %v1822 = vsel %vm1813, %v1355, 0
  %v1824 = vsel %vm1813, %v1360, 0
  %v1826 = vsel %vm1813, %v1365, 0
  %v1828 = vsel %vm1813, %v1370, 0
  %v1830 = vsel %vm1813, %v1375, 0
  %v1832 = vsel %vm1813, %v1380, 0
  %v1834 = vsel %vm1813, %v1385, 0
  %v1836 = vsel %vm1813, %v1390, 0
  %v1838 = vsel %vm1813, %v1395, 0
  %v1840 = vsel %vm1813, %v1400, 0
  %v1842 = vsel %vm1813, %v1405, 0
  %v1844 = vsel %vm1813, %v1410, 0
  %v1846 = vsel %vm1813, %v1415, 0
  %v1848 = vsel %vm1813, %v1420, 0
  %v1850 = vsel %vm1813, %v1425, 0
  %v1852 = vsel %vm1813, %v1430, 0
  %v1854 = vsel %vm1813, %v1435, 0
  %v1856 = vsel %vm1813, %v1440, 0
  %v1858 = vsel %vm1813, %v1445, 0
  %v1860 = vsel %vm1813, %v1450, 0
  %v1862 = vsel %vm1813, %v1455, 0
  %v1864 = vsel %vm1813, %v1460, 0
  %v1866 = vsel %vm1813, %v1465, 0
  %v1868 = vsel %vm1813, %v1470, 0
  %v1870 = vsel %vm1813, %v1475, 0
  %v1872 = vsel %vm1813, %v1480, 0
  %v1874 = vsel %vm1813, %v1485, 0
  %v1876 = vsel %vm1813, %v1490, 0
  %v1878 = vsel %vm1813, %v1750, 0
  %v1880 = vsel %vm1813, %v1752, 0
  %v1882 = vsel %vm1813, %v1754, 0
  %v1884 = vsel %vm1813, %v1756, 0
  %v1886 = vsel %vm1813, %v1758, 0
  %v1888 = vsel %vm1813, %v1760, 0
  %v1890 = vsel %vm1813, %v1762, 0
  %v1892 = vsel %vm1813, %v1764, 0
  %v1894 = vsel %vm1813, %v1766, 0
  %v1896 = vsel %vm1813, %v1768, 0
  %v1898 = vsel %vm1813, %v1770, 0
  %v1900 = vsel %vm1813, %v1772, 0
  %v1902 = vsel %vm1813, %v1774, 0
  %v1904 = vsel %vm1813, %v1776, 0
  %v1906 = vsel %vm1813, %v1778, 0
  %v1908 = vsel %vm1813, %v1780, 0
  %v1910 = vsel %vm1813, %v1782, 0
  %v1912 = vsel %vm1813, %v1784, 0
  %v1914 = vsel %vm1813, %v1786, 0
  %v1916 = vsel %vm1813, %v1788, 0
  %v1918 = vsel %vm1813, %v1790, 0
  %v1920 = vsel %vm1813, %v1792, 0
  %v1922 = vsel %vm1813, %v1794, 0
  %v1924 = vsel %vm1813, %v1796, 0
  %v1926 = vsel %vm1813, %v1798, 0
  %v1928 = vsel %vm1813, %v1800, 0
  %v1930 = vsel %vm1813, %v1802, 0
  %v1932 = vsel %vm1813, %v1804, 0
  %v1934 = vsel %vm1813, %v1806, 0
  %v1936 = vsel %vm1813, %v1808, 0
  %v1938 = vsel %vm1813, %v1810, 0
  %v1940 = vsel %vm1813, %v1812, 0
  %1942 = vmatprep.subr.mxu0 0.0
  %1943 = vmatpush1.xpose.msra.mxu0 %v1878
  %1944 = vmatprep.subr.mxu0 0.0
  %1945 = vmatpush1.xpose.msra.mxu0 %v1880
  %1946 = vmatprep.subr.mxu0 0.0
  %1947 = vmatpush1.xpose.msra.mxu0 %v1882
  %1948 = vmatprep.subr.mxu0 0.0
  %1949 = vmatpush1.xpose.msra.mxu0 %v1884
  %1950 = vmatprep.subr.mxu0 0.0
  %1951 = vmatpush1.xpose.msra.mxu0 %v1886
  %1952 = vmatprep.subr.mxu0 0.0
  %1953 = vmatpush1.xpose.msra.mxu0 %v1888
  %1954 = vmatprep.subr.mxu0 0.0
  %1955 = vmatpush1.xpose.msra.mxu0 %v1890
  %1956 = vmatprep.subr.mxu0 0.0
  %1957 = vmatpush1.xpose.msra.mxu0 %v1892
  %1958 = vmatprep.subr.mxu0 0.0
  %1959 = vmatpush1.xpose.msra.mxu0 %v1894
  %1960 = vmatprep.subr.mxu0 0.0
  %1961 = vmatpush1.xpose.msra.mxu0 %v1896
  %1962 = vmatprep.subr.mxu0 0.0
  %1963 = vmatpush1.xpose.msra.mxu0 %v1898
  %1964 = vmatprep.subr.mxu0 0.0
  %1965 = vmatpush1.xpose.msra.mxu0 %v1900
  %1966 = vmatprep.subr.mxu0 0.0
  %1967 = vmatpush1.xpose.msra.mxu0 %v1902
  %1968 = vmatprep.subr.mxu0 0.0
  %1969 = vmatpush1.xpose.msra.mxu0 %v1904
  %1970 = vmatprep.subr.mxu0 0.0
  %1971 = vmatpush1.xpose.msra.mxu0 %v1906
  %1972 = vmatprep.subr.mxu0 0.0
  %1973 = vmatpush1.xpose.msra.mxu0 %v1908
  %1974 = vmatprep.subr.mxu0 0.0
  %1975 = vmatpush1.xpose.msra.mxu0 %v1910
  %1976 = vmatprep.subr.mxu0 0.0
  %1977 = vmatpush1.xpose.msra.mxu0 %v1912
  %1978 = vmatprep.subr.mxu0 0.0
  %1979 = vmatpush1.xpose.msra.mxu0 %v1914
  %1980 = vmatprep.subr.mxu0 0.0
  %1981 = vmatpush1.xpose.msra.mxu0 %v1916
  %1982 = vmatprep.subr.mxu0 0.0
  %1983 = vmatpush1.xpose.msra.mxu0 %v1918
  %1984 = vmatprep.subr.mxu0 0.0
  %1985 = vmatpush1.xpose.msra.mxu0 %v1920
  %1986 = vmatprep.subr.mxu0 0.0
  %1987 = vmatpush1.xpose.msra.mxu0 %v1922
  %1988 = vmatprep.subr.mxu0 0.0
  %1989 = vmatpush1.xpose.msra.mxu0 %v1924
  %1990 = vmatprep.subr.mxu0 0.0
  %1991 = vmatpush1.xpose.msra.mxu0 %v1926
  %1992 = vmatprep.subr.mxu0 0.0
  %1993 = vmatpush1.xpose.msra.mxu0 %v1928
  %1994 = vmatprep.subr.mxu0 0.0
  %1995 = vmatpush1.xpose.msra.mxu0 %v1930
  %1996 = vmatprep.subr.mxu0 0.0
  %1997 = vmatpush1.xpose.msra.mxu0 %v1932
  %1998 = vmatprep.subr.mxu0 0.0
  %1999 = vmatpush1.xpose.msra.mxu0 %v1934
  %2000 = vmatprep.subr.mxu0 0.0
  %2001 = vmatpush1.xpose.msra.mxu0 %v1936
  %2002 = vmatprep.subr.mxu0 0.0
  %2003 = vmatpush1.xpose.msra.mxu0 %v1938
  %2004 = vmatprep.subr.mxu0 0.0
  %2005 = vmatpush1.xpose.msra.mxu0 %v1940
  %2006 = vmatprep.mubr.f32.mxu0 0.0
  %2007 = vmatmul.mubr.f32.gmra.mrb[0].mxu0 %v1814
  %v2008 = vpop.f32.mrb[0].mxu0
  %v2009 = vadd.f32 %v1653, %v2008
  %v2010 = vpop.f32.mrb[0].mxu0
  %v2011 = vadd.f32 %v1654, %v2010
  %2012 = vmatprep.mubr.f32.mxu0 0.0
  %2013 = vmatmul.mubr.f32.gmra.mrb[0].mxu0 %v1816
  %v2014 = vpop.f32.mrb[0].mxu0
  %v2015 = vadd.f32 %v1655, %v2014
  %v2016 = vpop.f32.mrb[0].mxu0
  %v2017 = vadd.f32 %v1656, %v2016
  %2018 = vmatprep.mubr.f32.mxu0 0.0
  %2019 = vmatmul.mubr.f32.gmra.mrb[0].mxu0 %v1818
  %v2020 = vpop.f32.mrb[0].mxu0
  %v2021 = vadd.f32 %v1657, %v2020
  %v2022 = vpop.f32.mrb[0].mxu0
  %v2023 = vadd.f32 %v1658, %v2022
  %2024 = vmatprep.mubr.f32.mxu0 0.0
  %2025 = vmatmul.mubr.f32.gmra.mrb[0].mxu0 %v1820
  %v2026 = vpop.f32.mrb[0].mxu0
  %v2027 = vadd.f32 %v1659, %v2026
  %v2028 = vpop.f32.mrb[0].mxu0
  %v2029 = vadd.f32 %v1660, %v2028
  %2030 = vmatprep.mubr.f32.mxu0 0.0
  %2031 = vmatmul.mubr.f32.gmra.mrb[0].mxu0 %v1822
  %v2032 = vpop.f32.mrb[0].mxu0
  %v2033 = vadd.f32 %v1661, %v2032
  %v2034 = vpop.f32.mrb[0].mxu0
  %v2035 = vadd.f32 %v1662, %v2034
  %2036 = vmatprep.mubr.f32.mxu0 0.0
  %2037 = vmatmul.mubr.f32.gmra.mrb[0].mxu0 %v1824
  %v2038 = vpop.f32.mrb[0].mxu0
  %v2039 = vadd.f32 %v1663, %v2038
  %v2040 = vpop.f32.mrb[0].mxu0
  %v2041 = vadd.f32 %v1664, %v2040
  %2042 = vmatprep.mubr.f32.mxu0 0.0
  %2043 = vmatmul.mubr.f32.gmra.mrb[0].mxu0 %v1826
  %v2044 = vpop.f32.mrb[0].mxu0
  %v2045 = vadd.f32 %v1665, %v2044
  %v2046 = vpop.f32.mrb[0].mxu0
  %v2047 = vadd.f32 %v1666, %v2046
  %2048 = vmatprep.mubr.f32.mxu0 0.0
  %2049 = vmatmul.mubr.f32.gmra.mrb[0].mxu0 %v1828
  %v2050 = vpop.f32.mrb[0].mxu0
  %v2051 = vadd.f32 %v1667, %v2050
  %v2052 = vpop.f32.mrb[0].mxu0
  %v2053 = vadd.f32 %v1668, %v2052
  %2054 = vmatprep.mubr.f32.mxu0 0.0
  %2055 = vmatmul.mubr.f32.gmra.mrb[0].mxu0 %v1830
  %v2056 = vpop.f32.mrb[0].mxu0
  %v2057 = vadd.f32 %v1669, %v2056
  %v2058 = vpop.f32.mrb[0].mxu0
  %v2059 = vadd.f32 %v1670, %v2058
  %2060 = vmatprep.mubr.f32.mxu0 0.0
  %2061 = vmatmul.mubr.f32.gmra.mrb[0].mxu0 %v1832
  %v2062 = vpop.f32.mrb[0].mxu0
  %v2063 = vadd.f32 %v1671, %v2062
  %v2064 = vpop.f32.mrb[0].mxu0
  %v2065 = vadd.f32 %v1672, %v2064
  %2066 = vmatprep.mubr.f32.mxu0 0.0
  %2067 = vmatmul.mubr.f32.gmra.mrb[0].mxu0 %v1834
  %v2068 = vpop.f32.mrb[0].mxu0
  %v2069 = vadd.f32 %v1673, %v2068
  %v2070 = vpop.f32.mrb[0].mxu0
  %v2071 = vadd.f32 %v1674, %v2070
  %2072 = vmatprep.mubr.f32.mxu0 0.0
  %2073 = vmatmul.mubr.f32.gmra.mrb[0].mxu0 %v1836
  %v2074 = vpop.f32.mrb[0].mxu0
  %v2075 = vadd.f32 %v1675, %v2074
  %v2076 = vpop.f32.mrb[0].mxu0
  %v2077 = vadd.f32 %v1676, %v2076
  %2078 = vmatprep.mubr.f32.mxu0 0.0
  %2079 = vmatmul.mubr.f32.gmra.mrb[0].mxu0 %v1838
  %v2080 = vpop.f32.mrb[0].mxu0
  %v2081 = vadd.f32 %v1677, %v2080
  %v2082 = vpop.f32.mrb[0].mxu0
  %v2083 = vadd.f32 %v1678, %v2082
  %2084 = vmatprep.mubr.f32.mxu0 0.0
  %2085 = vmatmul.mubr.f32.gmra.mrb[0].mxu0 %v1840
  %v2086 = vpop.f32.mrb[0].mxu0
  %v2087 = vadd.f32 %v1679, %v2086
  %v2088 = vpop.f32.mrb[0].mxu0
  %v2089 = vadd.f32 %v1680, %v2088
  %2090 = vmatprep.mubr.f32.mxu0 0.0
  %2091 = vmatmul.mubr.f32.gmra.mrb[0].mxu0 %v1842
  %v2092 = vpop.f32.mrb[0].mxu0
  %v2093 = vadd.f32 %v1681, %v2092
  %v2094 = vpop.f32.mrb[0].mxu0
  %v2095 = vadd.f32 %v1682, %v2094
  %2096 = vmatprep.mubr.f32.mxu0 0.0
  %2097 = vmatmul.mubr.f32.gmra.mrb[0].mxu0 %v1844
  %v2098 = vpop.f32.mrb[0].mxu0
  %v2099 = vadd.f32 %v1683, %v2098
  %v2100 = vpop.f32.mrb[0].mxu0
  %v2101 = vadd.f32 %v1684, %v2100
  %2102 = vmatprep.mubr.f32.mxu0 0.0
  %2103 = vmatmul.mubr.f32.gmra.mrb[0].mxu0 %v1846
  %v2104 = vpop.f32.mrb[0].mxu0
  %v2105 = vadd.f32 %v1685, %v2104
  %v2106 = vpop.f32.mrb[0].mxu0
  %v2107 = vadd.f32 %v1686, %v2106
  %2108 = vmatprep.mubr.f32.mxu0 0.0
  %2109 = vmatmul.mubr.f32.gmra.mrb[0].mxu0 %v1848
  %v2110 = vpop.f32.mrb[0].mxu0
  %v2111 = vadd.f32 %v1687, %v2110
  %v2112 = vpop.f32.mrb[0].mxu0
  %v2113 = vadd.f32 %v1688, %v2112
  %2114 = vmatprep.mubr.f32.mxu0 0.0
  %2115 = vmatmul.mubr.f32.gmra.mrb[0].mxu0 %v1850
  %v2116 = vpop.f32.mrb[0].mxu0
  %v2117 = vadd.f32 %v1689, %v2116
  %v2118 = vpop.f32.mrb[0].mxu0
  %v2119 = vadd.f32 %v1690, %v2118
  %2120 = vmatprep.mubr.f32.mxu0 0.0
  %2121 = vmatmul.mubr.f32.gmra.mrb[0].mxu0 %v1852
  %v2122 = vpop.f32.mrb[0].mxu0
  %v2123 = vadd.f32 %v1691, %v2122
  %v2124 = vpop.f32.mrb[0].mxu0
  %v2125 = vadd.f32 %v1692, %v2124
  %2126 = vmatprep.mubr.f32.mxu0 0.0
  %2127 = vmatmul.mubr.f32.gmra.mrb[0].mxu0 %v1854
  %v2128 = vpop.f32.mrb[0].mxu0
  %v2129 = vadd.f32 %v1693, %v2128
  %v2130 = vpop.f32.mrb[0].mxu0
  %v2131 = vadd.f32 %v1694, %v2130
  %2132 = vmatprep.mubr.f32.mxu0 0.0
  %2133 = vmatmul.mubr.f32.gmra.mrb[0].mxu0 %v1856
  %v2134 = vpop.f32.mrb[0].mxu0
  %v2135 = vadd.f32 %v1695, %v2134
  %v2136 = vpop.f32.mrb[0].mxu0
  %v2137 = vadd.f32 %v1696, %v2136
  %2138 = vmatprep.mubr.f32.mxu0 0.0
  %2139 = vmatmul.mubr.f32.gmra.mrb[0].mxu0 %v1858
  %v2140 = vpop.f32.mrb[0].mxu0
  %v2141 = vadd.f32 %v1697, %v2140
  %v2142 = vpop.f32.mrb[0].mxu0
  %v2143 = vadd.f32 %v1698, %v2142
  %2144 = vmatprep.mubr.f32.mxu0 0.0
  %2145 = vmatmul.mubr.f32.gmra.mrb[0].mxu0 %v1860
  %v2146 = vpop.f32.mrb[0].mxu0
  %v2147 = vadd.f32 %v1699, %v2146
  %v2148 = vpop.f32.mrb[0].mxu0
  %v2149 = vadd.f32 %v1700, %v2148
  %2150 = vmatprep.mubr.f32.mxu0 0.0
  %2151 = vmatmul.mubr.f32.gmra.mrb[0].mxu0 %v1862
  %v2152 = vpop.f32.mrb[0].mxu0
  %v2153 = vadd.f32 %v1701, %v2152
  %v2154 = vpop.f32.mrb[0].mxu0
  %v2155 = vadd.f32 %v1702, %v2154
  %2156 = vmatprep.mubr.f32.mxu0 0.0
  %2157 = vmatmul.mubr.f32.gmra.mrb[0].mxu0 %v1864
  %v2158 = vpop.f32.mrb[0].mxu0
  %v2159 = vadd.f32 %v1703, %v2158
  %v2160 = vpop.f32.mrb[0].mxu0
  %v2161 = vadd.f32 %v1704, %v2160
  %2162 = vmatprep.mubr.f32.mxu0 0.0
  %2163 = vmatmul.mubr.f32.gmra.mrb[0].mxu0 %v1866
  %v2164 = vpop.f32.mrb[0].mxu0
  %v2165 = vadd.f32 %v1705, %v2164
  %v2166 = vpop.f32.mrb[0].mxu0
  %v2167 = vadd.f32 %v1706, %v2166
  %2168 = vmatprep.mubr.f32.mxu0 0.0
  %2169 = vmatmul.mubr.f32.gmra.mrb[0].mxu0 %v1868
  %v2170 = vpop.f32.mrb[0].mxu0
  %v2171 = vadd.f32 %v1707, %v2170
  %v2172 = vpop.f32.mrb[0].mxu0
  %v2173 = vadd.f32 %v1708, %v2172
  %2174 = vmatprep.mubr.f32.mxu0 0.0
  %2175 = vmatmul.mubr.f32.gmra.mrb[0].mxu0 %v1870
  %v2176 = vpop.f32.mrb[0].mxu0
  %v2177 = vadd.f32 %v1709, %v2176
  %v2178 = vpop.f32.mrb[0].mxu0
  %v2179 = vadd.f32 %v1710, %v2178
  %2180 = vmatprep.mubr.f32.mxu0 0.0
  %2181 = vmatmul.mubr.f32.gmra.mrb[0].mxu0 %v1872
  %v2182 = vpop.f32.mrb[0].mxu0
  %v2183 = vadd.f32 %v1711, %v2182
  %v2184 = vpop.f32.mrb[0].mxu0
  %v2185 = vadd.f32 %v1712, %v2184
  %2186 = vmatprep.mubr.f32.mxu0 0.0
  %2187 = vmatmul.mubr.f32.gmra.mrb[0].mxu0 %v1874
  %v2188 = vpop.f32.mrb[0].mxu0
  %v2189 = vadd.f32 %v1713, %v2188
  %v2190 = vpop.f32.mrb[0].mxu0
  %v2191 = vadd.f32 %v1714, %v2190
  %2192 = vmatprep.mubr.f32.mxu0 0.0
  %2193 = vmatmul.mubr.f32.gmra.mrb[0].mxu0 %v1876
  %v2194 = vpop.f32.mrb[0].mxu0
  %v2195 = vadd.f32 %v1715, %v2194
  %v2196 = vpop.f32.mrb[0].mxu0
  %v2197 = vadd.f32 %v1716, %v2196
  %2198 = vdwg.mxu0
  %v2199 = vmax.f32 %v2009, %v2011
  %2200 = vmax.xlane.f32.xlu0 %v2199
  %v2201 = vpop.xlane.xlu0 %2200
  %v2202 = vmax.f32 %v2015, %v2017
  %2203 = vmax.xlane.f32.xlu0 %v2202
  %v2204 = vpop.xlane.xlu0 %2203
  %v2205 = vmax.f32 %v2021, %v2023
  %2206 = vmax.xlane.f32.xlu0 %v2205
  %v2207 = vpop.xlane.xlu0 %2206
  %v2208 = vmax.f32 %v2027, %v2029
  %2209 = vmax.xlane.f32.xlu0 %v2208
  %v2210 = vpop.xlane.xlu0 %2209
  %v2211 = vmax.f32 %v2033, %v2035
  %2212 = vmax.xlane.f32.xlu0 %v2211
  %v2213 = vpop.xlane.xlu0 %2212
  %v2214 = vmax.f32 %v2039, %v2041
  %2215 = vmax.xlane.f32.xlu0 %v2214
  %v2216 = vpop.xlane.xlu0 %2215
  %v2217 = vmax.f32 %v2045, %v2047
  %2218 = vmax.xlane.f32.xlu0 %v2217
  %v2219 = vpop.xlane.xlu0 %2218
  %v2220 = vmax.f32 %v2051, %v2053
  %2221 = vmax.xlane.f32.xlu0 %v2220
  %v2222 = vpop.xlane.xlu0 %2221
  %v2223 = vmax.f32 %v2057, %v2059
  %2224 = vmax.xlane.f32.xlu0 %v2223
  %v2225 = vpop.xlane.xlu0 %2224
  %v2226 = vmax.f32 %v2063, %v2065
  %2227 = vmax.xlane.f32.xlu0 %v2226
  %v2228 = vpop.xlane.xlu0 %2227
  %v2229 = vmax.f32 %v2069, %v2071
  %2230 = vmax.xlane.f32.xlu0 %v2229
  %v2231 = vpop.xlane.xlu0 %2230
  %v2232 = vmax.f32 %v2075, %v2077
  %2233 = vmax.xlane.f32.xlu0 %v2232
  %v2234 = vpop.xlane.xlu0 %2233
  %v2235 = vmax.f32 %v2081, %v2083
  %2236 = vmax.xlane.f32.xlu0 %v2235
  %v2237 = vpop.xlane.xlu0 %2236
  %v2238 = vmax.f32 %v2087, %v2089
  %2239 = vmax.xlane.f32.xlu0 %v2238
  %v2240 = vpop.xlane.xlu0 %2239
  %v2241 = vmax.f32 %v2093, %v2095
  %2242 = vmax.xlane.f32.xlu0 %v2241
  %v2243 = vpop.xlane.xlu0 %2242
  %v2244 = vmax.f32 %v2099, %v2101
  %2245 = vmax.xlane.f32.xlu0 %v2244
  %v2246 = vpop.xlane.xlu0 %2245
  %v2247 = vmax.f32 %v2105, %v2107
  %2248 = vmax.xlane.f32.xlu0 %v2247
  %v2249 = vpop.xlane.xlu0 %2248
  %v2250 = vmax.f32 %v2111, %v2113
  %2251 = vmax.xlane.f32.xlu0 %v2250
  %v2252 = vpop.xlane.xlu0 %2251
  %v2253 = vmax.f32 %v2117, %v2119
  %2254 = vmax.xlane.f32.xlu0 %v2253
  %v2255 = vpop.xlane.xlu0 %2254
  %v2256 = vmax.f32 %v2123, %v2125
  %2257 = vmax.xlane.f32.xlu0 %v2256
  %v2258 = vpop.xlane.xlu0 %2257
  %v2259 = vmax.f32 %v2129, %v2131
  %2260 = vmax.xlane.f32.xlu0 %v2259
  %v2261 = vpop.xlane.xlu0 %2260
  %v2262 = vmax.f32 %v2135, %v2137
  %2263 = vmax.xlane.f32.xlu0 %v2262
  %v2264 = vpop.xlane.xlu0 %2263
  %v2265 = vmax.f32 %v2141, %v2143
  %2266 = vmax.xlane.f32.xlu0 %v2265
  %v2267 = vpop.xlane.xlu0 %2266
  %v2268 = vmax.f32 %v2147, %v2149
  %2269 = vmax.xlane.f32.xlu0 %v2268
  %v2270 = vpop.xlane.xlu0 %2269
  %v2271 = vmax.f32 %v2153, %v2155
  %2272 = vmax.xlane.f32.xlu0 %v2271
  %v2273 = vpop.xlane.xlu0 %2272
  %v2274 = vmax.f32 %v2159, %v2161
  %2275 = vmax.xlane.f32.xlu0 %v2274
  %v2276 = vpop.xlane.xlu0 %2275
  %v2277 = vmax.f32 %v2165, %v2167
  %2278 = vmax.xlane.f32.xlu0 %v2277
  %v2279 = vpop.xlane.xlu0 %2278
  %v2280 = vmax.f32 %v2171, %v2173
  %2281 = vmax.xlane.f32.xlu0 %v2280
  %v2282 = vpop.xlane.xlu0 %2281
  %v2283 = vmax.f32 %v2177, %v2179
  %2284 = vmax.xlane.f32.xlu0 %v2283
  %v2285 = vpop.xlane.xlu0 %2284
  %v2286 = vmax.f32 %v2183, %v2185
  %2287 = vmax.xlane.f32.xlu0 %v2286
  %v2288 = vpop.xlane.xlu0 %2287
  %v2289 = vmax.f32 %v2189, %v2191
  %2290 = vmax.xlane.f32.xlu0 %v2289
  %v2291 = vpop.xlane.xlu0 %2290
  %v2292 = vmax.f32 %v2195, %v2197
  %2293 = vmax.xlane.f32.xlu0 %v2292
  %v2294 = vpop.xlane.xlu0 %2293
  %v2295 = vsub.f32 %v2009, %v2201
  %v2296 = vsub.f32 %v2011, %v2201
  %v2297 = vsub.f32 %v2015, %v2204
  %v2298 = vsub.f32 %v2017, %v2204
  %v2299 = vsub.f32 %v2021, %v2207
  %v2300 = vsub.f32 %v2023, %v2207
  %v2301 = vsub.f32 %v2027, %v2210
  %v2302 = vsub.f32 %v2029, %v2210
  %v2303 = vsub.f32 %v2033, %v2213
  %v2304 = vsub.f32 %v2035, %v2213
  %v2305 = vsub.f32 %v2039, %v2216
  %v2306 = vsub.f32 %v2041, %v2216
  %v2307 = vsub.f32 %v2045, %v2219
  %v2308 = vsub.f32 %v2047, %v2219
  %v2309 = vsub.f32 %v2051, %v2222
  %v2310 = vsub.f32 %v2053, %v2222
  %v2311 = vsub.f32 %v2057, %v2225
  %v2312 = vsub.f32 %v2059, %v2225
  %v2313 = vsub.f32 %v2063, %v2228
  %v2314 = vsub.f32 %v2065, %v2228
  %v2315 = vsub.f32 %v2069, %v2231
  %v2316 = vsub.f32 %v2071, %v2231
  %v2317 = vsub.f32 %v2075, %v2234
  %v2318 = vsub.f32 %v2077, %v2234
  %v2319 = vsub.f32 %v2081, %v2237
  %v2320 = vsub.f32 %v2083, %v2237
  %v2321 = vsub.f32 %v2087, %v2240
  %v2322 = vsub.f32 %v2089, %v2240
  %v2323 = vsub.f32 %v2093, %v2243
  %v2324 = vsub.f32 %v2095, %v2243
  %v2325 = vsub.f32 %v2099, %v2246
  %v2326 = vsub.f32 %v2101, %v2246
  %v2327 = vsub.f32 %v2105, %v2249
  %v2328 = vsub.f32 %v2107, %v2249
  %v2329 = vsub.f32 %v2111, %v2252
  %v2330 = vsub.f32 %v2113, %v2252
  %v2331 = vsub.f32 %v2117, %v2255
  %v2332 = vsub.f32 %v2119, %v2255
  %v2333 = vsub.f32 %v2123, %v2258
  %v2334 = vsub.f32 %v2125, %v2258
  %v2335 = vsub.f32 %v2129, %v2261
  %v2336 = vsub.f32 %v2131, %v2261
  %v2337 = vsub.f32 %v2135, %v2264
  %v2338 = vsub.f32 %v2137, %v2264
  %v2339 = vsub.f32 %v2141, %v2267
  %v2340 = vsub.f32 %v2143, %v2267
  %v2341 = vsub.f32 %v2147, %v2270
  %v2342 = vsub.f32 %v2149, %v2270
  %v2343 = vsub.f32 %v2153, %v2273
  %v2344 = vsub.f32 %v2155, %v2273
  %v2345 = vsub.f32 %v2159, %v2276
  %v2346 = vsub.f32 %v2161, %v2276
  %v2347 = vsub.f32 %v2165, %v2279
  %v2348 = vsub.f32 %v2167, %v2279
  %v2349 = vsub.f32 %v2171, %v2282
  %v2350 = vsub.f32 %v2173, %v2282
  %v2351 = vsub.f32 %v2177, %v2285
  %v2352 = vsub.f32 %v2179, %v2285
  %v2353 = vsub.f32 %v2183, %v2288
  %v2354 = vsub.f32 %v2185, %v2288
  %v2355 = vsub.f32 %v2189, %v2291
  %v2356 = vsub.f32 %v2191, %v2291
  %v2357 = vsub.f32 %v2195, %v2294
  %v2358 = vsub.f32 %v2197, %v2294
  %v2359 = vmul.f32 %v2295, 1.442695
  %v2360 = vpow.pop %v2359
  %v2361 = vmul.f32 %v2296, 1.442695
  %v2362 = vpow.pop %v2361
  %v2363 = vmul.f32 %v2297, 1.442695
  %v2364 = vpow.pop %v2363
  %v2365 = vmul.f32 %v2298, 1.442695
  %v2366 = vpow.pop %v2365
  %v2367 = vmul.f32 %v2299, 1.442695
  %v2368 = vpow.pop %v2367
  %v2369 = vmul.f32 %v2300, 1.442695
  %v2370 = vpow.pop %v2369
  %v2371 = vmul.f32 %v2301, 1.442695
  %v2372 = vpow.pop %v2371
  %v2373 = vmul.f32 %v2302, 1.442695
  %v2374 = vpow.pop %v2373
  %v2375 = vmul.f32 %v2303, 1.442695
  %v2376 = vpow.pop %v2375
  %v2377 = vmul.f32 %v2304, 1.442695
  %v2378 = vpow.pop %v2377
  %v2379 = vmul.f32 %v2305, 1.442695
  %v2380 = vpow.pop %v2379
  %v2381 = vmul.f32 %v2306, 1.442695
  %v2382 = vpow.pop %v2381
  %v2383 = vmul.f32 %v2307, 1.442695
  %v2384 = vpow.pop %v2383
  %v2385 = vmul.f32 %v2308, 1.442695
  %v2386 = vpow.pop %v2385
  %v2387 = vmul.f32 %v2309, 1.442695
  %v2388 = vpow.pop %v2387
  %v2389 = vmul.f32 %v2310, 1.442695
  %v2390 = vpow.pop %v2389
  %v2391 = vmul.f32 %v2311, 1.442695
  %v2392 = vpow.pop %v2391
  %v2393 = vmul.f32 %v2312, 1.442695
  %v2394 = vpow.pop %v2393
  %v2395 = vmul.f32 %v2313, 1.442695
  %v2396 = vpow.pop %v2395
  %v2397 = vmul.f32 %v2314, 1.442695
  %v2398 = vpow.pop %v2397
  %v2399 = vmul.f32 %v2315, 1.442695
  %v2400 = vpow.pop %v2399
  %v2401 = vmul.f32 %v2316, 1.442695
  %v2402 = vpow.pop %v2401
  %v2403 = vmul.f32 %v2317, 1.442695
  %v2404 = vpow.pop %v2403
  %v2405 = vmul.f32 %v2318, 1.442695
  %v2406 = vpow.pop %v2405
  %v2407 = vmul.f32 %v2319, 1.442695
  %v2408 = vpow.pop %v2407
  %v2409 = vmul.f32 %v2320, 1.442695
  %v2410 = vpow.pop %v2409
  %v2411 = vmul.f32 %v2321, 1.442695
  %v2412 = vpow.pop %v2411
  %v2413 = vmul.f32 %v2322, 1.442695
  %v2414 = vpow.pop %v2413
  %v2415 = vmul.f32 %v2323, 1.442695
  %v2416 = vpow.pop %v2415
  %v2417 = vmul.f32 %v2324, 1.442695
  %v2418 = vpow.pop %v2417
  %v2419 = vmul.f32 %v2325, 1.442695
  %v2420 = vpow.pop %v2419
  %v2421 = vmul.f32 %v2326, 1.442695
  %v2422 = vpow.pop %v2421
  %v2423 = vmul.f32 %v2327, 1.442695
  %v2424 = vpow.pop %v2423
  %v2425 = vmul.f32 %v2328, 1.442695
  %v2426 = vpow.pop %v2425
  %v2427 = vmul.f32 %v2329, 1.442695
  %v2428 = vpow.pop %v2427
  %v2429 = vmul.f32 %v2330, 1.442695
  %v2430 = vpow.pop %v2429
  %v2431 = vmul.f32 %v2331, 1.442695
  %v2432 = vpow.pop %v2431
  %v2433 = vmul.f32 %v2332, 1.442695
  %v2434 = vpow.pop %v2433
  %v2435 = vmul.f32 %v2333, 1.442695
  %v2436 = vpow.pop %v2435
  %v2437 = vmul.f32 %v2334, 1.442695
  %v2438 = vpow.pop %v2437
  %v2439 = vmul.f32 %v2335, 1.442695
  %v2440 = vpow.pop %v2439
  %v2441 = vmul.f32 %v2336, 1.442695
  %v2442 = vpow.pop %v2441
  %v2443 = vmul.f32 %v2337, 1.442695
  %v2444 = vpow.pop %v2443
  %v2445 = vmul.f32 %v2338, 1.442695
  %v2446 = vpow.pop %v2445
  %v2447 = vmul.f32 %v2339, 1.442695
  %v2448 = vpow.pop %v2447
  %v2449 = vmul.f32 %v2340, 1.442695
  %v2450 = vpow.pop %v2449
  %v2451 = vmul.f32 %v2341, 1.442695
  %v2452 = vpow.pop %v2451
  %v2453 = vmul.f32 %v2342, 1.442695
  %v2454 = vpow.pop %v2453
  %v2455 = vmul.f32 %v2343, 1.442695
  %v2456 = vpow.pop %v2455
  %v2457 = vmul.f32 %v2344, 1.442695
  %v2458 = vpow.pop %v2457
  %v2459 = vmul.f32 %v2345, 1.442695
  %v2460 = vpow.pop %v2459
  %v2461 = vmul.f32 %v2346, 1.442695
  %v2462 = vpow.pop %v2461
  %v2463 = vmul.f32 %v2347, 1.442695
  %v2464 = vpow.pop %v2463
  %v2465 = vmul.f32 %v2348, 1.442695
  %v2466 = vpow.pop %v2465
  %v2467 = vmul.f32 %v2349, 1.442695
  %v2468 = vpow.pop %v2467
  %v2469 = vmul.f32 %v2350, 1.442695
  %v2470 = vpow.pop %v2469
  %v2471 = vmul.f32 %v2351, 1.442695
  %v2472 = vpow.pop %v2471
  %v2473 = vmul.f32 %v2352, 1.442695
  %v2474 = vpow.pop %v2473
  %v2475 = vmul.f32 %v2353, 1.442695
  %v2476 = vpow.pop %v2475
  %v2477 = vmul.f32 %v2354, 1.442695
  %v2478 = vpow.pop %v2477
  %v2479 = vmul.f32 %v2355, 1.442695
  %v2480 = vpow.pop %v2479
  %v2481 = vmul.f32 %v2356, 1.442695
  %v2482 = vpow.pop %v2481
  %v2483 = vmul.f32 %v2357, 1.442695
  %v2484 = vpow.pop %v2483
  %v2485 = vmul.f32 %v2358, 1.442695
  %v2486 = vpow.pop %v2485
  %v2487 = vadd.f32 %v2360, %v2362
  %2488 = vadd.xlane.f32.xlu0 %v2487
  %v2489 = vpop.xlane.xlu0 %2488
  %v2490 = vadd.f32 %v2364, %v2366
  %2491 = vadd.xlane.f32.xlu0 %v2490
  %v2492 = vpop.xlane.xlu0 %2491
  %v2493 = vadd.f32 %v2368, %v2370
  %2494 = vadd.xlane.f32.xlu0 %v2493
  %v2495 = vpop.xlane.xlu0 %2494
  %v2496 = vadd.f32 %v2372, %v2374
  %2497 = vadd.xlane.f32.xlu0 %v2496
  %v2498 = vpop.xlane.xlu0 %2497
  %v2499 = vadd.f32 %v2376, %v2378
  %2500 = vadd.xlane.f32.xlu0 %v2499
  %v2501 = vpop.xlane.xlu0 %2500
  %v2502 = vadd.f32 %v2380, %v2382
  %2503 = vadd.xlane.f32.xlu0 %v2502
  %v2504 = vpop.xlane.xlu0 %2503
  %v2505 = vadd.f32 %v2384, %v2386
  %2506 = vadd.xlane.f32.xlu0 %v2505
  %v2507 = vpop.xlane.xlu0 %2506
  %v2508 = vadd.f32 %v2388, %v2390
  %2509 = vadd.xlane.f32.xlu0 %v2508
  %v2510 = vpop.xlane.xlu0 %2509
  %v2511 = vadd.f32 %v2392, %v2394
  %2512 = vadd.xlane.f32.xlu0 %v2511
  %v2513 = vpop.xlane.xlu0 %2512
  %v2514 = vadd.f32 %v2396, %v2398
  %2515 = vadd.xlane.f32.xlu0 %v2514
  %v2516 = vpop.xlane.xlu0 %2515
  %v2517 = vadd.f32 %v2400, %v2402
  %2518 = vadd.xlane.f32.xlu0 %v2517
  %v2519 = vpop.xlane.xlu0 %2518
  %v2520 = vadd.f32 %v2404, %v2406
  %2521 = vadd.xlane.f32.xlu0 %v2520
  %v2522 = vpop.xlane.xlu0 %2521
  %v2523 = vadd.f32 %v2408, %v2410
  %2524 = vadd.xlane.f32.xlu0 %v2523
  %v2525 = vpop.xlane.xlu0 %2524
  %v2526 = vadd.f32 %v2412, %v2414
  %2527 = vadd.xlane.f32.xlu0 %v2526
  %v2528 = vpop.xlane.xlu0 %2527
  %v2529 = vadd.f32 %v2416, %v2418
  %2530 = vadd.xlane.f32.xlu0 %v2529
  %v2531 = vpop.xlane.xlu0 %2530
  %v2532 = vadd.f32 %v2420, %v2422
  %2533 = vadd.xlane.f32.xlu0 %v2532
  %v2534 = vpop.xlane.xlu0 %2533
  %v2535 = vadd.f32 %v2424, %v2426
  %2536 = vadd.xlane.f32.xlu0 %v2535
  %v2537 = vpop.xlane.xlu0 %2536
  %v2538 = vadd.f32 %v2428, %v2430
  %2539 = vadd.xlane.f32.xlu0 %v2538
  %v2540 = vpop.xlane.xlu0 %2539
  %v2541 = vadd.f32 %v2432, %v2434
  %2542 = vadd.xlane.f32.xlu0 %v2541
  %v2543 = vpop.xlane.xlu0 %2542
  %v2544 = vadd.f32 %v2436, %v2438
  %2545 = vadd.xlane.f32.xlu0 %v2544
  %v2546 = vpop.xlane.xlu0 %2545
  %v2547 = vadd.f32 %v2440, %v2442
  %2548 = vadd.xlane.f32.xlu0 %v2547
  %v2549 = vpop.xlane.xlu0 %2548
  %v2550 = vadd.f32 %v2444, %v2446
  %2551 = vadd.xlane.f32.xlu0 %v2550
  %v2552 = vpop.xlane.xlu0 %2551
  %v2553 = vadd.f32 %v2448, %v2450
  %2554 = vadd.xlane.f32.xlu0 %v2553
  %v2555 = vpop.xlane.xlu0 %2554
  %v2556 = vadd.f32 %v2452, %v2454
  %2557 = vadd.xlane.f32.xlu0 %v2556
  %v2558 = vpop.xlane.xlu0 %2557
  %v2559 = vadd.f32 %v2456, %v2458
  %2560 = vadd.xlane.f32.xlu0 %v2559
  %v2561 = vpop.xlane.xlu0 %2560
  %v2562 = vadd.f32 %v2460, %v2462
  %2563 = vadd.xlane.f32.xlu0 %v2562
  %v2564 = vpop.xlane.xlu0 %2563
  %v2565 = vadd.f32 %v2464, %v2466
  %2566 = vadd.xlane.f32.xlu0 %v2565
  %v2567 = vpop.xlane.xlu0 %2566
  %v2568 = vadd.f32 %v2468, %v2470
  %2569 = vadd.xlane.f32.xlu0 %v2568
  %v2570 = vpop.xlane.xlu0 %2569
  %v2571 = vadd.f32 %v2472, %v2474
  %2572 = vadd.xlane.f32.xlu0 %v2571
  %v2573 = vpop.xlane.xlu0 %2572
  %v2574 = vadd.f32 %v2476, %v2478
  %2575 = vadd.xlane.f32.xlu0 %v2574
  %v2576 = vpop.xlane.xlu0 %2575
  %v2577 = vadd.f32 %v2480, %v2482
  %2578 = vadd.xlane.f32.xlu0 %v2577
  %v2579 = vpop.xlane.xlu0 %2578
  %v2580 = vadd.f32 %v2484, %v2486
  %2581 = vadd.xlane.f32.xlu0 %v2580
  %v2582 = vpop.xlane.xlu0 %2581
  %v2583 = vrcp.pop %v2489
  %v2584 = vrcp.pop %v2492
  %v2585 = vrcp.pop %v2495
  %v2586 = vrcp.pop %v2498
  %v2587 = vrcp.pop %v2501
  %v2588 = vrcp.pop %v2504
  %v2589 = vrcp.pop %v2507
  %v2590 = vrcp.pop %v2510
  %v2591 = vrcp.pop %v2513
  %v2592 = vrcp.pop %v2516
  %v2593 = vrcp.pop %v2519
  %v2594 = vrcp.pop %v2522
  %v2595 = vrcp.pop %v2525
  %v2596 = vrcp.pop %v2528
  %v2597 = vrcp.pop %v2531
  %v2598 = vrcp.pop %v2534
  %v2599 = vrcp.pop %v2537
  %v2600 = vrcp.pop %v2540
  %v2601 = vrcp.pop %v2543
  %v2602 = vrcp.pop %v2546
  %v2603 = vrcp.pop %v2549
  %v2604 = vrcp.pop %v2552
  %v2605 = vrcp.pop %v2555
  %v2606 = vrcp.pop %v2558
  %v2607 = vrcp.pop %v2561
  %v2608 = vrcp.pop %v2564
  %v2609 = vrcp.pop %v2567
  %v2610 = vrcp.pop %v2570
  %v2611 = vrcp.pop %v2573
  %v2612 = vrcp.pop %v2576
  %v2613 = vrcp.pop %v2579
  %v2614 = vrcp.pop %v2582
  %v2615 = vmul.f32 %v2360, %v2583
  %v2616 = vmul.f32 %v2362, %v2583
  %v2617 = vmul.f32 %v2364, %v2584
  %v2618 = vmul.f32 %v2366, %v2584
  %v2619 = vmul.f32 %v2368, %v2585
  %v2620 = vmul.f32 %v2370, %v2585
  %v2621 = vmul.f32 %v2372, %v2586
  %v2622 = vmul.f32 %v2374, %v2586
  %v2623 = vmul.f32 %v2376, %v2587
  %v2624 = vmul.f32 %v2378, %v2587
  %v2625 = vmul.f32 %v2380, %v2588
  %v2626 = vmul.f32 %v2382, %v2588
  %v2627 = vmul.f32 %v2384, %v2589
  %v2628 = vmul.f32 %v2386, %v2589
  %v2629 = vmul.f32 %v2388, %v2590
  %v2630 = vmul.f32 %v2390, %v2590
  %v2631 = vmul.f32 %v2392, %v2591
  %v2632 = vmul.f32 %v2394, %v2591
  %v2633 = vmul.f32 %v2396, %v2592
  %v2634 = vmul.f32 %v2398, %v2592
  %v2635 = vmul.f32 %v2400, %v2593
  %v2636 = vmul.f32 %v2402, %v2593
  %v2637 = vmul.f32 %v2404, %v2594
  %v2638 = vmul.f32 %v2406, %v2594
  %v2639 = vmul.f32 %v2408, %v2595
  %v2640 = vmul.f32 %v2410, %v2595
  %v2641 = vmul.f32 %v2412, %v2596
  %v2642 = vmul.f32 %v2414, %v2596
  %v2643 = vmul.f32 %v2416, %v2597
  %v2644 = vmul.f32 %v2418, %v2597
  %v2645 = vmul.f32 %v2420, %v2598
  %v2646 = vmul.f32 %v2422, %v2598
  %v2647 = vmul.f32 %v2424, %v2599
  %v2648 = vmul.f32 %v2426, %v2599
  %v2649 = vmul.f32 %v2428, %v2600
  %v2650 = vmul.f32 %v2430, %v2600
  %v2651 = vmul.f32 %v2432, %v2601
  %v2652 = vmul.f32 %v2434, %v2601
  %v2653 = vmul.f32 %v2436, %v2602
  %v2654 = vmul.f32 %v2438, %v2602
  %v2655 = vmul.f32 %v2440, %v2603
  %v2656 = vmul.f32 %v2442, %v2603
  %v2657 = vmul.f32 %v2444, %v2604
  %v2658 = vmul.f32 %v2446, %v2604
  %v2659 = vmul.f32 %v2448, %v2605
  %v2660 = vmul.f32 %v2450, %v2605
  %v2661 = vmul.f32 %v2452, %v2606
  %v2662 = vmul.f32 %v2454, %v2606
  %v2663 = vmul.f32 %v2456, %v2607
  %v2664 = vmul.f32 %v2458, %v2607
  %v2665 = vmul.f32 %v2460, %v2608
  %v2666 = vmul.f32 %v2462, %v2608
  %v2667 = vmul.f32 %v2464, %v2609
  %v2668 = vmul.f32 %v2466, %v2609
  %v2669 = vmul.f32 %v2468, %v2610
  %v2670 = vmul.f32 %v2470, %v2610
  %v2671 = vmul.f32 %v2472, %v2611
  %v2672 = vmul.f32 %v2474, %v2611
  %v2673 = vmul.f32 %v2476, %v2612
  %v2674 = vmul.f32 %v2478, %v2612
  %v2675 = vmul.f32 %v2480, %v2613
  %v2676 = vmul.f32 %v2482, %v2613
  %v2677 = vmul.f32 %v2484, %v2614
  %v2678 = vmul.f32 %v2486, %v2614
  %2679 = vrot.lane.b32.xlu0 %v1335, 64
  %v2680 = vpop.permute.xlu0 %2679
  %2681 = vrot.lane.b32.xlu0 %v1340, 64
  %v2682 = vpop.permute.xlu0 %2681
  %2683 = vrot.lane.b32.xlu0 %v1345, 64
  %v2684 = vpop.permute.xlu0 %2683
  %2685 = vrot.lane.b32.xlu0 %v1350, 64
  %v2686 = vpop.permute.xlu0 %2685
  %2687 = vrot.lane.b32.xlu0 %v1355, 64
  %v2688 = vpop.permute.xlu0 %2687
  %2689 = vrot.lane.b32.xlu0 %v1360, 64
  %v2690 = vpop.permute.xlu0 %2689
  %2691 = vrot.lane.b32.xlu0 %v1365, 64
  %v2692 = vpop.permute.xlu0 %2691
  %2693 = vrot.lane.b32.xlu0 %v1370, 64
  %v2694 = vpop.permute.xlu0 %2693
  %2695 = vrot.lane.b32.xlu0 %v1375, 64
  %v2696 = vpop.permute.xlu0 %2695
  %2697 = vrot.lane.b32.xlu0 %v1380, 64
  %v2698 = vpop.permute.xlu0 %2697
  %2699 = vrot.lane.b32.xlu0 %v1385, 64
  %v2700 = vpop.permute.xlu0 %2699
  %2701 = vrot.lane.b32.xlu0 %v1390, 64
  %v2702 = vpop.permute.xlu0 %2701
  %2703 = vrot.lane.b32.xlu0 %v1395, 64
  %v2704 = vpop.permute.xlu0 %2703
  %2705 = vrot.lane.b32.xlu0 %v1400, 64
  %v2706 = vpop.permute.xlu0 %2705
  %2707 = vrot.lane.b32.xlu0 %v1405, 64
  %v2708 = vpop.permute.xlu0 %2707
  %2709 = vrot.lane.b32.xlu0 %v1410, 64
  %v2710 = vpop.permute.xlu0 %2709
  %2711 = vrot.lane.b32.xlu0 %v1415, 64
  %v2712 = vpop.permute.xlu0 %2711
  %2713 = vrot.lane.b32.xlu0 %v1420, 64
  %v2714 = vpop.permute.xlu0 %2713
  %2715 = vrot.lane.b32.xlu0 %v1425, 64
  %v2716 = vpop.permute.xlu0 %2715
  %2717 = vrot.lane.b32.xlu0 %v1430, 64
  %v2718 = vpop.permute.xlu0 %2717
  %2719 = vrot.lane.b32.xlu0 %v1435, 64
  %v2720 = vpop.permute.xlu0 %2719
  %2721 = vrot.lane.b32.xlu0 %v1440, 64
  %v2722 = vpop.permute.xlu0 %2721
  %2723 = vrot.lane.b32.xlu0 %v1445, 64
  %v2724 = vpop.permute.xlu0 %2723
  %2725 = vrot.lane.b32.xlu0 %v1450, 64
  %v2726 = vpop.permute.xlu0 %2725
  %2727 = vrot.lane.b32.xlu0 %v1455, 64
  %v2728 = vpop.permute.xlu0 %2727
  %2729 = vrot.lane.b32.xlu0 %v1460, 64
  %v2730 = vpop.permute.xlu0 %2729
  %2731 = vrot.lane.b32.xlu0 %v1465, 64
  %v2732 = vpop.permute.xlu0 %2731
  %2733 = vrot.lane.b32.xlu0 %v1470, 64
  %v2734 = vpop.permute.xlu0 %2733
  %2735 = vrot.lane.b32.xlu0 %v1475, 64
  %v2736 = vpop.permute.xlu0 %2735
  %2737 = vrot.lane.b32.xlu0 %v1480, 64
  %v2738 = vpop.permute.xlu0 %2737
  %2739 = vrot.lane.b32.xlu0 %v1485, 64
  %v2740 = vpop.permute.xlu0 %2739
  %2741 = vrot.lane.b32.xlu0 %v1490, 64
  %v2742 = vpop.permute.xlu0 %2741
  %2775 = vmatprep.subr.mxu0 0.0
  %2776 = vmatpush1.msra.mxu0 %v2680
  %2777 = vmatprep.subr.mxu0 0.0
  %2778 = vmatpush1.msra.mxu0 %v2682
  %2779 = vmatprep.subr.mxu0 0.0
  %2780 = vmatpush1.msra.mxu0 %v2684
  %2781 = vmatprep.subr.mxu0 0.0
  %2782 = vmatpush1.msra.mxu0 %v2686
  %2783 = vmatprep.subr.mxu0 0.0
  %2784 = vmatpush1.msra.mxu0 %v2688
  %2785 = vmatprep.subr.mxu0 0.0
  %2786 = vmatpush1.msra.mxu0 %v2690
  %2787 = vmatprep.subr.mxu0 0.0
  %2788 = vmatpush1.msra.mxu0 %v2692
  %2789 = vmatprep.subr.mxu0 0.0
  %2790 = vmatpush1.msra.mxu0 %v2694
  %2791 = vmatprep.subr.mxu0 0.0
  %2792 = vmatpush1.msra.mxu0 %v2696
  %2793 = vmatprep.subr.mxu0 0.0
  %2794 = vmatpush1.msra.mxu0 %v2698
  %2795 = vmatprep.subr.mxu0 0.0
  %2796 = vmatpush1.msra.mxu0 %v2700
  %2797 = vmatprep.subr.mxu0 0.0
  %2798 = vmatpush1.msra.mxu0 %v2702
  %2799 = vmatprep.subr.mxu0 0.0
  %2800 = vmatpush1.msra.mxu0 %v2704
  %2801 = vmatprep.subr.mxu0 0.0
  %2802 = vmatpush1.msra.mxu0 %v2706
  %2803 = vmatprep.subr.mxu0 0.0
  %2804 = vmatpush1.msra.mxu0 %v2708
  %2805 = vmatprep.subr.mxu0 0.0
  %2806 = vmatpush1.msra.mxu0 %v2710
  %2807 = vmatprep.subr.mxu0 0.0
  %2808 = vmatpush1.msra.mxu0 %v2712
  %2809 = vmatprep.subr.mxu0 0.0
  %2810 = vmatpush1.msra.mxu0 %v2714
  %2811 = vmatprep.subr.mxu0 0.0
  %2812 = vmatpush1.msra.mxu0 %v2716
  %2813 = vmatprep.subr.mxu0 0.0
  %2814 = vmatpush1.msra.mxu0 %v2718
  %2815 = vmatprep.subr.mxu0 0.0
  %2816 = vmatpush1.msra.mxu0 %v2720
  %2817 = vmatprep.subr.mxu0 0.0
  %2818 = vmatpush1.msra.mxu0 %v2722
  %2819 = vmatprep.subr.mxu0 0.0
  %2820 = vmatpush1.msra.mxu0 %v2724
  %2821 = vmatprep.subr.mxu0 0.0
  %2822 = vmatpush1.msra.mxu0 %v2726
  %2823 = vmatprep.subr.mxu0 0.0
  %2824 = vmatpush1.msra.mxu0 %v2728
  %2825 = vmatprep.subr.mxu0 0.0
  %2826 = vmatpush1.msra.mxu0 %v2730
  %2827 = vmatprep.subr.mxu0 0.0
  %2828 = vmatpush1.msra.mxu0 %v2732
  %2829 = vmatprep.subr.mxu0 0.0
  %2830 = vmatpush1.msra.mxu0 %v2734
  %2831 = vmatprep.subr.mxu0 0.0
  %2832 = vmatpush1.msra.mxu0 %v2736
  %2833 = vmatprep.subr.mxu0 0.0
  %2834 = vmatpush1.msra.mxu0 %v2738
  %2835 = vmatprep.subr.mxu0 0.0
  %2836 = vmatpush1.msra.mxu0 %v2740
  %2837 = vmatprep.subr.mxu0 0.0
  %2838 = vmatpush1.msra.mxu0 %v2742
  %2839 = vmatprep.mubr.f32.mxu0 %v2616
  %2840 = vmatmul.mubr.f32.gmra.mrb[0].mxu0 %v2615
  %v2841 = vpop.f32.mrb[0].mxu0
  %v2842 = vadd.f32 0.0, %v2841
  %v2843 = vpop.f32.mrb[0].mxu0
  %2844 = vmatprep.mubr.f32.mxu0 %v2618
  %2845 = vmatmul.mubr.f32.gmra.mrb[0].mxu0 %v2617
  %v2846 = vpop.f32.mrb[0].mxu0
  %v2847 = vadd.f32 0.0, %v2846
  %v2848 = vpop.f32.mrb[0].mxu0
  %2849 = vmatprep.mubr.f32.mxu0 %v2620
  %2850 = vmatmul.mubr.f32.gmra.mrb[0].mxu0 %v2619
  %v2851 = vpop.f32.mrb[0].mxu0
  %v2852 = vadd.f32 0.0, %v2851
  %v2853 = vpop.f32.mrb[0].mxu0
  %2854 = vmatprep.mubr.f32.mxu0 %v2622
  %2855 = vmatmul.mubr.f32.gmra.mrb[0].mxu0 %v2621
  %v2856 = vpop.f32.mrb[0].mxu0
  %v2857 = vadd.f32 0.0, %v2856
  %v2858 = vpop.f32.mrb[0].mxu0
  %2859 = vmatprep.mubr.f32.mxu0 %v2624
  %2860 = vmatmul.mubr.f32.gmra.mrb[0].mxu0 %v2623
  %v2861 = vpop.f32.mrb[0].mxu0
  %v2862 = vadd.f32 0.0, %v2861
  %v2863 = vpop.f32.mrb[0].mxu0
  %2864 = vmatprep.mubr.f32.mxu0 %v2626
  %2865 = vmatmul.mubr.f32.gmra.mrb[0].mxu0 %v2625
  %v2866 = vpop.f32.mrb[0].mxu0
  %v2867 = vadd.f32 0.0, %v2866
  %v2868 = vpop.f32.mrb[0].mxu0
  %2869 = vmatprep.mubr.f32.mxu0 %v2628
  %2870 = vmatmul.mubr.f32.gmra.mrb[0].mxu0 %v2627
  %v2871 = vpop.f32.mrb[0].mxu0
  %v2872 = vadd.f32 0.0, %v2871
  %v2873 = vpop.f32.mrb[0].mxu0
  %2874 = vmatprep.mubr.f32.mxu0 %v2630
  %2875 = vmatmul.mubr.f32.gmra.mrb[0].mxu0 %v2629
  %v2876 = vpop.f32.mrb[0].mxu0
  %v2877 = vadd.f32 0.0, %v2876
  %v2878 = vpop.f32.mrb[0].mxu0
  %2879 = vmatprep.mubr.f32.mxu0 %v2632
  %2880 = vmatmul.mubr.f32.gmra.mrb[0].mxu0 %v2631
  %v2881 = vpop.f32.mrb[0].mxu0
  %v2882 = vadd.f32 0.0, %v2881
  %v2883 = vpop.f32.mrb[0].mxu0
  %2884 = vmatprep.mubr.f32.mxu0 %v2634
  %2885 = vmatmul.mubr.f32.gmra.mrb[0].mxu0 %v2633
  %v2886 = vpop.f32.mrb[0].mxu0
  %v2887 = vadd.f32 0.0, %v2886
  %v2888 = vpop.f32.mrb[0].mxu0
  %2889 = vmatprep.mubr.f32.mxu0 %v2636
  %2890 = vmatmul.mubr.f32.gmra.mrb[0].mxu0 %v2635
  %v2891 = vpop.f32.mrb[0].mxu0
  %v2892 = vadd.f32 0.0, %v2891
  %v2893 = vpop.f32.mrb[0].mxu0
  %2894 = vmatprep.mubr.f32.mxu0 %v2638
  %2895 = vmatmul.mubr.f32.gmra.mrb[0].mxu0 %v2637
  %v2896 = vpop.f32.mrb[0].mxu0
  %v2897 = vadd.f32 0.0, %v2896
  %v2898 = vpop.f32.mrb[0].mxu0
  %2899 = vmatprep.mubr.f32.mxu0 %v2640
  %2900 = vmatmul.mubr.f32.gmra.mrb[0].mxu0 %v2639
  %v2901 = vpop.f32.mrb[0].mxu0
  %v2902 = vadd.f32 0.0, %v2901
  %v2903 = vpop.f32.mrb[0].mxu0
  %2904 = vmatprep.mubr.f32.mxu0 %v2642
  %2905 = vmatmul.mubr.f32.gmra.mrb[0].mxu0 %v2641
  %v2906 = vpop.f32.mrb[0].mxu0
  %v2907 = vadd.f32 0.0, %v2906
  %v2908 = vpop.f32.mrb[0].mxu0
  %2909 = vmatprep.mubr.f32.mxu0 %v2644
  %2910 = vmatmul.mubr.f32.gmra.mrb[0].mxu0 %v2643
  %v2911 = vpop.f32.mrb[0].mxu0
  %v2912 = vadd.f32 0.0, %v2911
  %v2913 = vpop.f32.mrb[0].mxu0
  %2914 = vmatprep.mubr.f32.mxu0 %v2646
  %2915 = vmatmul.mubr.f32.gmra.mrb[0].mxu0 %v2645
  %v2916 = vpop.f32.mrb[0].mxu0
  %v2917 = vadd.f32 0.0, %v2916
  %v2918 = vpop.f32.mrb[0].mxu0
  %2919 = vmatprep.mubr.f32.mxu0 %v2648
  %2920 = vmatmul.mubr.f32.gmra.mrb[0].mxu0 %v2647
  %v2921 = vpop.f32.mrb[0].mxu0
  %v2922 = vadd.f32 0.0, %v2921
  %v2923 = vpop.f32.mrb[0].mxu0
  %2924 = vmatprep.mubr.f32.mxu0 %v2650
  %2925 = vmatmul.mubr.f32.gmra.mrb[0].mxu0 %v2649
  %v2926 = vpop.f32.mrb[0].mxu0
  %v2927 = vadd.f32 0.0, %v2926
  %v2928 = vpop.f32.mrb[0].mxu0
  %2929 = vmatprep.mubr.f32.mxu0 %v2652
  %2930 = vmatmul.mubr.f32.gmra.mrb[0].mxu0 %v2651
  %v2931 = vpop.f32.mrb[0].mxu0
  %v2932 = vadd.f32 0.0, %v2931
  %v2933 = vpop.f32.mrb[0].mxu0
  %2934 = vmatprep.mubr.f32.mxu0 %v2654
  %2935 = vmatmul.mubr.f32.gmra.mrb[0].mxu0 %v2653
  %v2936 = vpop.f32.mrb[0].mxu0
  %v2937 = vadd.f32 0.0, %v2936
  %v2938 = vpop.f32.mrb[0].mxu0
  %2939 = vmatprep.mubr.f32.mxu0 %v2656
  %2940 = vmatmul.mubr.f32.gmra.mrb[0].mxu0 %v2655
  %v2941 = vpop.f32.mrb[0].mxu0
  %v2942 = vadd.f32 0.0, %v2941
  %v2943 = vpop.f32.mrb[0].mxu0
  %2944 = vmatprep.mubr.f32.mxu0 %v2658
  %2945 = vmatmul.mubr.f32.gmra.mrb[0].mxu0 %v2657
  %v2946 = vpop.f32.mrb[0].mxu0
  %v2947 = vadd.f32 0.0, %v2946
  %v2948 = vpop.f32.mrb[0].mxu0
  %2949 = vmatprep.mubr.f32.mxu0 %v2660
  %2950 = vmatmul.mubr.f32.gmra.mrb[0].mxu0 %v2659
  %v2951 = vpop.f32.mrb[0].mxu0
  %v2952 = vadd.f32 0.0, %v2951
  %v2953 = vpop.f32.mrb[0].mxu0
  %2954 = vmatprep.mubr.f32.mxu0 %v2662
  %2955 = vmatmul.mubr.f32.gmra.mrb[0].mxu0 %v2661
  %v2956 = vpop.f32.mrb[0].mxu0
  %v2957 = vadd.f32 0.0, %v2956
  %v2958 = vpop.f32.mrb[0].mxu0
  %2959 = vmatprep.mubr.f32.mxu0 %v2664
  %2960 = vmatmul.mubr.f32.gmra.mrb[0].mxu0 %v2663
  %v2961 = vpop.f32.mrb[0].mxu0
  %v2962 = vadd.f32 0.0, %v2961
  %v2963 = vpop.f32.mrb[0].mxu0
  %2964 = vmatprep.mubr.f32.mxu0 %v2666
  %2965 = vmatmul.mubr.f32.gmra.mrb[0].mxu0 %v2665
  %v2966 = vpop.f32.mrb[0].mxu0
  %v2967 = vadd.f32 0.0, %v2966
  %v2968 = vpop.f32.mrb[0].mxu0
  %2969 = vmatprep.mubr.f32.mxu0 %v2668
  %2970 = vmatmul.mubr.f32.gmra.mrb[0].mxu0 %v2667
  %v2971 = vpop.f32.mrb[0].mxu0
  %v2972 = vadd.f32 0.0, %v2971
  %v2973 = vpop.f32.mrb[0].mxu0
  %2974 = vmatprep.mubr.f32.mxu0 %v2670
  %2975 = vmatmul.mubr.f32.gmra.mrb[0].mxu0 %v2669
  %v2976 = vpop.f32.mrb[0].mxu0
  %v2977 = vadd.f32 0.0, %v2976
  %v2978 = vpop.f32.mrb[0].mxu0
  %2979 = vmatprep.mubr.f32.mxu0 %v2672
  %2980 = vmatmul.mubr.f32.gmra.mrb[0].mxu0 %v2671
  %v2981 = vpop.f32.mrb[0].mxu0
  %v2982 = vadd.f32 0.0, %v2981
  %v2983 = vpop.f32.mrb[0].mxu0
  %2984 = vmatprep.mubr.f32.mxu0 %v2674
  %2985 = vmatmul.mubr.f32.gmra.mrb[0].mxu0 %v2673
  %v2986 = vpop.f32.mrb[0].mxu0
  %v2987 = vadd.f32 0.0, %v2986
  %v2988 = vpop.f32.mrb[0].mxu0
  %2989 = vmatprep.mubr.f32.mxu0 %v2676
  %2990 = vmatmul.mubr.f32.gmra.mrb[0].mxu0 %v2675
  %v2991 = vpop.f32.mrb[0].mxu0
  %v2992 = vadd.f32 0.0, %v2991
  %v2993 = vpop.f32.mrb[0].mxu0
  %2994 = vmatprep.mubr.f32.mxu0 %v2678
  %2995 = vmatmul.mubr.f32.gmra.mrb[0].mxu0 %v2677
  %v2996 = vpop.f32.mrb[0].mxu0
  %v2997 = vadd.f32 0.0, %v2996
  %v2998 = vpop.f32.mrb[0].mxu0
  %2999 = vdwg.mxu0
  %s3000 = scalar_lea.vmem %s1, 512
  %v3001 = vld [vmem:[%s3000] sm:$0xff]
  %v3002 = vld [vmem:[%s3000 + $0x8] sm:$0xff]
  %v3003 = vld [vmem:[%s3000 + $0x10] sm:$0xff]
  %v3004 = vld [vmem:[%s3000 + $0x18] sm:$0xff]
  %v3005 = vld [vmem:[%s3000 + $0x20] sm:$0xff]
  %v3006 = vld [vmem:[%s3000 + $0x28] sm:$0xff]
  %v3007 = vld [vmem:[%s3000 + $0x30] sm:$0xff]
  %v3008 = vld [vmem:[%s3000 + $0x38] sm:$0xff]
  %v3009 = vld [vmem:[%s3000 + $0x40] sm:$0xff]
  %v3010 = vld [vmem:[%s3000 + $0x48] sm:$0xff]
  %v3011 = vld [vmem:[%s3000 + $0x50] sm:$0xff]
  %v3012 = vld [vmem:[%s3000 + $0x58] sm:$0xff]
  %v3013 = vld [vmem:[%s3000 + $0x60] sm:$0xff]
  %v3014 = vld [vmem:[%s3000 + $0x68] sm:$0xff]
  %v3015 = vld [vmem:[%s3000 + $0x70] sm:$0xff]
  %v3016 = vld [vmem:[%s3000 + $0x78] sm:$0xff]
  %v3017 = vld [vmem:[%s3000 + $0x80] sm:$0xff]
  %v3018 = vld [vmem:[%s3000 + $0x88] sm:$0xff]
  %v3019 = vld [vmem:[%s3000 + $0x90] sm:$0xff]
  %v3020 = vld [vmem:[%s3000 + $0x98] sm:$0xff]
  %v3021 = vld [vmem:[%s3000 + $0xa0] sm:$0xff]
  %v3022 = vld [vmem:[%s3000 + $0xa8] sm:$0xff]
  %v3023 = vld [vmem:[%s3000 + $0xb0] sm:$0xff]
  %v3024 = vld [vmem:[%s3000 + $0xb8] sm:$0xff]
  %v3025 = vld [vmem:[%s3000 + $0xc0] sm:$0xff]
  %v3026 = vld [vmem:[%s3000 + $0xc8] sm:$0xff]
  %v3027 = vld [vmem:[%s3000 + $0xd0] sm:$0xff]
  %v3028 = vld [vmem:[%s3000 + $0xd8] sm:$0xff]
  %v3029 = vld [vmem:[%s3000 + $0xe0] sm:$0xff]
  %v3030 = vld [vmem:[%s3000 + $0xe8] sm:$0xff]
  %v3031 = vld [vmem:[%s3000 + $0xf0] sm:$0xff]
  %v3032 = vld [vmem:[%s3000 + $0xf8] sm:$0xff]
  %v3033 = vld [vmem:[%s3000 + $0x100] sm:$0xff]
  %v3034 = vld [vmem:[%s3000 + $0x108] sm:$0xff]
  %v3035 = vld [vmem:[%s3000 + $0x110] sm:$0xff]
  %v3036 = vld [vmem:[%s3000 + $0x118] sm:$0xff]
  %v3037 = vld [vmem:[%s3000 + $0x120] sm:$0xff]
  %v3038 = vld [vmem:[%s3000 + $0x128] sm:$0xff]
  %v3039 = vld [vmem:[%s3000 + $0x130] sm:$0xff]
  %v3040 = vld [vmem:[%s3000 + $0x138] sm:$0xff]
  %v3041 = vld [vmem:[%s3000 + $0x140] sm:$0xff]
  %v3042 = vld [vmem:[%s3000 + $0x148] sm:$0xff]
  %v3043 = vld [vmem:[%s3000 + $0x150] sm:$0xff]
  %v3044 = vld [vmem:[%s3000 + $0x158] sm:$0xff]
  %v3045 = vld [vmem:[%s3000 + $0x160] sm:$0xff]
  %v3046 = vld [vmem:[%s3000 + $0x168] sm:$0xff]
  %v3047 = vld [vmem:[%s3000 + $0x170] sm:$0xff]
  %v3048 = vld [vmem:[%s3000 + $0x178] sm:$0xff]
  %v3049 = vld [vmem:[%s3000 + $0x180] sm:$0xff]
  %v3050 = vld [vmem:[%s3000 + $0x188] sm:$0xff]
  %v3051 = vld [vmem:[%s3000 + $0x190] sm:$0xff]
  %v3052 = vld [vmem:[%s3000 + $0x198] sm:$0xff]
  %v3053 = vld [vmem:[%s3000 + $0x1a0] sm:$0xff]
  %v3054 = vld [vmem:[%s3000 + $0x1a8] sm:$0xff]
  %v3055 = vld [vmem:[%s3000 + $0x1b0] sm:$0xff]
  %v3056 = vld [vmem:[%s3000 + $0x1b8] sm:$0xff]
  %v3057 = vld [vmem:[%s3000 + $0x1c0] sm:$0xff]
  %v3058 = vld [vmem:[%s3000 + $0x1c8] sm:$0xff]
  %v3059 = vld [vmem:[%s3000 + $0x1d0] sm:$0xff]
  %v3060 = vld [vmem:[%s3000 + $0x1d8] sm:$0xff]
  %v3061 = vld [vmem:[%s3000 + $0x1e0] sm:$0xff]
  %v3062 = vld [vmem:[%s3000 + $0x1e8] sm:$0xff]
  %v3063 = vld [vmem:[%s3000 + $0x1f0] sm:$0xff]
  %v3064 = vld [vmem:[%s3000 + $0x1f8] sm:$0xff]
  %3065 = vrot.lane.b32.xlu0 %v1335, 112
  %v3066 = vpop.permute.xlu0 %3065
  %3067 = vrot.lane.b32.xlu0 %v1340, 112
  %v3068 = vpop.permute.xlu0 %3067
  %3069 = vrot.lane.b32.xlu0 %v1345, 112
  %v3070 = vpop.permute.xlu0 %3069
  %3071 = vrot.lane.b32.xlu0 %v1350, 112
  %v3072 = vpop.permute.xlu0 %3071
  %3073 = vrot.lane.b32.xlu0 %v1355, 112
  %v3074 = vpop.permute.xlu0 %3073
  %3075 = vrot.lane.b32.xlu0 %v1360, 112
  %v3076 = vpop.permute.xlu0 %3075
  %3077 = vrot.lane.b32.xlu0 %v1365, 112
  %v3078 = vpop.permute.xlu0 %3077
  %3079 = vrot.lane.b32.xlu0 %v1370, 112
  %v3080 = vpop.permute.xlu0 %3079
  %3081 = vrot.lane.b32.xlu0 %v1375, 112
  %v3082 = vpop.permute.xlu0 %3081
  %3083 = vrot.lane.b32.xlu0 %v1380, 112
  %v3084 = vpop.permute.xlu0 %3083
  %3085 = vrot.lane.b32.xlu0 %v1385, 112
  %v3086 = vpop.permute.xlu0 %3085
  %3087 = vrot.lane.b32.xlu0 %v1390, 112
  %v3088 = vpop.permute.xlu0 %3087
  %3089 = vrot.lane.b32.xlu0 %v1395, 112
  %v3090 = vpop.permute.xlu0 %3089
  %3091 = vrot.lane.b32.xlu0 %v1400, 112
  %v3092 = vpop.permute.xlu0 %3091
  %3093 = vrot.lane.b32.xlu0 %v1405, 112
  %v3094 = vpop.permute.xlu0 %3093
  %3095 = vrot.lane.b32.xlu0 %v1410, 112
  %v3096 = vpop.permute.xlu0 %3095
  %3097 = vrot.lane.b32.xlu0 %v1415, 112
  %v3098 = vpop.permute.xlu0 %3097
  %3099 = vrot.lane.b32.xlu0 %v1420, 112
  %v3100 = vpop.permute.xlu0 %3099
  %3101 = vrot.lane.b32.xlu0 %v1425, 112
  %v3102 = vpop.permute.xlu0 %3101
  %3103 = vrot.lane.b32.xlu0 %v1430, 112
  %v3104 = vpop.permute.xlu0 %3103
  %3105 = vrot.lane.b32.xlu0 %v1435, 112
  %v3106 = vpop.permute.xlu0 %3105
  %3107 = vrot.lane.b32.xlu0 %v1440, 112
  %v3108 = vpop.permute.xlu0 %3107
  %3109 = vrot.lane.b32.xlu0 %v1445, 112
  %v3110 = vpop.permute.xlu0 %3109
  %3111 = vrot.lane.b32.xlu0 %v1450, 112
  %v3112 = vpop.permute.xlu0 %3111
  %3113 = vrot.lane.b32.xlu0 %v1455, 112
  %v3114 = vpop.permute.xlu0 %3113
  %3115 = vrot.lane.b32.xlu0 %v1460, 112
  %v3116 = vpop.permute.xlu0 %3115
  %3117 = vrot.lane.b32.xlu0 %v1465, 112
  %v3118 = vpop.permute.xlu0 %3117
  %3119 = vrot.lane.b32.xlu0 %v1470, 112
  %v3120 = vpop.permute.xlu0 %3119
  %3121 = vrot.lane.b32.xlu0 %v1475, 112
  %v3122 = vpop.permute.xlu0 %3121
  %3123 = vrot.lane.b32.xlu0 %v1480, 112
  %v3124 = vpop.permute.xlu0 %3123
  %3125 = vrot.lane.b32.xlu0 %v1485, 112
  %v3126 = vpop.permute.xlu0 %3125
  %3127 = vrot.lane.b32.xlu0 %v1490, 112
  %v3128 = vpop.permute.xlu0 %3127
  %3129 = vrot.lane.b32.xlu0 %v1335, 80
  %v3130 = vpop.permute.xlu0 %3129
  %3131 = vrot.lane.b32.xlu0 %v1340, 80
  %v3132 = vpop.permute.xlu0 %3131
  %3133 = vrot.lane.b32.xlu0 %v1345, 80
  %v3134 = vpop.permute.xlu0 %3133
  %3135 = vrot.lane.b32.xlu0 %v1350, 80
  %v3136 = vpop.permute.xlu0 %3135
  %3137 = vrot.lane.b32.xlu0 %v1355, 80
  %v3138 = vpop.permute.xlu0 %3137
  %3139 = vrot.lane.b32.xlu0 %v1360, 80
  %v3140 = vpop.permute.xlu0 %3139
  %3141 = vrot.lane.b32.xlu0 %v1365, 80
  %v3142 = vpop.permute.xlu0 %3141
  %3143 = vrot.lane.b32.xlu0 %v1370, 80
  %v3144 = vpop.permute.xlu0 %3143
  %3145 = vrot.lane.b32.xlu0 %v1375, 80
  %v3146 = vpop.permute.xlu0 %3145
  %3147 = vrot.lane.b32.xlu0 %v1380, 80
  %v3148 = vpop.permute.xlu0 %3147
  %3149 = vrot.lane.b32.xlu0 %v1385, 80
  %v3150 = vpop.permute.xlu0 %3149
  %3151 = vrot.lane.b32.xlu0 %v1390, 80
  %v3152 = vpop.permute.xlu0 %3151
  %3153 = vrot.lane.b32.xlu0 %v1395, 80
  %v3154 = vpop.permute.xlu0 %3153
  %3155 = vrot.lane.b32.xlu0 %v1400, 80
  %v3156 = vpop.permute.xlu0 %3155
  %3157 = vrot.lane.b32.xlu0 %v1405, 80
  %v3158 = vpop.permute.xlu0 %3157
  %3159 = vrot.lane.b32.xlu0 %v1410, 80
  %v3160 = vpop.permute.xlu0 %3159
  %3161 = vrot.lane.b32.xlu0 %v1415, 80
  %v3162 = vpop.permute.xlu0 %3161
  %3163 = vrot.lane.b32.xlu0 %v1420, 80
  %v3164 = vpop.permute.xlu0 %3163
  %3165 = vrot.lane.b32.xlu0 %v1425, 80
  %v3166 = vpop.permute.xlu0 %3165
  %3167 = vrot.lane.b32.xlu0 %v1430, 80
  %v3168 = vpop.permute.xlu0 %3167
  %3169 = vrot.lane.b32.xlu0 %v1435, 80
  %v3170 = vpop.permute.xlu0 %3169
  %3171 = vrot.lane.b32.xlu0 %v1440, 80
  %v3172 = vpop.permute.xlu0 %3171
  %3173 = vrot.lane.b32.xlu0 %v1445, 80
  %v3174 = vpop.permute.xlu0 %3173
  %3175 = vrot.lane.b32.xlu0 %v1450, 80
  %v3176 = vpop.permute.xlu0 %3175
  %3177 = vrot.lane.b32.xlu0 %v1455, 80
  %v3178 = vpop.permute.xlu0 %3177
  %3179 = vrot.lane.b32.xlu0 %v1460, 80
  %v3180 = vpop.permute.xlu0 %3179
  %3181 = vrot.lane.b32.xlu0 %v1465, 80
  %v3182 = vpop.permute.xlu0 %3181
  %3183 = vrot.lane.b32.xlu0 %v1470, 80
  %v3184 = vpop.permute.xlu0 %3183
  %3185 = vrot.lane.b32.xlu0 %v1475, 80
  %v3186 = vpop.permute.xlu0 %3185
  %3187 = vrot.lane.b32.xlu0 %v1480, 80
  %v3188 = vpop.permute.xlu0 %3187
  %3189 = vrot.lane.b32.xlu0 %v1485, 80
  %v3190 = vpop.permute.xlu0 %3189
  %3191 = vrot.lane.b32.xlu0 %v1490, 80
  %v3192 = vpop.permute.xlu0 %3191
  %v3193 = vsel %vm1813, %v3066, 0
  %v3195 = vsel %vm1813, %v3068, 0
  %v3197 = vsel %vm1813, %v3070, 0
  %v3199 = vsel %vm1813, %v3072, 0
  %v3201 = vsel %vm1813, %v3074, 0
  %v3203 = vsel %vm1813, %v3076, 0
  %v3205 = vsel %vm1813, %v3078, 0
  %v3207 = vsel %vm1813, %v3080, 0
  %v3209 = vsel %vm1813, %v3082, 0
  %v3211 = vsel %vm1813, %v3084, 0
  %v3213 = vsel %vm1813, %v3086, 0
  %v3215 = vsel %vm1813, %v3088, 0
  %v3217 = vsel %vm1813, %v3090, 0
  %v3219 = vsel %vm1813, %v3092, 0
  %v3221 = vsel %vm1813, %v3094, 0
  %v3223 = vsel %vm1813, %v3096, 0
  %v3225 = vsel %vm1813, %v3098, 0
  %v3227 = vsel %vm1813, %v3100, 0
  %v3229 = vsel %vm1813, %v3102, 0
  %v3231 = vsel %vm1813, %v3104, 0
  %v3233 = vsel %vm1813, %v3106, 0
  %v3235 = vsel %vm1813, %v3108, 0
  %v3237 = vsel %vm1813, %v3110, 0
  %v3239 = vsel %vm1813, %v3112, 0
  %v3241 = vsel %vm1813, %v3114, 0
  %v3243 = vsel %vm1813, %v3116, 0
  %v3245 = vsel %vm1813, %v3118, 0
  %v3247 = vsel %vm1813, %v3120, 0
  %v3249 = vsel %vm1813, %v3122, 0
  %v3251 = vsel %vm1813, %v3124, 0
  %v3253 = vsel %vm1813, %v3126, 0
  %v3255 = vsel %vm1813, %v3128, 0
  %v3257 = vsel %vm1813, %v3130, 0
  %v3259 = vsel %vm1813, %v3132, 0
  %v3261 = vsel %vm1813, %v3134, 0
  %v3263 = vsel %vm1813, %v3136, 0
  %v3265 = vsel %vm1813, %v3138, 0
  %v3267 = vsel %vm1813, %v3140, 0
  %v3269 = vsel %vm1813, %v3142, 0
  %v3271 = vsel %vm1813, %v3144, 0
  %v3273 = vsel %vm1813, %v3146, 0
  %v3275 = vsel %vm1813, %v3148, 0
  %v3277 = vsel %vm1813, %v3150, 0
  %v3279 = vsel %vm1813, %v3152, 0
  %v3281 = vsel %vm1813, %v3154, 0
  %v3283 = vsel %vm1813, %v3156, 0
  %v3285 = vsel %vm1813, %v3158, 0
  %v3287 = vsel %vm1813, %v3160, 0
  %v3289 = vsel %vm1813, %v3162, 0
  %v3291 = vsel %vm1813, %v3164, 0
  %v3293 = vsel %vm1813, %v3166, 0
  %v3295 = vsel %vm1813, %v3168, 0
  %v3297 = vsel %vm1813, %v3170, 0
  %v3299 = vsel %vm1813, %v3172, 0
  %v3301 = vsel %vm1813, %v3174, 0
  %v3303 = vsel %vm1813, %v3176, 0
  %v3305 = vsel %vm1813, %v3178, 0
  %v3307 = vsel %vm1813, %v3180, 0
  %v3309 = vsel %vm1813, %v3182, 0
  %v3311 = vsel %vm1813, %v3184, 0
  %v3313 = vsel %vm1813, %v3186, 0
  %v3315 = vsel %vm1813, %v3188, 0
  %v3317 = vsel %vm1813, %v3190, 0
  %v3319 = vsel %vm1813, %v3192, 0
  %3321 = vmatprep.subr.mxu0 0.0
  %3322 = vmatpush1.xpose.msra.mxu0 %v3257
  %3323 = vmatprep.subr.mxu0 0.0
  %3324 = vmatpush1.xpose.msra.mxu0 %v3259
  %3325 = vmatprep.subr.mxu0 0.0
  %3326 = vmatpush1.xpose.msra.mxu0 %v3261
  %3327 = vmatprep.subr.mxu0 0.0
  %3328 = vmatpush1.xpose.msra.mxu0 %v3263
  %3329 = vmatprep.subr.mxu0 0.0
  %3330 = vmatpush1.xpose.msra.mxu0 %v3265
  %3331 = vmatprep.subr.mxu0 0.0
  %3332 = vmatpush1.xpose.msra.mxu0 %v3267
  %3333 = vmatprep.subr.mxu0 0.0
  %3334 = vmatpush1.xpose.msra.mxu0 %v3269
  %3335 = vmatprep.subr.mxu0 0.0
  %3336 = vmatpush1.xpose.msra.mxu0 %v3271
  %3337 = vmatprep.subr.mxu0 0.0
  %3338 = vmatpush1.xpose.msra.mxu0 %v3273
  %3339 = vmatprep.subr.mxu0 0.0
  %3340 = vmatpush1.xpose.msra.mxu0 %v3275
  %3341 = vmatprep.subr.mxu0 0.0
  %3342 = vmatpush1.xpose.msra.mxu0 %v3277
  %3343 = vmatprep.subr.mxu0 0.0
  %3344 = vmatpush1.xpose.msra.mxu0 %v3279
  %3345 = vmatprep.subr.mxu0 0.0
  %3346 = vmatpush1.xpose.msra.mxu0 %v3281
  %3347 = vmatprep.subr.mxu0 0.0
  %3348 = vmatpush1.xpose.msra.mxu0 %v3283
  %3349 = vmatprep.subr.mxu0 0.0
  %3350 = vmatpush1.xpose.msra.mxu0 %v3285
  %3351 = vmatprep.subr.mxu0 0.0
  %3352 = vmatpush1.xpose.msra.mxu0 %v3287
  %3353 = vmatprep.subr.mxu0 0.0
  %3354 = vmatpush1.xpose.msra.mxu0 %v3289
  %3355 = vmatprep.subr.mxu0 0.0
  %3356 = vmatpush1.xpose.msra.mxu0 %v3291
  %3357 = vmatprep.subr.mxu0 0.0
  %3358 = vmatpush1.xpose.msra.mxu0 %v3293
  %3359 = vmatprep.subr.mxu0 0.0
  %3360 = vmatpush1.xpose.msra.mxu0 %v3295
  %3361 = vmatprep.subr.mxu0 0.0
  %3362 = vmatpush1.xpose.msra.mxu0 %v3297
  %3363 = vmatprep.subr.mxu0 0.0
  %3364 = vmatpush1.xpose.msra.mxu0 %v3299
  %3365 = vmatprep.subr.mxu0 0.0
  %3366 = vmatpush1.xpose.msra.mxu0 %v3301
  %3367 = vmatprep.subr.mxu0 0.0
  %3368 = vmatpush1.xpose.msra.mxu0 %v3303
  %3369 = vmatprep.subr.mxu0 0.0
  %3370 = vmatpush1.xpose.msra.mxu0 %v3305
  %3371 = vmatprep.subr.mxu0 0.0
  %3372 = vmatpush1.xpose.msra.mxu0 %v3307
  %3373 = vmatprep.subr.mxu0 0.0
  %3374 = vmatpush1.xpose.msra.mxu0 %v3309
  %3375 = vmatprep.subr.mxu0 0.0
  %3376 = vmatpush1.xpose.msra.mxu0 %v3311
  %3377 = vmatprep.subr.mxu0 0.0
  %3378 = vmatpush1.xpose.msra.mxu0 %v3313
  %3379 = vmatprep.subr.mxu0 0.0
  %3380 = vmatpush1.xpose.msra.mxu0 %v3315
  %3381 = vmatprep.subr.mxu0 0.0
  %3382 = vmatpush1.xpose.msra.mxu0 %v3317
  %3383 = vmatprep.subr.mxu0 0.0
  %3384 = vmatpush1.xpose.msra.mxu0 %v3319
  %3385 = vmatprep.mubr.f32.mxu0 0.0
  %3386 = vmatmul.mubr.f32.gmra.mrb[0].mxu0 %v3193
  %v3387 = vpop.f32.mrb[0].mxu0
  %v3388 = vadd.f32 %v3001, %v3387
  %v3389 = vpop.f32.mrb[0].mxu0
  %v3390 = vadd.f32 %v3002, %v3389
  %3391 = vmatprep.mubr.f32.mxu0 0.0
  %3392 = vmatmul.mubr.f32.gmra.mrb[0].mxu0 %v3195
  %v3393 = vpop.f32.mrb[0].mxu0
  %v3394 = vadd.f32 %v3003, %v3393
  %v3395 = vpop.f32.mrb[0].mxu0
  %v3396 = vadd.f32 %v3004, %v3395
  %3397 = vmatprep.mubr.f32.mxu0 0.0
  %3398 = vmatmul.mubr.f32.gmra.mrb[0].mxu0 %v3197
  %v3399 = vpop.f32.mrb[0].mxu0
  %v3400 = vadd.f32 %v3005, %v3399
  %v3401 = vpop.f32.mrb[0].mxu0
  %v3402 = vadd.f32 %v3006, %v3401
  %3403 = vmatprep.mubr.f32.mxu0 0.0
  %3404 = vmatmul.mubr.f32.gmra.mrb[0].mxu0 %v3199
  %v3405 = vpop.f32.mrb[0].mxu0
  %v3406 = vadd.f32 %v3007, %v3405
  %v3407 = vpop.f32.mrb[0].mxu0
  %v3408 = vadd.f32 %v3008, %v3407
  %3409 = vmatprep.mubr.f32.mxu0 0.0
  %3410 = vmatmul.mubr.f32.gmra.mrb[0].mxu0 %v3201
  %v3411 = vpop.f32.mrb[0].mxu0
  %v3412 = vadd.f32 %v3009, %v3411
  %v3413 = vpop.f32.mrb[0].mxu0
  %v3414 = vadd.f32 %v3010, %v3413
  %3415 = vmatprep.mubr.f32.mxu0 0.0
  %3416 = vmatmul.mubr.f32.gmra.mrb[0].mxu0 %v3203
  %v3417 = vpop.f32.mrb[0].mxu0
  %v3418 = vadd.f32 %v3011, %v3417
  %v3419 = vpop.f32.mrb[0].mxu0
  %v3420 = vadd.f32 %v3012, %v3419
  %3421 = vmatprep.mubr.f32.mxu0 0.0
  %3422 = vmatmul.mubr.f32.gmra.mrb[0].mxu0 %v3205
  %v3423 = vpop.f32.mrb[0].mxu0
  %v3424 = vadd.f32 %v3013, %v3423
  %v3425 = vpop.f32.mrb[0].mxu0
  %v3426 = vadd.f32 %v3014, %v3425
  %3427 = vmatprep.mubr.f32.mxu0 0.0
  %3428 = vmatmul.mubr.f32.gmra.mrb[0].mxu0 %v3207
  %v3429 = vpop.f32.mrb[0].mxu0
  %v3430 = vadd.f32 %v3015, %v3429
  %v3431 = vpop.f32.mrb[0].mxu0
  %v3432 = vadd.f32 %v3016, %v3431
  %3433 = vmatprep.mubr.f32.mxu0 0.0
  %3434 = vmatmul.mubr.f32.gmra.mrb[0].mxu0 %v3209
  %v3435 = vpop.f32.mrb[0].mxu0
  %v3436 = vadd.f32 %v3017, %v3435
  %v3437 = vpop.f32.mrb[0].mxu0
  %v3438 = vadd.f32 %v3018, %v3437
  %3439 = vmatprep.mubr.f32.mxu0 0.0
  %3440 = vmatmul.mubr.f32.gmra.mrb[0].mxu0 %v3211
  %v3441 = vpop.f32.mrb[0].mxu0
  %v3442 = vadd.f32 %v3019, %v3441
  %v3443 = vpop.f32.mrb[0].mxu0
  %v3444 = vadd.f32 %v3020, %v3443
  %3445 = vmatprep.mubr.f32.mxu0 0.0
  %3446 = vmatmul.mubr.f32.gmra.mrb[0].mxu0 %v3213
  %v3447 = vpop.f32.mrb[0].mxu0
  %v3448 = vadd.f32 %v3021, %v3447
  %v3449 = vpop.f32.mrb[0].mxu0
  %v3450 = vadd.f32 %v3022, %v3449
  %3451 = vmatprep.mubr.f32.mxu0 0.0
  %3452 = vmatmul.mubr.f32.gmra.mrb[0].mxu0 %v3215
  %v3453 = vpop.f32.mrb[0].mxu0
  %v3454 = vadd.f32 %v3023, %v3453
  %v3455 = vpop.f32.mrb[0].mxu0
  %v3456 = vadd.f32 %v3024, %v3455
  %3457 = vmatprep.mubr.f32.mxu0 0.0
  %3458 = vmatmul.mubr.f32.gmra.mrb[0].mxu0 %v3217
  %v3459 = vpop.f32.mrb[0].mxu0
  %v3460 = vadd.f32 %v3025, %v3459
  %v3461 = vpop.f32.mrb[0].mxu0
  %v3462 = vadd.f32 %v3026, %v3461
  %3463 = vmatprep.mubr.f32.mxu0 0.0
  %3464 = vmatmul.mubr.f32.gmra.mrb[0].mxu0 %v3219
  %v3465 = vpop.f32.mrb[0].mxu0
  %v3466 = vadd.f32 %v3027, %v3465
  %v3467 = vpop.f32.mrb[0].mxu0
  %v3468 = vadd.f32 %v3028, %v3467
  %3469 = vmatprep.mubr.f32.mxu0 0.0
  %3470 = vmatmul.mubr.f32.gmra.mrb[0].mxu0 %v3221
  %v3471 = vpop.f32.mrb[0].mxu0
  %v3472 = vadd.f32 %v3029, %v3471
  %v3473 = vpop.f32.mrb[0].mxu0
  %v3474 = vadd.f32 %v3030, %v3473
  %3475 = vmatprep.mubr.f32.mxu0 0.0
  %3476 = vmatmul.mubr.f32.gmra.mrb[0].mxu0 %v3223
  %v3477 = vpop.f32.mrb[0].mxu0
  %v3478 = vadd.f32 %v3031, %v3477
  %v3479 = vpop.f32.mrb[0].mxu0
  %v3480 = vadd.f32 %v3032, %v3479
  %3481 = vmatprep.mubr.f32.mxu0 0.0
  %3482 = vmatmul.mubr.f32.gmra.mrb[0].mxu0 %v3225
  %v3483 = vpop.f32.mrb[0].mxu0
  %v3484 = vadd.f32 %v3033, %v3483
  %v3485 = vpop.f32.mrb[0].mxu0
  %v3486 = vadd.f32 %v3034, %v3485
  %3487 = vmatprep.mubr.f32.mxu0 0.0
  %3488 = vmatmul.mubr.f32.gmra.mrb[0].mxu0 %v3227
  %v3489 = vpop.f32.mrb[0].mxu0
  %v3490 = vadd.f32 %v3035, %v3489
  %v3491 = vpop.f32.mrb[0].mxu0
  %v3492 = vadd.f32 %v3036, %v3491
  %3493 = vmatprep.mubr.f32.mxu0 0.0
  %3494 = vmatmul.mubr.f32.gmra.mrb[0].mxu0 %v3229
  %v3495 = vpop.f32.mrb[0].mxu0
  %v3496 = vadd.f32 %v3037, %v3495
  %v3497 = vpop.f32.mrb[0].mxu0
  %v3498 = vadd.f32 %v3038, %v3497
  %3499 = vmatprep.mubr.f32.mxu0 0.0
  %3500 = vmatmul.mubr.f32.gmra.mrb[0].mxu0 %v3231
  %v3501 = vpop.f32.mrb[0].mxu0
  %v3502 = vadd.f32 %v3039, %v3501
  %v3503 = vpop.f32.mrb[0].mxu0
  %v3504 = vadd.f32 %v3040, %v3503
  %3505 = vmatprep.mubr.f32.mxu0 0.0
  %3506 = vmatmul.mubr.f32.gmra.mrb[0].mxu0 %v3233
  %v3507 = vpop.f32.mrb[0].mxu0
  %v3508 = vadd.f32 %v3041, %v3507
  %v3509 = vpop.f32.mrb[0].mxu0
  %v3510 = vadd.f32 %v3042, %v3509
  %3511 = vmatprep.mubr.f32.mxu0 0.0
  %3512 = vmatmul.mubr.f32.gmra.mrb[0].mxu0 %v3235
  %v3513 = vpop.f32.mrb[0].mxu0
  %v3514 = vadd.f32 %v3043, %v3513
  %v3515 = vpop.f32.mrb[0].mxu0
  %v3516 = vadd.f32 %v3044, %v3515
  %3517 = vmatprep.mubr.f32.mxu0 0.0
  %3518 = vmatmul.mubr.f32.gmra.mrb[0].mxu0 %v3237
  %v3519 = vpop.f32.mrb[0].mxu0
  %v3520 = vadd.f32 %v3045, %v3519
  %v3521 = vpop.f32.mrb[0].mxu0
  %v3522 = vadd.f32 %v3046, %v3521
  %3523 = vmatprep.mubr.f32.mxu0 0.0
  %3524 = vmatmul.mubr.f32.gmra.mrb[0].mxu0 %v3239
  %v3525 = vpop.f32.mrb[0].mxu0
  %v3526 = vadd.f32 %v3047, %v3525
  %v3527 = vpop.f32.mrb[0].mxu0
  %v3528 = vadd.f32 %v3048, %v3527
  %3529 = vmatprep.mubr.f32.mxu0 0.0
  %3530 = vmatmul.mubr.f32.gmra.mrb[0].mxu0 %v3241
  %v3531 = vpop.f32.mrb[0].mxu0
  %v3532 = vadd.f32 %v3049, %v3531
  %v3533 = vpop.f32.mrb[0].mxu0
  %v3534 = vadd.f32 %v3050, %v3533
  %3535 = vmatprep.mubr.f32.mxu0 0.0
  %3536 = vmatmul.mubr.f32.gmra.mrb[0].mxu0 %v3243
  %v3537 = vpop.f32.mrb[0].mxu0
  %v3538 = vadd.f32 %v3051, %v3537
  %v3539 = vpop.f32.mrb[0].mxu0
  %v3540 = vadd.f32 %v3052, %v3539
  %3541 = vmatprep.mubr.f32.mxu0 0.0
  %3542 = vmatmul.mubr.f32.gmra.mrb[0].mxu0 %v3245
  %v3543 = vpop.f32.mrb[0].mxu0
  %v3544 = vadd.f32 %v3053, %v3543
  %v3545 = vpop.f32.mrb[0].mxu0
  %v3546 = vadd.f32 %v3054, %v3545
  %3547 = vmatprep.mubr.f32.mxu0 0.0
  %3548 = vmatmul.mubr.f32.gmra.mrb[0].mxu0 %v3247
  %v3549 = vpop.f32.mrb[0].mxu0
  %v3550 = vadd.f32 %v3055, %v3549
  %v3551 = vpop.f32.mrb[0].mxu0
  %v3552 = vadd.f32 %v3056, %v3551
  %3553 = vmatprep.mubr.f32.mxu0 0.0
  %3554 = vmatmul.mubr.f32.gmra.mrb[0].mxu0 %v3249
  %v3555 = vpop.f32.mrb[0].mxu0
  %v3556 = vadd.f32 %v3057, %v3555
  %v3557 = vpop.f32.mrb[0].mxu0
  %v3558 = vadd.f32 %v3058, %v3557
  %3559 = vmatprep.mubr.f32.mxu0 0.0
  %3560 = vmatmul.mubr.f32.gmra.mrb[0].mxu0 %v3251
  %v3561 = vpop.f32.mrb[0].mxu0
  %v3562 = vadd.f32 %v3059, %v3561
  %v3563 = vpop.f32.mrb[0].mxu0
  %v3564 = vadd.f32 %v3060, %v3563
  %3565 = vmatprep.mubr.f32.mxu0 0.0
  %3566 = vmatmul.mubr.f32.gmra.mrb[0].mxu0 %v3253
  %v3567 = vpop.f32.mrb[0].mxu0
  %v3568 = vadd.f32 %v3061, %v3567
  %v3569 = vpop.f32.mrb[0].mxu0
  %v3570 = vadd.f32 %v3062, %v3569
  %3571 = vmatprep.mubr.f32.mxu0 0.0
  %3572 = vmatmul.mubr.f32.gmra.mrb[0].mxu0 %v3255
  %v3573 = vpop.f32.mrb[0].mxu0
  %v3574 = vadd.f32 %v3063, %v3573
  %v3575 = vpop.f32.mrb[0].mxu0
  %v3576 = vadd.f32 %v3064, %v3575
  %3577 = vdwg.mxu0
  %v3578 = vmax.f32 %v3388, %v3390
  %3579 = vmax.xlane.f32.xlu0 %v3578
  %v3580 = vpop.xlane.xlu0 %3579
  %v3581 = vmax.f32 %v3394, %v3396
  %3582 = vmax.xlane.f32.xlu0 %v3581
  %v3583 = vpop.xlane.xlu0 %3582
  %v3584 = vmax.f32 %v3400, %v3402
  %3585 = vmax.xlane.f32.xlu0 %v3584
  %v3586 = vpop.xlane.xlu0 %3585
  %v3587 = vmax.f32 %v3406, %v3408
  %3588 = vmax.xlane.f32.xlu0 %v3587
  %v3589 = vpop.xlane.xlu0 %3588
  %v3590 = vmax.f32 %v3412, %v3414
  %3591 = vmax.xlane.f32.xlu0 %v3590
  %v3592 = vpop.xlane.xlu0 %3591
  %v3593 = vmax.f32 %v3418, %v3420
  %3594 = vmax.xlane.f32.xlu0 %v3593
  %v3595 = vpop.xlane.xlu0 %3594
  %v3596 = vmax.f32 %v3424, %v3426
  %3597 = vmax.xlane.f32.xlu0 %v3596
  %v3598 = vpop.xlane.xlu0 %3597
  %v3599 = vmax.f32 %v3430, %v3432
  %3600 = vmax.xlane.f32.xlu0 %v3599
  %v3601 = vpop.xlane.xlu0 %3600
  %v3602 = vmax.f32 %v3436, %v3438
  %3603 = vmax.xlane.f32.xlu0 %v3602
  %v3604 = vpop.xlane.xlu0 %3603
  %v3605 = vmax.f32 %v3442, %v3444
  %3606 = vmax.xlane.f32.xlu0 %v3605
  %v3607 = vpop.xlane.xlu0 %3606
  %v3608 = vmax.f32 %v3448, %v3450
  %3609 = vmax.xlane.f32.xlu0 %v3608
  %v3610 = vpop.xlane.xlu0 %3609
  %v3611 = vmax.f32 %v3454, %v3456
  %3612 = vmax.xlane.f32.xlu0 %v3611
  %v3613 = vpop.xlane.xlu0 %3612
  %v3614 = vmax.f32 %v3460, %v3462
  %3615 = vmax.xlane.f32.xlu0 %v3614
  %v3616 = vpop.xlane.xlu0 %3615
  %v3617 = vmax.f32 %v3466, %v3468
  %3618 = vmax.xlane.f32.xlu0 %v3617
  %v3619 = vpop.xlane.xlu0 %3618
  %v3620 = vmax.f32 %v3472, %v3474
  %3621 = vmax.xlane.f32.xlu0 %v3620
  %v3622 = vpop.xlane.xlu0 %3621
  %v3623 = vmax.f32 %v3478, %v3480
  %3624 = vmax.xlane.f32.xlu0 %v3623
  %v3625 = vpop.xlane.xlu0 %3624
  %v3626 = vmax.f32 %v3484, %v3486
  %3627 = vmax.xlane.f32.xlu0 %v3626
  %v3628 = vpop.xlane.xlu0 %3627
  %v3629 = vmax.f32 %v3490, %v3492
  %3630 = vmax.xlane.f32.xlu0 %v3629
  %v3631 = vpop.xlane.xlu0 %3630
  %v3632 = vmax.f32 %v3496, %v3498
  %3633 = vmax.xlane.f32.xlu0 %v3632
  %v3634 = vpop.xlane.xlu0 %3633
  %v3635 = vmax.f32 %v3502, %v3504
  %3636 = vmax.xlane.f32.xlu0 %v3635
  %v3637 = vpop.xlane.xlu0 %3636
  %v3638 = vmax.f32 %v3508, %v3510
  %3639 = vmax.xlane.f32.xlu0 %v3638
  %v3640 = vpop.xlane.xlu0 %3639
  %v3641 = vmax.f32 %v3514, %v3516
  %3642 = vmax.xlane.f32.xlu0 %v3641
  %v3643 = vpop.xlane.xlu0 %3642
  %v3644 = vmax.f32 %v3520, %v3522
  %3645 = vmax.xlane.f32.xlu0 %v3644
  %v3646 = vpop.xlane.xlu0 %3645
  %v3647 = vmax.f32 %v3526, %v3528
  %3648 = vmax.xlane.f32.xlu0 %v3647
  %v3649 = vpop.xlane.xlu0 %3648
  %v3650 = vmax.f32 %v3532, %v3534
  %3651 = vmax.xlane.f32.xlu0 %v3650
  %v3652 = vpop.xlane.xlu0 %3651
  %v3653 = vmax.f32 %v3538, %v3540
  %3654 = vmax.xlane.f32.xlu0 %v3653
  %v3655 = vpop.xlane.xlu0 %3654
  %v3656 = vmax.f32 %v3544, %v3546
  %3657 = vmax.xlane.f32.xlu0 %v3656
  %v3658 = vpop.xlane.xlu0 %3657
  %v3659 = vmax.f32 %v3550, %v3552
  %3660 = vmax.xlane.f32.xlu0 %v3659
  %v3661 = vpop.xlane.xlu0 %3660
  %v3662 = vmax.f32 %v3556, %v3558
  %3663 = vmax.xlane.f32.xlu0 %v3662
  %v3664 = vpop.xlane.xlu0 %3663
  %v3665 = vmax.f32 %v3562, %v3564
  %3666 = vmax.xlane.f32.xlu0 %v3665
  %v3667 = vpop.xlane.xlu0 %3666
  %v3668 = vmax.f32 %v3568, %v3570
  %3669 = vmax.xlane.f32.xlu0 %v3668
  %v3670 = vpop.xlane.xlu0 %3669
  %v3671 = vmax.f32 %v3574, %v3576
  %3672 = vmax.xlane.f32.xlu0 %v3671
  %v3673 = vpop.xlane.xlu0 %3672
  %v3674 = vsub.f32 %v3388, %v3580
  %v3675 = vsub.f32 %v3390, %v3580
  %v3676 = vsub.f32 %v3394, %v3583
  %v3677 = vsub.f32 %v3396, %v3583
  %v3678 = vsub.f32 %v3400, %v3586
  %v3679 = vsub.f32 %v3402, %v3586
  %v3680 = vsub.f32 %v3406, %v3589
  %v3681 = vsub.f32 %v3408, %v3589
  %v3682 = vsub.f32 %v3412, %v3592
  %v3683 = vsub.f32 %v3414, %v3592
  %v3684 = vsub.f32 %v3418, %v3595
  %v3685 = vsub.f32 %v3420, %v3595
  %v3686 = vsub.f32 %v3424, %v3598
  %v3687 = vsub.f32 %v3426, %v3598
  %v3688 = vsub.f32 %v3430, %v3601
  %v3689 = vsub.f32 %v3432, %v3601
  %v3690 = vsub.f32 %v3436, %v3604
  %v3691 = vsub.f32 %v3438, %v3604
  %v3692 = vsub.f32 %v3442, %v3607
  %v3693 = vsub.f32 %v3444, %v3607
  %v3694 = vsub.f32 %v3448, %v3610
  %v3695 = vsub.f32 %v3450, %v3610
  %v3696 = vsub.f32 %v3454, %v3613
  %v3697 = vsub.f32 %v3456, %v3613
  %v3698 = vsub.f32 %v3460, %v3616
  %v3699 = vsub.f32 %v3462, %v3616
  %v3700 = vsub.f32 %v3466, %v3619
  %v3701 = vsub.f32 %v3468, %v3619
  %v3702 = vsub.f32 %v3472, %v3622
  %v3703 = vsub.f32 %v3474, %v3622
  %v3704 = vsub.f32 %v3478, %v3625
  %v3705 = vsub.f32 %v3480, %v3625
  %v3706 = vsub.f32 %v3484, %v3628
  %v3707 = vsub.f32 %v3486, %v3628
  %v3708 = vsub.f32 %v3490, %v3631
  %v3709 = vsub.f32 %v3492, %v3631
  %v3710 = vsub.f32 %v3496, %v3634
  %v3711 = vsub.f32 %v3498, %v3634
  %v3712 = vsub.f32 %v3502, %v3637
  %v3713 = vsub.f32 %v3504, %v3637
  %v3714 = vsub.f32 %v3508, %v3640
  %v3715 = vsub.f32 %v3510, %v3640
  %v3716 = vsub.f32 %v3514, %v3643
  %v3717 = vsub.f32 %v3516, %v3643
  %v3718 = vsub.f32 %v3520, %v3646
  %v3719 = vsub.f32 %v3522, %v3646
  %v3720 = vsub.f32 %v3526, %v3649
  %v3721 = vsub.f32 %v3528, %v3649
  %v3722 = vsub.f32 %v3532, %v3652
  %v3723 = vsub.f32 %v3534, %v3652
  %v3724 = vsub.f32 %v3538, %v3655
  %v3725 = vsub.f32 %v3540, %v3655
  %v3726 = vsub.f32 %v3544, %v3658
  %v3727 = vsub.f32 %v3546, %v3658
  %v3728 = vsub.f32 %v3550, %v3661
  %v3729 = vsub.f32 %v3552, %v3661
  %v3730 = vsub.f32 %v3556, %v3664
  %v3731 = vsub.f32 %v3558, %v3664
  %v3732 = vsub.f32 %v3562, %v3667
  %v3733 = vsub.f32 %v3564, %v3667
  %v3734 = vsub.f32 %v3568, %v3670
  %v3735 = vsub.f32 %v3570, %v3670
  %v3736 = vsub.f32 %v3574, %v3673
  %v3737 = vsub.f32 %v3576, %v3673
  %v3738 = vmul.f32 %v3674, 1.442695
  %v3739 = vpow.pop %v3738
  %v3740 = vmul.f32 %v3675, 1.442695
  %v3741 = vpow.pop %v3740
  %v3742 = vmul.f32 %v3676, 1.442695
  %v3743 = vpow.pop %v3742
  %v3744 = vmul.f32 %v3677, 1.442695
  %v3745 = vpow.pop %v3744
  %v3746 = vmul.f32 %v3678, 1.442695
  %v3747 = vpow.pop %v3746
  %v3748 = vmul.f32 %v3679, 1.442695
  %v3749 = vpow.pop %v3748
  %v3750 = vmul.f32 %v3680, 1.442695
  %v3751 = vpow.pop %v3750
  %v3752 = vmul.f32 %v3681, 1.442695
  %v3753 = vpow.pop %v3752
  %v3754 = vmul.f32 %v3682, 1.442695
  %v3755 = vpow.pop %v3754
  %v3756 = vmul.f32 %v3683, 1.442695
  %v3757 = vpow.pop %v3756
  %v3758 = vmul.f32 %v3684, 1.442695
  %v3759 = vpow.pop %v3758
  %v3760 = vmul.f32 %v3685, 1.442695
  %v3761 = vpow.pop %v3760
  %v3762 = vmul.f32 %v3686, 1.442695
  %v3763 = vpow.pop %v3762
  %v3764 = vmul.f32 %v3687, 1.442695
  %v3765 = vpow.pop %v3764
  %v3766 = vmul.f32 %v3688, 1.442695
  %v3767 = vpow.pop %v3766
  %v3768 = vmul.f32 %v3689, 1.442695
  %v3769 = vpow.pop %v3768
  %v3770 = vmul.f32 %v3690, 1.442695
  %v3771 = vpow.pop %v3770
  %v3772 = vmul.f32 %v3691, 1.442695
  %v3773 = vpow.pop %v3772
  %v3774 = vmul.f32 %v3692, 1.442695
  %v3775 = vpow.pop %v3774
  %v3776 = vmul.f32 %v3693, 1.442695
  %v3777 = vpow.pop %v3776
  %v3778 = vmul.f32 %v3694, 1.442695
  %v3779 = vpow.pop %v3778
  %v3780 = vmul.f32 %v3695, 1.442695
  %v3781 = vpow.pop %v3780
  %v3782 = vmul.f32 %v3696, 1.442695
  %v3783 = vpow.pop %v3782
  %v3784 = vmul.f32 %v3697, 1.442695
  %v3785 = vpow.pop %v3784
  %v3786 = vmul.f32 %v3698, 1.442695
  %v3787 = vpow.pop %v3786
  %v3788 = vmul.f32 %v3699, 1.442695
  %v3789 = vpow.pop %v3788
  %v3790 = vmul.f32 %v3700, 1.442695
  %v3791 = vpow.pop %v3790
  %v3792 = vmul.f32 %v3701, 1.442695
  %v3793 = vpow.pop %v3792
  %v3794 = vmul.f32 %v3702, 1.442695
  %v3795 = vpow.pop %v3794
  %v3796 = vmul.f32 %v3703, 1.442695
  %v3797 = vpow.pop %v3796
  %v3798 = vmul.f32 %v3704, 1.442695
  %v3799 = vpow.pop %v3798
  %v3800 = vmul.f32 %v3705, 1.442695
  %v3801 = vpow.pop %v3800
  %v3802 = vmul.f32 %v3706, 1.442695
  %v3803 = vpow.pop %v3802
  %v3804 = vmul.f32 %v3707, 1.442695
  %v3805 = vpow.pop %v3804
  %v3806 = vmul.f32 %v3708, 1.442695
  %v3807 = vpow.pop %v3806
  %v3808 = vmul.f32 %v3709, 1.442695
  %v3809 = vpow.pop %v3808
  %v3810 = vmul.f32 %v3710, 1.442695
  %v3811 = vpow.pop %v3810
  %v3812 = vmul.f32 %v3711, 1.442695
  %v3813 = vpow.pop %v3812
  %v3814 = vmul.f32 %v3712, 1.442695
  %v3815 = vpow.pop %v3814
  %v3816 = vmul.f32 %v3713, 1.442695
  %v3817 = vpow.pop %v3816
  %v3818 = vmul.f32 %v3714, 1.442695
  %v3819 = vpow.pop %v3818
  %v3820 = vmul.f32 %v3715, 1.442695
  %v3821 = vpow.pop %v3820
  %v3822 = vmul.f32 %v3716, 1.442695
  %v3823 = vpow.pop %v3822
  %v3824 = vmul.f32 %v3717, 1.442695
  %v3825 = vpow.pop %v3824
  %v3826 = vmul.f32 %v3718, 1.442695
  %v3827 = vpow.pop %v3826
  %v3828 = vmul.f32 %v3719, 1.442695
  %v3829 = vpow.pop %v3828
  %v3830 = vmul.f32 %v3720, 1.442695
  %v3831 = vpow.pop %v3830
  %v3832 = vmul.f32 %v3721, 1.442695
  %v3833 = vpow.pop %v3832
  %v3834 = vmul.f32 %v3722, 1.442695
  %v3835 = vpow.pop %v3834
  %v3836 = vmul.f32 %v3723, 1.442695
  %v3837 = vpow.pop %v3836
  %v3838 = vmul.f32 %v3724, 1.442695
  %v3839 = vpow.pop %v3838
  %v3840 = vmul.f32 %v3725, 1.442695
  %v3841 = vpow.pop %v3840
  %v3842 = vmul.f32 %v3726, 1.442695
  %v3843 = vpow.pop %v3842
  %v3844 = vmul.f32 %v3727, 1.442695
  %v3845 = vpow.pop %v3844
  %v3846 = vmul.f32 %v3728, 1.442695
  %v3847 = vpow.pop %v3846
  %v3848 = vmul.f32 %v3729, 1.442695
  %v3849 = vpow.pop %v3848
  %v3850 = vmul.f32 %v3730, 1.442695
  %v3851 = vpow.pop %v3850
  %v3852 = vmul.f32 %v3731, 1.442695
  %v3853 = vpow.pop %v3852
  %v3854 = vmul.f32 %v3732, 1.442695
  %v3855 = vpow.pop %v3854
  %v3856 = vmul.f32 %v3733, 1.442695
  %v3857 = vpow.pop %v3856
  %v3858 = vmul.f32 %v3734, 1.442695
  %v3859 = vpow.pop %v3858
  %v3860 = vmul.f32 %v3735, 1.442695
  %v3861 = vpow.pop %v3860
  %v3862 = vmul.f32 %v3736, 1.442695
  %v3863 = vpow.pop %v3862
  %v3864 = vmul.f32 %v3737, 1.442695
  %v3865 = vpow.pop %v3864
  %v3866 = vadd.f32 %v3739, %v3741
  %3867 = vadd.xlane.f32.xlu0 %v3866
  %v3868 = vpop.xlane.xlu0 %3867
  %v3869 = vadd.f32 %v3743, %v3745
  %3870 = vadd.xlane.f32.xlu0 %v3869
  %v3871 = vpop.xlane.xlu0 %3870
  %v3872 = vadd.f32 %v3747, %v3749
  %3873 = vadd.xlane.f32.xlu0 %v3872
  %v3874 = vpop.xlane.xlu0 %3873
  %v3875 = vadd.f32 %v3751, %v3753
  %3876 = vadd.xlane.f32.xlu0 %v3875
  %v3877 = vpop.xlane.xlu0 %3876
  %v3878 = vadd.f32 %v3755, %v3757
  %3879 = vadd.xlane.f32.xlu0 %v3878
  %v3880 = vpop.xlane.xlu0 %3879
  %v3881 = vadd.f32 %v3759, %v3761
  %3882 = vadd.xlane.f32.xlu0 %v3881
  %v3883 = vpop.xlane.xlu0 %3882
  %v3884 = vadd.f32 %v3763, %v3765
  %3885 = vadd.xlane.f32.xlu0 %v3884
  %v3886 = vpop.xlane.xlu0 %3885
  %v3887 = vadd.f32 %v3767, %v3769
  %3888 = vadd.xlane.f32.xlu0 %v3887
  %v3889 = vpop.xlane.xlu0 %3888
  %v3890 = vadd.f32 %v3771, %v3773
  %3891 = vadd.xlane.f32.xlu0 %v3890
  %v3892 = vpop.xlane.xlu0 %3891
  %v3893 = vadd.f32 %v3775, %v3777
  %3894 = vadd.xlane.f32.xlu0 %v3893
  %v3895 = vpop.xlane.xlu0 %3894
  %v3896 = vadd.f32 %v3779, %v3781
  %3897 = vadd.xlane.f32.xlu0 %v3896
  %v3898 = vpop.xlane.xlu0 %3897
  %v3899 = vadd.f32 %v3783, %v3785
  %3900 = vadd.xlane.f32.xlu0 %v3899
  %v3901 = vpop.xlane.xlu0 %3900
  %v3902 = vadd.f32 %v3787, %v3789
  %3903 = vadd.xlane.f32.xlu0 %v3902
  %v3904 = vpop.xlane.xlu0 %3903
  %v3905 = vadd.f32 %v3791, %v3793
  %3906 = vadd.xlane.f32.xlu0 %v3905
  %v3907 = vpop.xlane.xlu0 %3906
  %v3908 = vadd.f32 %v3795, %v3797
  %3909 = vadd.xlane.f32.xlu0 %v3908
  %v3910 = vpop.xlane.xlu0 %3909
  %v3911 = vadd.f32 %v3799, %v3801
  %3912 = vadd.xlane.f32.xlu0 %v3911
  %v3913 = vpop.xlane.xlu0 %3912
  %v3914 = vadd.f32 %v3803, %v3805
  %3915 = vadd.xlane.f32.xlu0 %v3914
  %v3916 = vpop.xlane.xlu0 %3915
  %v3917 = vadd.f32 %v3807, %v3809
  %3918 = vadd.xlane.f32.xlu0 %v3917
  %v3919 = vpop.xlane.xlu0 %3918
  %v3920 = vadd.f32 %v3811, %v3813
  %3921 = vadd.xlane.f32.xlu0 %v3920
  %v3922 = vpop.xlane.xlu0 %3921
  %v3923 = vadd.f32 %v3815, %v3817
  %3924 = vadd.xlane.f32.xlu0 %v3923
  %v3925 = vpop.xlane.xlu0 %3924
  %v3926 = vadd.f32 %v3819, %v3821
  %3927 = vadd.xlane.f32.xlu0 %v3926
  %v3928 = vpop.xlane.xlu0 %3927
  %v3929 = vadd.f32 %v3823, %v3825
  %3930 = vadd.xlane.f32.xlu0 %v3929
  %v3931 = vpop.xlane.xlu0 %3930
  %v3932 = vadd.f32 %v3827, %v3829
  %3933 = vadd.xlane.f32.xlu0 %v3932
  %v3934 = vpop.xlane.xlu0 %3933
  %v3935 = vadd.f32 %v3831, %v3833
  %3936 = vadd.xlane.f32.xlu0 %v3935
  %v3937 = vpop.xlane.xlu0 %3936
  %v3938 = vadd.f32 %v3835, %v3837
  %3939 = vadd.xlane.f32.xlu0 %v3938
  %v3940 = vpop.xlane.xlu0 %3939
  %v3941 = vadd.f32 %v3839, %v3841
  %3942 = vadd.xlane.f32.xlu0 %v3941
  %v3943 = vpop.xlane.xlu0 %3942
  %v3944 = vadd.f32 %v3843, %v3845
  %3945 = vadd.xlane.f32.xlu0 %v3944
  %v3946 = vpop.xlane.xlu0 %3945
  %v3947 = vadd.f32 %v3847, %v3849
  %3948 = vadd.xlane.f32.xlu0 %v3947
  %v3949 = vpop.xlane.xlu0 %3948
  %v3950 = vadd.f32 %v3851, %v3853
  %3951 = vadd.xlane.f32.xlu0 %v3950
  %v3952 = vpop.xlane.xlu0 %3951
  %v3953 = vadd.f32 %v3855, %v3857
  %3954 = vadd.xlane.f32.xlu0 %v3953
  %v3955 = vpop.xlane.xlu0 %3954
  %v3956 = vadd.f32 %v3859, %v3861
  %3957 = vadd.xlane.f32.xlu0 %v3956
  %v3958 = vpop.xlane.xlu0 %3957
  %v3959 = vadd.f32 %v3863, %v3865
  %3960 = vadd.xlane.f32.xlu0 %v3959
  %v3961 = vpop.xlane.xlu0 %3960
  %v3962 = vrcp.pop %v3868
  %v3963 = vrcp.pop %v3871
  %v3964 = vrcp.pop %v3874
  %v3965 = vrcp.pop %v3877
  %v3966 = vrcp.pop %v3880
  %v3967 = vrcp.pop %v3883
  %v3968 = vrcp.pop %v3886
  %v3969 = vrcp.pop %v3889
  %v3970 = vrcp.pop %v3892
  %v3971 = vrcp.pop %v3895
  %v3972 = vrcp.pop %v3898
  %v3973 = vrcp.pop %v3901
  %v3974 = vrcp.pop %v3904
  %v3975 = vrcp.pop %v3907
  %v3976 = vrcp.pop %v3910
  %v3977 = vrcp.pop %v3913
  %v3978 = vrcp.pop %v3916
  %v3979 = vrcp.pop %v3919
  %v3980 = vrcp.pop %v3922
  %v3981 = vrcp.pop %v3925
  %v3982 = vrcp.pop %v3928
  %v3983 = vrcp.pop %v3931
  %v3984 = vrcp.pop %v3934
  %v3985 = vrcp.pop %v3937
  %v3986 = vrcp.pop %v3940
  %v3987 = vrcp.pop %v3943
  %v3988 = vrcp.pop %v3946
  %v3989 = vrcp.pop %v3949
  %v3990 = vrcp.pop %v3952
  %v3991 = vrcp.pop %v3955
  %v3992 = vrcp.pop %v3958
  %v3993 = vrcp.pop %v3961
  %v3994 = vmul.f32 %v3739, %v3962
  %v3995 = vmul.f32 %v3741, %v3962
  %v3996 = vmul.f32 %v3743, %v3963
  %v3997 = vmul.f32 %v3745, %v3963
  %v3998 = vmul.f32 %v3747, %v3964
  %v3999 = vmul.f32 %v3749, %v3964
  %v4000 = vmul.f32 %v3751, %v3965
  %v4001 = vmul.f32 %v3753, %v3965
  %v4002 = vmul.f32 %v3755, %v3966
  %v4003 = vmul.f32 %v3757, %v3966
  %v4004 = vmul.f32 %v3759, %v3967
  %v4005 = vmul.f32 %v3761, %v3967
  %v4006 = vmul.f32 %v3763, %v3968
  %v4007 = vmul.f32 %v3765, %v3968
  %v4008 = vmul.f32 %v3767, %v3969
  %v4009 = vmul.f32 %v3769, %v3969
  %v4010 = vmul.f32 %v3771, %v3970
  %v4011 = vmul.f32 %v3773, %v3970
  %v4012 = vmul.f32 %v3775, %v3971
  %v4013 = vmul.f32 %v3777, %v3971
  %v4014 = vmul.f32 %v3779, %v3972
  %v4015 = vmul.f32 %v3781, %v3972
  %v4016 = vmul.f32 %v3783, %v3973
  %v4017 = vmul.f32 %v3785, %v3973
  %v4018 = vmul.f32 %v3787, %v3974
  %v4019 = vmul.f32 %v3789, %v3974
  %v4020 = vmul.f32 %v3791, %v3975
  %v4021 = vmul.f32 %v3793, %v3975
  %v4022 = vmul.f32 %v3795, %v3976
  %v4023 = vmul.f32 %v3797, %v3976
  %v4024 = vmul.f32 %v3799, %v3977
  %v4025 = vmul.f32 %v3801, %v3977
  %v4026 = vmul.f32 %v3803, %v3978
  %v4027 = vmul.f32 %v3805, %v3978
  %v4028 = vmul.f32 %v3807, %v3979
  %v4029 = vmul.f32 %v3809, %v3979
  %v4030 = vmul.f32 %v3811, %v3980
  %v4031 = vmul.f32 %v3813, %v3980
  %v4032 = vmul.f32 %v3815, %v3981
  %v4033 = vmul.f32 %v3817, %v3981
  %v4034 = vmul.f32 %v3819, %v3982
  %v4035 = vmul.f32 %v3821, %v3982
  %v4036 = vmul.f32 %v3823, %v3983
  %v4037 = vmul.f32 %v3825, %v3983
  %v4038 = vmul.f32 %v3827, %v3984
  %v4039 = vmul.f32 %v3829, %v3984
  %v4040 = vmul.f32 %v3831, %v3985
  %v4041 = vmul.f32 %v3833, %v3985
  %v4042 = vmul.f32 %v3835, %v3986
  %v4043 = vmul.f32 %v3837, %v3986
  %v4044 = vmul.f32 %v3839, %v3987
  %v4045 = vmul.f32 %v3841, %v3987
  %v4046 = vmul.f32 %v3843, %v3988
  %v4047 = vmul.f32 %v3845, %v3988
  %v4048 = vmul.f32 %v3847, %v3989
  %v4049 = vmul.f32 %v3849, %v3989
  %v4050 = vmul.f32 %v3851, %v3990
  %v4051 = vmul.f32 %v3853, %v3990
  %v4052 = vmul.f32 %v3855, %v3991
  %v4053 = vmul.f32 %v3857, %v3991
  %v4054 = vmul.f32 %v3859, %v3992
  %v4055 = vmul.f32 %v3861, %v3992
  %v4056 = vmul.f32 %v3863, %v3993
  %v4057 = vmul.f32 %v3865, %v3993
  %4058 = vrot.lane.b32.xlu0 %v1335, 48
  %v4059 = vpop.permute.xlu0 %4058
  %4060 = vrot.lane.b32.xlu0 %v1340, 48
  %v4061 = vpop.permute.xlu0 %4060
  %4062 = vrot.lane.b32.xlu0 %v1345, 48
  %v4063 = vpop.permute.xlu0 %4062
  %4064 = vrot.lane.b32.xlu0 %v1350, 48
  %v4065 = vpop.permute.xlu0 %4064
  %4066 = vrot.lane.b32.xlu0 %v1355, 48
  %v4067 = vpop.permute.xlu0 %4066
  %4068 = vrot.lane.b32.xlu0 %v1360, 48
  %v4069 = vpop.permute.xlu0 %4068
  %4070 = vrot.lane.b32.xlu0 %v1365, 48
  %v4071 = vpop.permute.xlu0 %4070
  %4072 = vrot.lane.b32.xlu0 %v1370, 48
  %v4073 = vpop.permute.xlu0 %4072
  %4074 = vrot.lane.b32.xlu0 %v1375, 48
  %v4075 = vpop.permute.xlu0 %4074
  %4076 = vrot.lane.b32.xlu0 %v1380, 48
  %v4077 = vpop.permute.xlu0 %4076
  %4078 = vrot.lane.b32.xlu0 %v1385, 48
  %v4079 = vpop.permute.xlu0 %4078
  %4080 = vrot.lane.b32.xlu0 %v1390, 48
  %v4081 = vpop.permute.xlu0 %4080
  %4082 = vrot.lane.b32.xlu0 %v1395, 48
  %v4083 = vpop.permute.xlu0 %4082
  %4084 = vrot.lane.b32.xlu0 %v1400, 48
  %v4085 = vpop.permute.xlu0 %4084
  %4086 = vrot.lane.b32.xlu0 %v1405, 48
  %v4087 = vpop.permute.xlu0 %4086
  %4088 = vrot.lane.b32.xlu0 %v1410, 48
  %v4089 = vpop.permute.xlu0 %4088
  %4090 = vrot.lane.b32.xlu0 %v1415, 48
  %v4091 = vpop.permute.xlu0 %4090
  %4092 = vrot.lane.b32.xlu0 %v1420, 48
  %v4093 = vpop.permute.xlu0 %4092
  %4094 = vrot.lane.b32.xlu0 %v1425, 48
  %v4095 = vpop.permute.xlu0 %4094
  %4096 = vrot.lane.b32.xlu0 %v1430, 48
  %v4097 = vpop.permute.xlu0 %4096
  %4098 = vrot.lane.b32.xlu0 %v1435, 48
  %v4099 = vpop.permute.xlu0 %4098
  %4100 = vrot.lane.b32.xlu0 %v1440, 48
  %v4101 = vpop.permute.xlu0 %4100
  %4102 = vrot.lane.b32.xlu0 %v1445, 48
  %v4103 = vpop.permute.xlu0 %4102
  %4104 = vrot.lane.b32.xlu0 %v1450, 48
  %v4105 = vpop.permute.xlu0 %4104
  %4106 = vrot.lane.b32.xlu0 %v1455, 48
  %v4107 = vpop.permute.xlu0 %4106
  %4108 = vrot.lane.b32.xlu0 %v1460, 48
  %v4109 = vpop.permute.xlu0 %4108
  %4110 = vrot.lane.b32.xlu0 %v1465, 48
  %v4111 = vpop.permute.xlu0 %4110
  %4112 = vrot.lane.b32.xlu0 %v1470, 48
  %v4113 = vpop.permute.xlu0 %4112
  %4114 = vrot.lane.b32.xlu0 %v1475, 48
  %v4115 = vpop.permute.xlu0 %4114
  %4116 = vrot.lane.b32.xlu0 %v1480, 48
  %v4117 = vpop.permute.xlu0 %4116
  %4118 = vrot.lane.b32.xlu0 %v1485, 48
  %v4119 = vpop.permute.xlu0 %4118
  %4120 = vrot.lane.b32.xlu0 %v1490, 48
  %v4121 = vpop.permute.xlu0 %4120
  %4154 = vmatprep.subr.mxu0 0.0
  %4155 = vmatpush1.msra.mxu0 %v4059
  %4156 = vmatprep.subr.mxu0 0.0
  %4157 = vmatpush1.msra.mxu0 %v4061
  %4158 = vmatprep.subr.mxu0 0.0
  %4159 = vmatpush1.msra.mxu0 %v4063
  %4160 = vmatprep.subr.mxu0 0.0
  %4161 = vmatpush1.msra.mxu0 %v4065
  %4162 = vmatprep.subr.mxu0 0.0
  %4163 = vmatpush1.msra.mxu0 %v4067
  %4164 = vmatprep.subr.mxu0 0.0
  %4165 = vmatpush1.msra.mxu0 %v4069
  %4166 = vmatprep.subr.mxu0 0.0
  %4167 = vmatpush1.msra.mxu0 %v4071
  %4168 = vmatprep.subr.mxu0 0.0
  %4169 = vmatpush1.msra.mxu0 %v4073
  %4170 = vmatprep.subr.mxu0 0.0
  %4171 = vmatpush1.msra.mxu0 %v4075
  %4172 = vmatprep.subr.mxu0 0.0
  %4173 = vmatpush1.msra.mxu0 %v4077
  %4174 = vmatprep.subr.mxu0 0.0
  %4175 = vmatpush1.msra.mxu0 %v4079
  %4176 = vmatprep.subr.mxu0 0.0
  %4177 = vmatpush1.msra.mxu0 %v4081
  %4178 = vmatprep.subr.mxu0 0.0
  %4179 = vmatpush1.msra.mxu0 %v4083
  %4180 = vmatprep.subr.mxu0 0.0
  %4181 = vmatpush1.msra.mxu0 %v4085
  %4182 = vmatprep.subr.mxu0 0.0
  %4183 = vmatpush1.msra.mxu0 %v4087
  %4184 = vmatprep.subr.mxu0 0.0
  %4185 = vmatpush1.msra.mxu0 %v4089
  %4186 = vmatprep.subr.mxu0 0.0
  %4187 = vmatpush1.msra.mxu0 %v4091
  %4188 = vmatprep.subr.mxu0 0.0
  %4189 = vmatpush1.msra.mxu0 %v4093
  %4190 = vmatprep.subr.mxu0 0.0
  %4191 = vmatpush1.msra.mxu0 %v4095
  %4192 = vmatprep.subr.mxu0 0.0
  %4193 = vmatpush1.msra.mxu0 %v4097
  %4194 = vmatprep.subr.mxu0 0.0
  %4195 = vmatpush1.msra.mxu0 %v4099
  %4196 = vmatprep.subr.mxu0 0.0
  %4197 = vmatpush1.msra.mxu0 %v4101
  %4198 = vmatprep.subr.mxu0 0.0
  %4199 = vmatpush1.msra.mxu0 %v4103
  %4200 = vmatprep.subr.mxu0 0.0
  %4201 = vmatpush1.msra.mxu0 %v4105
  %4202 = vmatprep.subr.mxu0 0.0
  %4203 = vmatpush1.msra.mxu0 %v4107
  %4204 = vmatprep.subr.mxu0 0.0
  %4205 = vmatpush1.msra.mxu0 %v4109
  %4206 = vmatprep.subr.mxu0 0.0
  %4207 = vmatpush1.msra.mxu0 %v4111
  %4208 = vmatprep.subr.mxu0 0.0
  %4209 = vmatpush1.msra.mxu0 %v4113
  %4210 = vmatprep.subr.mxu0 0.0
  %4211 = vmatpush1.msra.mxu0 %v4115
  %4212 = vmatprep.subr.mxu0 0.0
  %4213 = vmatpush1.msra.mxu0 %v4117
  %4214 = vmatprep.subr.mxu0 0.0
  %4215 = vmatpush1.msra.mxu0 %v4119
  %4216 = vmatprep.subr.mxu0 0.0
  %4217 = vmatpush1.msra.mxu0 %v4121
  %4218 = vmatprep.mubr.f32.mxu0 %v3995
  %4219 = vmatmul.mubr.f32.gmra.mrb[0].mxu0 %v3994
  %v4220 = vpop.f32.mrb[0].mxu0
  %v4221 = vadd.f32 0.0, %v4220
  %v4222 = vpop.f32.mrb[0].mxu0
  %4223 = vmatprep.mubr.f32.mxu0 %v3997
  %4224 = vmatmul.mubr.f32.gmra.mrb[0].mxu0 %v3996
  %v4225 = vpop.f32.mrb[0].mxu0
  %v4226 = vadd.f32 0.0, %v4225
  %v4227 = vpop.f32.mrb[0].mxu0
  %4228 = vmatprep.mubr.f32.mxu0 %v3999
  %4229 = vmatmul.mubr.f32.gmra.mrb[0].mxu0 %v3998
  %v4230 = vpop.f32.mrb[0].mxu0
  %v4231 = vadd.f32 0.0, %v4230
  %v4232 = vpop.f32.mrb[0].mxu0
  %4233 = vmatprep.mubr.f32.mxu0 %v4001
  %4234 = vmatmul.mubr.f32.gmra.mrb[0].mxu0 %v4000
  %v4235 = vpop.f32.mrb[0].mxu0
  %v4236 = vadd.f32 0.0, %v4235
  %v4237 = vpop.f32.mrb[0].mxu0
  %4238 = vmatprep.mubr.f32.mxu0 %v4003
  %4239 = vmatmul.mubr.f32.gmra.mrb[0].mxu0 %v4002
  %v4240 = vpop.f32.mrb[0].mxu0
  %v4241 = vadd.f32 0.0, %v4240
  %v4242 = vpop.f32.mrb[0].mxu0
  %4243 = vmatprep.mubr.f32.mxu0 %v4005
  %4244 = vmatmul.mubr.f32.gmra.mrb[0].mxu0 %v4004
  %v4245 = vpop.f32.mrb[0].mxu0
  %v4246 = vadd.f32 0.0, %v4245
  %v4247 = vpop.f32.mrb[0].mxu0
  %4248 = vmatprep.mubr.f32.mxu0 %v4007
  %4249 = vmatmul.mubr.f32.gmra.mrb[0].mxu0 %v4006
  %v4250 = vpop.f32.mrb[0].mxu0
  %v4251 = vadd.f32 0.0, %v4250
  %v4252 = vpop.f32.mrb[0].mxu0
  %4253 = vmatprep.mubr.f32.mxu0 %v4009
  %4254 = vmatmul.mubr.f32.gmra.mrb[0].mxu0 %v4008
  %v4255 = vpop.f32.mrb[0].mxu0
  %v4256 = vadd.f32 0.0, %v4255
  %v4257 = vpop.f32.mrb[0].mxu0
  %4258 = vmatprep.mubr.f32.mxu0 %v4011
  %4259 = vmatmul.mubr.f32.gmra.mrb[0].mxu0 %v4010
  %v4260 = vpop.f32.mrb[0].mxu0
  %v4261 = vadd.f32 0.0, %v4260
  %v4262 = vpop.f32.mrb[0].mxu0
  %4263 = vmatprep.mubr.f32.mxu0 %v4013
  %4264 = vmatmul.mubr.f32.gmra.mrb[0].mxu0 %v4012
  %v4265 = vpop.f32.mrb[0].mxu0
  %v4266 = vadd.f32 0.0, %v4265
  %v4267 = vpop.f32.mrb[0].mxu0
  %4268 = vmatprep.mubr.f32.mxu0 %v4015
  %4269 = vmatmul.mubr.f32.gmra.mrb[0].mxu0 %v4014
  %v4270 = vpop.f32.mrb[0].mxu0
  %v4271 = vadd.f32 0.0, %v4270
  %v4272 = vpop.f32.mrb[0].mxu0
  %4273 = vmatprep.mubr.f32.mxu0 %v4017
  %4274 = vmatmul.mubr.f32.gmra.mrb[0].mxu0 %v4016
  %v4275 = vpop.f32.mrb[0].mxu0
  %v4276 = vadd.f32 0.0, %v4275
  %v4277 = vpop.f32.mrb[0].mxu0
  %4278 = vmatprep.mubr.f32.mxu0 %v4019
  %4279 = vmatmul.mubr.f32.gmra.mrb[0].mxu0 %v4018
  %v4280 = vpop.f32.mrb[0].mxu0
  %v4281 = vadd.f32 0.0, %v4280
  %v4282 = vpop.f32.mrb[0].mxu0
  %4283 = vmatprep.mubr.f32.mxu0 %v4021
  %4284 = vmatmul.mubr.f32.gmra.mrb[0].mxu0 %v4020
  %v4285 = vpop.f32.mrb[0].mxu0
  %v4286 = vadd.f32 0.0, %v4285
  %v4287 = vpop.f32.mrb[0].mxu0
  %4288 = vmatprep.mubr.f32.mxu0 %v4023
  %4289 = vmatmul.mubr.f32.gmra.mrb[0].mxu0 %v4022
  %v4290 = vpop.f32.mrb[0].mxu0
  %v4291 = vadd.f32 0.0, %v4290
  %v4292 = vpop.f32.mrb[0].mxu0
  %4293 = vmatprep.mubr.f32.mxu0 %v4025
  %4294 = vmatmul.mubr.f32.gmra.mrb[0].mxu0 %v4024
  %v4295 = vpop.f32.mrb[0].mxu0
  %v4296 = vadd.f32 0.0, %v4295
  %v4297 = vpop.f32.mrb[0].mxu0
  %4298 = vmatprep.mubr.f32.mxu0 %v4027
  %4299 = vmatmul.mubr.f32.gmra.mrb[0].mxu0 %v4026
  %v4300 = vpop.f32.mrb[0].mxu0
  %v4301 = vadd.f32 0.0, %v4300
  %v4302 = vpop.f32.mrb[0].mxu0
  %4303 = vmatprep.mubr.f32.mxu0 %v4029
  %4304 = vmatmul.mubr.f32.gmra.mrb[0].mxu0 %v4028
  %v4305 = vpop.f32.mrb[0].mxu0
  %v4306 = vadd.f32 0.0, %v4305
  %v4307 = vpop.f32.mrb[0].mxu0
  %4308 = vmatprep.mubr.f32.mxu0 %v4031
  %4309 = vmatmul.mubr.f32.gmra.mrb[0].mxu0 %v4030
  %v4310 = vpop.f32.mrb[0].mxu0
  %v4311 = vadd.f32 0.0, %v4310
  %v4312 = vpop.f32.mrb[0].mxu0
  %4313 = vmatprep.mubr.f32.mxu0 %v4033
  %4314 = vmatmul.mubr.f32.gmra.mrb[0].mxu0 %v4032
  %v4315 = vpop.f32.mrb[0].mxu0
  %v4316 = vadd.f32 0.0, %v4315
  %v4317 = vpop.f32.mrb[0].mxu0
  %4318 = vmatprep.mubr.f32.mxu0 %v4035
  %4319 = vmatmul.mubr.f32.gmra.mrb[0].mxu0 %v4034
  %v4320 = vpop.f32.mrb[0].mxu0
  %v4321 = vadd.f32 0.0, %v4320
  %v4322 = vpop.f32.mrb[0].mxu0
  %4323 = vmatprep.mubr.f32.mxu0 %v4037
  %4324 = vmatmul.mubr.f32.gmra.mrb[0].mxu0 %v4036
  %v4325 = vpop.f32.mrb[0].mxu0
  %v4326 = vadd.f32 0.0, %v4325
  %v4327 = vpop.f32.mrb[0].mxu0
  %4328 = vmatprep.mubr.f32.mxu0 %v4039
  %4329 = vmatmul.mubr.f32.gmra.mrb[0].mxu0 %v4038
  %v4330 = vpop.f32.mrb[0].mxu0
  %v4331 = vadd.f32 0.0, %v4330
  %v4332 = vpop.f32.mrb[0].mxu0
  %4333 = vmatprep.mubr.f32.mxu0 %v4041
  %4334 = vmatmul.mubr.f32.gmra.mrb[0].mxu0 %v4040
  %v4335 = vpop.f32.mrb[0].mxu0
  %v4336 = vadd.f32 0.0, %v4335
  %v4337 = vpop.f32.mrb[0].mxu0
  %4338 = vmatprep.mubr.f32.mxu0 %v4043
  %4339 = vmatmul.mubr.f32.gmra.mrb[0].mxu0 %v4042
  %v4340 = vpop.f32.mrb[0].mxu0
  %v4341 = vadd.f32 0.0, %v4340
  %v4342 = vpop.f32.mrb[0].mxu0
  %4343 = vmatprep.mubr.f32.mxu0 %v4045
  %4344 = vmatmul.mubr.f32.gmra.mrb[0].mxu0 %v4044
  %v4345 = vpop.f32.mrb[0].mxu0
  %v4346 = vadd.f32 0.0, %v4345
  %v4347 = vpop.f32.mrb[0].mxu0
  %4348 = vmatprep.mubr.f32.mxu0 %v4047
  %4349 = vmatmul.mubr.f32.gmra.mrb[0].mxu0 %v4046
  %v4350 = vpop.f32.mrb[0].mxu0
  %v4351 = vadd.f32 0.0, %v4350
  %v4352 = vpop.f32.mrb[0].mxu0
  %4353 = vmatprep.mubr.f32.mxu0 %v4049
  %4354 = vmatmul.mubr.f32.gmra.mrb[0].mxu0 %v4048
  %v4355 = vpop.f32.mrb[0].mxu0
  %v4356 = vadd.f32 0.0, %v4355
  %v4357 = vpop.f32.mrb[0].mxu0
  %4358 = vmatprep.mubr.f32.mxu0 %v4051
  %4359 = vmatmul.mubr.f32.gmra.mrb[0].mxu0 %v4050
  %v4360 = vpop.f32.mrb[0].mxu0
  %v4361 = vadd.f32 0.0, %v4360
  %v4362 = vpop.f32.mrb[0].mxu0
  %4363 = vmatprep.mubr.f32.mxu0 %v4053
  %4364 = vmatmul.mubr.f32.gmra.mrb[0].mxu0 %v4052
  %v4365 = vpop.f32.mrb[0].mxu0
  %v4366 = vadd.f32 0.0, %v4365
  %v4367 = vpop.f32.mrb[0].mxu0
  %4368 = vmatprep.mubr.f32.mxu0 %v4055
  %4369 = vmatmul.mubr.f32.gmra.mrb[0].mxu0 %v4054
  %v4370 = vpop.f32.mrb[0].mxu0
  %v4371 = vadd.f32 0.0, %v4370
  %v4372 = vpop.f32.mrb[0].mxu0
  %4373 = vmatprep.mubr.f32.mxu0 %v4057
  %4374 = vmatmul.mubr.f32.gmra.mrb[0].mxu0 %v4056
  %v4375 = vpop.f32.mrb[0].mxu0
  %v4376 = vadd.f32 0.0, %v4375
  %v4377 = vpop.f32.mrb[0].mxu0
  %4378 = vdwg.mxu0
  %4411 = vrot.lane.b32.xlu0 %v4221, 16
  %v4412 = vpop.permute.xlu0 %4411
  %4413 = vrot.lane.b32.xlu0 %v4226, 16
  %v4414 = vpop.permute.xlu0 %4413
  %4415 = vrot.lane.b32.xlu0 %v4231, 16
  %v4416 = vpop.permute.xlu0 %4415
  %4417 = vrot.lane.b32.xlu0 %v4236, 16
  %v4418 = vpop.permute.xlu0 %4417
  %4419 = vrot.lane.b32.xlu0 %v4241, 16
  %v4420 = vpop.permute.xlu0 %4419
  %4421 = vrot.lane.b32.xlu0 %v4246, 16
  %v4422 = vpop.permute.xlu0 %4421
  %4423 = vrot.lane.b32.xlu0 %v4251, 16
  %v4424 = vpop.permute.xlu0 %4423
  %4425 = vrot.lane.b32.xlu0 %v4256, 16
  %v4426 = vpop.permute.xlu0 %4425
  %4427 = vrot.lane.b32.xlu0 %v4261, 16
  %v4428 = vpop.permute.xlu0 %4427
  %4429 = vrot.lane.b32.xlu0 %v4266, 16
  %v4430 = vpop.permute.xlu0 %4429
  %4431 = vrot.lane.b32.xlu0 %v4271, 16
  %v4432 = vpop.permute.xlu0 %4431
  %4433 = vrot.lane.b32.xlu0 %v4276, 16
  %v4434 = vpop.permute.xlu0 %4433
  %4435 = vrot.lane.b32.xlu0 %v4281, 16
  %v4436 = vpop.permute.xlu0 %4435
  %4437 = vrot.lane.b32.xlu0 %v4286, 16
  %v4438 = vpop.permute.xlu0 %4437
  %4439 = vrot.lane.b32.xlu0 %v4291, 16
  %v4440 = vpop.permute.xlu0 %4439
  %4441 = vrot.lane.b32.xlu0 %v4296, 16
  %v4442 = vpop.permute.xlu0 %4441
  %4443 = vrot.lane.b32.xlu0 %v4301, 16
  %v4444 = vpop.permute.xlu0 %4443
  %4445 = vrot.lane.b32.xlu0 %v4306, 16
  %v4446 = vpop.permute.xlu0 %4445
  %4447 = vrot.lane.b32.xlu0 %v4311, 16
  %v4448 = vpop.permute.xlu0 %4447
  %4449 = vrot.lane.b32.xlu0 %v4316, 16
  %v4450 = vpop.permute.xlu0 %4449
  %4451 = vrot.lane.b32.xlu0 %v4321, 16
  %v4452 = vpop.permute.xlu0 %4451
  %4453 = vrot.lane.b32.xlu0 %v4326, 16
  %v4454 = vpop.permute.xlu0 %4453
  %4455 = vrot.lane.b32.xlu0 %v4331, 16
  %v4456 = vpop.permute.xlu0 %4455
  %4457 = vrot.lane.b32.xlu0 %v4336, 16
  %v4458 = vpop.permute.xlu0 %4457
  %4459 = vrot.lane.b32.xlu0 %v4341, 16
  %v4460 = vpop.permute.xlu0 %4459
  %4461 = vrot.lane.b32.xlu0 %v4346, 16
  %v4462 = vpop.permute.xlu0 %4461
  %4463 = vrot.lane.b32.xlu0 %v4351, 16
  %v4464 = vpop.permute.xlu0 %4463
  %4465 = vrot.lane.b32.xlu0 %v4356, 16
  %v4466 = vpop.permute.xlu0 %4465
  %4467 = vrot.lane.b32.xlu0 %v4361, 16
  %v4468 = vpop.permute.xlu0 %4467
  %4469 = vrot.lane.b32.xlu0 %v4366, 16
  %v4470 = vpop.permute.xlu0 %4469
  %4471 = vrot.lane.b32.xlu0 %v4371, 16
  %v4472 = vpop.permute.xlu0 %4471
  %4473 = vrot.lane.b32.xlu0 %v4376, 16
  %v4474 = vpop.permute.xlu0 %4473
  %v4507 = vsel %vm1813, %v2842, %v4412
  %v4508 = vsel %vm1813, %v2847, %v4414
  %v4509 = vsel %vm1813, %v2852, %v4416
  %v4510 = vsel %vm1813, %v2857, %v4418
  %v4511 = vsel %vm1813, %v2862, %v4420
  %v4512 = vsel %vm1813, %v2867, %v4422
  %v4513 = vsel %vm1813, %v2872, %v4424
  %v4514 = vsel %vm1813, %v2877, %v4426
  %v4515 = vsel %vm1813, %v2882, %v4428
  %v4516 = vsel %vm1813, %v2887, %v4430
  %v4517 = vsel %vm1813, %v2892, %v4432
  %v4518 = vsel %vm1813, %v2897, %v4434
  %v4519 = vsel %vm1813, %v2902, %v4436
  %v4520 = vsel %vm1813, %v2907, %v4438
  %v4521 = vsel %vm1813, %v2912, %v4440
  %v4522 = vsel %vm1813, %v2917, %v4442
  %v4523 = vsel %vm1813, %v2922, %v4444
  %v4524 = vsel %vm1813, %v2927, %v4446
  %v4525 = vsel %vm1813, %v2932, %v4448
  %v4526 = vsel %vm1813, %v2937, %v4450
  %v4527 = vsel %vm1813, %v2942, %v4452
  %v4528 = vsel %vm1813, %v2947, %v4454
  %v4529 = vsel %vm1813, %v2952, %v4456
  %v4530 = vsel %vm1813, %v2957, %v4458
  %v4531 = vsel %vm1813, %v2962, %v4460
  %v4532 = vsel %vm1813, %v2967, %v4462
  %v4533 = vsel %vm1813, %v2972, %v4464
  %v4534 = vsel %vm1813, %v2977, %v4466
  %v4535 = vsel %vm1813, %v2982, %v4468
  %v4536 = vsel %vm1813, %v2987, %v4470
  %v4537 = vsel %vm1813, %v2992, %v4472
  %v4538 = vsel %vm1813, %v2997, %v4474
  %4571 = vrot.lane.b32.xlu0 %v1495, 96
  %v4572 = vpop.permute.xlu0 %4571
  %4573 = vrot.lane.b32.xlu0 %v1500, 96
  %v4574 = vpop.permute.xlu0 %4573
  %4575 = vrot.lane.b32.xlu0 %v1505, 96
  %v4576 = vpop.permute.xlu0 %4575
  %4577 = vrot.lane.b32.xlu0 %v1510, 96
  %v4578 = vpop.permute.xlu0 %4577
  %4579 = vrot.lane.b32.xlu0 %v1515, 96
  %v4580 = vpop.permute.xlu0 %4579
  %4581 = vrot.lane.b32.xlu0 %v1520, 96
  %v4582 = vpop.permute.xlu0 %4581
  %4583 = vrot.lane.b32.xlu0 %v1525, 96
  %v4584 = vpop.permute.xlu0 %4583
  %4585 = vrot.lane.b32.xlu0 %v1530, 96
  %v4586 = vpop.permute.xlu0 %4585
  %4587 = vrot.lane.b32.xlu0 %v1535, 96
  %v4588 = vpop.permute.xlu0 %4587
  %4589 = vrot.lane.b32.xlu0 %v1540, 96
  %v4590 = vpop.permute.xlu0 %4589
  %4591 = vrot.lane.b32.xlu0 %v1545, 96
  %v4592 = vpop.permute.xlu0 %4591
  %4593 = vrot.lane.b32.xlu0 %v1550, 96
  %v4594 = vpop.permute.xlu0 %4593
  %4595 = vrot.lane.b32.xlu0 %v1555, 96
  %v4596 = vpop.permute.xlu0 %4595
  %4597 = vrot.lane.b32.xlu0 %v1560, 96
  %v4598 = vpop.permute.xlu0 %4597
  %4599 = vrot.lane.b32.xlu0 %v1565, 96
  %v4600 = vpop.permute.xlu0 %4599
  %4601 = vrot.lane.b32.xlu0 %v1570, 96
  %v4602 = vpop.permute.xlu0 %4601
  %4603 = vrot.lane.b32.xlu0 %v1575, 96
  %v4604 = vpop.permute.xlu0 %4603
  %4605 = vrot.lane.b32.xlu0 %v1580, 96
  %v4606 = vpop.permute.xlu0 %4605
  %4607 = vrot.lane.b32.xlu0 %v1585, 96
  %v4608 = vpop.permute.xlu0 %4607
  %4609 = vrot.lane.b32.xlu0 %v1590, 96
  %v4610 = vpop.permute.xlu0 %4609
  %4611 = vrot.lane.b32.xlu0 %v1595, 96
  %v4612 = vpop.permute.xlu0 %4611
  %4613 = vrot.lane.b32.xlu0 %v1600, 96
  %v4614 = vpop.permute.xlu0 %4613
  %4615 = vrot.lane.b32.xlu0 %v1605, 96
  %v4616 = vpop.permute.xlu0 %4615
  %4617 = vrot.lane.b32.xlu0 %v1610, 96
  %v4618 = vpop.permute.xlu0 %4617
  %4619 = vrot.lane.b32.xlu0 %v1615, 96
  %v4620 = vpop.permute.xlu0 %4619
  %4621 = vrot.lane.b32.xlu0 %v1620, 96
  %v4622 = vpop.permute.xlu0 %4621
  %4623 = vrot.lane.b32.xlu0 %v1625, 96
  %v4624 = vpop.permute.xlu0 %4623
  %4625 = vrot.lane.b32.xlu0 %v1630, 96
  %v4626 = vpop.permute.xlu0 %4625
  %4627 = vrot.lane.b32.xlu0 %v1635, 96
  %v4628 = vpop.permute.xlu0 %4627
  %4629 = vrot.lane.b32.xlu0 %v1640, 96
  %v4630 = vpop.permute.xlu0 %4629
  %4631 = vrot.lane.b32.xlu0 %v1645, 96
  %v4632 = vpop.permute.xlu0 %4631
  %4633 = vrot.lane.b32.xlu0 %v1650, 96
  %v4634 = vpop.permute.xlu0 %4633
  %v4635 = vsel %vm1813, %v1495, 0
  %v4637 = vsel %vm1813, %v1500, 0
  %v4639 = vsel %vm1813, %v1505, 0
  %v4641 = vsel %vm1813, %v1510, 0
  %v4643 = vsel %vm1813, %v1515, 0
  %v4645 = vsel %vm1813, %v1520, 0
  %v4647 = vsel %vm1813, %v1525, 0
  %v4649 = vsel %vm1813, %v1530, 0
  %v4651 = vsel %vm1813, %v1535, 0
  %v4653 = vsel %vm1813, %v1540, 0
  %v4655 = vsel %vm1813, %v1545, 0
  %v4657 = vsel %vm1813, %v1550, 0
  %v4659 = vsel %vm1813, %v1555, 0
  %v4661 = vsel %vm1813, %v1560, 0
  %v4663 = vsel %vm1813, %v1565, 0
  %v4665 = vsel %vm1813, %v1570, 0
  %v4667 = vsel %vm1813, %v1575, 0
  %v4669 = vsel %vm1813, %v1580, 0
  %v4671 = vsel %vm1813, %v1585, 0
  %v4673 = vsel %vm1813, %v1590, 0
  %v4675 = vsel %vm1813, %v1595, 0
  %v4677 = vsel %vm1813, %v1600, 0
  %v4679 = vsel %vm1813, %v1605, 0
  %v4681 = vsel %vm1813, %v1610, 0
  %v4683 = vsel %vm1813, %v1615, 0
  %v4685 = vsel %vm1813, %v1620, 0
  %v4687 = vsel %vm1813, %v1625, 0
  %v4689 = vsel %vm1813, %v1630, 0
  %v4691 = vsel %vm1813, %v1635, 0
  %v4693 = vsel %vm1813, %v1640, 0
  %v4695 = vsel %vm1813, %v1645, 0
  %v4697 = vsel %vm1813, %v1650, 0
  %v4699 = vsel %vm1813, %v4572, 0
  %v4701 = vsel %vm1813, %v4574, 0
  %v4703 = vsel %vm1813, %v4576, 0
  %v4705 = vsel %vm1813, %v4578, 0
  %v4707 = vsel %vm1813, %v4580, 0
  %v4709 = vsel %vm1813, %v4582, 0
  %v4711 = vsel %vm1813, %v4584, 0
  %v4713 = vsel %vm1813, %v4586, 0
  %v4715 = vsel %vm1813, %v4588, 0
  %v4717 = vsel %vm1813, %v4590, 0
  %v4719 = vsel %vm1813, %v4592, 0
  %v4721 = vsel %vm1813, %v4594, 0
  %v4723 = vsel %vm1813, %v4596, 0
  %v4725 = vsel %vm1813, %v4598, 0
  %v4727 = vsel %vm1813, %v4600, 0
  %v4729 = vsel %vm1813, %v4602, 0
  %v4731 = vsel %vm1813, %v4604, 0
  %v4733 = vsel %vm1813, %v4606, 0
  %v4735 = vsel %vm1813, %v4608, 0
  %v4737 = vsel %vm1813, %v4610, 0
  %v4739 = vsel %vm1813, %v4612, 0
  %v4741 = vsel %vm1813, %v4614, 0
  %v4743 = vsel %vm1813, %v4616, 0
  %v4745 = vsel %vm1813, %v4618, 0
  %v4747 = vsel %vm1813, %v4620, 0
  %v4749 = vsel %vm1813, %v4622, 0
  %v4751 = vsel %vm1813, %v4624, 0
  %v4753 = vsel %vm1813, %v4626, 0
  %v4755 = vsel %vm1813, %v4628, 0
  %v4757 = vsel %vm1813, %v4630, 0
  %v4759 = vsel %vm1813, %v4632, 0
  %v4761 = vsel %vm1813, %v4634, 0
  %4763 = vmatprep.subr.mxu0 0.0
  %4764 = vmatpush1.xpose.msra.mxu0 %v4699
  %4765 = vmatprep.subr.mxu0 0.0
  %4766 = vmatpush1.xpose.msra.mxu0 %v4701
  %4767 = vmatprep.subr.mxu0 0.0
  %4768 = vmatpush1.xpose.msra.mxu0 %v4703
  %4769 = vmatprep.subr.mxu0 0.0
  %4770 = vmatpush1.xpose.msra.mxu0 %v4705
  %4771 = vmatprep.subr.mxu0 0.0
  %4772 = vmatpush1.xpose.msra.mxu0 %v4707
  %4773 = vmatprep.subr.mxu0 0.0
  %4774 = vmatpush1.xpose.msra.mxu0 %v4709
  %4775 = vmatprep.subr.mxu0 0.0
  %4776 = vmatpush1.xpose.msra.mxu0 %v4711
  %4777 = vmatprep.subr.mxu0 0.0
  %4778 = vmatpush1.xpose.msra.mxu0 %v4713
  %4779 = vmatprep.subr.mxu0 0.0
  %4780 = vmatpush1.xpose.msra.mxu0 %v4715
  %4781 = vmatprep.subr.mxu0 0.0
  %4782 = vmatpush1.xpose.msra.mxu0 %v4717
  %4783 = vmatprep.subr.mxu0 0.0
  %4784 = vmatpush1.xpose.msra.mxu0 %v4719
  %4785 = vmatprep.subr.mxu0 0.0
  %4786 = vmatpush1.xpose.msra.mxu0 %v4721
  %4787 = vmatprep.subr.mxu0 0.0
  %4788 = vmatpush1.xpose.msra.mxu0 %v4723
  %4789 = vmatprep.subr.mxu0 0.0
  %4790 = vmatpush1.xpose.msra.mxu0 %v4725
  %4791 = vmatprep.subr.mxu0 0.0
  %4792 = vmatpush1.xpose.msra.mxu0 %v4727
  %4793 = vmatprep.subr.mxu0 0.0
  %4794 = vmatpush1.xpose.msra.mxu0 %v4729
  %4795 = vmatprep.subr.mxu0 0.0
  %4796 = vmatpush1.xpose.msra.mxu0 %v4731
  %4797 = vmatprep.subr.mxu0 0.0
  %4798 = vmatpush1.xpose.msra.mxu0 %v4733
  %4799 = vmatprep.subr.mxu0 0.0
  %4800 = vmatpush1.xpose.msra.mxu0 %v4735
  %4801 = vmatprep.subr.mxu0 0.0
  %4802 = vmatpush1.xpose.msra.mxu0 %v4737
  %4803 = vmatprep.subr.mxu0 0.0
  %4804 = vmatpush1.xpose.msra.mxu0 %v4739
  %4805 = vmatprep.subr.mxu0 0.0
  %4806 = vmatpush1.xpose.msra.mxu0 %v4741
  %4807 = vmatprep.subr.mxu0 0.0
  %4808 = vmatpush1.xpose.msra.mxu0 %v4743
  %4809 = vmatprep.subr.mxu0 0.0
  %4810 = vmatpush1.xpose.msra.mxu0 %v4745
  %4811 = vmatprep.subr.mxu0 0.0
  %4812 = vmatpush1.xpose.msra.mxu0 %v4747
  %4813 = vmatprep.subr.mxu0 0.0
  %4814 = vmatpush1.xpose.msra.mxu0 %v4749
  %4815 = vmatprep.subr.mxu0 0.0
  %4816 = vmatpush1.xpose.msra.mxu0 %v4751
  %4817 = vmatprep.subr.mxu0 0.0
  %4818 = vmatpush1.xpose.msra.mxu0 %v4753
  %4819 = vmatprep.subr.mxu0 0.0
  %4820 = vmatpush1.xpose.msra.mxu0 %v4755
  %4821 = vmatprep.subr.mxu0 0.0
  %4822 = vmatpush1.xpose.msra.mxu0 %v4757
  %4823 = vmatprep.subr.mxu0 0.0
  %4824 = vmatpush1.xpose.msra.mxu0 %v4759
  %4825 = vmatprep.subr.mxu0 0.0
  %4826 = vmatpush1.xpose.msra.mxu0 %v4761
  %4827 = vmatprep.mubr.f32.mxu0 0.0
  %4828 = vmatmul.mubr.f32.gmra.mrb[0].mxu0 %v4635
  %v4829 = vpop.f32.mrb[0].mxu0
  %v4830 = vadd.f32 %v1653, %v4829
  %v4831 = vpop.f32.mrb[0].mxu0
  %v4832 = vadd.f32 %v1654, %v4831
  %4833 = vmatprep.mubr.f32.mxu0 0.0
  %4834 = vmatmul.mubr.f32.gmra.mrb[0].mxu0 %v4637
  %v4835 = vpop.f32.mrb[0].mxu0
  %v4836 = vadd.f32 %v1655, %v4835
  %v4837 = vpop.f32.mrb[0].mxu0
  %v4838 = vadd.f32 %v1656, %v4837
  %4839 = vmatprep.mubr.f32.mxu0 0.0
  %4840 = vmatmul.mubr.f32.gmra.mrb[0].mxu0 %v4639
  %v4841 = vpop.f32.mrb[0].mxu0
  %v4842 = vadd.f32 %v1657, %v4841
  %v4843 = vpop.f32.mrb[0].mxu0
  %v4844 = vadd.f32 %v1658, %v4843
  %4845 = vmatprep.mubr.f32.mxu0 0.0
  %4846 = vmatmul.mubr.f32.gmra.mrb[0].mxu0 %v4641
  %v4847 = vpop.f32.mrb[0].mxu0
  %v4848 = vadd.f32 %v1659, %v4847
  %v4849 = vpop.f32.mrb[0].mxu0
  %v4850 = vadd.f32 %v1660, %v4849
  %4851 = vmatprep.mubr.f32.mxu0 0.0
  %4852 = vmatmul.mubr.f32.gmra.mrb[0].mxu0 %v4643
  %v4853 = vpop.f32.mrb[0].mxu0
  %v4854 = vadd.f32 %v1661, %v4853
  %v4855 = vpop.f32.mrb[0].mxu0
  %v4856 = vadd.f32 %v1662, %v4855
  %4857 = vmatprep.mubr.f32.mxu0 0.0
  %4858 = vmatmul.mubr.f32.gmra.mrb[0].mxu0 %v4645
  %v4859 = vpop.f32.mrb[0].mxu0
  %v4860 = vadd.f32 %v1663, %v4859
  %v4861 = vpop.f32.mrb[0].mxu0
  %v4862 = vadd.f32 %v1664, %v4861
  %4863 = vmatprep.mubr.f32.mxu0 0.0
  %4864 = vmatmul.mubr.f32.gmra.mrb[0].mxu0 %v4647
  %v4865 = vpop.f32.mrb[0].mxu0
  %v4866 = vadd.f32 %v1665, %v4865
  %v4867 = vpop.f32.mrb[0].mxu0
  %v4868 = vadd.f32 %v1666, %v4867
  %4869 = vmatprep.mubr.f32.mxu0 0.0
  %4870 = vmatmul.mubr.f32.gmra.mrb[0].mxu0 %v4649
  %v4871 = vpop.f32.mrb[0].mxu0
  %v4872 = vadd.f32 %v1667, %v4871
  %v4873 = vpop.f32.mrb[0].mxu0
  %v4874 = vadd.f32 %v1668, %v4873
  %4875 = vmatprep.mubr.f32.mxu0 0.0
  %4876 = vmatmul.mubr.f32.gmra.mrb[0].mxu0 %v4651
  %v4877 = vpop.f32.mrb[0].mxu0
  %v4878 = vadd.f32 %v1669, %v4877
  %v4879 = vpop.f32.mrb[0].mxu0
  %v4880 = vadd.f32 %v1670, %v4879
  %4881 = vmatprep.mubr.f32.mxu0 0.0
  %4882 = vmatmul.mubr.f32.gmra.mrb[0].mxu0 %v4653
  %v4883 = vpop.f32.mrb[0].mxu0
  %v4884 = vadd.f32 %v1671, %v4883
  %v4885 = vpop.f32.mrb[0].mxu0
  %v4886 = vadd.f32 %v1672, %v4885
  %4887 = vmatprep.mubr.f32.mxu0 0.0
  %4888 = vmatmul.mubr.f32.gmra.mrb[0].mxu0 %v4655
  %v4889 = vpop.f32.mrb[0].mxu0
  %v4890 = vadd.f32 %v1673, %v4889
  %v4891 = vpop.f32.mrb[0].mxu0
  %v4892 = vadd.f32 %v1674, %v4891
  %4893 = vmatprep.mubr.f32.mxu0 0.0
  %4894 = vmatmul.mubr.f32.gmra.mrb[0].mxu0 %v4657
  %v4895 = vpop.f32.mrb[0].mxu0
  %v4896 = vadd.f32 %v1675, %v4895
  %v4897 = vpop.f32.mrb[0].mxu0
  %v4898 = vadd.f32 %v1676, %v4897
  %4899 = vmatprep.mubr.f32.mxu0 0.0
  %4900 = vmatmul.mubr.f32.gmra.mrb[0].mxu0 %v4659
  %v4901 = vpop.f32.mrb[0].mxu0
  %v4902 = vadd.f32 %v1677, %v4901
  %v4903 = vpop.f32.mrb[0].mxu0
  %v4904 = vadd.f32 %v1678, %v4903
  %4905 = vmatprep.mubr.f32.mxu0 0.0
  %4906 = vmatmul.mubr.f32.gmra.mrb[0].mxu0 %v4661
  %v4907 = vpop.f32.mrb[0].mxu0
  %v4908 = vadd.f32 %v1679, %v4907
  %v4909 = vpop.f32.mrb[0].mxu0
  %v4910 = vadd.f32 %v1680, %v4909
  %4911 = vmatprep.mubr.f32.mxu0 0.0
  %4912 = vmatmul.mubr.f32.gmra.mrb[0].mxu0 %v4663
  %v4913 = vpop.f32.mrb[0].mxu0
  %v4914 = vadd.f32 %v1681, %v4913
  %v4915 = vpop.f32.mrb[0].mxu0
  %v4916 = vadd.f32 %v1682, %v4915
  %4917 = vmatprep.mubr.f32.mxu0 0.0
  %4918 = vmatmul.mubr.f32.gmra.mrb[0].mxu0 %v4665
  %v4919 = vpop.f32.mrb[0].mxu0
  %v4920 = vadd.f32 %v1683, %v4919
  %v4921 = vpop.f32.mrb[0].mxu0
  %v4922 = vadd.f32 %v1684, %v4921
  %4923 = vmatprep.mubr.f32.mxu0 0.0
  %4924 = vmatmul.mubr.f32.gmra.mrb[0].mxu0 %v4667
  %v4925 = vpop.f32.mrb[0].mxu0
  %v4926 = vadd.f32 %v1685, %v4925
  %v4927 = vpop.f32.mrb[0].mxu0
  %v4928 = vadd.f32 %v1686, %v4927
  %4929 = vmatprep.mubr.f32.mxu0 0.0
  %4930 = vmatmul.mubr.f32.gmra.mrb[0].mxu0 %v4669
  %v4931 = vpop.f32.mrb[0].mxu0
  %v4932 = vadd.f32 %v1687, %v4931
  %v4933 = vpop.f32.mrb[0].mxu0
  %v4934 = vadd.f32 %v1688, %v4933
  %4935 = vmatprep.mubr.f32.mxu0 0.0
  %4936 = vmatmul.mubr.f32.gmra.mrb[0].mxu0 %v4671
  %v4937 = vpop.f32.mrb[0].mxu0
  %v4938 = vadd.f32 %v1689, %v4937
  %v4939 = vpop.f32.mrb[0].mxu0
  %v4940 = vadd.f32 %v1690, %v4939
  %4941 = vmatprep.mubr.f32.mxu0 0.0
  %4942 = vmatmul.mubr.f32.gmra.mrb[0].mxu0 %v4673
  %v4943 = vpop.f32.mrb[0].mxu0
  %v4944 = vadd.f32 %v1691, %v4943
  %v4945 = vpop.f32.mrb[0].mxu0
  %v4946 = vadd.f32 %v1692, %v4945
  %4947 = vmatprep.mubr.f32.mxu0 0.0
  %4948 = vmatmul.mubr.f32.gmra.mrb[0].mxu0 %v4675
  %v4949 = vpop.f32.mrb[0].mxu0
  %v4950 = vadd.f32 %v1693, %v4949
  %v4951 = vpop.f32.mrb[0].mxu0
  %v4952 = vadd.f32 %v1694, %v4951
  %4953 = vmatprep.mubr.f32.mxu0 0.0
  %4954 = vmatmul.mubr.f32.gmra.mrb[0].mxu0 %v4677
  %v4955 = vpop.f32.mrb[0].mxu0
  %v4956 = vadd.f32 %v1695, %v4955
  %v4957 = vpop.f32.mrb[0].mxu0
  %v4958 = vadd.f32 %v1696, %v4957
  %4959 = vmatprep.mubr.f32.mxu0 0.0
  %4960 = vmatmul.mubr.f32.gmra.mrb[0].mxu0 %v4679
  %v4961 = vpop.f32.mrb[0].mxu0
  %v4962 = vadd.f32 %v1697, %v4961
  %v4963 = vpop.f32.mrb[0].mxu0
  %v4964 = vadd.f32 %v1698, %v4963
  %4965 = vmatprep.mubr.f32.mxu0 0.0
  %4966 = vmatmul.mubr.f32.gmra.mrb[0].mxu0 %v4681
  %v4967 = vpop.f32.mrb[0].mxu0
  %v4968 = vadd.f32 %v1699, %v4967
  %v4969 = vpop.f32.mrb[0].mxu0
  %v4970 = vadd.f32 %v1700, %v4969
  %4971 = vmatprep.mubr.f32.mxu0 0.0
  %4972 = vmatmul.mubr.f32.gmra.mrb[0].mxu0 %v4683
  %v4973 = vpop.f32.mrb[0].mxu0
  %v4974 = vadd.f32 %v1701, %v4973
  %v4975 = vpop.f32.mrb[0].mxu0
  %v4976 = vadd.f32 %v1702, %v4975
  %4977 = vmatprep.mubr.f32.mxu0 0.0
  %4978 = vmatmul.mubr.f32.gmra.mrb[0].mxu0 %v4685
  %v4979 = vpop.f32.mrb[0].mxu0
  %v4980 = vadd.f32 %v1703, %v4979
  %v4981 = vpop.f32.mrb[0].mxu0
  %v4982 = vadd.f32 %v1704, %v4981
  %4983 = vmatprep.mubr.f32.mxu0 0.0
  %4984 = vmatmul.mubr.f32.gmra.mrb[0].mxu0 %v4687
  %v4985 = vpop.f32.mrb[0].mxu0
  %v4986 = vadd.f32 %v1705, %v4985
  %v4987 = vpop.f32.mrb[0].mxu0
  %v4988 = vadd.f32 %v1706, %v4987
  %4989 = vmatprep.mubr.f32.mxu0 0.0
  %4990 = vmatmul.mubr.f32.gmra.mrb[0].mxu0 %v4689
  %v4991 = vpop.f32.mrb[0].mxu0
  %v4992 = vadd.f32 %v1707, %v4991
  %v4993 = vpop.f32.mrb[0].mxu0
  %v4994 = vadd.f32 %v1708, %v4993
  %4995 = vmatprep.mubr.f32.mxu0 0.0
  %4996 = vmatmul.mubr.f32.gmra.mrb[0].mxu0 %v4691
  %v4997 = vpop.f32.mrb[0].mxu0
  %v4998 = vadd.f32 %v1709, %v4997
  %v4999 = vpop.f32.mrb[0].mxu0
  %v5000 = vadd.f32 %v1710, %v4999
  %5001 = vmatprep.mubr.f32.mxu0 0.0
  %5002 = vmatmul.mubr.f32.gmra.mrb[0].mxu0 %v4693
  %v5003 = vpop.f32.mrb[0].mxu0
  %v5004 = vadd.f32 %v1711, %v5003
  %v5005 = vpop.f32.mrb[0].mxu0
  %v5006 = vadd.f32 %v1712, %v5005
  %5007 = vmatprep.mubr.f32.mxu0 0.0
  %5008 = vmatmul.mubr.f32.gmra.mrb[0].mxu0 %v4695
  %v5009 = vpop.f32.mrb[0].mxu0
  %v5010 = vadd.f32 %v1713, %v5009
  %v5011 = vpop.f32.mrb[0].mxu0
  %v5012 = vadd.f32 %v1714, %v5011
  %5013 = vmatprep.mubr.f32.mxu0 0.0
  %5014 = vmatmul.mubr.f32.gmra.mrb[0].mxu0 %v4697
  %v5015 = vpop.f32.mrb[0].mxu0
  %v5016 = vadd.f32 %v1715, %v5015
  %v5017 = vpop.f32.mrb[0].mxu0
  %v5018 = vadd.f32 %v1716, %v5017
  %5019 = vdwg.mxu0
  %v5020 = vmax.f32 %v4830, %v4832
  %5021 = vmax.xlane.f32.xlu0 %v5020
  %v5022 = vpop.xlane.xlu0 %5021
  %v5023 = vmax.f32 %v4836, %v4838
  %5024 = vmax.xlane.f32.xlu0 %v5023
  %v5025 = vpop.xlane.xlu0 %5024
  %v5026 = vmax.f32 %v4842, %v4844
  %5027 = vmax.xlane.f32.xlu0 %v5026
  %v5028 = vpop.xlane.xlu0 %5027
  %v5029 = vmax.f32 %v4848, %v4850
  %5030 = vmax.xlane.f32.xlu0 %v5029
  %v5031 = vpop.xlane.xlu0 %5030
  %v5032 = vmax.f32 %v4854, %v4856
  %5033 = vmax.xlane.f32.xlu0 %v5032
  %v5034 = vpop.xlane.xlu0 %5033
  %v5035 = vmax.f32 %v4860, %v4862
  %5036 = vmax.xlane.f32.xlu0 %v5035
  %v5037 = vpop.xlane.xlu0 %5036
  %v5038 = vmax.f32 %v4866, %v4868
  %5039 = vmax.xlane.f32.xlu0 %v5038
  %v5040 = vpop.xlane.xlu0 %5039
  %v5041 = vmax.f32 %v4872, %v4874
  %5042 = vmax.xlane.f32.xlu0 %v5041
  %v5043 = vpop.xlane.xlu0 %5042
  %v5044 = vmax.f32 %v4878, %v4880
  %5045 = vmax.xlane.f32.xlu0 %v5044
  %v5046 = vpop.xlane.xlu0 %5045
  %v5047 = vmax.f32 %v4884, %v4886
  %5048 = vmax.xlane.f32.xlu0 %v5047
  %v5049 = vpop.xlane.xlu0 %5048
  %v5050 = vmax.f32 %v4890, %v4892
  %5051 = vmax.xlane.f32.xlu0 %v5050
  %v5052 = vpop.xlane.xlu0 %5051
  %v5053 = vmax.f32 %v4896, %v4898
  %5054 = vmax.xlane.f32.xlu0 %v5053
  %v5055 = vpop.xlane.xlu0 %5054
  %v5056 = vmax.f32 %v4902, %v4904
  %5057 = vmax.xlane.f32.xlu0 %v5056
  %v5058 = vpop.xlane.xlu0 %5057
  %v5059 = vmax.f32 %v4908, %v4910
  %5060 = vmax.xlane.f32.xlu0 %v5059
  %v5061 = vpop.xlane.xlu0 %5060
  %v5062 = vmax.f32 %v4914, %v4916
  %5063 = vmax.xlane.f32.xlu0 %v5062
  %v5064 = vpop.xlane.xlu0 %5063
  %v5065 = vmax.f32 %v4920, %v4922
  %5066 = vmax.xlane.f32.xlu0 %v5065
  %v5067 = vpop.xlane.xlu0 %5066
  %v5068 = vmax.f32 %v4926, %v4928
  %5069 = vmax.xlane.f32.xlu0 %v5068
  %v5070 = vpop.xlane.xlu0 %5069
  %v5071 = vmax.f32 %v4932, %v4934
  %5072 = vmax.xlane.f32.xlu0 %v5071
  %v5073 = vpop.xlane.xlu0 %5072
  %v5074 = vmax.f32 %v4938, %v4940
  %5075 = vmax.xlane.f32.xlu0 %v5074
  %v5076 = vpop.xlane.xlu0 %5075
  %v5077 = vmax.f32 %v4944, %v4946
  %5078 = vmax.xlane.f32.xlu0 %v5077
  %v5079 = vpop.xlane.xlu0 %5078
  %v5080 = vmax.f32 %v4950, %v4952
  %5081 = vmax.xlane.f32.xlu0 %v5080
  %v5082 = vpop.xlane.xlu0 %5081
  %v5083 = vmax.f32 %v4956, %v4958
  %5084 = vmax.xlane.f32.xlu0 %v5083
  %v5085 = vpop.xlane.xlu0 %5084
  %v5086 = vmax.f32 %v4962, %v4964
  %5087 = vmax.xlane.f32.xlu0 %v5086
  %v5088 = vpop.xlane.xlu0 %5087
  %v5089 = vmax.f32 %v4968, %v4970
  %5090 = vmax.xlane.f32.xlu0 %v5089
  %v5091 = vpop.xlane.xlu0 %5090
  %v5092 = vmax.f32 %v4974, %v4976
  %5093 = vmax.xlane.f32.xlu0 %v5092
  %v5094 = vpop.xlane.xlu0 %5093
  %v5095 = vmax.f32 %v4980, %v4982
  %5096 = vmax.xlane.f32.xlu0 %v5095
  %v5097 = vpop.xlane.xlu0 %5096
  %v5098 = vmax.f32 %v4986, %v4988
  %5099 = vmax.xlane.f32.xlu0 %v5098
  %v5100 = vpop.xlane.xlu0 %5099
  %v5101 = vmax.f32 %v4992, %v4994
  %5102 = vmax.xlane.f32.xlu0 %v5101
  %v5103 = vpop.xlane.xlu0 %5102
  %v5104 = vmax.f32 %v4998, %v5000
  %5105 = vmax.xlane.f32.xlu0 %v5104
  %v5106 = vpop.xlane.xlu0 %5105
  %v5107 = vmax.f32 %v5004, %v5006
  %5108 = vmax.xlane.f32.xlu0 %v5107
  %v5109 = vpop.xlane.xlu0 %5108
  %v5110 = vmax.f32 %v5010, %v5012
  %5111 = vmax.xlane.f32.xlu0 %v5110
  %v5112 = vpop.xlane.xlu0 %5111
  %v5113 = vmax.f32 %v5016, %v5018
  %5114 = vmax.xlane.f32.xlu0 %v5113
  %v5115 = vpop.xlane.xlu0 %5114
  %v5116 = vsub.f32 %v4830, %v5022
  %v5117 = vsub.f32 %v4832, %v5022
  %v5118 = vsub.f32 %v4836, %v5025
  %v5119 = vsub.f32 %v4838, %v5025
  %v5120 = vsub.f32 %v4842, %v5028
  %v5121 = vsub.f32 %v4844, %v5028
  %v5122 = vsub.f32 %v4848, %v5031
  %v5123 = vsub.f32 %v4850, %v5031
  %v5124 = vsub.f32 %v4854, %v5034
  %v5125 = vsub.f32 %v4856, %v5034
  %v5126 = vsub.f32 %v4860, %v5037
  %v5127 = vsub.f32 %v4862, %v5037
  %v5128 = vsub.f32 %v4866, %v5040
  %v5129 = vsub.f32 %v4868, %v5040
  %v5130 = vsub.f32 %v4872, %v5043
  %v5131 = vsub.f32 %v4874, %v5043
  %v5132 = vsub.f32 %v4878, %v5046
  %v5133 = vsub.f32 %v4880, %v5046
  %v5134 = vsub.f32 %v4884, %v5049
  %v5135 = vsub.f32 %v4886, %v5049
  %v5136 = vsub.f32 %v4890, %v5052
  %v5137 = vsub.f32 %v4892, %v5052
  %v5138 = vsub.f32 %v4896, %v5055
  %v5139 = vsub.f32 %v4898, %v5055
  %v5140 = vsub.f32 %v4902, %v5058
  %v5141 = vsub.f32 %v4904, %v5058
  %v5142 = vsub.f32 %v4908, %v5061
  %v5143 = vsub.f32 %v4910, %v5061
  %v5144 = vsub.f32 %v4914, %v5064
  %v5145 = vsub.f32 %v4916, %v5064
  %v5146 = vsub.f32 %v4920, %v5067
  %v5147 = vsub.f32 %v4922, %v5067
  %v5148 = vsub.f32 %v4926, %v5070
  %v5149 = vsub.f32 %v4928, %v5070
  %v5150 = vsub.f32 %v4932, %v5073
  %v5151 = vsub.f32 %v4934, %v5073
  %v5152 = vsub.f32 %v4938, %v5076
  %v5153 = vsub.f32 %v4940, %v5076
  %v5154 = vsub.f32 %v4944, %v5079
  %v5155 = vsub.f32 %v4946, %v5079
  %v5156 = vsub.f32 %v4950, %v5082
  %v5157 = vsub.f32 %v4952, %v5082
  %v5158 = vsub.f32 %v4956, %v5085
  %v5159 = vsub.f32 %v4958, %v5085
  %v5160 = vsub.f32 %v4962, %v5088
  %v5161 = vsub.f32 %v4964, %v5088
  %v5162 = vsub.f32 %v4968, %v5091
  %v5163 = vsub.f32 %v4970, %v5091
  %v5164 = vsub.f32 %v4974, %v5094
  %v5165 = vsub.f32 %v4976, %v5094
  %v5166 = vsub.f32 %v4980, %v5097
  %v5167 = vsub.f32 %v4982, %v5097
  %v5168 = vsub.f32 %v4986, %v5100
  %v5169 = vsub.f32 %v4988, %v5100
  %v5170 = vsub.f32 %v4992, %v5103
  %v5171 = vsub.f32 %v4994, %v5103
  %v5172 = vsub.f32 %v4998, %v5106
  %v5173 = vsub.f32 %v5000, %v5106
  %v5174 = vsub.f32 %v5004, %v5109
  %v5175 = vsub.f32 %v5006, %v5109
  %v5176 = vsub.f32 %v5010, %v5112
  %v5177 = vsub.f32 %v5012, %v5112
  %v5178 = vsub.f32 %v5016, %v5115
  %v5179 = vsub.f32 %v5018, %v5115
  %v5180 = vmul.f32 %v5116, 1.442695
  %v5181 = vpow.pop %v5180
  %v5182 = vmul.f32 %v5117, 1.442695
  %v5183 = vpow.pop %v5182
  %v5184 = vmul.f32 %v5118, 1.442695
  %v5185 = vpow.pop %v5184
  %v5186 = vmul.f32 %v5119, 1.442695
  %v5187 = vpow.pop %v5186
  %v5188 = vmul.f32 %v5120, 1.442695
  %v5189 = vpow.pop %v5188
  %v5190 = vmul.f32 %v5121, 1.442695
  %v5191 = vpow.pop %v5190
  %v5192 = vmul.f32 %v5122, 1.442695
  %v5193 = vpow.pop %v5192
  %v5194 = vmul.f32 %v5123, 1.442695
  %v5195 = vpow.pop %v5194
  %v5196 = vmul.f32 %v5124, 1.442695
  %v5197 = vpow.pop %v5196
  %v5198 = vmul.f32 %v5125, 1.442695
  %v5199 = vpow.pop %v5198
  %v5200 = vmul.f32 %v5126, 1.442695
  %v5201 = vpow.pop %v5200
  %v5202 = vmul.f32 %v5127, 1.442695
  %v5203 = vpow.pop %v5202
  %v5204 = vmul.f32 %v5128, 1.442695
  %v5205 = vpow.pop %v5204
  %v5206 = vmul.f32 %v5129, 1.442695
  %v5207 = vpow.pop %v5206
  %v5208 = vmul.f32 %v5130, 1.442695
  %v5209 = vpow.pop %v5208
  %v5210 = vmul.f32 %v5131, 1.442695
  %v5211 = vpow.pop %v5210
  %v5212 = vmul.f32 %v5132, 1.442695
  %v5213 = vpow.pop %v5212
  %v5214 = vmul.f32 %v5133, 1.442695
  %v5215 = vpow.pop %v5214
  %v5216 = vmul.f32 %v5134, 1.442695
  %v5217 = vpow.pop %v5216
  %v5218 = vmul.f32 %v5135, 1.442695
  %v5219 = vpow.pop %v5218
  %v5220 = vmul.f32 %v5136, 1.442695
  %v5221 = vpow.pop %v5220
  %v5222 = vmul.f32 %v5137, 1.442695
  %v5223 = vpow.pop %v5222
  %v5224 = vmul.f32 %v5138, 1.442695
  %v5225 = vpow.pop %v5224
  %v5226 = vmul.f32 %v5139, 1.442695
  %v5227 = vpow.pop %v5226
  %v5228 = vmul.f32 %v5140, 1.442695
  %v5229 = vpow.pop %v5228
  %v5230 = vmul.f32 %v5141, 1.442695
  %v5231 = vpow.pop %v5230
  %v5232 = vmul.f32 %v5142, 1.442695
  %v5233 = vpow.pop %v5232
  %v5234 = vmul.f32 %v5143, 1.442695
  %v5235 = vpow.pop %v5234
  %v5236 = vmul.f32 %v5144, 1.442695
  %v5237 = vpow.pop %v5236
  %v5238 = vmul.f32 %v5145, 1.442695
  %v5239 = vpow.pop %v5238
  %v5240 = vmul.f32 %v5146, 1.442695
  %v5241 = vpow.pop %v5240
  %v5242 = vmul.f32 %v5147, 1.442695
  %v5243 = vpow.pop %v5242
  %v5244 = vmul.f32 %v5148, 1.442695
  %v5245 = vpow.pop %v5244
  %v5246 = vmul.f32 %v5149, 1.442695
  %v5247 = vpow.pop %v5246
  %v5248 = vmul.f32 %v5150, 1.442695
  %v5249 = vpow.pop %v5248
  %v5250 = vmul.f32 %v5151, 1.442695
  %v5251 = vpow.pop %v5250
  %v5252 = vmul.f32 %v5152, 1.442695
  %v5253 = vpow.pop %v5252
  %v5254 = vmul.f32 %v5153, 1.442695
  %v5255 = vpow.pop %v5254
  %v5256 = vmul.f32 %v5154, 1.442695
  %v5257 = vpow.pop %v5256
  %v5258 = vmul.f32 %v5155, 1.442695
  %v5259 = vpow.pop %v5258
  %v5260 = vmul.f32 %v5156, 1.442695
  %v5261 = vpow.pop %v5260
  %v5262 = vmul.f32 %v5157, 1.442695
  %v5263 = vpow.pop %v5262
  %v5264 = vmul.f32 %v5158, 1.442695
  %v5265 = vpow.pop %v5264
  %v5266 = vmul.f32 %v5159, 1.442695
  %v5267 = vpow.pop %v5266
  %v5268 = vmul.f32 %v5160, 1.442695
  %v5269 = vpow.pop %v5268
  %v5270 = vmul.f32 %v5161, 1.442695
  %v5271 = vpow.pop %v5270
  %v5272 = vmul.f32 %v5162, 1.442695
  %v5273 = vpow.pop %v5272
  %v5274 = vmul.f32 %v5163, 1.442695
  %v5275 = vpow.pop %v5274
  %v5276 = vmul.f32 %v5164, 1.442695
  %v5277 = vpow.pop %v5276
  %v5278 = vmul.f32 %v5165, 1.442695
  %v5279 = vpow.pop %v5278
  %v5280 = vmul.f32 %v5166, 1.442695
  %v5281 = vpow.pop %v5280
  %v5282 = vmul.f32 %v5167, 1.442695
  %v5283 = vpow.pop %v5282
  %v5284 = vmul.f32 %v5168, 1.442695
  %v5285 = vpow.pop %v5284
  %v5286 = vmul.f32 %v5169, 1.442695
  %v5287 = vpow.pop %v5286
  %v5288 = vmul.f32 %v5170, 1.442695
  %v5289 = vpow.pop %v5288
  %v5290 = vmul.f32 %v5171, 1.442695
  %v5291 = vpow.pop %v5290
  %v5292 = vmul.f32 %v5172, 1.442695
  %v5293 = vpow.pop %v5292
  %v5294 = vmul.f32 %v5173, 1.442695
  %v5295 = vpow.pop %v5294
  %v5296 = vmul.f32 %v5174, 1.442695
  %v5297 = vpow.pop %v5296
  %v5298 = vmul.f32 %v5175, 1.442695
  %v5299 = vpow.pop %v5298
  %v5300 = vmul.f32 %v5176, 1.442695
  %v5301 = vpow.pop %v5300
  %v5302 = vmul.f32 %v5177, 1.442695
  %v5303 = vpow.pop %v5302
  %v5304 = vmul.f32 %v5178, 1.442695
  %v5305 = vpow.pop %v5304
  %v5306 = vmul.f32 %v5179, 1.442695
  %v5307 = vpow.pop %v5306
  %v5308 = vadd.f32 %v5181, %v5183
  %5309 = vadd.xlane.f32.xlu0 %v5308
  %v5310 = vpop.xlane.xlu0 %5309
  %v5311 = vadd.f32 %v5185, %v5187
  %5312 = vadd.xlane.f32.xlu0 %v5311
  %v5313 = vpop.xlane.xlu0 %5312
  %v5314 = vadd.f32 %v5189, %v5191
  %5315 = vadd.xlane.f32.xlu0 %v5314
  %v5316 = vpop.xlane.xlu0 %5315
  %v5317 = vadd.f32 %v5193, %v5195
  %5318 = vadd.xlane.f32.xlu0 %v5317
  %v5319 = vpop.xlane.xlu0 %5318
  %v5320 = vadd.f32 %v5197, %v5199
  %5321 = vadd.xlane.f32.xlu0 %v5320
  %v5322 = vpop.xlane.xlu0 %5321
  %v5323 = vadd.f32 %v5201, %v5203
  %5324 = vadd.xlane.f32.xlu0 %v5323
  %v5325 = vpop.xlane.xlu0 %5324
  %v5326 = vadd.f32 %v5205, %v5207
  %5327 = vadd.xlane.f32.xlu0 %v5326
  %v5328 = vpop.xlane.xlu0 %5327
  %v5329 = vadd.f32 %v5209, %v5211
  %5330 = vadd.xlane.f32.xlu0 %v5329
  %v5331 = vpop.xlane.xlu0 %5330
  %v5332 = vadd.f32 %v5213, %v5215
  %5333 = vadd.xlane.f32.xlu0 %v5332
  %v5334 = vpop.xlane.xlu0 %5333
  %v5335 = vadd.f32 %v5217, %v5219
  %5336 = vadd.xlane.f32.xlu0 %v5335
  %v5337 = vpop.xlane.xlu0 %5336
  %v5338 = vadd.f32 %v5221, %v5223
  %5339 = vadd.xlane.f32.xlu0 %v5338
  %v5340 = vpop.xlane.xlu0 %5339
  %v5341 = vadd.f32 %v5225, %v5227
  %5342 = vadd.xlane.f32.xlu0 %v5341
  %v5343 = vpop.xlane.xlu0 %5342
  %v5344 = vadd.f32 %v5229, %v5231
  %5345 = vadd.xlane.f32.xlu0 %v5344
  %v5346 = vpop.xlane.xlu0 %5345
  %v5347 = vadd.f32 %v5233, %v5235
  %5348 = vadd.xlane.f32.xlu0 %v5347
  %v5349 = vpop.xlane.xlu0 %5348
  %v5350 = vadd.f32 %v5237, %v5239
  %5351 = vadd.xlane.f32.xlu0 %v5350
  %v5352 = vpop.xlane.xlu0 %5351
  %v5353 = vadd.f32 %v5241, %v5243
  %5354 = vadd.xlane.f32.xlu0 %v5353
  %v5355 = vpop.xlane.xlu0 %5354
  %v5356 = vadd.f32 %v5245, %v5247
  %5357 = vadd.xlane.f32.xlu0 %v5356
  %v5358 = vpop.xlane.xlu0 %5357
  %v5359 = vadd.f32 %v5249, %v5251
  %5360 = vadd.xlane.f32.xlu0 %v5359
  %v5361 = vpop.xlane.xlu0 %5360
  %v5362 = vadd.f32 %v5253, %v5255
  %5363 = vadd.xlane.f32.xlu0 %v5362
  %v5364 = vpop.xlane.xlu0 %5363
  %v5365 = vadd.f32 %v5257, %v5259
  %5366 = vadd.xlane.f32.xlu0 %v5365
  %v5367 = vpop.xlane.xlu0 %5366
  %v5368 = vadd.f32 %v5261, %v5263
  %5369 = vadd.xlane.f32.xlu0 %v5368
  %v5370 = vpop.xlane.xlu0 %5369
  %v5371 = vadd.f32 %v5265, %v5267
  %5372 = vadd.xlane.f32.xlu0 %v5371
  %v5373 = vpop.xlane.xlu0 %5372
  %v5374 = vadd.f32 %v5269, %v5271
  %5375 = vadd.xlane.f32.xlu0 %v5374
  %v5376 = vpop.xlane.xlu0 %5375
  %v5377 = vadd.f32 %v5273, %v5275
  %5378 = vadd.xlane.f32.xlu0 %v5377
  %v5379 = vpop.xlane.xlu0 %5378
  %v5380 = vadd.f32 %v5277, %v5279
  %5381 = vadd.xlane.f32.xlu0 %v5380
  %v5382 = vpop.xlane.xlu0 %5381
  %v5383 = vadd.f32 %v5281, %v5283
  %5384 = vadd.xlane.f32.xlu0 %v5383
  %v5385 = vpop.xlane.xlu0 %5384
  %v5386 = vadd.f32 %v5285, %v5287
  %5387 = vadd.xlane.f32.xlu0 %v5386
  %v5388 = vpop.xlane.xlu0 %5387
  %v5389 = vadd.f32 %v5289, %v5291
  %5390 = vadd.xlane.f32.xlu0 %v5389
  %v5391 = vpop.xlane.xlu0 %5390
  %v5392 = vadd.f32 %v5293, %v5295
  %5393 = vadd.xlane.f32.xlu0 %v5392
  %v5394 = vpop.xlane.xlu0 %5393
  %v5395 = vadd.f32 %v5297, %v5299
  %5396 = vadd.xlane.f32.xlu0 %v5395
  %v5397 = vpop.xlane.xlu0 %5396
  %v5398 = vadd.f32 %v5301, %v5303
  %5399 = vadd.xlane.f32.xlu0 %v5398
  %v5400 = vpop.xlane.xlu0 %5399
  %v5401 = vadd.f32 %v5305, %v5307
  %5402 = vadd.xlane.f32.xlu0 %v5401
  %v5403 = vpop.xlane.xlu0 %5402
  %v5404 = vrcp.pop %v5310
  %v5405 = vrcp.pop %v5313
  %v5406 = vrcp.pop %v5316
  %v5407 = vrcp.pop %v5319
  %v5408 = vrcp.pop %v5322
  %v5409 = vrcp.pop %v5325
  %v5410 = vrcp.pop %v5328
  %v5411 = vrcp.pop %v5331
  %v5412 = vrcp.pop %v5334
  %v5413 = vrcp.pop %v5337
  %v5414 = vrcp.pop %v5340
  %v5415 = vrcp.pop %v5343
  %v5416 = vrcp.pop %v5346
  %v5417 = vrcp.pop %v5349
  %v5418 = vrcp.pop %v5352
  %v5419 = vrcp.pop %v5355
  %v5420 = vrcp.pop %v5358
  %v5421 = vrcp.pop %v5361
  %v5422 = vrcp.pop %v5364
  %v5423 = vrcp.pop %v5367
  %v5424 = vrcp.pop %v5370
  %v5425 = vrcp.pop %v5373
  %v5426 = vrcp.pop %v5376
  %v5427 = vrcp.pop %v5379
  %v5428 = vrcp.pop %v5382
  %v5429 = vrcp.pop %v5385
  %v5430 = vrcp.pop %v5388
  %v5431 = vrcp.pop %v5391
  %v5432 = vrcp.pop %v5394
  %v5433 = vrcp.pop %v5397
  %v5434 = vrcp.pop %v5400
  %v5435 = vrcp.pop %v5403
  %v5436 = vmul.f32 %v5181, %v5404
  %v5437 = vmul.f32 %v5183, %v5404
  %v5438 = vmul.f32 %v5185, %v5405
  %v5439 = vmul.f32 %v5187, %v5405
  %v5440 = vmul.f32 %v5189, %v5406
  %v5441 = vmul.f32 %v5191, %v5406
  %v5442 = vmul.f32 %v5193, %v5407
  %v5443 = vmul.f32 %v5195, %v5407
  %v5444 = vmul.f32 %v5197, %v5408
  %v5445 = vmul.f32 %v5199, %v5408
  %v5446 = vmul.f32 %v5201, %v5409
  %v5447 = vmul.f32 %v5203, %v5409
  %v5448 = vmul.f32 %v5205, %v5410
  %v5449 = vmul.f32 %v5207, %v5410
  %v5450 = vmul.f32 %v5209, %v5411
  %v5451 = vmul.f32 %v5211, %v5411
  %v5452 = vmul.f32 %v5213, %v5412
  %v5453 = vmul.f32 %v5215, %v5412
  %v5454 = vmul.f32 %v5217, %v5413
  %v5455 = vmul.f32 %v5219, %v5413
  %v5456 = vmul.f32 %v5221, %v5414
  %v5457 = vmul.f32 %v5223, %v5414
  %v5458 = vmul.f32 %v5225, %v5415
  %v5459 = vmul.f32 %v5227, %v5415
  %v5460 = vmul.f32 %v5229, %v5416
  %v5461 = vmul.f32 %v5231, %v5416
  %v5462 = vmul.f32 %v5233, %v5417
  %v5463 = vmul.f32 %v5235, %v5417
  %v5464 = vmul.f32 %v5237, %v5418
  %v5465 = vmul.f32 %v5239, %v5418
  %v5466 = vmul.f32 %v5241, %v5419
  %v5467 = vmul.f32 %v5243, %v5419
  %v5468 = vmul.f32 %v5245, %v5420
  %v5469 = vmul.f32 %v5247, %v5420
  %v5470 = vmul.f32 %v5249, %v5421
  %v5471 = vmul.f32 %v5251, %v5421
  %v5472 = vmul.f32 %v5253, %v5422
  %v5473 = vmul.f32 %v5255, %v5422
  %v5474 = vmul.f32 %v5257, %v5423
  %v5475 = vmul.f32 %v5259, %v5423
  %v5476 = vmul.f32 %v5261, %v5424
  %v5477 = vmul.f32 %v5263, %v5424
  %v5478 = vmul.f32 %v5265, %v5425
  %v5479 = vmul.f32 %v5267, %v5425
  %v5480 = vmul.f32 %v5269, %v5426
  %v5481 = vmul.f32 %v5271, %v5426
  %v5482 = vmul.f32 %v5273, %v5427
  %v5483 = vmul.f32 %v5275, %v5427
  %v5484 = vmul.f32 %v5277, %v5428
  %v5485 = vmul.f32 %v5279, %v5428
  %v5486 = vmul.f32 %v5281, %v5429
  %v5487 = vmul.f32 %v5283, %v5429
  %v5488 = vmul.f32 %v5285, %v5430
  %v5489 = vmul.f32 %v5287, %v5430
  %v5490 = vmul.f32 %v5289, %v5431
  %v5491 = vmul.f32 %v5291, %v5431
  %v5492 = vmul.f32 %v5293, %v5432
  %v5493 = vmul.f32 %v5295, %v5432
  %v5494 = vmul.f32 %v5297, %v5433
  %v5495 = vmul.f32 %v5299, %v5433
  %v5496 = vmul.f32 %v5301, %v5434
  %v5497 = vmul.f32 %v5303, %v5434
  %v5498 = vmul.f32 %v5305, %v5435
  %v5499 = vmul.f32 %v5307, %v5435
  %5500 = vrot.lane.b32.xlu0 %v1495, 64
  %v5501 = vpop.permute.xlu0 %5500
  %5502 = vrot.lane.b32.xlu0 %v1500, 64
  %v5503 = vpop.permute.xlu0 %5502
  %5504 = vrot.lane.b32.xlu0 %v1505, 64
  %v5505 = vpop.permute.xlu0 %5504
  %5506 = vrot.lane.b32.xlu0 %v1510, 64
  %v5507 = vpop.permute.xlu0 %5506
  %5508 = vrot.lane.b32.xlu0 %v1515, 64
  %v5509 = vpop.permute.xlu0 %5508
  %5510 = vrot.lane.b32.xlu0 %v1520, 64
  %v5511 = vpop.permute.xlu0 %5510
  %5512 = vrot.lane.b32.xlu0 %v1525, 64
  %v5513 = vpop.permute.xlu0 %5512
  %5514 = vrot.lane.b32.xlu0 %v1530, 64
  %v5515 = vpop.permute.xlu0 %5514
  %5516 = vrot.lane.b32.xlu0 %v1535, 64
  %v5517 = vpop.permute.xlu0 %5516
  %5518 = vrot.lane.b32.xlu0 %v1540, 64
  %v5519 = vpop.permute.xlu0 %5518
  %5520 = vrot.lane.b32.xlu0 %v1545, 64
  %v5521 = vpop.permute.xlu0 %5520
  %5522 = vrot.lane.b32.xlu0 %v1550, 64
  %v5523 = vpop.permute.xlu0 %5522
  %5524 = vrot.lane.b32.xlu0 %v1555, 64
  %v5525 = vpop.permute.xlu0 %5524
  %5526 = vrot.lane.b32.xlu0 %v1560, 64
  %v5527 = vpop.permute.xlu0 %5526
  %5528 = vrot.lane.b32.xlu0 %v1565, 64
  %v5529 = vpop.permute.xlu0 %5528
  %5530 = vrot.lane.b32.xlu0 %v1570, 64
  %v5531 = vpop.permute.xlu0 %5530
  %5532 = vrot.lane.b32.xlu0 %v1575, 64
  %v5533 = vpop.permute.xlu0 %5532
  %5534 = vrot.lane.b32.xlu0 %v1580, 64
  %v5535 = vpop.permute.xlu0 %5534
  %5536 = vrot.lane.b32.xlu0 %v1585, 64
  %v5537 = vpop.permute.xlu0 %5536
  %5538 = vrot.lane.b32.xlu0 %v1590, 64
  %v5539 = vpop.permute.xlu0 %5538
  %5540 = vrot.lane.b32.xlu0 %v1595, 64
  %v5541 = vpop.permute.xlu0 %5540
  %5542 = vrot.lane.b32.xlu0 %v1600, 64
  %v5543 = vpop.permute.xlu0 %5542
  %5544 = vrot.lane.b32.xlu0 %v1605, 64
  %v5545 = vpop.permute.xlu0 %5544
  %5546 = vrot.lane.b32.xlu0 %v1610, 64
  %v5547 = vpop.permute.xlu0 %5546
  %5548 = vrot.lane.b32.xlu0 %v1615, 64
  %v5549 = vpop.permute.xlu0 %5548
  %5550 = vrot.lane.b32.xlu0 %v1620, 64
  %v5551 = vpop.permute.xlu0 %5550
  %5552 = vrot.lane.b32.xlu0 %v1625, 64
  %v5553 = vpop.permute.xlu0 %5552
  %5554 = vrot.lane.b32.xlu0 %v1630, 64
  %v5555 = vpop.permute.xlu0 %5554
  %5556 = vrot.lane.b32.xlu0 %v1635, 64
  %v5557 = vpop.permute.xlu0 %5556
  %5558 = vrot.lane.b32.xlu0 %v1640, 64
  %v5559 = vpop.permute.xlu0 %5558
  %5560 = vrot.lane.b32.xlu0 %v1645, 64
  %v5561 = vpop.permute.xlu0 %5560
  %5562 = vrot.lane.b32.xlu0 %v1650, 64
  %v5563 = vpop.permute.xlu0 %5562
  %5596 = vmatprep.subr.mxu0 0.0
  %5597 = vmatpush1.msra.mxu0 %v5501
  %5598 = vmatprep.subr.mxu0 0.0
  %5599 = vmatpush1.msra.mxu0 %v5503
  %5600 = vmatprep.subr.mxu0 0.0
  %5601 = vmatpush1.msra.mxu0 %v5505
  %5602 = vmatprep.subr.mxu0 0.0
  %5603 = vmatpush1.msra.mxu0 %v5507
  %5604 = vmatprep.subr.mxu0 0.0
  %5605 = vmatpush1.msra.mxu0 %v5509
  %5606 = vmatprep.subr.mxu0 0.0
  %5607 = vmatpush1.msra.mxu0 %v5511
  %5608 = vmatprep.subr.mxu0 0.0
  %5609 = vmatpush1.msra.mxu0 %v5513
  %5610 = vmatprep.subr.mxu0 0.0
  %5611 = vmatpush1.msra.mxu0 %v5515
  %5612 = vmatprep.subr.mxu0 0.0
  %5613 = vmatpush1.msra.mxu0 %v5517
  %5614 = vmatprep.subr.mxu0 0.0
  %5615 = vmatpush1.msra.mxu0 %v5519
  %5616 = vmatprep.subr.mxu0 0.0
  %5617 = vmatpush1.msra.mxu0 %v5521
  %5618 = vmatprep.subr.mxu0 0.0
  %5619 = vmatpush1.msra.mxu0 %v5523
  %5620 = vmatprep.subr.mxu0 0.0
  %5621 = vmatpush1.msra.mxu0 %v5525
  %5622 = vmatprep.subr.mxu0 0.0
  %5623 = vmatpush1.msra.mxu0 %v5527
  %5624 = vmatprep.subr.mxu0 0.0
  %5625 = vmatpush1.msra.mxu0 %v5529
  %5626 = vmatprep.subr.mxu0 0.0
  %5627 = vmatpush1.msra.mxu0 %v5531
  %5628 = vmatprep.subr.mxu0 0.0
  %5629 = vmatpush1.msra.mxu0 %v5533
  %5630 = vmatprep.subr.mxu0 0.0
  %5631 = vmatpush1.msra.mxu0 %v5535
  %5632 = vmatprep.subr.mxu0 0.0
  %5633 = vmatpush1.msra.mxu0 %v5537
  %5634 = vmatprep.subr.mxu0 0.0
  %5635 = vmatpush1.msra.mxu0 %v5539
  %5636 = vmatprep.subr.mxu0 0.0
  %5637 = vmatpush1.msra.mxu0 %v5541
  %5638 = vmatprep.subr.mxu0 0.0
  %5639 = vmatpush1.msra.mxu0 %v5543
  %5640 = vmatprep.subr.mxu0 0.0
  %5641 = vmatpush1.msra.mxu0 %v5545
  %5642 = vmatprep.subr.mxu0 0.0
  %5643 = vmatpush1.msra.mxu0 %v5547
  %5644 = vmatprep.subr.mxu0 0.0
  %5645 = vmatpush1.msra.mxu0 %v5549
  %5646 = vmatprep.subr.mxu0 0.0
  %5647 = vmatpush1.msra.mxu0 %v5551
  %5648 = vmatprep.subr.mxu0 0.0
  %5649 = vmatpush1.msra.mxu0 %v5553
  %5650 = vmatprep.subr.mxu0 0.0
  %5651 = vmatpush1.msra.mxu0 %v5555
  %5652 = vmatprep.subr.mxu0 0.0
  %5653 = vmatpush1.msra.mxu0 %v5557
  %5654 = vmatprep.subr.mxu0 0.0
  %5655 = vmatpush1.msra.mxu0 %v5559
  %5656 = vmatprep.subr.mxu0 0.0
  %5657 = vmatpush1.msra.mxu0 %v5561
  %5658 = vmatprep.subr.mxu0 0.0
  %5659 = vmatpush1.msra.mxu0 %v5563
  %5660 = vmatprep.mubr.f32.mxu0 %v5437
  %5661 = vmatmul.mubr.f32.gmra.mrb[0].mxu0 %v5436
  %v5662 = vpop.f32.mrb[0].mxu0
  %v5663 = vadd.f32 0.0, %v5662
  %v5664 = vpop.f32.mrb[0].mxu0
  %5665 = vmatprep.mubr.f32.mxu0 %v5439
  %5666 = vmatmul.mubr.f32.gmra.mrb[0].mxu0 %v5438
  %v5667 = vpop.f32.mrb[0].mxu0
  %v5668 = vadd.f32 0.0, %v5667
  %v5669 = vpop.f32.mrb[0].mxu0
  %5670 = vmatprep.mubr.f32.mxu0 %v5441
  %5671 = vmatmul.mubr.f32.gmra.mrb[0].mxu0 %v5440
  %v5672 = vpop.f32.mrb[0].mxu0
  %v5673 = vadd.f32 0.0, %v5672
  %v5674 = vpop.f32.mrb[0].mxu0
  %5675 = vmatprep.mubr.f32.mxu0 %v5443
  %5676 = vmatmul.mubr.f32.gmra.mrb[0].mxu0 %v5442
  %v5677 = vpop.f32.mrb[0].mxu0
  %v5678 = vadd.f32 0.0, %v5677
  %v5679 = vpop.f32.mrb[0].mxu0
  %5680 = vmatprep.mubr.f32.mxu0 %v5445
  %5681 = vmatmul.mubr.f32.gmra.mrb[0].mxu0 %v5444
  %v5682 = vpop.f32.mrb[0].mxu0
  %v5683 = vadd.f32 0.0, %v5682
  %v5684 = vpop.f32.mrb[0].mxu0
  %5685 = vmatprep.mubr.f32.mxu0 %v5447
  %5686 = vmatmul.mubr.f32.gmra.mrb[0].mxu0 %v5446
  %v5687 = vpop.f32.mrb[0].mxu0
  %v5688 = vadd.f32 0.0, %v5687
  %v5689 = vpop.f32.mrb[0].mxu0
  %5690 = vmatprep.mubr.f32.mxu0 %v5449
  %5691 = vmatmul.mubr.f32.gmra.mrb[0].mxu0 %v5448
  %v5692 = vpop.f32.mrb[0].mxu0
  %v5693 = vadd.f32 0.0, %v5692
  %v5694 = vpop.f32.mrb[0].mxu0
  %5695 = vmatprep.mubr.f32.mxu0 %v5451
  %5696 = vmatmul.mubr.f32.gmra.mrb[0].mxu0 %v5450
  %v5697 = vpop.f32.mrb[0].mxu0
  %v5698 = vadd.f32 0.0, %v5697
  %v5699 = vpop.f32.mrb[0].mxu0
  %5700 = vmatprep.mubr.f32.mxu0 %v5453
  %5701 = vmatmul.mubr.f32.gmra.mrb[0].mxu0 %v5452
  %v5702 = vpop.f32.mrb[0].mxu0
  %v5703 = vadd.f32 0.0, %v5702
  %v5704 = vpop.f32.mrb[0].mxu0
  %5705 = vmatprep.mubr.f32.mxu0 %v5455
  %5706 = vmatmul.mubr.f32.gmra.mrb[0].mxu0 %v5454
  %v5707 = vpop.f32.mrb[0].mxu0
  %v5708 = vadd.f32 0.0, %v5707
  %v5709 = vpop.f32.mrb[0].mxu0
  %5710 = vmatprep.mubr.f32.mxu0 %v5457
  %5711 = vmatmul.mubr.f32.gmra.mrb[0].mxu0 %v5456
  %v5712 = vpop.f32.mrb[0].mxu0
  %v5713 = vadd.f32 0.0, %v5712
  %v5714 = vpop.f32.mrb[0].mxu0
  %5715 = vmatprep.mubr.f32.mxu0 %v5459
  %5716 = vmatmul.mubr.f32.gmra.mrb[0].mxu0 %v5458
  %v5717 = vpop.f32.mrb[0].mxu0
  %v5718 = vadd.f32 0.0, %v5717
  %v5719 = vpop.f32.mrb[0].mxu0
  %5720 = vmatprep.mubr.f32.mxu0 %v5461
  %5721 = vmatmul.mubr.f32.gmra.mrb[0].mxu0 %v5460
  %v5722 = vpop.f32.mrb[0].mxu0
  %v5723 = vadd.f32 0.0, %v5722
  %v5724 = vpop.f32.mrb[0].mxu0
  %5725 = vmatprep.mubr.f32.mxu0 %v5463
  %5726 = vmatmul.mubr.f32.gmra.mrb[0].mxu0 %v5462
  %v5727 = vpop.f32.mrb[0].mxu0
  %v5728 = vadd.f32 0.0, %v5727
  %v5729 = vpop.f32.mrb[0].mxu0
  %5730 = vmatprep.mubr.f32.mxu0 %v5465
  %5731 = vmatmul.mubr.f32.gmra.mrb[0].mxu0 %v5464
  %v5732 = vpop.f32.mrb[0].mxu0
  %v5733 = vadd.f32 0.0, %v5732
  %v5734 = vpop.f32.mrb[0].mxu0
  %5735 = vmatprep.mubr.f32.mxu0 %v5467
  %5736 = vmatmul.mubr.f32.gmra.mrb[0].mxu0 %v5466
  %v5737 = vpop.f32.mrb[0].mxu0
  %v5738 = vadd.f32 0.0, %v5737
  %v5739 = vpop.f32.mrb[0].mxu0
  %5740 = vmatprep.mubr.f32.mxu0 %v5469
  %5741 = vmatmul.mubr.f32.gmra.mrb[0].mxu0 %v5468
  %v5742 = vpop.f32.mrb[0].mxu0
  %v5743 = vadd.f32 0.0, %v5742
  %v5744 = vpop.f32.mrb[0].mxu0
  %5745 = vmatprep.mubr.f32.mxu0 %v5471
  %5746 = vmatmul.mubr.f32.gmra.mrb[0].mxu0 %v5470
  %v5747 = vpop.f32.mrb[0].mxu0
  %v5748 = vadd.f32 0.0, %v5747
  %v5749 = vpop.f32.mrb[0].mxu0
  %5750 = vmatprep.mubr.f32.mxu0 %v5473
  %5751 = vmatmul.mubr.f32.gmra.mrb[0].mxu0 %v5472
  %v5752 = vpop.f32.mrb[0].mxu0
  %v5753 = vadd.f32 0.0, %v5752
  %v5754 = vpop.f32.mrb[0].mxu0
  %5755 = vmatprep.mubr.f32.mxu0 %v5475
  %5756 = vmatmul.mubr.f32.gmra.mrb[0].mxu0 %v5474
  %v5757 = vpop.f32.mrb[0].mxu0
  %v5758 = vadd.f32 0.0, %v5757
  %v5759 = vpop.f32.mrb[0].mxu0
  %5760 = vmatprep.mubr.f32.mxu0 %v5477
  %5761 = vmatmul.mubr.f32.gmra.mrb[0].mxu0 %v5476
  %v5762 = vpop.f32.mrb[0].mxu0
  %v5763 = vadd.f32 0.0, %v5762
  %v5764 = vpop.f32.mrb[0].mxu0
  %5765 = vmatprep.mubr.f32.mxu0 %v5479
  %5766 = vmatmul.mubr.f32.gmra.mrb[0].mxu0 %v5478
  %v5767 = vpop.f32.mrb[0].mxu0
  %v5768 = vadd.f32 0.0, %v5767
  %v5769 = vpop.f32.mrb[0].mxu0
  %5770 = vmatprep.mubr.f32.mxu0 %v5481
  %5771 = vmatmul.mubr.f32.gmra.mrb[0].mxu0 %v5480
  %v5772 = vpop.f32.mrb[0].mxu0
  %v5773 = vadd.f32 0.0, %v5772
  %v5774 = vpop.f32.mrb[0].mxu0
  %5775 = vmatprep.mubr.f32.mxu0 %v5483
  %5776 = vmatmul.mubr.f32.gmra.mrb[0].mxu0 %v5482
  %v5777 = vpop.f32.mrb[0].mxu0
  %v5778 = vadd.f32 0.0, %v5777
  %v5779 = vpop.f32.mrb[0].mxu0
  %5780 = vmatprep.mubr.f32.mxu0 %v5485
  %5781 = vmatmul.mubr.f32.gmra.mrb[0].mxu0 %v5484
  %v5782 = vpop.f32.mrb[0].mxu0
  %v5783 = vadd.f32 0.0, %v5782
  %v5784 = vpop.f32.mrb[0].mxu0
  %5785 = vmatprep.mubr.f32.mxu0 %v5487
  %5786 = vmatmul.mubr.f32.gmra.mrb[0].mxu0 %v5486
  %v5787 = vpop.f32.mrb[0].mxu0
  %v5788 = vadd.f32 0.0, %v5787
  %v5789 = vpop.f32.mrb[0].mxu0
  %5790 = vmatprep.mubr.f32.mxu0 %v5489
  %5791 = vmatmul.mubr.f32.gmra.mrb[0].mxu0 %v5488
  %v5792 = vpop.f32.mrb[0].mxu0
  %v5793 = vadd.f32 0.0, %v5792
  %v5794 = vpop.f32.mrb[0].mxu0
  %5795 = vmatprep.mubr.f32.mxu0 %v5491
  %5796 = vmatmul.mubr.f32.gmra.mrb[0].mxu0 %v5490
  %v5797 = vpop.f32.mrb[0].mxu0
  %v5798 = vadd.f32 0.0, %v5797
  %v5799 = vpop.f32.mrb[0].mxu0
  %5800 = vmatprep.mubr.f32.mxu0 %v5493
  %5801 = vmatmul.mubr.f32.gmra.mrb[0].mxu0 %v5492
  %v5802 = vpop.f32.mrb[0].mxu0
  %v5803 = vadd.f32 0.0, %v5802
  %v5804 = vpop.f32.mrb[0].mxu0
  %5805 = vmatprep.mubr.f32.mxu0 %v5495
  %5806 = vmatmul.mubr.f32.gmra.mrb[0].mxu0 %v5494
  %v5807 = vpop.f32.mrb[0].mxu0
  %v5808 = vadd.f32 0.0, %v5807
  %v5809 = vpop.f32.mrb[0].mxu0
  %5810 = vmatprep.mubr.f32.mxu0 %v5497
  %5811 = vmatmul.mubr.f32.gmra.mrb[0].mxu0 %v5496
  %v5812 = vpop.f32.mrb[0].mxu0
  %v5813 = vadd.f32 0.0, %v5812
  %v5814 = vpop.f32.mrb[0].mxu0
  %5815 = vmatprep.mubr.f32.mxu0 %v5499
  %5816 = vmatmul.mubr.f32.gmra.mrb[0].mxu0 %v5498
  %v5817 = vpop.f32.mrb[0].mxu0
  %v5818 = vadd.f32 0.0, %v5817
  %v5819 = vpop.f32.mrb[0].mxu0
  %5820 = vdwg.mxu0
  %5821 = vrot.lane.b32.xlu0 %v1495, 112
  %v5822 = vpop.permute.xlu0 %5821
  %5823 = vrot.lane.b32.xlu0 %v1500, 112
  %v5824 = vpop.permute.xlu0 %5823
  %5825 = vrot.lane.b32.xlu0 %v1505, 112
  %v5826 = vpop.permute.xlu0 %5825
  %5827 = vrot.lane.b32.xlu0 %v1510, 112
  %v5828 = vpop.permute.xlu0 %5827
  %5829 = vrot.lane.b32.xlu0 %v1515, 112
  %v5830 = vpop.permute.xlu0 %5829
  %5831 = vrot.lane.b32.xlu0 %v1520, 112
  %v5832 = vpop.permute.xlu0 %5831
  %5833 = vrot.lane.b32.xlu0 %v1525, 112
  %v5834 = vpop.permute.xlu0 %5833
  %5835 = vrot.lane.b32.xlu0 %v1530, 112
  %v5836 = vpop.permute.xlu0 %5835
  %5837 = vrot.lane.b32.xlu0 %v1535, 112
  %v5838 = vpop.permute.xlu0 %5837
  %5839 = vrot.lane.b32.xlu0 %v1540, 112
  %v5840 = vpop.permute.xlu0 %5839
  %5841 = vrot.lane.b32.xlu0 %v1545, 112
  %v5842 = vpop.permute.xlu0 %5841
  %5843 = vrot.lane.b32.xlu0 %v1550, 112
  %v5844 = vpop.permute.xlu0 %5843
  %5845 = vrot.lane.b32.xlu0 %v1555, 112
  %v5846 = vpop.permute.xlu0 %5845
  %5847 = vrot.lane.b32.xlu0 %v1560, 112
  %v5848 = vpop.permute.xlu0 %5847
  %5849 = vrot.lane.b32.xlu0 %v1565, 112
  %v5850 = vpop.permute.xlu0 %5849
  %5851 = vrot.lane.b32.xlu0 %v1570, 112
  %v5852 = vpop.permute.xlu0 %5851
  %5853 = vrot.lane.b32.xlu0 %v1575, 112
  %v5854 = vpop.permute.xlu0 %5853
  %5855 = vrot.lane.b32.xlu0 %v1580, 112
  %v5856 = vpop.permute.xlu0 %5855
  %5857 = vrot.lane.b32.xlu0 %v1585, 112
  %v5858 = vpop.permute.xlu0 %5857
  %5859 = vrot.lane.b32.xlu0 %v1590, 112
  %v5860 = vpop.permute.xlu0 %5859
  %5861 = vrot.lane.b32.xlu0 %v1595, 112
  %v5862 = vpop.permute.xlu0 %5861
  %5863 = vrot.lane.b32.xlu0 %v1600, 112
  %v5864 = vpop.permute.xlu0 %5863
  %5865 = vrot.lane.b32.xlu0 %v1605, 112
  %v5866 = vpop.permute.xlu0 %5865
  %5867 = vrot.lane.b32.xlu0 %v1610, 112
  %v5868 = vpop.permute.xlu0 %5867
  %5869 = vrot.lane.b32.xlu0 %v1615, 112
  %v5870 = vpop.permute.xlu0 %5869
  %5871 = vrot.lane.b32.xlu0 %v1620, 112
  %v5872 = vpop.permute.xlu0 %5871
  %5873 = vrot.lane.b32.xlu0 %v1625, 112
  %v5874 = vpop.permute.xlu0 %5873
  %5875 = vrot.lane.b32.xlu0 %v1630, 112
  %v5876 = vpop.permute.xlu0 %5875
  %5877 = vrot.lane.b32.xlu0 %v1635, 112
  %v5878 = vpop.permute.xlu0 %5877
  %5879 = vrot.lane.b32.xlu0 %v1640, 112
  %v5880 = vpop.permute.xlu0 %5879
  %5881 = vrot.lane.b32.xlu0 %v1645, 112
  %v5882 = vpop.permute.xlu0 %5881
  %5883 = vrot.lane.b32.xlu0 %v1650, 112
  %v5884 = vpop.permute.xlu0 %5883
  %5885 = vrot.lane.b32.xlu0 %v1495, 80
  %v5886 = vpop.permute.xlu0 %5885
  %5887 = vrot.lane.b32.xlu0 %v1500, 80
  %v5888 = vpop.permute.xlu0 %5887
  %5889 = vrot.lane.b32.xlu0 %v1505, 80
  %v5890 = vpop.permute.xlu0 %5889
  %5891 = vrot.lane.b32.xlu0 %v1510, 80
  %v5892 = vpop.permute.xlu0 %5891
  %5893 = vrot.lane.b32.xlu0 %v1515, 80
  %v5894 = vpop.permute.xlu0 %5893
  %5895 = vrot.lane.b32.xlu0 %v1520, 80
  %v5896 = vpop.permute.xlu0 %5895
  %5897 = vrot.lane.b32.xlu0 %v1525, 80
  %v5898 = vpop.permute.xlu0 %5897
  %5899 = vrot.lane.b32.xlu0 %v1530, 80
  %v5900 = vpop.permute.xlu0 %5899
  %5901 = vrot.lane.b32.xlu0 %v1535, 80
  %v5902 = vpop.permute.xlu0 %5901
  %5903 = vrot.lane.b32.xlu0 %v1540, 80
  %v5904 = vpop.permute.xlu0 %5903
  %5905 = vrot.lane.b32.xlu0 %v1545, 80
  %v5906 = vpop.permute.xlu0 %5905
  %5907 = vrot.lane.b32.xlu0 %v1550, 80
  %v5908 = vpop.permute.xlu0 %5907
  %5909 = vrot.lane.b32.xlu0 %v1555, 80
  %v5910 = vpop.permute.xlu0 %5909
  %5911 = vrot.lane.b32.xlu0 %v1560, 80
  %v5912 = vpop.permute.xlu0 %5911
  %5913 = vrot.lane.b32.xlu0 %v1565, 80
  %v5914 = vpop.permute.xlu0 %5913
  %5915 = vrot.lane.b32.xlu0 %v1570, 80
  %v5916 = vpop.permute.xlu0 %5915
  %5917 = vrot.lane.b32.xlu0 %v1575, 80
  %v5918 = vpop.permute.xlu0 %5917
  %5919 = vrot.lane.b32.xlu0 %v1580, 80
  %v5920 = vpop.permute.xlu0 %5919
  %5921 = vrot.lane.b32.xlu0 %v1585, 80
  %v5922 = vpop.permute.xlu0 %5921
  %5923 = vrot.lane.b32.xlu0 %v1590, 80
  %v5924 = vpop.permute.xlu0 %5923
  %5925 = vrot.lane.b32.xlu0 %v1595, 80
  %v5926 = vpop.permute.xlu0 %5925
  %5927 = vrot.lane.b32.xlu0 %v1600, 80
  %v5928 = vpop.permute.xlu0 %5927
  %5929 = vrot.lane.b32.xlu0 %v1605, 80
  %v5930 = vpop.permute.xlu0 %5929
  %5931 = vrot.lane.b32.xlu0 %v1610, 80
  %v5932 = vpop.permute.xlu0 %5931
  %5933 = vrot.lane.b32.xlu0 %v1615, 80
  %v5934 = vpop.permute.xlu0 %5933
  %5935 = vrot.lane.b32.xlu0 %v1620, 80
  %v5936 = vpop.permute.xlu0 %5935
  %5937 = vrot.lane.b32.xlu0 %v1625, 80
  %v5938 = vpop.permute.xlu0 %5937
  %5939 = vrot.lane.b32.xlu0 %v1630, 80
  %v5940 = vpop.permute.xlu0 %5939
  %5941 = vrot.lane.b32.xlu0 %v1635, 80
  %v5942 = vpop.permute.xlu0 %5941
  %5943 = vrot.lane.b32.xlu0 %v1640, 80
  %v5944 = vpop.permute.xlu0 %5943
  %5945 = vrot.lane.b32.xlu0 %v1645, 80
  %v5946 = vpop.permute.xlu0 %5945
  %5947 = vrot.lane.b32.xlu0 %v1650, 80
  %v5948 = vpop.permute.xlu0 %5947
  %v5949 = vsel %vm1813, %v5822, 0
  %v5951 = vsel %vm1813, %v5824, 0
  %v5953 = vsel %vm1813, %v5826, 0
  %v5955 = vsel %vm1813, %v5828, 0
  %v5957 = vsel %vm1813, %v5830, 0
  %v5959 = vsel %vm1813, %v5832, 0
  %v5961 = vsel %vm1813, %v5834, 0
  %v5963 = vsel %vm1813, %v5836, 0
  %v5965 = vsel %vm1813, %v5838, 0
  %v5967 = vsel %vm1813, %v5840, 0
  %v5969 = vsel %vm1813, %v5842, 0
  %v5971 = vsel %vm1813, %v5844, 0
  %v5973 = vsel %vm1813, %v5846, 0
  %v5975 = vsel %vm1813, %v5848, 0
  %v5977 = vsel %vm1813, %v5850, 0
  %v5979 = vsel %vm1813, %v5852, 0
  %v5981 = vsel %vm1813, %v5854, 0
  %v5983 = vsel %vm1813, %v5856, 0
  %v5985 = vsel %vm1813, %v5858, 0
  %v5987 = vsel %vm1813, %v5860, 0
  %v5989 = vsel %vm1813, %v5862, 0
  %v5991 = vsel %vm1813, %v5864, 0
  %v5993 = vsel %vm1813, %v5866, 0
  %v5995 = vsel %vm1813, %v5868, 0
  %v5997 = vsel %vm1813, %v5870, 0
  %v5999 = vsel %vm1813, %v5872, 0
  %v6001 = vsel %vm1813, %v5874, 0
  %v6003 = vsel %vm1813, %v5876, 0
  %v6005 = vsel %vm1813, %v5878, 0
  %v6007 = vsel %vm1813, %v5880, 0
  %v6009 = vsel %vm1813, %v5882, 0
  %v6011 = vsel %vm1813, %v5884, 0
  %v6013 = vsel %vm1813, %v5886, 0
  %v6015 = vsel %vm1813, %v5888, 0
  %v6017 = vsel %vm1813, %v5890, 0
  %v6019 = vsel %vm1813, %v5892, 0
  %v6021 = vsel %vm1813, %v5894, 0
  %v6023 = vsel %vm1813, %v5896, 0
  %v6025 = vsel %vm1813, %v5898, 0
  %v6027 = vsel %vm1813, %v5900, 0
  %v6029 = vsel %vm1813, %v5902, 0
  %v6031 = vsel %vm1813, %v5904, 0
  %v6033 = vsel %vm1813, %v5906, 0
  %v6035 = vsel %vm1813, %v5908, 0
  %v6037 = vsel %vm1813, %v5910, 0
  %v6039 = vsel %vm1813, %v5912, 0
  %v6041 = vsel %vm1813, %v5914, 0
  %v6043 = vsel %vm1813, %v5916, 0
  %v6045 = vsel %vm1813, %v5918, 0
  %v6047 = vsel %vm1813, %v5920, 0
  %v6049 = vsel %vm1813, %v5922, 0
  %v6051 = vsel %vm1813, %v5924, 0
  %v6053 = vsel %vm1813, %v5926, 0
  %v6055 = vsel %vm1813, %v5928, 0
  %v6057 = vsel %vm1813, %v5930, 0
  %v6059 = vsel %vm1813, %v5932, 0
  %v6061 = vsel %vm1813, %v5934, 0
  %v6063 = vsel %vm1813, %v5936, 0
  %v6065 = vsel %vm1813, %v5938, 0
  %v6067 = vsel %vm1813, %v5940, 0
  %v6069 = vsel %vm1813, %v5942, 0
  %v6071 = vsel %vm1813, %v5944, 0
  %v6073 = vsel %vm1813, %v5946, 0
  %v6075 = vsel %vm1813, %v5948, 0
  %6077 = vmatprep.subr.mxu0 0.0
  %6078 = vmatpush1.xpose.msra.mxu0 %v6013
  %6079 = vmatprep.subr.mxu0 0.0
  %6080 = vmatpush1.xpose.msra.mxu0 %v6015
  %6081 = vmatprep.subr.mxu0 0.0
  %6082 = vmatpush1.xpose.msra.mxu0 %v6017
  %6083 = vmatprep.subr.mxu0 0.0
  %6084 = vmatpush1.xpose.msra.mxu0 %v6019
  %6085 = vmatprep.subr.mxu0 0.0
  %6086 = vmatpush1.xpose.msra.mxu0 %v6021
  %6087 = vmatprep.subr.mxu0 0.0
  %6088 = vmatpush1.xpose.msra.mxu0 %v6023
  %6089 = vmatprep.subr.mxu0 0.0
  %6090 = vmatpush1.xpose.msra.mxu0 %v6025
  %6091 = vmatprep.subr.mxu0 0.0
  %6092 = vmatpush1.xpose.msra.mxu0 %v6027
  %6093 = vmatprep.subr.mxu0 0.0
  %6094 = vmatpush1.xpose.msra.mxu0 %v6029
  %6095 = vmatprep.subr.mxu0 0.0
  %6096 = vmatpush1.xpose.msra.mxu0 %v6031
  %6097 = vmatprep.subr.mxu0 0.0
  %6098 = vmatpush1.xpose.msra.mxu0 %v6033
  %6099 = vmatprep.subr.mxu0 0.0
  %6100 = vmatpush1.xpose.msra.mxu0 %v6035
  %6101 = vmatprep.subr.mxu0 0.0
  %6102 = vmatpush1.xpose.msra.mxu0 %v6037
  %6103 = vmatprep.subr.mxu0 0.0
  %6104 = vmatpush1.xpose.msra.mxu0 %v6039
  %6105 = vmatprep.subr.mxu0 0.0
  %6106 = vmatpush1.xpose.msra.mxu0 %v6041
  %6107 = vmatprep.subr.mxu0 0.0
  %6108 = vmatpush1.xpose.msra.mxu0 %v6043
  %6109 = vmatprep.subr.mxu0 0.0
  %6110 = vmatpush1.xpose.msra.mxu0 %v6045
  %6111 = vmatprep.subr.mxu0 0.0
  %6112 = vmatpush1.xpose.msra.mxu0 %v6047
  %6113 = vmatprep.subr.mxu0 0.0
  %6114 = vmatpush1.xpose.msra.mxu0 %v6049
  %6115 = vmatprep.subr.mxu0 0.0
  %6116 = vmatpush1.xpose.msra.mxu0 %v6051
  %6117 = vmatprep.subr.mxu0 0.0
  %6118 = vmatpush1.xpose.msra.mxu0 %v6053
  %6119 = vmatprep.subr.mxu0 0.0
  %6120 = vmatpush1.xpose.msra.mxu0 %v6055
  %6121 = vmatprep.subr.mxu0 0.0
  %6122 = vmatpush1.xpose.msra.mxu0 %v6057
  %6123 = vmatprep.subr.mxu0 0.0
  %6124 = vmatpush1.xpose.msra.mxu0 %v6059
  %6125 = vmatprep.subr.mxu0 0.0
  %6126 = vmatpush1.xpose.msra.mxu0 %v6061
  %6127 = vmatprep.subr.mxu0 0.0
  %6128 = vmatpush1.xpose.msra.mxu0 %v6063
  %6129 = vmatprep.subr.mxu0 0.0
  %6130 = vmatpush1.xpose.msra.mxu0 %v6065
  %6131 = vmatprep.subr.mxu0 0.0
  %6132 = vmatpush1.xpose.msra.mxu0 %v6067
  %6133 = vmatprep.subr.mxu0 0.0
  %6134 = vmatpush1.xpose.msra.mxu0 %v6069
  %6135 = vmatprep.subr.mxu0 0.0
  %6136 = vmatpush1.xpose.msra.mxu0 %v6071
  %6137 = vmatprep.subr.mxu0 0.0
  %6138 = vmatpush1.xpose.msra.mxu0 %v6073
  %6139 = vmatprep.subr.mxu0 0.0
  %6140 = vmatpush1.xpose.msra.mxu0 %v6075
  %6141 = vmatprep.mubr.f32.mxu0 0.0
  %6142 = vmatmul.mubr.f32.gmra.mrb[0].mxu0 %v5949
  %v6143 = vpop.f32.mrb[0].mxu0
  %v6144 = vadd.f32 %v3001, %v6143
  %v6145 = vpop.f32.mrb[0].mxu0
  %v6146 = vadd.f32 %v3002, %v6145
  %6147 = vmatprep.mubr.f32.mxu0 0.0
  %6148 = vmatmul.mubr.f32.gmra.mrb[0].mxu0 %v5951
  %v6149 = vpop.f32.mrb[0].mxu0
  %v6150 = vadd.f32 %v3003, %v6149
  %v6151 = vpop.f32.mrb[0].mxu0
  %v6152 = vadd.f32 %v3004, %v6151
  %6153 = vmatprep.mubr.f32.mxu0 0.0
  %6154 = vmatmul.mubr.f32.gmra.mrb[0].mxu0 %v5953
  %v6155 = vpop.f32.mrb[0].mxu0
  %v6156 = vadd.f32 %v3005, %v6155
  %v6157 = vpop.f32.mrb[0].mxu0
  %v6158 = vadd.f32 %v3006, %v6157
  %6159 = vmatprep.mubr.f32.mxu0 0.0
  %6160 = vmatmul.mubr.f32.gmra.mrb[0].mxu0 %v5955
  %v6161 = vpop.f32.mrb[0].mxu0
  %v6162 = vadd.f32 %v3007, %v6161
  %v6163 = vpop.f32.mrb[0].mxu0
  %v6164 = vadd.f32 %v3008, %v6163
  %6165 = vmatprep.mubr.f32.mxu0 0.0
  %6166 = vmatmul.mubr.f32.gmra.mrb[0].mxu0 %v5957
  %v6167 = vpop.f32.mrb[0].mxu0
  %v6168 = vadd.f32 %v3009, %v6167
  %v6169 = vpop.f32.mrb[0].mxu0
  %v6170 = vadd.f32 %v3010, %v6169
  %6171 = vmatprep.mubr.f32.mxu0 0.0
  %6172 = vmatmul.mubr.f32.gmra.mrb[0].mxu0 %v5959
  %v6173 = vpop.f32.mrb[0].mxu0
  %v6174 = vadd.f32 %v3011, %v6173
  %v6175 = vpop.f32.mrb[0].mxu0
  %v6176 = vadd.f32 %v3012, %v6175
  %6177 = vmatprep.mubr.f32.mxu0 0.0
  %6178 = vmatmul.mubr.f32.gmra.mrb[0].mxu0 %v5961
  %v6179 = vpop.f32.mrb[0].mxu0
  %v6180 = vadd.f32 %v3013, %v6179
  %v6181 = vpop.f32.mrb[0].mxu0
  %v6182 = vadd.f32 %v3014, %v6181
  %6183 = vmatprep.mubr.f32.mxu0 0.0
  %6184 = vmatmul.mubr.f32.gmra.mrb[0].mxu0 %v5963
  %v6185 = vpop.f32.mrb[0].mxu0
  %v6186 = vadd.f32 %v3015, %v6185
  %v6187 = vpop.f32.mrb[0].mxu0
  %v6188 = vadd.f32 %v3016, %v6187
  %6189 = vmatprep.mubr.f32.mxu0 0.0
  %6190 = vmatmul.mubr.f32.gmra.mrb[0].mxu0 %v5965
  %v6191 = vpop.f32.mrb[0].mxu0
  %v6192 = vadd.f32 %v3017, %v6191
  %v6193 = vpop.f32.mrb[0].mxu0
  %v6194 = vadd.f32 %v3018, %v6193
  %6195 = vmatprep.mubr.f32.mxu0 0.0
  %6196 = vmatmul.mubr.f32.gmra.mrb[0].mxu0 %v5967
  %v6197 = vpop.f32.mrb[0].mxu0
  %v6198 = vadd.f32 %v3019, %v6197
  %v6199 = vpop.f32.mrb[0].mxu0
  %v6200 = vadd.f32 %v3020, %v6199
  %6201 = vmatprep.mubr.f32.mxu0 0.0
  %6202 = vmatmul.mubr.f32.gmra.mrb[0].mxu0 %v5969
  %v6203 = vpop.f32.mrb[0].mxu0
  %v6204 = vadd.f32 %v3021, %v6203
  %v6205 = vpop.f32.mrb[0].mxu0
  %v6206 = vadd.f32 %v3022, %v6205
  %6207 = vmatprep.mubr.f32.mxu0 0.0
  %6208 = vmatmul.mubr.f32.gmra.mrb[0].mxu0 %v5971
  %v6209 = vpop.f32.mrb[0].mxu0
  %v6210 = vadd.f32 %v3023, %v6209
  %v6211 = vpop.f32.mrb[0].mxu0
  %v6212 = vadd.f32 %v3024, %v6211
  %6213 = vmatprep.mubr.f32.mxu0 0.0
  %6214 = vmatmul.mubr.f32.gmra.mrb[0].mxu0 %v5973
  %v6215 = vpop.f32.mrb[0].mxu0
  %v6216 = vadd.f32 %v3025, %v6215
  %v6217 = vpop.f32.mrb[0].mxu0
  %v6218 = vadd.f32 %v3026, %v6217
  %6219 = vmatprep.mubr.f32.mxu0 0.0
  %6220 = vmatmul.mubr.f32.gmra.mrb[0].mxu0 %v5975
  %v6221 = vpop.f32.mrb[0].mxu0
  %v6222 = vadd.f32 %v3027, %v6221
  %v6223 = vpop.f32.mrb[0].mxu0
  %v6224 = vadd.f32 %v3028, %v6223
  %6225 = vmatprep.mubr.f32.mxu0 0.0
  %6226 = vmatmul.mubr.f32.gmra.mrb[0].mxu0 %v5977
  %v6227 = vpop.f32.mrb[0].mxu0
  %v6228 = vadd.f32 %v3029, %v6227
  %v6229 = vpop.f32.mrb[0].mxu0
  %v6230 = vadd.f32 %v3030, %v6229
  %6231 = vmatprep.mubr.f32.mxu0 0.0
  %6232 = vmatmul.mubr.f32.gmra.mrb[0].mxu0 %v5979
  %v6233 = vpop.f32.mrb[0].mxu0
  %v6234 = vadd.f32 %v3031, %v6233
  %v6235 = vpop.f32.mrb[0].mxu0
  %v6236 = vadd.f32 %v3032, %v6235
  %6237 = vmatprep.mubr.f32.mxu0 0.0
  %6238 = vmatmul.mubr.f32.gmra.mrb[0].mxu0 %v5981
  %v6239 = vpop.f32.mrb[0].mxu0
  %v6240 = vadd.f32 %v3033, %v6239
  %v6241 = vpop.f32.mrb[0].mxu0
  %v6242 = vadd.f32 %v3034, %v6241
  %6243 = vmatprep.mubr.f32.mxu0 0.0
  %6244 = vmatmul.mubr.f32.gmra.mrb[0].mxu0 %v5983
  %v6245 = vpop.f32.mrb[0].mxu0
  %v6246 = vadd.f32 %v3035, %v6245
  %v6247 = vpop.f32.mrb[0].mxu0
  %v6248 = vadd.f32 %v3036, %v6247
  %6249 = vmatprep.mubr.f32.mxu0 0.0
  %6250 = vmatmul.mubr.f32.gmra.mrb[0].mxu0 %v5985
  %v6251 = vpop.f32.mrb[0].mxu0
  %v6252 = vadd.f32 %v3037, %v6251
  %v6253 = vpop.f32.mrb[0].mxu0
  %v6254 = vadd.f32 %v3038, %v6253
  %6255 = vmatprep.mubr.f32.mxu0 0.0
  %6256 = vmatmul.mubr.f32.gmra.mrb[0].mxu0 %v5987
  %v6257 = vpop.f32.mrb[0].mxu0
  %v6258 = vadd.f32 %v3039, %v6257
  %v6259 = vpop.f32.mrb[0].mxu0
  %v6260 = vadd.f32 %v3040, %v6259
  %6261 = vmatprep.mubr.f32.mxu0 0.0
  %6262 = vmatmul.mubr.f32.gmra.mrb[0].mxu0 %v5989
  %v6263 = vpop.f32.mrb[0].mxu0
  %v6264 = vadd.f32 %v3041, %v6263
  %v6265 = vpop.f32.mrb[0].mxu0
  %v6266 = vadd.f32 %v3042, %v6265
  %6267 = vmatprep.mubr.f32.mxu0 0.0
  %6268 = vmatmul.mubr.f32.gmra.mrb[0].mxu0 %v5991
  %v6269 = vpop.f32.mrb[0].mxu0
  %v6270 = vadd.f32 %v3043, %v6269
  %v6271 = vpop.f32.mrb[0].mxu0
  %v6272 = vadd.f32 %v3044, %v6271
  %6273 = vmatprep.mubr.f32.mxu0 0.0
  %6274 = vmatmul.mubr.f32.gmra.mrb[0].mxu0 %v5993
  %v6275 = vpop.f32.mrb[0].mxu0
  %v6276 = vadd.f32 %v3045, %v6275
  %v6277 = vpop.f32.mrb[0].mxu0
  %v6278 = vadd.f32 %v3046, %v6277
  %6279 = vmatprep.mubr.f32.mxu0 0.0
  %6280 = vmatmul.mubr.f32.gmra.mrb[0].mxu0 %v5995
  %v6281 = vpop.f32.mrb[0].mxu0
  %v6282 = vadd.f32 %v3047, %v6281
  %v6283 = vpop.f32.mrb[0].mxu0
  %v6284 = vadd.f32 %v3048, %v6283
  %6285 = vmatprep.mubr.f32.mxu0 0.0
  %6286 = vmatmul.mubr.f32.gmra.mrb[0].mxu0 %v5997
  %v6287 = vpop.f32.mrb[0].mxu0
  %v6288 = vadd.f32 %v3049, %v6287
  %v6289 = vpop.f32.mrb[0].mxu0
  %v6290 = vadd.f32 %v3050, %v6289
  %6291 = vmatprep.mubr.f32.mxu0 0.0
  %6292 = vmatmul.mubr.f32.gmra.mrb[0].mxu0 %v5999
  %v6293 = vpop.f32.mrb[0].mxu0
  %v6294 = vadd.f32 %v3051, %v6293
  %v6295 = vpop.f32.mrb[0].mxu0
  %v6296 = vadd.f32 %v3052, %v6295
  %6297 = vmatprep.mubr.f32.mxu0 0.0
  %6298 = vmatmul.mubr.f32.gmra.mrb[0].mxu0 %v6001
  %v6299 = vpop.f32.mrb[0].mxu0
  %v6300 = vadd.f32 %v3053, %v6299
  %v6301 = vpop.f32.mrb[0].mxu0
  %v6302 = vadd.f32 %v3054, %v6301
  %6303 = vmatprep.mubr.f32.mxu0 0.0
  %6304 = vmatmul.mubr.f32.gmra.mrb[0].mxu0 %v6003
  %v6305 = vpop.f32.mrb[0].mxu0
  %v6306 = vadd.f32 %v3055, %v6305
  %v6307 = vpop.f32.mrb[0].mxu0
  %v6308 = vadd.f32 %v3056, %v6307
  %6309 = vmatprep.mubr.f32.mxu0 0.0
  %6310 = vmatmul.mubr.f32.gmra.mrb[0].mxu0 %v6005
  %v6311 = vpop.f32.mrb[0].mxu0
  %v6312 = vadd.f32 %v3057, %v6311
  %v6313 = vpop.f32.mrb[0].mxu0
  %v6314 = vadd.f32 %v3058, %v6313
  %6315 = vmatprep.mubr.f32.mxu0 0.0
  %6316 = vmatmul.mubr.f32.gmra.mrb[0].mxu0 %v6007
  %v6317 = vpop.f32.mrb[0].mxu0
  %v6318 = vadd.f32 %v3059, %v6317
  %v6319 = vpop.f32.mrb[0].mxu0
  %v6320 = vadd.f32 %v3060, %v6319
  %6321 = vmatprep.mubr.f32.mxu0 0.0
  %6322 = vmatmul.mubr.f32.gmra.mrb[0].mxu0 %v6009
  %v6323 = vpop.f32.mrb[0].mxu0
  %v6324 = vadd.f32 %v3061, %v6323
  %v6325 = vpop.f32.mrb[0].mxu0
  %v6326 = vadd.f32 %v3062, %v6325
  %6327 = vmatprep.mubr.f32.mxu0 0.0
  %6328 = vmatmul.mubr.f32.gmra.mrb[0].mxu0 %v6011
  %v6329 = vpop.f32.mrb[0].mxu0
  %v6330 = vadd.f32 %v3063, %v6329
  %v6331 = vpop.f32.mrb[0].mxu0
  %v6332 = vadd.f32 %v3064, %v6331
  %6333 = vdwg.mxu0
  %v6334 = vmax.f32 %v6144, %v6146
  %6335 = vmax.xlane.f32.xlu0 %v6334
  %v6336 = vpop.xlane.xlu0 %6335
  %v6337 = vmax.f32 %v6150, %v6152
  %6338 = vmax.xlane.f32.xlu0 %v6337
  %v6339 = vpop.xlane.xlu0 %6338
  %v6340 = vmax.f32 %v6156, %v6158
  %6341 = vmax.xlane.f32.xlu0 %v6340
  %v6342 = vpop.xlane.xlu0 %6341
  %v6343 = vmax.f32 %v6162, %v6164
  %6344 = vmax.xlane.f32.xlu0 %v6343
  %v6345 = vpop.xlane.xlu0 %6344
  %v6346 = vmax.f32 %v6168, %v6170
  %6347 = vmax.xlane.f32.xlu0 %v6346
  %v6348 = vpop.xlane.xlu0 %6347
  %v6349 = vmax.f32 %v6174, %v6176
  %6350 = vmax.xlane.f32.xlu0 %v6349
  %v6351 = vpop.xlane.xlu0 %6350
  %v6352 = vmax.f32 %v6180, %v6182
  %6353 = vmax.xlane.f32.xlu0 %v6352
  %v6354 = vpop.xlane.xlu0 %6353
  %v6355 = vmax.f32 %v6186, %v6188
  %6356 = vmax.xlane.f32.xlu0 %v6355
  %v6357 = vpop.xlane.xlu0 %6356
  %v6358 = vmax.f32 %v6192, %v6194
  %6359 = vmax.xlane.f32.xlu0 %v6358
  %v6360 = vpop.xlane.xlu0 %6359
  %v6361 = vmax.f32 %v6198, %v6200
  %6362 = vmax.xlane.f32.xlu0 %v6361
  %v6363 = vpop.xlane.xlu0 %6362
  %v6364 = vmax.f32 %v6204, %v6206
  %6365 = vmax.xlane.f32.xlu0 %v6364
  %v6366 = vpop.xlane.xlu0 %6365
  %v6367 = vmax.f32 %v6210, %v6212
  %6368 = vmax.xlane.f32.xlu0 %v6367
  %v6369 = vpop.xlane.xlu0 %6368
  %v6370 = vmax.f32 %v6216, %v6218
  %6371 = vmax.xlane.f32.xlu0 %v6370
  %v6372 = vpop.xlane.xlu0 %6371
  %v6373 = vmax.f32 %v6222, %v6224
  %6374 = vmax.xlane.f32.xlu0 %v6373
  %v6375 = vpop.xlane.xlu0 %6374
  %v6376 = vmax.f32 %v6228, %v6230
  %6377 = vmax.xlane.f32.xlu0 %v6376
  %v6378 = vpop.xlane.xlu0 %6377
  %v6379 = vmax.f32 %v6234, %v6236
  %6380 = vmax.xlane.f32.xlu0 %v6379
  %v6381 = vpop.xlane.xlu0 %6380
  %v6382 = vmax.f32 %v6240, %v6242
  %6383 = vmax.xlane.f32.xlu0 %v6382
  %v6384 = vpop.xlane.xlu0 %6383
  %v6385 = vmax.f32 %v6246, %v6248
  %6386 = vmax.xlane.f32.xlu0 %v6385
  %v6387 = vpop.xlane.xlu0 %6386
  %v6388 = vmax.f32 %v6252, %v6254
  %6389 = vmax.xlane.f32.xlu0 %v6388
  %v6390 = vpop.xlane.xlu0 %6389
  %v6391 = vmax.f32 %v6258, %v6260
  %6392 = vmax.xlane.f32.xlu0 %v6391
  %v6393 = vpop.xlane.xlu0 %6392
  %v6394 = vmax.f32 %v6264, %v6266
  %6395 = vmax.xlane.f32.xlu0 %v6394
  %v6396 = vpop.xlane.xlu0 %6395
  %v6397 = vmax.f32 %v6270, %v6272
  %6398 = vmax.xlane.f32.xlu0 %v6397
  %v6399 = vpop.xlane.xlu0 %6398
  %v6400 = vmax.f32 %v6276, %v6278
  %6401 = vmax.xlane.f32.xlu0 %v6400
  %v6402 = vpop.xlane.xlu0 %6401
  %v6403 = vmax.f32 %v6282, %v6284
  %6404 = vmax.xlane.f32.xlu0 %v6403
  %v6405 = vpop.xlane.xlu0 %6404
  %v6406 = vmax.f32 %v6288, %v6290
  %6407 = vmax.xlane.f32.xlu0 %v6406
  %v6408 = vpop.xlane.xlu0 %6407
  %v6409 = vmax.f32 %v6294, %v6296
  %6410 = vmax.xlane.f32.xlu0 %v6409
  %v6411 = vpop.xlane.xlu0 %6410
  %v6412 = vmax.f32 %v6300, %v6302
  %6413 = vmax.xlane.f32.xlu0 %v6412
  %v6414 = vpop.xlane.xlu0 %6413
  %v6415 = vmax.f32 %v6306, %v6308
  %6416 = vmax.xlane.f32.xlu0 %v6415
  %v6417 = vpop.xlane.xlu0 %6416
  %v6418 = vmax.f32 %v6312, %v6314
  %6419 = vmax.xlane.f32.xlu0 %v6418
  %v6420 = vpop.xlane.xlu0 %6419
  %v6421 = vmax.f32 %v6318, %v6320
  %6422 = vmax.xlane.f32.xlu0 %v6421
  %v6423 = vpop.xlane.xlu0 %6422
  %v6424 = vmax.f32 %v6324, %v6326
  %6425 = vmax.xlane.f32.xlu0 %v6424
  %v6426 = vpop.xlane.xlu0 %6425
  %v6427 = vmax.f32 %v6330, %v6332
  %6428 = vmax.xlane.f32.xlu0 %v6427
  %v6429 = vpop.xlane.xlu0 %6428
  %v6430 = vsub.f32 %v6144, %v6336
  %v6431 = vsub.f32 %v6146, %v6336
  %v6432 = vsub.f32 %v6150, %v6339
  %v6433 = vsub.f32 %v6152, %v6339
  %v6434 = vsub.f32 %v6156, %v6342
  %v6435 = vsub.f32 %v6158, %v6342
  %v6436 = vsub.f32 %v6162, %v6345
  %v6437 = vsub.f32 %v6164, %v6345
  %v6438 = vsub.f32 %v6168, %v6348
  %v6439 = vsub.f32 %v6170, %v6348
  %v6440 = vsub.f32 %v6174, %v6351
  %v6441 = vsub.f32 %v6176, %v6351
  %v6442 = vsub.f32 %v6180, %v6354
  %v6443 = vsub.f32 %v6182, %v6354
  %v6444 = vsub.f32 %v6186, %v6357
  %v6445 = vsub.f32 %v6188, %v6357
  %v6446 = vsub.f32 %v6192, %v6360
  %v6447 = vsub.f32 %v6194, %v6360
  %v6448 = vsub.f32 %v6198, %v6363
  %v6449 = vsub.f32 %v6200, %v6363
  %v6450 = vsub.f32 %v6204, %v6366
  %v6451 = vsub.f32 %v6206, %v6366
  %v6452 = vsub.f32 %v6210, %v6369
  %v6453 = vsub.f32 %v6212, %v6369
  %v6454 = vsub.f32 %v6216, %v6372
  %v6455 = vsub.f32 %v6218, %v6372
  %v6456 = vsub.f32 %v6222, %v6375
  %v6457 = vsub.f32 %v6224, %v6375
  %v6458 = vsub.f32 %v6228, %v6378
  %v6459 = vsub.f32 %v6230, %v6378
  %v6460 = vsub.f32 %v6234, %v6381
  %v6461 = vsub.f32 %v6236, %v6381
  %v6462 = vsub.f32 %v6240, %v6384
  %v6463 = vsub.f32 %v6242, %v6384
  %v6464 = vsub.f32 %v6246, %v6387
  %v6465 = vsub.f32 %v6248, %v6387
  %v6466 = vsub.f32 %v6252, %v6390
  %v6467 = vsub.f32 %v6254, %v6390
  %v6468 = vsub.f32 %v6258, %v6393
  %v6469 = vsub.f32 %v6260, %v6393
  %v6470 = vsub.f32 %v6264, %v6396
  %v6471 = vsub.f32 %v6266, %v6396
  %v6472 = vsub.f32 %v6270, %v6399
  %v6473 = vsub.f32 %v6272, %v6399
  %v6474 = vsub.f32 %v6276, %v6402
  %v6475 = vsub.f32 %v6278, %v6402
  %v6476 = vsub.f32 %v6282, %v6405
  %v6477 = vsub.f32 %v6284, %v6405
  %v6478 = vsub.f32 %v6288, %v6408
  %v6479 = vsub.f32 %v6290, %v6408
  %v6480 = vsub.f32 %v6294, %v6411
  %v6481 = vsub.f32 %v6296, %v6411
  %v6482 = vsub.f32 %v6300, %v6414
  %v6483 = vsub.f32 %v6302, %v6414
  %v6484 = vsub.f32 %v6306, %v6417
  %v6485 = vsub.f32 %v6308, %v6417
  %v6486 = vsub.f32 %v6312, %v6420
  %v6487 = vsub.f32 %v6314, %v6420
  %v6488 = vsub.f32 %v6318, %v6423
  %v6489 = vsub.f32 %v6320, %v6423
  %v6490 = vsub.f32 %v6324, %v6426
  %v6491 = vsub.f32 %v6326, %v6426
  %v6492 = vsub.f32 %v6330, %v6429
  %v6493 = vsub.f32 %v6332, %v6429
  %v6494 = vmul.f32 %v6430, 1.442695
  %v6495 = vpow.pop %v6494
  %v6496 = vmul.f32 %v6431, 1.442695
  %v6497 = vpow.pop %v6496
  %v6498 = vmul.f32 %v6432, 1.442695
  %v6499 = vpow.pop %v6498
  %v6500 = vmul.f32 %v6433, 1.442695
  %v6501 = vpow.pop %v6500
  %v6502 = vmul.f32 %v6434, 1.442695
  %v6503 = vpow.pop %v6502
  %v6504 = vmul.f32 %v6435, 1.442695
  %v6505 = vpow.pop %v6504
  %v6506 = vmul.f32 %v6436, 1.442695
  %v6507 = vpow.pop %v6506
  %v6508 = vmul.f32 %v6437, 1.442695
  %v6509 = vpow.pop %v6508
  %v6510 = vmul.f32 %v6438, 1.442695
  %v6511 = vpow.pop %v6510
  %v6512 = vmul.f32 %v6439, 1.442695
  %v6513 = vpow.pop %v6512
  %v6514 = vmul.f32 %v6440, 1.442695
  %v6515 = vpow.pop %v6514
  %v6516 = vmul.f32 %v6441, 1.442695
  %v6517 = vpow.pop %v6516
  %v6518 = vmul.f32 %v6442, 1.442695
  %v6519 = vpow.pop %v6518
  %v6520 = vmul.f32 %v6443, 1.442695
  %v6521 = vpow.pop %v6520
  %v6522 = vmul.f32 %v6444, 1.442695
  %v6523 = vpow.pop %v6522
  %v6524 = vmul.f32 %v6445, 1.442695
  %v6525 = vpow.pop %v6524
  %v6526 = vmul.f32 %v6446, 1.442695
  %v6527 = vpow.pop %v6526
  %v6528 = vmul.f32 %v6447, 1.442695
  %v6529 = vpow.pop %v6528
  %v6530 = vmul.f32 %v6448, 1.442695
  %v6531 = vpow.pop %v6530
  %v6532 = vmul.f32 %v6449, 1.442695
  %v6533 = vpow.pop %v6532
  %v6534 = vmul.f32 %v6450, 1.442695
  %v6535 = vpow.pop %v6534
  %v6536 = vmul.f32 %v6451, 1.442695
  %v6537 = vpow.pop %v6536
  %v6538 = vmul.f32 %v6452, 1.442695
  %v6539 = vpow.pop %v6538
  %v6540 = vmul.f32 %v6453, 1.442695
  %v6541 = vpow.pop %v6540
  %v6542 = vmul.f32 %v6454, 1.442695
  %v6543 = vpow.pop %v6542
  %v6544 = vmul.f32 %v6455, 1.442695
  %v6545 = vpow.pop %v6544
  %v6546 = vmul.f32 %v6456, 1.442695
  %v6547 = vpow.pop %v6546
  %v6548 = vmul.f32 %v6457, 1.442695
  %v6549 = vpow.pop %v6548
  %v6550 = vmul.f32 %v6458, 1.442695
  %v6551 = vpow.pop %v6550
  %v6552 = vmul.f32 %v6459, 1.442695
  %v6553 = vpow.pop %v6552
  %v6554 = vmul.f32 %v6460, 1.442695
  %v6555 = vpow.pop %v6554
  %v6556 = vmul.f32 %v6461, 1.442695
  %v6557 = vpow.pop %v6556
  %v6558 = vmul.f32 %v6462, 1.442695
  %v6559 = vpow.pop %v6558
  %v6560 = vmul.f32 %v6463, 1.442695
  %v6561 = vpow.pop %v6560
  %v6562 = vmul.f32 %v6464, 1.442695
  %v6563 = vpow.pop %v6562
  %v6564 = vmul.f32 %v6465, 1.442695
  %v6565 = vpow.pop %v6564
  %v6566 = vmul.f32 %v6466, 1.442695
  %v6567 = vpow.pop %v6566
  %v6568 = vmul.f32 %v6467, 1.442695
  %v6569 = vpow.pop %v6568
  %v6570 = vmul.f32 %v6468, 1.442695
  %v6571 = vpow.pop %v6570
  %v6572 = vmul.f32 %v6469, 1.442695
  %v6573 = vpow.pop %v6572
  %v6574 = vmul.f32 %v6470, 1.442695
  %v6575 = vpow.pop %v6574
  %v6576 = vmul.f32 %v6471, 1.442695
  %v6577 = vpow.pop %v6576
  %v6578 = vmul.f32 %v6472, 1.442695
  %v6579 = vpow.pop %v6578
  %v6580 = vmul.f32 %v6473, 1.442695
  %v6581 = vpow.pop %v6580
  %v6582 = vmul.f32 %v6474, 1.442695
  %v6583 = vpow.pop %v6582
  %v6584 = vmul.f32 %v6475, 1.442695
  %v6585 = vpow.pop %v6584
  %v6586 = vmul.f32 %v6476, 1.442695
  %v6587 = vpow.pop %v6586
  %v6588 = vmul.f32 %v6477, 1.442695
  %v6589 = vpow.pop %v6588
  %v6590 = vmul.f32 %v6478, 1.442695
  %v6591 = vpow.pop %v6590
  %v6592 = vmul.f32 %v6479, 1.442695
  %v6593 = vpow.pop %v6592
  %v6594 = vmul.f32 %v6480, 1.442695
  %v6595 = vpow.pop %v6594
  %v6596 = vmul.f32 %v6481, 1.442695
  %v6597 = vpow.pop %v6596
  %v6598 = vmul.f32 %v6482, 1.442695
  %v6599 = vpow.pop %v6598
  %v6600 = vmul.f32 %v6483, 1.442695
  %v6601 = vpow.pop %v6600
  %v6602 = vmul.f32 %v6484, 1.442695
  %v6603 = vpow.pop %v6602
  %v6604 = vmul.f32 %v6485, 1.442695
  %v6605 = vpow.pop %v6604
  %v6606 = vmul.f32 %v6486, 1.442695
  %v6607 = vpow.pop %v6606
  %v6608 = vmul.f32 %v6487, 1.442695
  %v6609 = vpow.pop %v6608
  %v6610 = vmul.f32 %v6488, 1.442695
  %v6611 = vpow.pop %v6610
  %v6612 = vmul.f32 %v6489, 1.442695
  %v6613 = vpow.pop %v6612
  %v6614 = vmul.f32 %v6490, 1.442695
  %v6615 = vpow.pop %v6614
  %v6616 = vmul.f32 %v6491, 1.442695
  %v6617 = vpow.pop %v6616
  %v6618 = vmul.f32 %v6492, 1.442695
  %v6619 = vpow.pop %v6618
  %v6620 = vmul.f32 %v6493, 1.442695
  %v6621 = vpow.pop %v6620
  %v6622 = vadd.f32 %v6495, %v6497
  %6623 = vadd.xlane.f32.xlu0 %v6622
  %v6624 = vpop.xlane.xlu0 %6623
  %v6625 = vadd.f32 %v6499, %v6501
  %6626 = vadd.xlane.f32.xlu0 %v6625
  %v6627 = vpop.xlane.xlu0 %6626
  %v6628 = vadd.f32 %v6503, %v6505
  %6629 = vadd.xlane.f32.xlu0 %v6628
  %v6630 = vpop.xlane.xlu0 %6629
  %v6631 = vadd.f32 %v6507, %v6509
  %6632 = vadd.xlane.f32.xlu0 %v6631
  %v6633 = vpop.xlane.xlu0 %6632
  %v6634 = vadd.f32 %v6511, %v6513
  %6635 = vadd.xlane.f32.xlu0 %v6634
  %v6636 = vpop.xlane.xlu0 %6635
  %v6637 = vadd.f32 %v6515, %v6517
  %6638 = vadd.xlane.f32.xlu0 %v6637
  %v6639 = vpop.xlane.xlu0 %6638
  %v6640 = vadd.f32 %v6519, %v6521
  %6641 = vadd.xlane.f32.xlu0 %v6640
  %v6642 = vpop.xlane.xlu0 %6641
  %v6643 = vadd.f32 %v6523, %v6525
  %6644 = vadd.xlane.f32.xlu0 %v6643
  %v6645 = vpop.xlane.xlu0 %6644
  %v6646 = vadd.f32 %v6527, %v6529
  %6647 = vadd.xlane.f32.xlu0 %v6646
  %v6648 = vpop.xlane.xlu0 %6647
  %v6649 = vadd.f32 %v6531, %v6533
  %6650 = vadd.xlane.f32.xlu0 %v6649
  %v6651 = vpop.xlane.xlu0 %6650
  %v6652 = vadd.f32 %v6535, %v6537
  %6653 = vadd.xlane.f32.xlu0 %v6652
  %v6654 = vpop.xlane.xlu0 %6653
  %v6655 = vadd.f32 %v6539, %v6541
  %6656 = vadd.xlane.f32.xlu0 %v6655
  %v6657 = vpop.xlane.xlu0 %6656
  %v6658 = vadd.f32 %v6543, %v6545
  %6659 = vadd.xlane.f32.xlu0 %v6658
  %v6660 = vpop.xlane.xlu0 %6659
  %v6661 = vadd.f32 %v6547, %v6549
  %6662 = vadd.xlane.f32.xlu0 %v6661
  %v6663 = vpop.xlane.xlu0 %6662
  %v6664 = vadd.f32 %v6551, %v6553
  %6665 = vadd.xlane.f32.xlu0 %v6664
  %v6666 = vpop.xlane.xlu0 %6665
  %v6667 = vadd.f32 %v6555, %v6557
  %6668 = vadd.xlane.f32.xlu0 %v6667
  %v6669 = vpop.xlane.xlu0 %6668
  %v6670 = vadd.f32 %v6559, %v6561
  %6671 = vadd.xlane.f32.xlu0 %v6670
  %v6672 = vpop.xlane.xlu0 %6671
  %v6673 = vadd.f32 %v6563, %v6565
  %6674 = vadd.xlane.f32.xlu0 %v6673
  %v6675 = vpop.xlane.xlu0 %6674
  %v6676 = vadd.f32 %v6567, %v6569
  %6677 = vadd.xlane.f32.xlu0 %v6676
  %v6678 = vpop.xlane.xlu0 %6677
  %v6679 = vadd.f32 %v6571, %v6573
  %6680 = vadd.xlane.f32.xlu0 %v6679
  %v6681 = vpop.xlane.xlu0 %6680
  %v6682 = vadd.f32 %v6575, %v6577
  %6683 = vadd.xlane.f32.xlu0 %v6682
  %v6684 = vpop.xlane.xlu0 %6683
  %v6685 = vadd.f32 %v6579, %v6581
  %6686 = vadd.xlane.f32.xlu0 %v6685
  %v6687 = vpop.xlane.xlu0 %6686
  %v6688 = vadd.f32 %v6583, %v6585
  %6689 = vadd.xlane.f32.xlu0 %v6688
  %v6690 = vpop.xlane.xlu0 %6689
  %v6691 = vadd.f32 %v6587, %v6589
  %6692 = vadd.xlane.f32.xlu0 %v6691
  %v6693 = vpop.xlane.xlu0 %6692
  %v6694 = vadd.f32 %v6591, %v6593
  %6695 = vadd.xlane.f32.xlu0 %v6694
  %v6696 = vpop.xlane.xlu0 %6695
  %v6697 = vadd.f32 %v6595, %v6597
  %6698 = vadd.xlane.f32.xlu0 %v6697
  %v6699 = vpop.xlane.xlu0 %6698
  %v6700 = vadd.f32 %v6599, %v6601
  %6701 = vadd.xlane.f32.xlu0 %v6700
  %v6702 = vpop.xlane.xlu0 %6701
  %v6703 = vadd.f32 %v6603, %v6605
  %6704 = vadd.xlane.f32.xlu0 %v6703
  %v6705 = vpop.xlane.xlu0 %6704
  %v6706 = vadd.f32 %v6607, %v6609
  %6707 = vadd.xlane.f32.xlu0 %v6706
  %v6708 = vpop.xlane.xlu0 %6707
  %v6709 = vadd.f32 %v6611, %v6613
  %6710 = vadd.xlane.f32.xlu0 %v6709
  %v6711 = vpop.xlane.xlu0 %6710
  %v6712 = vadd.f32 %v6615, %v6617
  %6713 = vadd.xlane.f32.xlu0 %v6712
  %v6714 = vpop.xlane.xlu0 %6713
  %v6715 = vadd.f32 %v6619, %v6621
  %6716 = vadd.xlane.f32.xlu0 %v6715
  %v6717 = vpop.xlane.xlu0 %6716
  %v6718 = vrcp.pop %v6624
  %v6719 = vrcp.pop %v6627
  %v6720 = vrcp.pop %v6630
  %v6721 = vrcp.pop %v6633
  %v6722 = vrcp.pop %v6636
  %v6723 = vrcp.pop %v6639
  %v6724 = vrcp.pop %v6642
  %v6725 = vrcp.pop %v6645
  %v6726 = vrcp.pop %v6648
  %v6727 = vrcp.pop %v6651
  %v6728 = vrcp.pop %v6654
  %v6729 = vrcp.pop %v6657
  %v6730 = vrcp.pop %v6660
  %v6731 = vrcp.pop %v6663
  %v6732 = vrcp.pop %v6666
  %v6733 = vrcp.pop %v6669
  %v6734 = vrcp.pop %v6672
  %v6735 = vrcp.pop %v6675
  %v6736 = vrcp.pop %v6678
  %v6737 = vrcp.pop %v6681
  %v6738 = vrcp.pop %v6684
  %v6739 = vrcp.pop %v6687
  %v6740 = vrcp.pop %v6690
  %v6741 = vrcp.pop %v6693
  %v6742 = vrcp.pop %v6696
  %v6743 = vrcp.pop %v6699
  %v6744 = vrcp.pop %v6702
  %v6745 = vrcp.pop %v6705
  %v6746 = vrcp.pop %v6708
  %v6747 = vrcp.pop %v6711
  %v6748 = vrcp.pop %v6714
  %v6749 = vrcp.pop %v6717
  %v6750 = vmul.f32 %v6495, %v6718
  %v6751 = vmul.f32 %v6497, %v6718
  %v6752 = vmul.f32 %v6499, %v6719
  %v6753 = vmul.f32 %v6501, %v6719
  %v6754 = vmul.f32 %v6503, %v6720
  %v6755 = vmul.f32 %v6505, %v6720
  %v6756 = vmul.f32 %v6507, %v6721
  %v6757 = vmul.f32 %v6509, %v6721
  %v6758 = vmul.f32 %v6511, %v6722
  %v6759 = vmul.f32 %v6513, %v6722
  %v6760 = vmul.f32 %v6515, %v6723
  %v6761 = vmul.f32 %v6517, %v6723
  %v6762 = vmul.f32 %v6519, %v6724
  %v6763 = vmul.f32 %v6521, %v6724
  %v6764 = vmul.f32 %v6523, %v6725
  %v6765 = vmul.f32 %v6525, %v6725
  %v6766 = vmul.f32 %v6527, %v6726
  %v6767 = vmul.f32 %v6529, %v6726
  %v6768 = vmul.f32 %v6531, %v6727
  %v6769 = vmul.f32 %v6533, %v6727
  %v6770 = vmul.f32 %v6535, %v6728
  %v6771 = vmul.f32 %v6537, %v6728
  %v6772 = vmul.f32 %v6539, %v6729
  %v6773 = vmul.f32 %v6541, %v6729
  %v6774 = vmul.f32 %v6543, %v6730
  %v6775 = vmul.f32 %v6545, %v6730
  %v6776 = vmul.f32 %v6547, %v6731
  %v6777 = vmul.f32 %v6549, %v6731
  %v6778 = vmul.f32 %v6551, %v6732
  %v6779 = vmul.f32 %v6553, %v6732
  %v6780 = vmul.f32 %v6555, %v6733
  %v6781 = vmul.f32 %v6557, %v6733
  %v6782 = vmul.f32 %v6559, %v6734
  %v6783 = vmul.f32 %v6561, %v6734
  %v6784 = vmul.f32 %v6563, %v6735
  %v6785 = vmul.f32 %v6565, %v6735
  %v6786 = vmul.f32 %v6567, %v6736
  %v6787 = vmul.f32 %v6569, %v6736
  %v6788 = vmul.f32 %v6571, %v6737
  %v6789 = vmul.f32 %v6573, %v6737
  %v6790 = vmul.f32 %v6575, %v6738
  %v6791 = vmul.f32 %v6577, %v6738
  %v6792 = vmul.f32 %v6579, %v6739
  %v6793 = vmul.f32 %v6581, %v6739
  %v6794 = vmul.f32 %v6583, %v6740
  %v6795 = vmul.f32 %v6585, %v6740
  %v6796 = vmul.f32 %v6587, %v6741
  %v6797 = vmul.f32 %v6589, %v6741
  %v6798 = vmul.f32 %v6591, %v6742
  %v6799 = vmul.f32 %v6593, %v6742
  %v6800 = vmul.f32 %v6595, %v6743
  %v6801 = vmul.f32 %v6597, %v6743
  %v6802 = vmul.f32 %v6599, %v6744
  %v6803 = vmul.f32 %v6601, %v6744
  %v6804 = vmul.f32 %v6603, %v6745
  %v6805 = vmul.f32 %v6605, %v6745
  %v6806 = vmul.f32 %v6607, %v6746
  %v6807 = vmul.f32 %v6609, %v6746
  %v6808 = vmul.f32 %v6611, %v6747
  %v6809 = vmul.f32 %v6613, %v6747
  %v6810 = vmul.f32 %v6615, %v6748
  %v6811 = vmul.f32 %v6617, %v6748
  %v6812 = vmul.f32 %v6619, %v6749
  %v6813 = vmul.f32 %v6621, %v6749
  %6814 = vrot.lane.b32.xlu0 %v1495, 48
  %v6815 = vpop.permute.xlu0 %6814
  %6816 = vrot.lane.b32.xlu0 %v1500, 48
  %v6817 = vpop.permute.xlu0 %6816
  %6818 = vrot.lane.b32.xlu0 %v1505, 48
  %v6819 = vpop.permute.xlu0 %6818
  %6820 = vrot.lane.b32.xlu0 %v1510, 48
  %v6821 = vpop.permute.xlu0 %6820
  %6822 = vrot.lane.b32.xlu0 %v1515, 48
  %v6823 = vpop.permute.xlu0 %6822
  %6824 = vrot.lane.b32.xlu0 %v1520, 48
  %v6825 = vpop.permute.xlu0 %6824
  %6826 = vrot.lane.b32.xlu0 %v1525, 48
  %v6827 = vpop.permute.xlu0 %6826
  %6828 = vrot.lane.b32.xlu0 %v1530, 48
  %v6829 = vpop.permute.xlu0 %6828
  %6830 = vrot.lane.b32.xlu0 %v1535, 48
  %v6831 = vpop.permute.xlu0 %6830
  %6832 = vrot.lane.b32.xlu0 %v1540, 48
  %v6833 = vpop.permute.xlu0 %6832
  %6834 = vrot.lane.b32.xlu0 %v1545, 48
  %v6835 = vpop.permute.xlu0 %6834
  %6836 = vrot.lane.b32.xlu0 %v1550, 48
  %v6837 = vpop.permute.xlu0 %6836
  %6838 = vrot.lane.b32.xlu0 %v1555, 48
  %v6839 = vpop.permute.xlu0 %6838
  %6840 = vrot.lane.b32.xlu0 %v1560, 48
  %v6841 = vpop.permute.xlu0 %6840
  %6842 = vrot.lane.b32.xlu0 %v1565, 48
  %v6843 = vpop.permute.xlu0 %6842
  %6844 = vrot.lane.b32.xlu0 %v1570, 48
  %v6845 = vpop.permute.xlu0 %6844
  %6846 = vrot.lane.b32.xlu0 %v1575, 48
  %v6847 = vpop.permute.xlu0 %6846
  %6848 = vrot.lane.b32.xlu0 %v1580, 48
  %v6849 = vpop.permute.xlu0 %6848
  %6850 = vrot.lane.b32.xlu0 %v1585, 48
  %v6851 = vpop.permute.xlu0 %6850
  %6852 = vrot.lane.b32.xlu0 %v1590, 48
  %v6853 = vpop.permute.xlu0 %6852
  %6854 = vrot.lane.b32.xlu0 %v1595, 48
  %v6855 = vpop.permute.xlu0 %6854
  %6856 = vrot.lane.b32.xlu0 %v1600, 48
  %v6857 = vpop.permute.xlu0 %6856
  %6858 = vrot.lane.b32.xlu0 %v1605, 48
  %v6859 = vpop.permute.xlu0 %6858
  %6860 = vrot.lane.b32.xlu0 %v1610, 48
  %v6861 = vpop.permute.xlu0 %6860
  %6862 = vrot.lane.b32.xlu0 %v1615, 48
  %v6863 = vpop.permute.xlu0 %6862
  %6864 = vrot.lane.b32.xlu0 %v1620, 48
  %v6865 = vpop.permute.xlu0 %6864
  %6866 = vrot.lane.b32.xlu0 %v1625, 48
  %v6867 = vpop.permute.xlu0 %6866
  %6868 = vrot.lane.b32.xlu0 %v1630, 48
  %v6869 = vpop.permute.xlu0 %6868
  %6870 = vrot.lane.b32.xlu0 %v1635, 48
  %v6871 = vpop.permute.xlu0 %6870
  %6872 = vrot.lane.b32.xlu0 %v1640, 48
  %v6873 = vpop.permute.xlu0 %6872
  %6874 = vrot.lane.b32.xlu0 %v1645, 48
  %v6875 = vpop.permute.xlu0 %6874
  %6876 = vrot.lane.b32.xlu0 %v1650, 48
  %v6877 = vpop.permute.xlu0 %6876
  %6910 = vmatprep.subr.mxu0 0.0
  %6911 = vmatpush1.msra.mxu0 %v6815
  %6912 = vmatprep.subr.mxu0 0.0
  %6913 = vmatpush1.msra.mxu0 %v6817
  %6914 = vmatprep.subr.mxu0 0.0
  %6915 = vmatpush1.msra.mxu0 %v6819
  %6916 = vmatprep.subr.mxu0 0.0
  %6917 = vmatpush1.msra.mxu0 %v6821
  %6918 = vmatprep.subr.mxu0 0.0
  %6919 = vmatpush1.msra.mxu0 %v6823
  %6920 = vmatprep.subr.mxu0 0.0
  %6921 = vmatpush1.msra.mxu0 %v6825
  %6922 = vmatprep.subr.mxu0 0.0
  %6923 = vmatpush1.msra.mxu0 %v6827
  %6924 = vmatprep.subr.mxu0 0.0
  %6925 = vmatpush1.msra.mxu0 %v6829
  %6926 = vmatprep.subr.mxu0 0.0
  %6927 = vmatpush1.msra.mxu0 %v6831
  %6928 = vmatprep.subr.mxu0 0.0
  %6929 = vmatpush1.msra.mxu0 %v6833
  %6930 = vmatprep.subr.mxu0 0.0
  %6931 = vmatpush1.msra.mxu0 %v6835
  %6932 = vmatprep.subr.mxu0 0.0
  %6933 = vmatpush1.msra.mxu0 %v6837
  %6934 = vmatprep.subr.mxu0 0.0
  %6935 = vmatpush1.msra.mxu0 %v6839
  %6936 = vmatprep.subr.mxu0 0.0
  %6937 = vmatpush1.msra.mxu0 %v6841
  %6938 = vmatprep.subr.mxu0 0.0
  %6939 = vmatpush1.msra.mxu0 %v6843
  %6940 = vmatprep.subr.mxu0 0.0
  %6941 = vmatpush1.msra.mxu0 %v6845
  %6942 = vmatprep.subr.mxu0 0.0
  %6943 = vmatpush1.msra.mxu0 %v6847
  %6944 = vmatprep.subr.mxu0 0.0
  %6945 = vmatpush1.msra.mxu0 %v6849
  %6946 = vmatprep.subr.mxu0 0.0
  %6947 = vmatpush1.msra.mxu0 %v6851
  %6948 = vmatprep.subr.mxu0 0.0
  %6949 = vmatpush1.msra.mxu0 %v6853
  %6950 = vmatprep.subr.mxu0 0.0
  %6951 = vmatpush1.msra.mxu0 %v6855
  %6952 = vmatprep.subr.mxu0 0.0
  %6953 = vmatpush1.msra.mxu0 %v6857
  %6954 = vmatprep.subr.mxu0 0.0
  %6955 = vmatpush1.msra.mxu0 %v6859
  %6956 = vmatprep.subr.mxu0 0.0
  %6957 = vmatpush1.msra.mxu0 %v6861
  %6958 = vmatprep.subr.mxu0 0.0
  %6959 = vmatpush1.msra.mxu0 %v6863
  %6960 = vmatprep.subr.mxu0 0.0
  %6961 = vmatpush1.msra.mxu0 %v6865
  %6962 = vmatprep.subr.mxu0 0.0
  %6963 = vmatpush1.msra.mxu0 %v6867
  %6964 = vmatprep.subr.mxu0 0.0
  %6965 = vmatpush1.msra.mxu0 %v6869
  %6966 = vmatprep.subr.mxu0 0.0
  %6967 = vmatpush1.msra.mxu0 %v6871
  %6968 = vmatprep.subr.mxu0 0.0
  %6969 = vmatpush1.msra.mxu0 %v6873
  %6970 = vmatprep.subr.mxu0 0.0
  %6971 = vmatpush1.msra.mxu0 %v6875
  %6972 = vmatprep.subr.mxu0 0.0
  %6973 = vmatpush1.msra.mxu0 %v6877
  %6974 = vmatprep.mubr.f32.mxu0 %v6751
  %6975 = vmatmul.mubr.f32.gmra.mrb[0].mxu0 %v6750
  %v6976 = vpop.f32.mrb[0].mxu0
  %v6977 = vadd.f32 0.0, %v6976
  %v6978 = vpop.f32.mrb[0].mxu0
  %6979 = vmatprep.mubr.f32.mxu0 %v6753
  %6980 = vmatmul.mubr.f32.gmra.mrb[0].mxu0 %v6752
  %v6981 = vpop.f32.mrb[0].mxu0
  %v6982 = vadd.f32 0.0, %v6981
  %v6983 = vpop.f32.mrb[0].mxu0
  %6984 = vmatprep.mubr.f32.mxu0 %v6755
  %6985 = vmatmul.mubr.f32.gmra.mrb[0].mxu0 %v6754
  %v6986 = vpop.f32.mrb[0].mxu0
  %v6987 = vadd.f32 0.0, %v6986
  %v6988 = vpop.f32.mrb[0].mxu0
  %6989 = vmatprep.mubr.f32.mxu0 %v6757
  %6990 = vmatmul.mubr.f32.gmra.mrb[0].mxu0 %v6756
  %v6991 = vpop.f32.mrb[0].mxu0
  %v6992 = vadd.f32 0.0, %v6991
  %v6993 = vpop.f32.mrb[0].mxu0
  %6994 = vmatprep.mubr.f32.mxu0 %v6759
  %6995 = vmatmul.mubr.f32.gmra.mrb[0].mxu0 %v6758
  %v6996 = vpop.f32.mrb[0].mxu0
  %v6997 = vadd.f32 0.0, %v6996
  %v6998 = vpop.f32.mrb[0].mxu0
  %6999 = vmatprep.mubr.f32.mxu0 %v6761
  %7000 = vmatmul.mubr.f32.gmra.mrb[0].mxu0 %v6760
  %v7001 = vpop.f32.mrb[0].mxu0
  %v7002 = vadd.f32 0.0, %v7001
  %v7003 = vpop.f32.mrb[0].mxu0
  %7004 = vmatprep.mubr.f32.mxu0 %v6763
  %7005 = vmatmul.mubr.f32.gmra.mrb[0].mxu0 %v6762
  %v7006 = vpop.f32.mrb[0].mxu0
  %v7007 = vadd.f32 0.0, %v7006
  %v7008 = vpop.f32.mrb[0].mxu0
  %7009 = vmatprep.mubr.f32.mxu0 %v6765
  %7010 = vmatmul.mubr.f32.gmra.mrb[0].mxu0 %v6764
  %v7011 = vpop.f32.mrb[0].mxu0
  %v7012 = vadd.f32 0.0, %v7011
  %v7013 = vpop.f32.mrb[0].mxu0
  %7014 = vmatprep.mubr.f32.mxu0 %v6767
  %7015 = vmatmul.mubr.f32.gmra.mrb[0].mxu0 %v6766
  %v7016 = vpop.f32.mrb[0].mxu0
  %v7017 = vadd.f32 0.0, %v7016
  %v7018 = vpop.f32.mrb[0].mxu0
  %7019 = vmatprep.mubr.f32.mxu0 %v6769
  %7020 = vmatmul.mubr.f32.gmra.mrb[0].mxu0 %v6768
  %v7021 = vpop.f32.mrb[0].mxu0
  %v7022 = vadd.f32 0.0, %v7021
  %v7023 = vpop.f32.mrb[0].mxu0
  %7024 = vmatprep.mubr.f32.mxu0 %v6771
  %7025 = vmatmul.mubr.f32.gmra.mrb[0].mxu0 %v6770
  %v7026 = vpop.f32.mrb[0].mxu0
  %v7027 = vadd.f32 0.0, %v7026
  %v7028 = vpop.f32.mrb[0].mxu0
  %7029 = vmatprep.mubr.f32.mxu0 %v6773
  %7030 = vmatmul.mubr.f32.gmra.mrb[0].mxu0 %v6772
  %v7031 = vpop.f32.mrb[0].mxu0
  %v7032 = vadd.f32 0.0, %v7031
  %v7033 = vpop.f32.mrb[0].mxu0
  %7034 = vmatprep.mubr.f32.mxu0 %v6775
  %7035 = vmatmul.mubr.f32.gmra.mrb[0].mxu0 %v6774
  %v7036 = vpop.f32.mrb[0].mxu0
  %v7037 = vadd.f32 0.0, %v7036
  %v7038 = vpop.f32.mrb[0].mxu0
  %7039 = vmatprep.mubr.f32.mxu0 %v6777
  %7040 = vmatmul.mubr.f32.gmra.mrb[0].mxu0 %v6776
  %v7041 = vpop.f32.mrb[0].mxu0
  %v7042 = vadd.f32 0.0, %v7041
  %v7043 = vpop.f32.mrb[0].mxu0
  %7044 = vmatprep.mubr.f32.mxu0 %v6779
  %7045 = vmatmul.mubr.f32.gmra.mrb[0].mxu0 %v6778
  %v7046 = vpop.f32.mrb[0].mxu0
  %v7047 = vadd.f32 0.0, %v7046
  %v7048 = vpop.f32.mrb[0].mxu0
  %7049 = vmatprep.mubr.f32.mxu0 %v6781
  %7050 = vmatmul.mubr.f32.gmra.mrb[0].mxu0 %v6780
  %v7051 = vpop.f32.mrb[0].mxu0
  %v7052 = vadd.f32 0.0, %v7051
  %v7053 = vpop.f32.mrb[0].mxu0
  %7054 = vmatprep.mubr.f32.mxu0 %v6783
  %7055 = vmatmul.mubr.f32.gmra.mrb[0].mxu0 %v6782
  %v7056 = vpop.f32.mrb[0].mxu0
  %v7057 = vadd.f32 0.0, %v7056
  %v7058 = vpop.f32.mrb[0].mxu0
  %7059 = vmatprep.mubr.f32.mxu0 %v6785
  %7060 = vmatmul.mubr.f32.gmra.mrb[0].mxu0 %v6784
  %v7061 = vpop.f32.mrb[0].mxu0
  %v7062 = vadd.f32 0.0, %v7061
  %v7063 = vpop.f32.mrb[0].mxu0
  %7064 = vmatprep.mubr.f32.mxu0 %v6787
  %7065 = vmatmul.mubr.f32.gmra.mrb[0].mxu0 %v6786
  %v7066 = vpop.f32.mrb[0].mxu0
  %v7067 = vadd.f32 0.0, %v7066
  %v7068 = vpop.f32.mrb[0].mxu0
  %7069 = vmatprep.mubr.f32.mxu0 %v6789
  %7070 = vmatmul.mubr.f32.gmra.mrb[0].mxu0 %v6788
  %v7071 = vpop.f32.mrb[0].mxu0
  %v7072 = vadd.f32 0.0, %v7071
  %v7073 = vpop.f32.mrb[0].mxu0
  %7074 = vmatprep.mubr.f32.mxu0 %v6791
  %7075 = vmatmul.mubr.f32.gmra.mrb[0].mxu0 %v6790
  %v7076 = vpop.f32.mrb[0].mxu0
  %v7077 = vadd.f32 0.0, %v7076
  %v7078 = vpop.f32.mrb[0].mxu0
  %7079 = vmatprep.mubr.f32.mxu0 %v6793
  %7080 = vmatmul.mubr.f32.gmra.mrb[0].mxu0 %v6792
  %v7081 = vpop.f32.mrb[0].mxu0
  %v7082 = vadd.f32 0.0, %v7081
  %v7083 = vpop.f32.mrb[0].mxu0
  %7084 = vmatprep.mubr.f32.mxu0 %v6795
  %7085 = vmatmul.mubr.f32.gmra.mrb[0].mxu0 %v6794
  %v7086 = vpop.f32.mrb[0].mxu0
  %v7087 = vadd.f32 0.0, %v7086
  %v7088 = vpop.f32.mrb[0].mxu0
  %7089 = vmatprep.mubr.f32.mxu0 %v6797
  %7090 = vmatmul.mubr.f32.gmra.mrb[0].mxu0 %v6796
  %v7091 = vpop.f32.mrb[0].mxu0
  %v7092 = vadd.f32 0.0, %v7091
  %v7093 = vpop.f32.mrb[0].mxu0
  %7094 = vmatprep.mubr.f32.mxu0 %v6799
  %7095 = vmatmul.mubr.f32.gmra.mrb[0].mxu0 %v6798
  %v7096 = vpop.f32.mrb[0].mxu0
  %v7097 = vadd.f32 0.0, %v7096
  %v7098 = vpop.f32.mrb[0].mxu0
  %7099 = vmatprep.mubr.f32.mxu0 %v6801
  %7100 = vmatmul.mubr.f32.gmra.mrb[0].mxu0 %v6800
  %v7101 = vpop.f32.mrb[0].mxu0
  %v7102 = vadd.f32 0.0, %v7101
  %v7103 = vpop.f32.mrb[0].mxu0
  %7104 = vmatprep.mubr.f32.mxu0 %v6803
  %7105 = vmatmul.mubr.f32.gmra.mrb[0].mxu0 %v6802
  %v7106 = vpop.f32.mrb[0].mxu0
  %v7107 = vadd.f32 0.0, %v7106
  %v7108 = vpop.f32.mrb[0].mxu0
  %7109 = vmatprep.mubr.f32.mxu0 %v6805
  %7110 = vmatmul.mubr.f32.gmra.mrb[0].mxu0 %v6804
  %v7111 = vpop.f32.mrb[0].mxu0
  %v7112 = vadd.f32 0.0, %v7111
  %v7113 = vpop.f32.mrb[0].mxu0
  %7114 = vmatprep.mubr.f32.mxu0 %v6807
  %7115 = vmatmul.mubr.f32.gmra.mrb[0].mxu0 %v6806
  %v7116 = vpop.f32.mrb[0].mxu0
  %v7117 = vadd.f32 0.0, %v7116
  %v7118 = vpop.f32.mrb[0].mxu0
  %7119 = vmatprep.mubr.f32.mxu0 %v6809
  %7120 = vmatmul.mubr.f32.gmra.mrb[0].mxu0 %v6808
  %v7121 = vpop.f32.mrb[0].mxu0
  %v7122 = vadd.f32 0.0, %v7121
  %v7123 = vpop.f32.mrb[0].mxu0
  %7124 = vmatprep.mubr.f32.mxu0 %v6811
  %7125 = vmatmul.mubr.f32.gmra.mrb[0].mxu0 %v6810
  %v7126 = vpop.f32.mrb[0].mxu0
  %v7127 = vadd.f32 0.0, %v7126
  %v7128 = vpop.f32.mrb[0].mxu0
  %7129 = vmatprep.mubr.f32.mxu0 %v6813
  %7130 = vmatmul.mubr.f32.gmra.mrb[0].mxu0 %v6812
  %v7131 = vpop.f32.mrb[0].mxu0
  %v7132 = vadd.f32 0.0, %v7131
  %v7133 = vpop.f32.mrb[0].mxu0
  %7134 = vdwg.mxu0
  %7167 = vrot.lane.b32.xlu0 %v6977, 16
  %v7168 = vpop.permute.xlu0 %7167
  %7169 = vrot.lane.b32.xlu0 %v6982, 16
  %v7170 = vpop.permute.xlu0 %7169
  %7171 = vrot.lane.b32.xlu0 %v6987, 16
  %v7172 = vpop.permute.xlu0 %7171
  %7173 = vrot.lane.b32.xlu0 %v6992, 16
  %v7174 = vpop.permute.xlu0 %7173
  %7175 = vrot.lane.b32.xlu0 %v6997, 16
  %v7176 = vpop.permute.xlu0 %7175
  %7177 = vrot.lane.b32.xlu0 %v7002, 16
  %v7178 = vpop.permute.xlu0 %7177
  %7179 = vrot.lane.b32.xlu0 %v7007, 16
  %v7180 = vpop.permute.xlu0 %7179
  %7181 = vrot.lane.b32.xlu0 %v7012, 16
  %v7182 = vpop.permute.xlu0 %7181
  %7183 = vrot.lane.b32.xlu0 %v7017, 16
  %v7184 = vpop.permute.xlu0 %7183
  %7185 = vrot.lane.b32.xlu0 %v7022, 16
  %v7186 = vpop.permute.xlu0 %7185
  %7187 = vrot.lane.b32.xlu0 %v7027, 16
  %v7188 = vpop.permute.xlu0 %7187
  %7189 = vrot.lane.b32.xlu0 %v7032, 16
  %v7190 = vpop.permute.xlu0 %7189
  %7191 = vrot.lane.b32.xlu0 %v7037, 16
  %v7192 = vpop.permute.xlu0 %7191
  %7193 = vrot.lane.b32.xlu0 %v7042, 16
  %v7194 = vpop.permute.xlu0 %7193
  %7195 = vrot.lane.b32.xlu0 %v7047, 16
  %v7196 = vpop.permute.xlu0 %7195
  %7197 = vrot.lane.b32.xlu0 %v7052, 16
  %v7198 = vpop.permute.xlu0 %7197
  %7199 = vrot.lane.b32.xlu0 %v7057, 16
  %v7200 = vpop.permute.xlu0 %7199
  %7201 = vrot.lane.b32.xlu0 %v7062, 16
  %v7202 = vpop.permute.xlu0 %7201
  %7203 = vrot.lane.b32.xlu0 %v7067, 16
  %v7204 = vpop.permute.xlu0 %7203
  %7205 = vrot.lane.b32.xlu0 %v7072, 16
  %v7206 = vpop.permute.xlu0 %7205
  %7207 = vrot.lane.b32.xlu0 %v7077, 16
  %v7208 = vpop.permute.xlu0 %7207
  %7209 = vrot.lane.b32.xlu0 %v7082, 16
  %v7210 = vpop.permute.xlu0 %7209
  %7211 = vrot.lane.b32.xlu0 %v7087, 16
  %v7212 = vpop.permute.xlu0 %7211
  %7213 = vrot.lane.b32.xlu0 %v7092, 16
  %v7214 = vpop.permute.xlu0 %7213
  %7215 = vrot.lane.b32.xlu0 %v7097, 16
  %v7216 = vpop.permute.xlu0 %7215
  %7217 = vrot.lane.b32.xlu0 %v7102, 16
  %v7218 = vpop.permute.xlu0 %7217
  %7219 = vrot.lane.b32.xlu0 %v7107, 16
  %v7220 = vpop.permute.xlu0 %7219
  %7221 = vrot.lane.b32.xlu0 %v7112, 16
  %v7222 = vpop.permute.xlu0 %7221
  %7223 = vrot.lane.b32.xlu0 %v7117, 16
  %v7224 = vpop.permute.xlu0 %7223
  %7225 = vrot.lane.b32.xlu0 %v7122, 16
  %v7226 = vpop.permute.xlu0 %7225
  %7227 = vrot.lane.b32.xlu0 %v7127, 16
  %v7228 = vpop.permute.xlu0 %7227
  %7229 = vrot.lane.b32.xlu0 %v7132, 16
  %v7230 = vpop.permute.xlu0 %7229
  %v7263 = vsel %vm1813, %v5663, %v7168
  %v7264 = vsel %vm1813, %v5668, %v7170
  %v7265 = vsel %vm1813, %v5673, %v7172
  %v7266 = vsel %vm1813, %v5678, %v7174
  %v7267 = vsel %vm1813, %v5683, %v7176
  %v7268 = vsel %vm1813, %v5688, %v7178
  %v7269 = vsel %vm1813, %v5693, %v7180
  %v7270 = vsel %vm1813, %v5698, %v7182
  %v7271 = vsel %vm1813, %v5703, %v7184
  %v7272 = vsel %vm1813, %v5708, %v7186
  %v7273 = vsel %vm1813, %v5713, %v7188
  %v7274 = vsel %vm1813, %v5718, %v7190
  %v7275 = vsel %vm1813, %v5723, %v7192
  %v7276 = vsel %vm1813, %v5728, %v7194
  %v7277 = vsel %vm1813, %v5733, %v7196
  %v7278 = vsel %vm1813, %v5738, %v7198
  %v7279 = vsel %vm1813, %v5743, %v7200
  %v7280 = vsel %vm1813, %v5748, %v7202
  %v7281 = vsel %vm1813, %v5753, %v7204
  %v7282 = vsel %vm1813, %v5758, %v7206
  %v7283 = vsel %vm1813, %v5763, %v7208
  %v7284 = vsel %vm1813, %v5768, %v7210
  %v7285 = vsel %vm1813, %v5773, %v7212
  %v7286 = vsel %vm1813, %v5778, %v7214
  %v7287 = vsel %vm1813, %v5783, %v7216
  %v7288 = vsel %vm1813, %v5788, %v7218
  %v7289 = vsel %vm1813, %v5793, %v7220
  %v7290 = vsel %vm1813, %v5798, %v7222
  %v7291 = vsel %vm1813, %v5803, %v7224
  %v7292 = vsel %vm1813, %v5808, %v7226
  %v7293 = vsel %vm1813, %v5813, %v7228
  %v7294 = vsel %vm1813, %v5818, %v7230
  %v7295 = vld [vmem:[%s3] sm:$0xff]
  %v7296 = vld [vmem:[%s3 + $0x8] sm:$0xff]
  %v7297 = vld [vmem:[%s3 + $0x10] sm:$0xff]
  %v7298 = vld [vmem:[%s3 + $0x18] sm:$0xff]
  %v7299 = vlaneseq
  %v7300 = vshrl.u32 %v7299, 7
  %v7301 = vsub.s32 0, %v7300
  %v7302 = vrot.slane %v95, %v7301
  %v7304 = vsel %vm98, %v4507, 0
  %v7307 = vsel %vm98, %v4508, 0
  %v7310 = vsel %vm98, %v4509, 0
  %v7313 = vsel %vm98, %v4510, 0
  %v7316 = vsel %vm98, %v4511, 0
  %v7319 = vsel %vm98, %v4512, 0
  %v7322 = vsel %vm98, %v4513, 0
  %v7325 = vsel %vm98, %v4514, 0
  %v7328 = vsel %vm98, %v4515, 0
  %v7331 = vsel %vm98, %v4516, 0
  %v7334 = vsel %vm98, %v4517, 0
  %v7337 = vsel %vm98, %v4518, 0
  %v7340 = vsel %vm98, %v4519, 0
  %v7343 = vsel %vm98, %v4520, 0
  %v7346 = vsel %vm98, %v4521, 0
  %v7349 = vsel %vm98, %v4522, 0
  %v7352 = vsel %vm98, %v4523, 0
  %v7355 = vsel %vm98, %v4524, 0
  %v7358 = vsel %vm98, %v4525, 0
  %v7361 = vsel %vm98, %v4526, 0
  %v7364 = vsel %vm98, %v4527, 0
  %v7367 = vsel %vm98, %v4528, 0
  %v7370 = vsel %vm98, %v4529, 0
  %v7373 = vsel %vm98, %v4530, 0
  %v7376 = vsel %vm98, %v4531, 0
  %v7379 = vsel %vm98, %v4532, 0
  %v7382 = vsel %vm98, %v4533, 0
  %v7385 = vsel %vm98, %v4534, 0
  %v7388 = vsel %vm98, %v4535, 0
  %v7391 = vsel %vm98, %v4536, 0
  %v7394 = vsel %vm98, %v4537, 0
  %v7397 = vsel %vm98, %v4538, 0
  %v7400 = vsel %vm98, %v7263, 0
  %v7403 = vsel %vm98, %v7264, 0
  %v7406 = vsel %vm98, %v7265, 0
  %v7409 = vsel %vm98, %v7266, 0
  %v7412 = vsel %vm98, %v7267, 0
  %v7415 = vsel %vm98, %v7268, 0
  %v7418 = vsel %vm98, %v7269, 0
  %v7421 = vsel %vm98, %v7270, 0
  %v7424 = vsel %vm98, %v7271, 0
  %v7427 = vsel %vm98, %v7272, 0
  %v7430 = vsel %vm98, %v7273, 0
  %v7433 = vsel %vm98, %v7274, 0
  %v7436 = vsel %vm98, %v7275, 0
  %v7439 = vsel %vm98, %v7276, 0
  %v7442 = vsel %vm98, %v7277, 0
  %v7445 = vsel %vm98, %v7278, 0
  %v7448 = vsel %vm98, %v7279, 0
  %v7451 = vsel %vm98, %v7280, 0
  %v7454 = vsel %vm98, %v7281, 0
  %v7457 = vsel %vm98, %v7282, 0
  %v7460 = vsel %vm98, %v7283, 0
  %v7463 = vsel %vm98, %v7284, 0
  %v7466 = vsel %vm98, %v7285, 0
  %v7469 = vsel %vm98, %v7286, 0
  %v7472 = vsel %vm98, %v7287, 0
  %v7475 = vsel %vm98, %v7288, 0
  %v7478 = vsel %vm98, %v7289, 0
  %v7481 = vsel %vm98, %v7290, 0
  %v7484 = vsel %vm98, %v7291, 0
  %v7487 = vsel %vm98, %v7292, 0
  %v7490 = vsel %vm98, %v7293, 0
  %v7493 = vsel %vm98, %v7294, 0
  %7495 = vmatprep.subr.mxu0 0.0
  %7496 = vmatpush1.msra.mxu0 %v7295
  %7497 = vmatprep.subr.mxu0 0.0
  %7498 = vmatpush1.msra.mxu0 %v7296
  %7499 = vmatprep.subr.mxu0 0.0
  %7500 = vmatpush1.msra.mxu0 %v7297
  %7501 = vmatprep.subr.mxu0 0.0
  %7502 = vmatpush1.msra.mxu0 %v7298
  %7503 = vmatprep.subr.mxu0 0.0
  %7504 = vmatpush1.msra.mxu0 0.0
  %7505 = vmatprep.subr.mxu0 0.0
  %7506 = vmatpush1.msra.mxu0 0.0
  %7507 = vmatprep.subr.mxu0 0.0
  %7508 = vmatpush1.msra.mxu0 0.0
  %7509 = vmatprep.subr.mxu0 0.0
  %7510 = vmatpush1.msra.mxu0 0.0
  %7511 = vmatprep.subr.mxu0 0.0
  %7512 = vmatpush1.msra.mxu0 0.0
  %7513 = vmatprep.subr.mxu0 0.0
  %7514 = vmatpush1.msra.mxu0 0.0
  %7515 = vmatprep.subr.mxu0 0.0
  %7516 = vmatpush1.msra.mxu0 0.0
  %7517 = vmatprep.subr.mxu0 0.0
  %7518 = vmatpush1.msra.mxu0 0.0
  %7519 = vmatprep.subr.mxu0 0.0
  %7520 = vmatpush1.msra.mxu0 0.0
  %7521 = vmatprep.subr.mxu0 0.0
  %7522 = vmatpush1.msra.mxu0 0.0
  %7523 = vmatprep.subr.mxu0 0.0
  %7524 = vmatpush1.msra.mxu0 0.0
  %7525 = vmatprep.subr.mxu0 0.0
  %7526 = vmatpush1.msra.mxu0 0.0
  %7527 = vmatprep.subr.mxu0 0.0
  %7528 = vmatpush1.msra.mxu0 0.0
  %7529 = vmatprep.subr.mxu0 0.0
  %7530 = vmatpush1.msra.mxu0 0.0
  %7531 = vmatprep.subr.mxu0 0.0
  %7532 = vmatpush1.msra.mxu0 0.0
  %7533 = vmatprep.subr.mxu0 0.0
  %7534 = vmatpush1.msra.mxu0 0.0
  %7535 = vmatprep.subr.mxu0 0.0
  %7536 = vmatpush1.msra.mxu0 0.0
  %7537 = vmatprep.subr.mxu0 0.0
  %7538 = vmatpush1.msra.mxu0 0.0
  %7539 = vmatprep.subr.mxu0 0.0
  %7540 = vmatpush1.msra.mxu0 0.0
  %7541 = vmatprep.subr.mxu0 0.0
  %7542 = vmatpush1.msra.mxu0 0.0
  %7543 = vmatprep.subr.mxu0 0.0
  %7544 = vmatpush1.msra.mxu0 0.0
  %7545 = vmatprep.subr.mxu0 0.0
  %7546 = vmatpush1.msra.mxu0 0.0
  %7547 = vmatprep.subr.mxu0 0.0
  %7548 = vmatpush1.msra.mxu0 0.0
  %7549 = vmatprep.subr.mxu0 0.0
  %7550 = vmatpush1.msra.mxu0 0.0
  %7551 = vmatprep.subr.mxu0 0.0
  %7552 = vmatpush1.msra.mxu0 0.0
  %7553 = vmatprep.subr.mxu0 0.0
  %7554 = vmatpush1.msra.mxu0 0.0
  %7555 = vmatprep.subr.mxu0 0.0
  %7556 = vmatpush1.msra.mxu0 0.0
  %7557 = vmatprep.subr.mxu0 0.0
  %7558 = vmatpush1.msra.mxu0 0.0
  %7559 = vmatprep.mubr.f32.mxu0 0.0
  %7560 = vmatmul.mubr.f32.gmra.mrb[0].mxu0 %v7304
  %v7561 = vpop.f32.mrb[0].mxu0
  %v7562 = vadd.f32 %v7302, %v7561
  %v7563 = vpop.f32.mrb[0].mxu0
  %7564 = vmatprep.mubr.f32.mxu0 0.0
  %7565 = vmatmul.mubr.f32.gmra.mrb[0].mxu0 %v7307
  %v7566 = vpop.f32.mrb[0].mxu0
  %v7567 = vadd.f32 %v7302, %v7566
  %v7568 = vpop.f32.mrb[0].mxu0
  %7569 = vmatprep.mubr.f32.mxu0 0.0
  %7570 = vmatmul.mubr.f32.gmra.mrb[0].mxu0 %v7310
  %v7571 = vpop.f32.mrb[0].mxu0
  %v7572 = vadd.f32 %v7302, %v7571
  %v7573 = vpop.f32.mrb[0].mxu0
  %7574 = vmatprep.mubr.f32.mxu0 0.0
  %7575 = vmatmul.mubr.f32.gmra.mrb[0].mxu0 %v7313
  %v7576 = vpop.f32.mrb[0].mxu0
  %v7577 = vadd.f32 %v7302, %v7576
  %v7578 = vpop.f32.mrb[0].mxu0
  %7579 = vmatprep.mubr.f32.mxu0 0.0
  %7580 = vmatmul.mubr.f32.gmra.mrb[0].mxu0 %v7316
  %v7581 = vpop.f32.mrb[0].mxu0
  %v7582 = vadd.f32 %v7302, %v7581
  %v7583 = vpop.f32.mrb[0].mxu0
  %7584 = vmatprep.mubr.f32.mxu0 0.0
  %7585 = vmatmul.mubr.f32.gmra.mrb[0].mxu0 %v7319
  %v7586 = vpop.f32.mrb[0].mxu0
  %v7587 = vadd.f32 %v7302, %v7586
  %v7588 = vpop.f32.mrb[0].mxu0
  %7589 = vmatprep.mubr.f32.mxu0 0.0
  %7590 = vmatmul.mubr.f32.gmra.mrb[0].mxu0 %v7322
  %v7591 = vpop.f32.mrb[0].mxu0
  %v7592 = vadd.f32 %v7302, %v7591
  %v7593 = vpop.f32.mrb[0].mxu0
  %7594 = vmatprep.mubr.f32.mxu0 0.0
  %7595 = vmatmul.mubr.f32.gmra.mrb[0].mxu0 %v7325
  %v7596 = vpop.f32.mrb[0].mxu0
  %v7597 = vadd.f32 %v7302, %v7596
  %v7598 = vpop.f32.mrb[0].mxu0
  %7599 = vmatprep.mubr.f32.mxu0 0.0
  %7600 = vmatmul.mubr.f32.gmra.mrb[0].mxu0 %v7328
  %v7601 = vpop.f32.mrb[0].mxu0
  %v7602 = vadd.f32 %v7302, %v7601
  %v7603 = vpop.f32.mrb[0].mxu0
  %7604 = vmatprep.mubr.f32.mxu0 0.0
  %7605 = vmatmul.mubr.f32.gmra.mrb[0].mxu0 %v7331
  %v7606 = vpop.f32.mrb[0].mxu0
  %v7607 = vadd.f32 %v7302, %v7606
  %v7608 = vpop.f32.mrb[0].mxu0
  %7609 = vmatprep.mubr.f32.mxu0 0.0
  %7610 = vmatmul.mubr.f32.gmra.mrb[0].mxu0 %v7334
  %v7611 = vpop.f32.mrb[0].mxu0
  %v7612 = vadd.f32 %v7302, %v7611
  %v7613 = vpop.f32.mrb[0].mxu0
  %7614 = vmatprep.mubr.f32.mxu0 0.0
  %7615 = vmatmul.mubr.f32.gmra.mrb[0].mxu0 %v7337
  %v7616 = vpop.f32.mrb[0].mxu0
  %v7617 = vadd.f32 %v7302, %v7616
  %v7618 = vpop.f32.mrb[0].mxu0
  %7619 = vmatprep.mubr.f32.mxu0 0.0
  %7620 = vmatmul.mubr.f32.gmra.mrb[0].mxu0 %v7340
  %v7621 = vpop.f32.mrb[0].mxu0
  %v7622 = vadd.f32 %v7302, %v7621
  %v7623 = vpop.f32.mrb[0].mxu0
  %7624 = vmatprep.mubr.f32.mxu0 0.0
  %7625 = vmatmul.mubr.f32.gmra.mrb[0].mxu0 %v7343
  %v7626 = vpop.f32.mrb[0].mxu0
  %v7627 = vadd.f32 %v7302, %v7626
  %v7628 = vpop.f32.mrb[0].mxu0
  %7629 = vmatprep.mubr.f32.mxu0 0.0
  %7630 = vmatmul.mubr.f32.gmra.mrb[0].mxu0 %v7346
  %v7631 = vpop.f32.mrb[0].mxu0
  %v7632 = vadd.f32 %v7302, %v7631
  %v7633 = vpop.f32.mrb[0].mxu0
  %7634 = vmatprep.mubr.f32.mxu0 0.0
  %7635 = vmatmul.mubr.f32.gmra.mrb[0].mxu0 %v7349
  %v7636 = vpop.f32.mrb[0].mxu0
  %v7637 = vadd.f32 %v7302, %v7636
  %v7638 = vpop.f32.mrb[0].mxu0
  %7639 = vmatprep.mubr.f32.mxu0 0.0
  %7640 = vmatmul.mubr.f32.gmra.mrb[0].mxu0 %v7352
  %v7641 = vpop.f32.mrb[0].mxu0
  %v7642 = vadd.f32 %v7302, %v7641
  %v7643 = vpop.f32.mrb[0].mxu0
  %7644 = vmatprep.mubr.f32.mxu0 0.0
  %7645 = vmatmul.mubr.f32.gmra.mrb[0].mxu0 %v7355
  %v7646 = vpop.f32.mrb[0].mxu0
  %v7647 = vadd.f32 %v7302, %v7646
  %v7648 = vpop.f32.mrb[0].mxu0
  %7649 = vmatprep.mubr.f32.mxu0 0.0
  %7650 = vmatmul.mubr.f32.gmra.mrb[0].mxu0 %v7358
  %v7651 = vpop.f32.mrb[0].mxu0
  %v7652 = vadd.f32 %v7302, %v7651
  %v7653 = vpop.f32.mrb[0].mxu0
  %7654 = vmatprep.mubr.f32.mxu0 0.0
  %7655 = vmatmul.mubr.f32.gmra.mrb[0].mxu0 %v7361
  %v7656 = vpop.f32.mrb[0].mxu0
  %v7657 = vadd.f32 %v7302, %v7656
  %v7658 = vpop.f32.mrb[0].mxu0
  %7659 = vmatprep.mubr.f32.mxu0 0.0
  %7660 = vmatmul.mubr.f32.gmra.mrb[0].mxu0 %v7364
  %v7661 = vpop.f32.mrb[0].mxu0
  %v7662 = vadd.f32 %v7302, %v7661
  %v7663 = vpop.f32.mrb[0].mxu0
  %7664 = vmatprep.mubr.f32.mxu0 0.0
  %7665 = vmatmul.mubr.f32.gmra.mrb[0].mxu0 %v7367
  %v7666 = vpop.f32.mrb[0].mxu0
  %v7667 = vadd.f32 %v7302, %v7666
  %v7668 = vpop.f32.mrb[0].mxu0
  %7669 = vmatprep.mubr.f32.mxu0 0.0
  %7670 = vmatmul.mubr.f32.gmra.mrb[0].mxu0 %v7370
  %v7671 = vpop.f32.mrb[0].mxu0
  %v7672 = vadd.f32 %v7302, %v7671
  %v7673 = vpop.f32.mrb[0].mxu0
  %7674 = vmatprep.mubr.f32.mxu0 0.0
  %7675 = vmatmul.mubr.f32.gmra.mrb[0].mxu0 %v7373
  %v7676 = vpop.f32.mrb[0].mxu0
  %v7677 = vadd.f32 %v7302, %v7676
  %v7678 = vpop.f32.mrb[0].mxu0
  %7679 = vmatprep.mubr.f32.mxu0 0.0
  %7680 = vmatmul.mubr.f32.gmra.mrb[0].mxu0 %v7376
  %v7681 = vpop.f32.mrb[0].mxu0
  %v7682 = vadd.f32 %v7302, %v7681
  %v7683 = vpop.f32.mrb[0].mxu0
  %7684 = vmatprep.mubr.f32.mxu0 0.0
  %7685 = vmatmul.mubr.f32.gmra.mrb[0].mxu0 %v7379
  %v7686 = vpop.f32.mrb[0].mxu0
  %v7687 = vadd.f32 %v7302, %v7686
  %v7688 = vpop.f32.mrb[0].mxu0
  %7689 = vmatprep.mubr.f32.mxu0 0.0
  %7690 = vmatmul.mubr.f32.gmra.mrb[0].mxu0 %v7382
  %v7691 = vpop.f32.mrb[0].mxu0
  %v7692 = vadd.f32 %v7302, %v7691
  %v7693 = vpop.f32.mrb[0].mxu0
  %7694 = vmatprep.mubr.f32.mxu0 0.0
  %7695 = vmatmul.mubr.f32.gmra.mrb[0].mxu0 %v7385
  %v7696 = vpop.f32.mrb[0].mxu0
  %v7697 = vadd.f32 %v7302, %v7696
  %v7698 = vpop.f32.mrb[0].mxu0
  %7699 = vmatprep.mubr.f32.mxu0 0.0
  %7700 = vmatmul.mubr.f32.gmra.mrb[0].mxu0 %v7388
  %v7701 = vpop.f32.mrb[0].mxu0
  %v7702 = vadd.f32 %v7302, %v7701
  %v7703 = vpop.f32.mrb[0].mxu0
  %7704 = vmatprep.mubr.f32.mxu0 0.0
  %7705 = vmatmul.mubr.f32.gmra.mrb[0].mxu0 %v7391
  %v7706 = vpop.f32.mrb[0].mxu0
  %v7707 = vadd.f32 %v7302, %v7706
  %v7708 = vpop.f32.mrb[0].mxu0
  %7709 = vmatprep.mubr.f32.mxu0 0.0
  %7710 = vmatmul.mubr.f32.gmra.mrb[0].mxu0 %v7394
  %v7711 = vpop.f32.mrb[0].mxu0
  %v7712 = vadd.f32 %v7302, %v7711
  %v7713 = vpop.f32.mrb[0].mxu0
  %7714 = vmatprep.mubr.f32.mxu0 0.0
  %7715 = vmatmul.mubr.f32.gmra.mrb[0].mxu0 %v7397
  %v7716 = vpop.f32.mrb[0].mxu0
  %v7717 = vadd.f32 %v7302, %v7716
  %v7718 = vpop.f32.mrb[0].mxu0
  %7719 = vmatprep.mubr.f32.mxu0 0.0
  %7720 = vmatmul.mubr.f32.gmra.mrb[0].mxu0 %v7400
  %v7721 = vpop.f32.mrb[0].mxu0
  %v7722 = vadd.f32 %v7302, %v7721
  %v7723 = vpop.f32.mrb[0].mxu0
  %7724 = vmatprep.mubr.f32.mxu0 0.0
  %7725 = vmatmul.mubr.f32.gmra.mrb[0].mxu0 %v7403
  %v7726 = vpop.f32.mrb[0].mxu0
  %v7727 = vadd.f32 %v7302, %v7726
  %v7728 = vpop.f32.mrb[0].mxu0
  %7729 = vmatprep.mubr.f32.mxu0 0.0
  %7730 = vmatmul.mubr.f32.gmra.mrb[0].mxu0 %v7406
  %v7731 = vpop.f32.mrb[0].mxu0
  %v7732 = vadd.f32 %v7302, %v7731
  %v7733 = vpop.f32.mrb[0].mxu0
  %7734 = vmatprep.mubr.f32.mxu0 0.0
  %7735 = vmatmul.mubr.f32.gmra.mrb[0].mxu0 %v7409
  %v7736 = vpop.f32.mrb[0].mxu0
  %v7737 = vadd.f32 %v7302, %v7736
  %v7738 = vpop.f32.mrb[0].mxu0
  %7739 = vmatprep.mubr.f32.mxu0 0.0
  %7740 = vmatmul.mubr.f32.gmra.mrb[0].mxu0 %v7412
  %v7741 = vpop.f32.mrb[0].mxu0
  %v7742 = vadd.f32 %v7302, %v7741
  %v7743 = vpop.f32.mrb[0].mxu0
  %7744 = vmatprep.mubr.f32.mxu0 0.0
  %7745 = vmatmul.mubr.f32.gmra.mrb[0].mxu0 %v7415
  %v7746 = vpop.f32.mrb[0].mxu0
  %v7747 = vadd.f32 %v7302, %v7746
  %v7748 = vpop.f32.mrb[0].mxu0
  %7749 = vmatprep.mubr.f32.mxu0 0.0
  %7750 = vmatmul.mubr.f32.gmra.mrb[0].mxu0 %v7418
  %v7751 = vpop.f32.mrb[0].mxu0
  %v7752 = vadd.f32 %v7302, %v7751
  %v7753 = vpop.f32.mrb[0].mxu0
  %7754 = vmatprep.mubr.f32.mxu0 0.0
  %7755 = vmatmul.mubr.f32.gmra.mrb[0].mxu0 %v7421
  %v7756 = vpop.f32.mrb[0].mxu0
  %v7757 = vadd.f32 %v7302, %v7756
  %v7758 = vpop.f32.mrb[0].mxu0
  %7759 = vmatprep.mubr.f32.mxu0 0.0
  %7760 = vmatmul.mubr.f32.gmra.mrb[0].mxu0 %v7424
  %v7761 = vpop.f32.mrb[0].mxu0
  %v7762 = vadd.f32 %v7302, %v7761
  %v7763 = vpop.f32.mrb[0].mxu0
  %7764 = vmatprep.mubr.f32.mxu0 0.0
  %7765 = vmatmul.mubr.f32.gmra.mrb[0].mxu0 %v7427
  %v7766 = vpop.f32.mrb[0].mxu0
  %v7767 = vadd.f32 %v7302, %v7766
  %v7768 = vpop.f32.mrb[0].mxu0
  %7769 = vmatprep.mubr.f32.mxu0 0.0
  %7770 = vmatmul.mubr.f32.gmra.mrb[0].mxu0 %v7430
  %v7771 = vpop.f32.mrb[0].mxu0
  %v7772 = vadd.f32 %v7302, %v7771
  %v7773 = vpop.f32.mrb[0].mxu0
  %7774 = vmatprep.mubr.f32.mxu0 0.0
  %7775 = vmatmul.mubr.f32.gmra.mrb[0].mxu0 %v7433
  %v7776 = vpop.f32.mrb[0].mxu0
  %v7777 = vadd.f32 %v7302, %v7776
  %v7778 = vpop.f32.mrb[0].mxu0
  %7779 = vmatprep.mubr.f32.mxu0 0.0
  %7780 = vmatmul.mubr.f32.gmra.mrb[0].mxu0 %v7436
  %v7781 = vpop.f32.mrb[0].mxu0
  %v7782 = vadd.f32 %v7302, %v7781
  %v7783 = vpop.f32.mrb[0].mxu0
  %7784 = vmatprep.mubr.f32.mxu0 0.0
  %7785 = vmatmul.mubr.f32.gmra.mrb[0].mxu0 %v7439
  %v7786 = vpop.f32.mrb[0].mxu0
  %v7787 = vadd.f32 %v7302, %v7786
  %v7788 = vpop.f32.mrb[0].mxu0
  %7789 = vmatprep.mubr.f32.mxu0 0.0
  %7790 = vmatmul.mubr.f32.gmra.mrb[0].mxu0 %v7442
  %v7791 = vpop.f32.mrb[0].mxu0
  %v7792 = vadd.f32 %v7302, %v7791
  %v7793 = vpop.f32.mrb[0].mxu0
  %7794 = vmatprep.mubr.f32.mxu0 0.0
  %7795 = vmatmul.mubr.f32.gmra.mrb[0].mxu0 %v7445
  %v7796 = vpop.f32.mrb[0].mxu0
  %v7797 = vadd.f32 %v7302, %v7796
  %v7798 = vpop.f32.mrb[0].mxu0
  %7799 = vmatprep.mubr.f32.mxu0 0.0
  %7800 = vmatmul.mubr.f32.gmra.mrb[0].mxu0 %v7448
  %v7801 = vpop.f32.mrb[0].mxu0
  %v7802 = vadd.f32 %v7302, %v7801
  %v7803 = vpop.f32.mrb[0].mxu0
  %7804 = vmatprep.mubr.f32.mxu0 0.0
  %7805 = vmatmul.mubr.f32.gmra.mrb[0].mxu0 %v7451
  %v7806 = vpop.f32.mrb[0].mxu0
  %v7807 = vadd.f32 %v7302, %v7806
  %v7808 = vpop.f32.mrb[0].mxu0
  %7809 = vmatprep.mubr.f32.mxu0 0.0
  %7810 = vmatmul.mubr.f32.gmra.mrb[0].mxu0 %v7454
  %v7811 = vpop.f32.mrb[0].mxu0
  %v7812 = vadd.f32 %v7302, %v7811
  %v7813 = vpop.f32.mrb[0].mxu0
  %7814 = vmatprep.mubr.f32.mxu0 0.0
  %7815 = vmatmul.mubr.f32.gmra.mrb[0].mxu0 %v7457
  %v7816 = vpop.f32.mrb[0].mxu0
  %v7817 = vadd.f32 %v7302, %v7816
  %v7818 = vpop.f32.mrb[0].mxu0
  %7819 = vmatprep.mubr.f32.mxu0 0.0
  %7820 = vmatmul.mubr.f32.gmra.mrb[0].mxu0 %v7460
  %v7821 = vpop.f32.mrb[0].mxu0
  %v7822 = vadd.f32 %v7302, %v7821
  %v7823 = vpop.f32.mrb[0].mxu0
  %7824 = vmatprep.mubr.f32.mxu0 0.0
  %7825 = vmatmul.mubr.f32.gmra.mrb[0].mxu0 %v7463
  %v7826 = vpop.f32.mrb[0].mxu0
  %v7827 = vadd.f32 %v7302, %v7826
  %v7828 = vpop.f32.mrb[0].mxu0
  %7829 = vmatprep.mubr.f32.mxu0 0.0
  %7830 = vmatmul.mubr.f32.gmra.mrb[0].mxu0 %v7466
  %v7831 = vpop.f32.mrb[0].mxu0
  %v7832 = vadd.f32 %v7302, %v7831
  %v7833 = vpop.f32.mrb[0].mxu0
  %7834 = vmatprep.mubr.f32.mxu0 0.0
  %7835 = vmatmul.mubr.f32.gmra.mrb[0].mxu0 %v7469
  %v7836 = vpop.f32.mrb[0].mxu0
  %v7837 = vadd.f32 %v7302, %v7836
  %v7838 = vpop.f32.mrb[0].mxu0
  %7839 = vmatprep.mubr.f32.mxu0 0.0
  %7840 = vmatmul.mubr.f32.gmra.mrb[0].mxu0 %v7472
  %v7841 = vpop.f32.mrb[0].mxu0
  %v7842 = vadd.f32 %v7302, %v7841
  %v7843 = vpop.f32.mrb[0].mxu0
  %7844 = vmatprep.mubr.f32.mxu0 0.0
  %7845 = vmatmul.mubr.f32.gmra.mrb[0].mxu0 %v7475
  %v7846 = vpop.f32.mrb[0].mxu0
  %v7847 = vadd.f32 %v7302, %v7846
  %v7848 = vpop.f32.mrb[0].mxu0
  %7849 = vmatprep.mubr.f32.mxu0 0.0
  %7850 = vmatmul.mubr.f32.gmra.mrb[0].mxu0 %v7478
  %v7851 = vpop.f32.mrb[0].mxu0
  %v7852 = vadd.f32 %v7302, %v7851
  %v7853 = vpop.f32.mrb[0].mxu0
  %7854 = vmatprep.mubr.f32.mxu0 0.0
  %7855 = vmatmul.mubr.f32.gmra.mrb[0].mxu0 %v7481
  %v7856 = vpop.f32.mrb[0].mxu0
  %v7857 = vadd.f32 %v7302, %v7856
  %v7858 = vpop.f32.mrb[0].mxu0
  %7859 = vmatprep.mubr.f32.mxu0 0.0
  %7860 = vmatmul.mubr.f32.gmra.mrb[0].mxu0 %v7484
  %v7861 = vpop.f32.mrb[0].mxu0
  %v7862 = vadd.f32 %v7302, %v7861
  %v7863 = vpop.f32.mrb[0].mxu0
  %7864 = vmatprep.mubr.f32.mxu0 0.0
  %7865 = vmatmul.mubr.f32.gmra.mrb[0].mxu0 %v7487
  %v7866 = vpop.f32.mrb[0].mxu0
  %v7867 = vadd.f32 %v7302, %v7866
  %v7868 = vpop.f32.mrb[0].mxu0
  %7869 = vmatprep.mubr.f32.mxu0 0.0
  %7870 = vmatmul.mubr.f32.gmra.mrb[0].mxu0 %v7490
  %v7871 = vpop.f32.mrb[0].mxu0
  %v7872 = vadd.f32 %v7302, %v7871
  %v7873 = vpop.f32.mrb[0].mxu0
  %7874 = vmatprep.mubr.f32.mxu0 0.0
  %7875 = vmatmul.mubr.f32.gmra.mrb[0].mxu0 %v7493
  %v7876 = vpop.f32.mrb[0].mxu0
  %v7877 = vadd.f32 %v7302, %v7876
  %v7878 = vpop.f32.mrb[0].mxu0
  %7879 = vdwg.mxu0
  %v7880 = vadd.f32 %v26, %v7562
  %v7881 = vadd.f32 %v27, %v7567
  %v7882 = vadd.f32 %v28, %v7572
  %v7883 = vadd.f32 %v29, %v7577
  %v7884 = vadd.f32 %v30, %v7582
  %v7885 = vadd.f32 %v31, %v7587
  %v7886 = vadd.f32 %v32, %v7592
  %v7887 = vadd.f32 %v33, %v7597
  %v7888 = vadd.f32 %v34, %v7602
  %v7889 = vadd.f32 %v35, %v7607
  %v7890 = vadd.f32 %v36, %v7612
  %v7891 = vadd.f32 %v37, %v7617
  %v7892 = vadd.f32 %v38, %v7622
  %v7893 = vadd.f32 %v39, %v7627
  %v7894 = vadd.f32 %v40, %v7632
  %v7895 = vadd.f32 %v41, %v7637
  %v7896 = vadd.f32 %v42, %v7642
  %v7897 = vadd.f32 %v43, %v7647
  %v7898 = vadd.f32 %v44, %v7652
  %v7899 = vadd.f32 %v45, %v7657
  %v7900 = vadd.f32 %v46, %v7662
  %v7901 = vadd.f32 %v47, %v7667
  %v7902 = vadd.f32 %v48, %v7672
  %v7903 = vadd.f32 %v49, %v7677
  %v7904 = vadd.f32 %v50, %v7682
  %v7905 = vadd.f32 %v51, %v7687
  %v7906 = vadd.f32 %v52, %v7692
  %v7907 = vadd.f32 %v53, %v7697
  %v7908 = vadd.f32 %v54, %v7702
  %v7909 = vadd.f32 %v55, %v7707
  %v7910 = vadd.f32 %v56, %v7712
  %v7911 = vadd.f32 %v57, %v7717
  %v7912 = vadd.f32 %v58, %v7722
  %v7913 = vadd.f32 %v59, %v7727
  %v7914 = vadd.f32 %v60, %v7732
  %v7915 = vadd.f32 %v61, %v7737
  %v7916 = vadd.f32 %v62, %v7742
  %v7917 = vadd.f32 %v63, %v7747
  %v7918 = vadd.f32 %v64, %v7752
  %v7919 = vadd.f32 %v65, %v7757
  %v7920 = vadd.f32 %v66, %v7762
  %v7921 = vadd.f32 %v67, %v7767
  %v7922 = vadd.f32 %v68, %v7772
  %v7923 = vadd.f32 %v69, %v7777
  %v7924 = vadd.f32 %v70, %v7782
  %v7925 = vadd.f32 %v71, %v7787
  %v7926 = vadd.f32 %v72, %v7792
  %v7927 = vadd.f32 %v73, %v7797
  %v7928 = vadd.f32 %v74, %v7802
  %v7929 = vadd.f32 %v75, %v7807
  %v7930 = vadd.f32 %v76, %v7812
  %v7931 = vadd.f32 %v77, %v7817
  %v7932 = vadd.f32 %v78, %v7822
  %v7933 = vadd.f32 %v79, %v7827
  %v7934 = vadd.f32 %v80, %v7832
  %v7935 = vadd.f32 %v81, %v7837
  %v7936 = vadd.f32 %v82, %v7842
  %v7937 = vadd.f32 %v83, %v7847
  %v7938 = vadd.f32 %v84, %v7852
  %v7939 = vadd.f32 %v85, %v7857
  %v7940 = vadd.f32 %v86, %v7862
  %v7941 = vadd.f32 %v87, %v7867
  %v7942 = vadd.f32 %v88, %v7872
  %v7943 = vadd.f32 %v89, %v7877
  %v7944 = vsel %vm98, %v7880, 0.0
  %7945 = vadd.xlane.f32.xlu0 %v7944
  %v7946 = vpop.xlane.xlu0 %7945
  %v7947 = vsel %vm98, %v7881, 0.0
  %7948 = vadd.xlane.f32.xlu0 %v7947
  %v7949 = vpop.xlane.xlu0 %7948
  %v7950 = vsel %vm98, %v7882, 0.0
  %7951 = vadd.xlane.f32.xlu0 %v7950
  %v7952 = vpop.xlane.xlu0 %7951
  %v7953 = vsel %vm98, %v7883, 0.0
  %7954 = vadd.xlane.f32.xlu0 %v7953
  %v7955 = vpop.xlane.xlu0 %7954
  %v7956 = vsel %vm98, %v7884, 0.0
  %7957 = vadd.xlane.f32.xlu0 %v7956
  %v7958 = vpop.xlane.xlu0 %7957
  %v7959 = vsel %vm98, %v7885, 0.0
  %7960 = vadd.xlane.f32.xlu0 %v7959
  %v7961 = vpop.xlane.xlu0 %7960
  %v7962 = vsel %vm98, %v7886, 0.0
  %7963 = vadd.xlane.f32.xlu0 %v7962
  %v7964 = vpop.xlane.xlu0 %7963
  %v7965 = vsel %vm98, %v7887, 0.0
  %7966 = vadd.xlane.f32.xlu0 %v7965
  %v7967 = vpop.xlane.xlu0 %7966
  %v7968 = vsel %vm98, %v7888, 0.0
  %7969 = vadd.xlane.f32.xlu0 %v7968
  %v7970 = vpop.xlane.xlu0 %7969
  %v7971 = vsel %vm98, %v7889, 0.0
  %7972 = vadd.xlane.f32.xlu0 %v7971
  %v7973 = vpop.xlane.xlu0 %7972
  %v7974 = vsel %vm98, %v7890, 0.0
  %7975 = vadd.xlane.f32.xlu0 %v7974
  %v7976 = vpop.xlane.xlu0 %7975
  %v7977 = vsel %vm98, %v7891, 0.0
  %7978 = vadd.xlane.f32.xlu0 %v7977
  %v7979 = vpop.xlane.xlu0 %7978
  %v7980 = vsel %vm98, %v7892, 0.0
  %7981 = vadd.xlane.f32.xlu0 %v7980
  %v7982 = vpop.xlane.xlu0 %7981
  %v7983 = vsel %vm98, %v7893, 0.0
  %7984 = vadd.xlane.f32.xlu0 %v7983
  %v7985 = vpop.xlane.xlu0 %7984
  %v7986 = vsel %vm98, %v7894, 0.0
  %7987 = vadd.xlane.f32.xlu0 %v7986
  %v7988 = vpop.xlane.xlu0 %7987
  %v7989 = vsel %vm98, %v7895, 0.0
  %7990 = vadd.xlane.f32.xlu0 %v7989
  %v7991 = vpop.xlane.xlu0 %7990
  %v7992 = vsel %vm98, %v7896, 0.0
  %7993 = vadd.xlane.f32.xlu0 %v7992
  %v7994 = vpop.xlane.xlu0 %7993
  %v7995 = vsel %vm98, %v7897, 0.0
  %7996 = vadd.xlane.f32.xlu0 %v7995
  %v7997 = vpop.xlane.xlu0 %7996
  %v7998 = vsel %vm98, %v7898, 0.0
  %7999 = vadd.xlane.f32.xlu0 %v7998
  %v8000 = vpop.xlane.xlu0 %7999
  %v8001 = vsel %vm98, %v7899, 0.0
  %8002 = vadd.xlane.f32.xlu0 %v8001
  %v8003 = vpop.xlane.xlu0 %8002
  %v8004 = vsel %vm98, %v7900, 0.0
  %8005 = vadd.xlane.f32.xlu0 %v8004
  %v8006 = vpop.xlane.xlu0 %8005
  %v8007 = vsel %vm98, %v7901, 0.0
  %8008 = vadd.xlane.f32.xlu0 %v8007
  %v8009 = vpop.xlane.xlu0 %8008
  %v8010 = vsel %vm98, %v7902, 0.0
  %8011 = vadd.xlane.f32.xlu0 %v8010
  %v8012 = vpop.xlane.xlu0 %8011
  %v8013 = vsel %vm98, %v7903, 0.0
  %8014 = vadd.xlane.f32.xlu0 %v8013
  %v8015 = vpop.xlane.xlu0 %8014
  %v8016 = vsel %vm98, %v7904, 0.0
  %8017 = vadd.xlane.f32.xlu0 %v8016
  %v8018 = vpop.xlane.xlu0 %8017
  %v8019 = vsel %vm98, %v7905, 0.0
  %8020 = vadd.xlane.f32.xlu0 %v8019
  %v8021 = vpop.xlane.xlu0 %8020
  %v8022 = vsel %vm98, %v7906, 0.0
  %8023 = vadd.xlane.f32.xlu0 %v8022
  %v8024 = vpop.xlane.xlu0 %8023
  %v8025 = vsel %vm98, %v7907, 0.0
  %8026 = vadd.xlane.f32.xlu0 %v8025
  %v8027 = vpop.xlane.xlu0 %8026
  %v8028 = vsel %vm98, %v7908, 0.0
  %8029 = vadd.xlane.f32.xlu0 %v8028
  %v8030 = vpop.xlane.xlu0 %8029
  %v8031 = vsel %vm98, %v7909, 0.0
  %8032 = vadd.xlane.f32.xlu0 %v8031
  %v8033 = vpop.xlane.xlu0 %8032
  %v8034 = vsel %vm98, %v7910, 0.0
  %8035 = vadd.xlane.f32.xlu0 %v8034
  %v8036 = vpop.xlane.xlu0 %8035
  %v8037 = vsel %vm98, %v7911, 0.0
  %8038 = vadd.xlane.f32.xlu0 %v8037
  %v8039 = vpop.xlane.xlu0 %8038
  %v8040 = vsel %vm98, %v7912, 0.0
  %8041 = vadd.xlane.f32.xlu0 %v8040
  %v8042 = vpop.xlane.xlu0 %8041
  %v8043 = vsel %vm98, %v7913, 0.0
  %8044 = vadd.xlane.f32.xlu0 %v8043
  %v8045 = vpop.xlane.xlu0 %8044
  %v8046 = vsel %vm98, %v7914, 0.0
  %8047 = vadd.xlane.f32.xlu0 %v8046
  %v8048 = vpop.xlane.xlu0 %8047
  %v8049 = vsel %vm98, %v7915, 0.0
  %8050 = vadd.xlane.f32.xlu0 %v8049
  %v8051 = vpop.xlane.xlu0 %8050
  %v8052 = vsel %vm98, %v7916, 0.0
  %8053 = vadd.xlane.f32.xlu0 %v8052
  %v8054 = vpop.xlane.xlu0 %8053
  %v8055 = vsel %vm98, %v7917, 0.0
  %8056 = vadd.xlane.f32.xlu0 %v8055
  %v8057 = vpop.xlane.xlu0 %8056
  %v8058 = vsel %vm98, %v7918, 0.0
  %8059 = vadd.xlane.f32.xlu0 %v8058
  %v8060 = vpop.xlane.xlu0 %8059
  %v8061 = vsel %vm98, %v7919, 0.0
  %8062 = vadd.xlane.f32.xlu0 %v8061
  %v8063 = vpop.xlane.xlu0 %8062
  %v8064 = vsel %vm98, %v7920, 0.0
  %8065 = vadd.xlane.f32.xlu0 %v8064
  %v8066 = vpop.xlane.xlu0 %8065
  %v8067 = vsel %vm98, %v7921, 0.0
  %8068 = vadd.xlane.f32.xlu0 %v8067
  %v8069 = vpop.xlane.xlu0 %8068
  %v8070 = vsel %vm98, %v7922, 0.0
  %8071 = vadd.xlane.f32.xlu0 %v8070
  %v8072 = vpop.xlane.xlu0 %8071
  %v8073 = vsel %vm98, %v7923, 0.0
  %8074 = vadd.xlane.f32.xlu0 %v8073
  %v8075 = vpop.xlane.xlu0 %8074
  %v8076 = vsel %vm98, %v7924, 0.0
  %8077 = vadd.xlane.f32.xlu0 %v8076
  %v8078 = vpop.xlane.xlu0 %8077
  %v8079 = vsel %vm98, %v7925, 0.0
  %8080 = vadd.xlane.f32.xlu0 %v8079
  %v8081 = vpop.xlane.xlu0 %8080
  %v8082 = vsel %vm98, %v7926, 0.0
  %8083 = vadd.xlane.f32.xlu0 %v8082
  %v8084 = vpop.xlane.xlu0 %8083
  %v8085 = vsel %vm98, %v7927, 0.0
  %8086 = vadd.xlane.f32.xlu0 %v8085
  %v8087 = vpop.xlane.xlu0 %8086
  %v8088 = vsel %vm98, %v7928, 0.0
  %8089 = vadd.xlane.f32.xlu0 %v8088
  %v8090 = vpop.xlane.xlu0 %8089
  %v8091 = vsel %vm98, %v7929, 0.0
  %8092 = vadd.xlane.f32.xlu0 %v8091
  %v8093 = vpop.xlane.xlu0 %8092
  %v8094 = vsel %vm98, %v7930, 0.0
  %8095 = vadd.xlane.f32.xlu0 %v8094
  %v8096 = vpop.xlane.xlu0 %8095
  %v8097 = vsel %vm98, %v7931, 0.0
  %8098 = vadd.xlane.f32.xlu0 %v8097
  %v8099 = vpop.xlane.xlu0 %8098
  %v8100 = vsel %vm98, %v7932, 0.0
  %8101 = vadd.xlane.f32.xlu0 %v8100
  %v8102 = vpop.xlane.xlu0 %8101
  %v8103 = vsel %vm98, %v7933, 0.0
  %8104 = vadd.xlane.f32.xlu0 %v8103
  %v8105 = vpop.xlane.xlu0 %8104
  %v8106 = vsel %vm98, %v7934, 0.0
  %8107 = vadd.xlane.f32.xlu0 %v8106
  %v8108 = vpop.xlane.xlu0 %8107
  %v8109 = vsel %vm98, %v7935, 0.0
  %8110 = vadd.xlane.f32.xlu0 %v8109
  %v8111 = vpop.xlane.xlu0 %8110
  %v8112 = vsel %vm98, %v7936, 0.0
  %8113 = vadd.xlane.f32.xlu0 %v8112
  %v8114 = vpop.xlane.xlu0 %8113
  %v8115 = vsel %vm98, %v7937, 0.0
  %8116 = vadd.xlane.f32.xlu0 %v8115
  %v8117 = vpop.xlane.xlu0 %8116
  %v8118 = vsel %vm98, %v7938, 0.0
  %8119 = vadd.xlane.f32.xlu0 %v8118
  %v8120 = vpop.xlane.xlu0 %8119
  %v8121 = vsel %vm98, %v7939, 0.0
  %8122 = vadd.xlane.f32.xlu0 %v8121
  %v8123 = vpop.xlane.xlu0 %8122
  %v8124 = vsel %vm98, %v7940, 0.0
  %8125 = vadd.xlane.f32.xlu0 %v8124
  %v8126 = vpop.xlane.xlu0 %8125
  %v8127 = vsel %vm98, %v7941, 0.0
  %8128 = vadd.xlane.f32.xlu0 %v8127
  %v8129 = vpop.xlane.xlu0 %8128
  %v8130 = vsel %vm98, %v7942, 0.0
  %8131 = vadd.xlane.f32.xlu0 %v8130
  %v8132 = vpop.xlane.xlu0 %8131
  %v8133 = vsel %vm98, %v7943, 0.0
  %8134 = vadd.xlane.f32.xlu0 %v8133
  %v8135 = vpop.xlane.xlu0 %8134
  %v8136 = vmul.f32 %v7946, %v291
  %v8137 = vmul.f32 %v7949, %v291
  %v8138 = vmul.f32 %v7952, %v291
  %v8139 = vmul.f32 %v7955, %v291
  %v8140 = vmul.f32 %v7958, %v291
  %v8141 = vmul.f32 %v7961, %v291
  %v8142 = vmul.f32 %v7964, %v291
  %v8143 = vmul.f32 %v7967, %v291
  %v8144 = vmul.f32 %v7970, %v291
  %v8145 = vmul.f32 %v7973, %v291
  %v8146 = vmul.f32 %v7976, %v291
  %v8147 = vmul.f32 %v7979, %v291
  %v8148 = vmul.f32 %v7982, %v291
  %v8149 = vmul.f32 %v7985, %v291
  %v8150 = vmul.f32 %v7988, %v291
  %v8151 = vmul.f32 %v7991, %v291
  %v8152 = vmul.f32 %v7994, %v291
  %v8153 = vmul.f32 %v7997, %v291
  %v8154 = vmul.f32 %v8000, %v291
  %v8155 = vmul.f32 %v8003, %v291
  %v8156 = vmul.f32 %v8006, %v291
  %v8157 = vmul.f32 %v8009, %v291
  %v8158 = vmul.f32 %v8012, %v291
  %v8159 = vmul.f32 %v8015, %v291
  %v8160 = vmul.f32 %v8018, %v291
  %v8161 = vmul.f32 %v8021, %v291
  %v8162 = vmul.f32 %v8024, %v291
  %v8163 = vmul.f32 %v8027, %v291
  %v8164 = vmul.f32 %v8030, %v291
  %v8165 = vmul.f32 %v8033, %v291
  %v8166 = vmul.f32 %v8036, %v291
  %v8167 = vmul.f32 %v8039, %v291
  %v8168 = vmul.f32 %v8042, %v291
  %v8169 = vmul.f32 %v8045, %v291
  %v8170 = vmul.f32 %v8048, %v291
  %v8171 = vmul.f32 %v8051, %v291
  %v8172 = vmul.f32 %v8054, %v291
  %v8173 = vmul.f32 %v8057, %v291
  %v8174 = vmul.f32 %v8060, %v291
  %v8175 = vmul.f32 %v8063, %v291
  %v8176 = vmul.f32 %v8066, %v291
  %v8177 = vmul.f32 %v8069, %v291
  %v8178 = vmul.f32 %v8072, %v291
  %v8179 = vmul.f32 %v8075, %v291
  %v8180 = vmul.f32 %v8078, %v291
  %v8181 = vmul.f32 %v8081, %v291
  %v8182 = vmul.f32 %v8084, %v291
  %v8183 = vmul.f32 %v8087, %v291
  %v8184 = vmul.f32 %v8090, %v291
  %v8185 = vmul.f32 %v8093, %v291
  %v8186 = vmul.f32 %v8096, %v291
  %v8187 = vmul.f32 %v8099, %v291
  %v8188 = vmul.f32 %v8102, %v291
  %v8189 = vmul.f32 %v8105, %v291
  %v8190 = vmul.f32 %v8108, %v291
  %v8191 = vmul.f32 %v8111, %v291
  %v8192 = vmul.f32 %v8114, %v291
  %v8193 = vmul.f32 %v8117, %v291
  %v8194 = vmul.f32 %v8120, %v291
  %v8195 = vmul.f32 %v8123, %v291
  %v8196 = vmul.f32 %v8126, %v291
  %v8197 = vmul.f32 %v8129, %v291
  %v8198 = vmul.f32 %v8132, %v291
  %v8199 = vmul.f32 %v8135, %v291
  %v8200 = vsub.f32 %v7880, %v8136
  %v8201 = vsub.f32 %v7881, %v8137
  %v8202 = vsub.f32 %v7882, %v8138
  %v8203 = vsub.f32 %v7883, %v8139
  %v8204 = vsub.f32 %v7884, %v8140
  %v8205 = vsub.f32 %v7885, %v8141
  %v8206 = vsub.f32 %v7886, %v8142
  %v8207 = vsub.f32 %v7887, %v8143
  %v8208 = vsub.f32 %v7888, %v8144
  %v8209 = vsub.f32 %v7889, %v8145
  %v8210 = vsub.f32 %v7890, %v8146
  %v8211 = vsub.f32 %v7891, %v8147
  %v8212 = vsub.f32 %v7892, %v8148
  %v8213 = vsub.f32 %v7893, %v8149
  %v8214 = vsub.f32 %v7894, %v8150
  %v8215 = vsub.f32 %v7895, %v8151
  %v8216 = vsub.f32 %v7896, %v8152
  %v8217 = vsub.f32 %v7897, %v8153
  %v8218 = vsub.f32 %v7898, %v8154
  %v8219 = vsub.f32 %v7899, %v8155
  %v8220 = vsub.f32 %v7900, %v8156
  %v8221 = vsub.f32 %v7901, %v8157
  %v8222 = vsub.f32 %v7902, %v8158
  %v8223 = vsub.f32 %v7903, %v8159
  %v8224 = vsub.f32 %v7904, %v8160
  %v8225 = vsub.f32 %v7905, %v8161
  %v8226 = vsub.f32 %v7906, %v8162
  %v8227 = vsub.f32 %v7907, %v8163
  %v8228 = vsub.f32 %v7908, %v8164
  %v8229 = vsub.f32 %v7909, %v8165
  %v8230 = vsub.f32 %v7910, %v8166
  %v8231 = vsub.f32 %v7911, %v8167
  %v8232 = vsub.f32 %v7912, %v8168
  %v8233 = vsub.f32 %v7913, %v8169
  %v8234 = vsub.f32 %v7914, %v8170
  %v8235 = vsub.f32 %v7915, %v8171
  %v8236 = vsub.f32 %v7916, %v8172
  %v8237 = vsub.f32 %v7917, %v8173
  %v8238 = vsub.f32 %v7918, %v8174
  %v8239 = vsub.f32 %v7919, %v8175
  %v8240 = vsub.f32 %v7920, %v8176
  %v8241 = vsub.f32 %v7921, %v8177
  %v8242 = vsub.f32 %v7922, %v8178
  %v8243 = vsub.f32 %v7923, %v8179
  %v8244 = vsub.f32 %v7924, %v8180
  %v8245 = vsub.f32 %v7925, %v8181
  %v8246 = vsub.f32 %v7926, %v8182
  %v8247 = vsub.f32 %v7927, %v8183
  %v8248 = vsub.f32 %v7928, %v8184
  %v8249 = vsub.f32 %v7929, %v8185
  %v8250 = vsub.f32 %v7930, %v8186
  %v8251 = vsub.f32 %v7931, %v8187
  %v8252 = vsub.f32 %v7932, %v8188
  %v8253 = vsub.f32 %v7933, %v8189
  %v8254 = vsub.f32 %v7934, %v8190
  %v8255 = vsub.f32 %v7935, %v8191
  %v8256 = vsub.f32 %v7936, %v8192
  %v8257 = vsub.f32 %v7937, %v8193
  %v8258 = vsub.f32 %v7938, %v8194
  %v8259 = vsub.f32 %v7939, %v8195
  %v8260 = vsub.f32 %v7940, %v8196
  %v8261 = vsub.f32 %v7941, %v8197
  %v8262 = vsub.f32 %v7942, %v8198
  %v8263 = vsub.f32 %v7943, %v8199
  %v8264 = vmul.f32 %v8200, %v8200
  %v8265 = vmul.f32 %v8201, %v8201
  %v8266 = vmul.f32 %v8202, %v8202
  %v8267 = vmul.f32 %v8203, %v8203
  %v8268 = vmul.f32 %v8204, %v8204
  %v8269 = vmul.f32 %v8205, %v8205
  %v8270 = vmul.f32 %v8206, %v8206
  %v8271 = vmul.f32 %v8207, %v8207
  %v8272 = vmul.f32 %v8208, %v8208
  %v8273 = vmul.f32 %v8209, %v8209
  %v8274 = vmul.f32 %v8210, %v8210
  %v8275 = vmul.f32 %v8211, %v8211
  %v8276 = vmul.f32 %v8212, %v8212
  %v8277 = vmul.f32 %v8213, %v8213
  %v8278 = vmul.f32 %v8214, %v8214
  %v8279 = vmul.f32 %v8215, %v8215
  %v8280 = vmul.f32 %v8216, %v8216
  %v8281 = vmul.f32 %v8217, %v8217
  %v8282 = vmul.f32 %v8218, %v8218
  %v8283 = vmul.f32 %v8219, %v8219
  %v8284 = vmul.f32 %v8220, %v8220
  %v8285 = vmul.f32 %v8221, %v8221
  %v8286 = vmul.f32 %v8222, %v8222
  %v8287 = vmul.f32 %v8223, %v8223
  %v8288 = vmul.f32 %v8224, %v8224
  %v8289 = vmul.f32 %v8225, %v8225
  %v8290 = vmul.f32 %v8226, %v8226
  %v8291 = vmul.f32 %v8227, %v8227
  %v8292 = vmul.f32 %v8228, %v8228
  %v8293 = vmul.f32 %v8229, %v8229
  %v8294 = vmul.f32 %v8230, %v8230
  %v8295 = vmul.f32 %v8231, %v8231
  %v8296 = vmul.f32 %v8232, %v8232
  %v8297 = vmul.f32 %v8233, %v8233
  %v8298 = vmul.f32 %v8234, %v8234
  %v8299 = vmul.f32 %v8235, %v8235
  %v8300 = vmul.f32 %v8236, %v8236
  %v8301 = vmul.f32 %v8237, %v8237
  %v8302 = vmul.f32 %v8238, %v8238
  %v8303 = vmul.f32 %v8239, %v8239
  %v8304 = vmul.f32 %v8240, %v8240
  %v8305 = vmul.f32 %v8241, %v8241
  %v8306 = vmul.f32 %v8242, %v8242
  %v8307 = vmul.f32 %v8243, %v8243
  %v8308 = vmul.f32 %v8244, %v8244
  %v8309 = vmul.f32 %v8245, %v8245
  %v8310 = vmul.f32 %v8246, %v8246
  %v8311 = vmul.f32 %v8247, %v8247
  %v8312 = vmul.f32 %v8248, %v8248
  %v8313 = vmul.f32 %v8249, %v8249
  %v8314 = vmul.f32 %v8250, %v8250
  %v8315 = vmul.f32 %v8251, %v8251
  %v8316 = vmul.f32 %v8252, %v8252
  %v8317 = vmul.f32 %v8253, %v8253
  %v8318 = vmul.f32 %v8254, %v8254
  %v8319 = vmul.f32 %v8255, %v8255
  %v8320 = vmul.f32 %v8256, %v8256
  %v8321 = vmul.f32 %v8257, %v8257
  %v8322 = vmul.f32 %v8258, %v8258
  %v8323 = vmul.f32 %v8259, %v8259
  %v8324 = vmul.f32 %v8260, %v8260
  %v8325 = vmul.f32 %v8261, %v8261
  %v8326 = vmul.f32 %v8262, %v8262
  %v8327 = vmul.f32 %v8263, %v8263
  %v8328 = vsel %vm98, %v8264, 0.0
  %8329 = vadd.xlane.f32.xlu0 %v8328
  %v8330 = vpop.xlane.xlu0 %8329
  %v8331 = vsel %vm98, %v8265, 0.0
  %8332 = vadd.xlane.f32.xlu0 %v8331
  %v8333 = vpop.xlane.xlu0 %8332
  %v8334 = vsel %vm98, %v8266, 0.0
  %8335 = vadd.xlane.f32.xlu0 %v8334
  %v8336 = vpop.xlane.xlu0 %8335
  %v8337 = vsel %vm98, %v8267, 0.0
  %8338 = vadd.xlane.f32.xlu0 %v8337
  %v8339 = vpop.xlane.xlu0 %8338
  %v8340 = vsel %vm98, %v8268, 0.0
  %8341 = vadd.xlane.f32.xlu0 %v8340
  %v8342 = vpop.xlane.xlu0 %8341
  %v8343 = vsel %vm98, %v8269, 0.0
  %8344 = vadd.xlane.f32.xlu0 %v8343
  %v8345 = vpop.xlane.xlu0 %8344
  %v8346 = vsel %vm98, %v8270, 0.0
  %8347 = vadd.xlane.f32.xlu0 %v8346
  %v8348 = vpop.xlane.xlu0 %8347
  %v8349 = vsel %vm98, %v8271, 0.0
  %8350 = vadd.xlane.f32.xlu0 %v8349
  %v8351 = vpop.xlane.xlu0 %8350
  %v8352 = vsel %vm98, %v8272, 0.0
  %8353 = vadd.xlane.f32.xlu0 %v8352
  %v8354 = vpop.xlane.xlu0 %8353
  %v8355 = vsel %vm98, %v8273, 0.0
  %8356 = vadd.xlane.f32.xlu0 %v8355
  %v8357 = vpop.xlane.xlu0 %8356
  %v8358 = vsel %vm98, %v8274, 0.0
  %8359 = vadd.xlane.f32.xlu0 %v8358
  %v8360 = vpop.xlane.xlu0 %8359
  %v8361 = vsel %vm98, %v8275, 0.0
  %8362 = vadd.xlane.f32.xlu0 %v8361
  %v8363 = vpop.xlane.xlu0 %8362
  %v8364 = vsel %vm98, %v8276, 0.0
  %8365 = vadd.xlane.f32.xlu0 %v8364
  %v8366 = vpop.xlane.xlu0 %8365
  %v8367 = vsel %vm98, %v8277, 0.0
  %8368 = vadd.xlane.f32.xlu0 %v8367
  %v8369 = vpop.xlane.xlu0 %8368
  %v8370 = vsel %vm98, %v8278, 0.0
  %8371 = vadd.xlane.f32.xlu0 %v8370
  %v8372 = vpop.xlane.xlu0 %8371
  %v8373 = vsel %vm98, %v8279, 0.0
  %8374 = vadd.xlane.f32.xlu0 %v8373
  %v8375 = vpop.xlane.xlu0 %8374
  %v8376 = vsel %vm98, %v8280, 0.0
  %8377 = vadd.xlane.f32.xlu0 %v8376
  %v8378 = vpop.xlane.xlu0 %8377
  %v8379 = vsel %vm98, %v8281, 0.0
  %8380 = vadd.xlane.f32.xlu0 %v8379
  %v8381 = vpop.xlane.xlu0 %8380
  %v8382 = vsel %vm98, %v8282, 0.0
  %8383 = vadd.xlane.f32.xlu0 %v8382
  %v8384 = vpop.xlane.xlu0 %8383
  %v8385 = vsel %vm98, %v8283, 0.0
  %8386 = vadd.xlane.f32.xlu0 %v8385
  %v8387 = vpop.xlane.xlu0 %8386
  %v8388 = vsel %vm98, %v8284, 0.0
  %8389 = vadd.xlane.f32.xlu0 %v8388
  %v8390 = vpop.xlane.xlu0 %8389
  %v8391 = vsel %vm98, %v8285, 0.0
  %8392 = vadd.xlane.f32.xlu0 %v8391
  %v8393 = vpop.xlane.xlu0 %8392
  %v8394 = vsel %vm98, %v8286, 0.0
  %8395 = vadd.xlane.f32.xlu0 %v8394
  %v8396 = vpop.xlane.xlu0 %8395
  %v8397 = vsel %vm98, %v8287, 0.0
  %8398 = vadd.xlane.f32.xlu0 %v8397
  %v8399 = vpop.xlane.xlu0 %8398
  %v8400 = vsel %vm98, %v8288, 0.0
  %8401 = vadd.xlane.f32.xlu0 %v8400
  %v8402 = vpop.xlane.xlu0 %8401
  %v8403 = vsel %vm98, %v8289, 0.0
  %8404 = vadd.xlane.f32.xlu0 %v8403
  %v8405 = vpop.xlane.xlu0 %8404
  %v8406 = vsel %vm98, %v8290, 0.0
  %8407 = vadd.xlane.f32.xlu0 %v8406
  %v8408 = vpop.xlane.xlu0 %8407
  %v8409 = vsel %vm98, %v8291, 0.0
  %8410 = vadd.xlane.f32.xlu0 %v8409
  %v8411 = vpop.xlane.xlu0 %8410
  %v8412 = vsel %vm98, %v8292, 0.0
  %8413 = vadd.xlane.f32.xlu0 %v8412
  %v8414 = vpop.xlane.xlu0 %8413
  %v8415 = vsel %vm98, %v8293, 0.0
  %8416 = vadd.xlane.f32.xlu0 %v8415
  %v8417 = vpop.xlane.xlu0 %8416
  %v8418 = vsel %vm98, %v8294, 0.0
  %8419 = vadd.xlane.f32.xlu0 %v8418
  %v8420 = vpop.xlane.xlu0 %8419
  %v8421 = vsel %vm98, %v8295, 0.0
  %8422 = vadd.xlane.f32.xlu0 %v8421
  %v8423 = vpop.xlane.xlu0 %8422
  %v8424 = vsel %vm98, %v8296, 0.0
  %8425 = vadd.xlane.f32.xlu0 %v8424
  %v8426 = vpop.xlane.xlu0 %8425
  %v8427 = vsel %vm98, %v8297, 0.0
  %8428 = vadd.xlane.f32.xlu0 %v8427
  %v8429 = vpop.xlane.xlu0 %8428
  %v8430 = vsel %vm98, %v8298, 0.0
  %8431 = vadd.xlane.f32.xlu0 %v8430
  %v8432 = vpop.xlane.xlu0 %8431
  %v8433 = vsel %vm98, %v8299, 0.0
  %8434 = vadd.xlane.f32.xlu0 %v8433
  %v8435 = vpop.xlane.xlu0 %8434
  %v8436 = vsel %vm98, %v8300, 0.0
  %8437 = vadd.xlane.f32.xlu0 %v8436
  %v8438 = vpop.xlane.xlu0 %8437
  %v8439 = vsel %vm98, %v8301, 0.0
  %8440 = vadd.xlane.f32.xlu0 %v8439
  %v8441 = vpop.xlane.xlu0 %8440
  %v8442 = vsel %vm98, %v8302, 0.0
  %8443 = vadd.xlane.f32.xlu0 %v8442
  %v8444 = vpop.xlane.xlu0 %8443
  %v8445 = vsel %vm98, %v8303, 0.0
  %8446 = vadd.xlane.f32.xlu0 %v8445
  %v8447 = vpop.xlane.xlu0 %8446
  %v8448 = vsel %vm98, %v8304, 0.0
  %8449 = vadd.xlane.f32.xlu0 %v8448
  %v8450 = vpop.xlane.xlu0 %8449
  %v8451 = vsel %vm98, %v8305, 0.0
  %8452 = vadd.xlane.f32.xlu0 %v8451
  %v8453 = vpop.xlane.xlu0 %8452
  %v8454 = vsel %vm98, %v8306, 0.0
  %8455 = vadd.xlane.f32.xlu0 %v8454
  %v8456 = vpop.xlane.xlu0 %8455
  %v8457 = vsel %vm98, %v8307, 0.0
  %8458 = vadd.xlane.f32.xlu0 %v8457
  %v8459 = vpop.xlane.xlu0 %8458
  %v8460 = vsel %vm98, %v8308, 0.0
  %8461 = vadd.xlane.f32.xlu0 %v8460
  %v8462 = vpop.xlane.xlu0 %8461
  %v8463 = vsel %vm98, %v8309, 0.0
  %8464 = vadd.xlane.f32.xlu0 %v8463
  %v8465 = vpop.xlane.xlu0 %8464
  %v8466 = vsel %vm98, %v8310, 0.0
  %8467 = vadd.xlane.f32.xlu0 %v8466
  %v8468 = vpop.xlane.xlu0 %8467
  %v8469 = vsel %vm98, %v8311, 0.0
  %8470 = vadd.xlane.f32.xlu0 %v8469
  %v8471 = vpop.xlane.xlu0 %8470
  %v8472 = vsel %vm98, %v8312, 0.0
  %8473 = vadd.xlane.f32.xlu0 %v8472
  %v8474 = vpop.xlane.xlu0 %8473
  %v8475 = vsel %vm98, %v8313, 0.0
  %8476 = vadd.xlane.f32.xlu0 %v8475
  %v8477 = vpop.xlane.xlu0 %8476
  %v8478 = vsel %vm98, %v8314, 0.0
  %8479 = vadd.xlane.f32.xlu0 %v8478
  %v8480 = vpop.xlane.xlu0 %8479
  %v8481 = vsel %vm98, %v8315, 0.0
  %8482 = vadd.xlane.f32.xlu0 %v8481
  %v8483 = vpop.xlane.xlu0 %8482
  %v8484 = vsel %vm98, %v8316, 0.0
  %8485 = vadd.xlane.f32.xlu0 %v8484
  %v8486 = vpop.xlane.xlu0 %8485
  %v8487 = vsel %vm98, %v8317, 0.0
  %8488 = vadd.xlane.f32.xlu0 %v8487
  %v8489 = vpop.xlane.xlu0 %8488
  %v8490 = vsel %vm98, %v8318, 0.0
  %8491 = vadd.xlane.f32.xlu0 %v8490
  %v8492 = vpop.xlane.xlu0 %8491
  %v8493 = vsel %vm98, %v8319, 0.0
  %8494 = vadd.xlane.f32.xlu0 %v8493
  %v8495 = vpop.xlane.xlu0 %8494
  %v8496 = vsel %vm98, %v8320, 0.0
  %8497 = vadd.xlane.f32.xlu0 %v8496
  %v8498 = vpop.xlane.xlu0 %8497
  %v8499 = vsel %vm98, %v8321, 0.0
  %8500 = vadd.xlane.f32.xlu0 %v8499
  %v8501 = vpop.xlane.xlu0 %8500
  %v8502 = vsel %vm98, %v8322, 0.0
  %8503 = vadd.xlane.f32.xlu0 %v8502
  %v8504 = vpop.xlane.xlu0 %8503
  %v8505 = vsel %vm98, %v8323, 0.0
  %8506 = vadd.xlane.f32.xlu0 %v8505
  %v8507 = vpop.xlane.xlu0 %8506
  %v8508 = vsel %vm98, %v8324, 0.0
  %8509 = vadd.xlane.f32.xlu0 %v8508
  %v8510 = vpop.xlane.xlu0 %8509
  %v8511 = vsel %vm98, %v8325, 0.0
  %8512 = vadd.xlane.f32.xlu0 %v8511
  %v8513 = vpop.xlane.xlu0 %8512
  %v8514 = vsel %vm98, %v8326, 0.0
  %8515 = vadd.xlane.f32.xlu0 %v8514
  %v8516 = vpop.xlane.xlu0 %8515
  %v8517 = vsel %vm98, %v8327, 0.0
  %8518 = vadd.xlane.f32.xlu0 %v8517
  %v8519 = vpop.xlane.xlu0 %8518
  %v8520 = vmul.f32 %v8330, %v291
  %v8521 = vmul.f32 %v8333, %v291
  %v8522 = vmul.f32 %v8336, %v291
  %v8523 = vmul.f32 %v8339, %v291
  %v8524 = vmul.f32 %v8342, %v291
  %v8525 = vmul.f32 %v8345, %v291
  %v8526 = vmul.f32 %v8348, %v291
  %v8527 = vmul.f32 %v8351, %v291
  %v8528 = vmul.f32 %v8354, %v291
  %v8529 = vmul.f32 %v8357, %v291
  %v8530 = vmul.f32 %v8360, %v291
  %v8531 = vmul.f32 %v8363, %v291
  %v8532 = vmul.f32 %v8366, %v291
  %v8533 = vmul.f32 %v8369, %v291
  %v8534 = vmul.f32 %v8372, %v291
  %v8535 = vmul.f32 %v8375, %v291
  %v8536 = vmul.f32 %v8378, %v291
  %v8537 = vmul.f32 %v8381, %v291
  %v8538 = vmul.f32 %v8384, %v291
  %v8539 = vmul.f32 %v8387, %v291
  %v8540 = vmul.f32 %v8390, %v291
  %v8541 = vmul.f32 %v8393, %v291
  %v8542 = vmul.f32 %v8396, %v291
  %v8543 = vmul.f32 %v8399, %v291
  %v8544 = vmul.f32 %v8402, %v291
  %v8545 = vmul.f32 %v8405, %v291
  %v8546 = vmul.f32 %v8408, %v291
  %v8547 = vmul.f32 %v8411, %v291
  %v8548 = vmul.f32 %v8414, %v291
  %v8549 = vmul.f32 %v8417, %v291
  %v8550 = vmul.f32 %v8420, %v291
  %v8551 = vmul.f32 %v8423, %v291
  %v8552 = vmul.f32 %v8426, %v291
  %v8553 = vmul.f32 %v8429, %v291
  %v8554 = vmul.f32 %v8432, %v291
  %v8555 = vmul.f32 %v8435, %v291
  %v8556 = vmul.f32 %v8438, %v291
  %v8557 = vmul.f32 %v8441, %v291
  %v8558 = vmul.f32 %v8444, %v291
  %v8559 = vmul.f32 %v8447, %v291
  %v8560 = vmul.f32 %v8450, %v291
  %v8561 = vmul.f32 %v8453, %v291
  %v8562 = vmul.f32 %v8456, %v291
  %v8563 = vmul.f32 %v8459, %v291
  %v8564 = vmul.f32 %v8462, %v291
  %v8565 = vmul.f32 %v8465, %v291
  %v8566 = vmul.f32 %v8468, %v291
  %v8567 = vmul.f32 %v8471, %v291
  %v8568 = vmul.f32 %v8474, %v291
  %v8569 = vmul.f32 %v8477, %v291
  %v8570 = vmul.f32 %v8480, %v291
  %v8571 = vmul.f32 %v8483, %v291
  %v8572 = vmul.f32 %v8486, %v291
  %v8573 = vmul.f32 %v8489, %v291
  %v8574 = vmul.f32 %v8492, %v291
  %v8575 = vmul.f32 %v8495, %v291
  %v8576 = vmul.f32 %v8498, %v291
  %v8577 = vmul.f32 %v8501, %v291
  %v8578 = vmul.f32 %v8504, %v291
  %v8579 = vmul.f32 %v8507, %v291
  %v8580 = vmul.f32 %v8510, %v291
  %v8581 = vmul.f32 %v8513, %v291
  %v8582 = vmul.f32 %v8516, %v291
  %v8583 = vmul.f32 %v8519, %v291
  %v8584 = vadd.f32 %v8520, 1e-05
  %v8585 = vadd.f32 %v8521, 1e-05
  %v8586 = vadd.f32 %v8522, 1e-05
  %v8587 = vadd.f32 %v8523, 1e-05
  %v8588 = vadd.f32 %v8524, 1e-05
  %v8589 = vadd.f32 %v8525, 1e-05
  %v8590 = vadd.f32 %v8526, 1e-05
  %v8591 = vadd.f32 %v8527, 1e-05
  %v8592 = vadd.f32 %v8528, 1e-05
  %v8593 = vadd.f32 %v8529, 1e-05
  %v8594 = vadd.f32 %v8530, 1e-05
  %v8595 = vadd.f32 %v8531, 1e-05
  %v8596 = vadd.f32 %v8532, 1e-05
  %v8597 = vadd.f32 %v8533, 1e-05
  %v8598 = vadd.f32 %v8534, 1e-05
  %v8599 = vadd.f32 %v8535, 1e-05
  %v8600 = vadd.f32 %v8536, 1e-05
  %v8601 = vadd.f32 %v8537, 1e-05
  %v8602 = vadd.f32 %v8538, 1e-05
  %v8603 = vadd.f32 %v8539, 1e-05
  %v8604 = vadd.f32 %v8540, 1e-05
  %v8605 = vadd.f32 %v8541, 1e-05
  %v8606 = vadd.f32 %v8542, 1e-05
  %v8607 = vadd.f32 %v8543, 1e-05
  %v8608 = vadd.f32 %v8544, 1e-05
  %v8609 = vadd.f32 %v8545, 1e-05
  %v8610 = vadd.f32 %v8546, 1e-05
  %v8611 = vadd.f32 %v8547, 1e-05
  %v8612 = vadd.f32 %v8548, 1e-05
  %v8613 = vadd.f32 %v8549, 1e-05
  %v8614 = vadd.f32 %v8550, 1e-05
  %v8615 = vadd.f32 %v8551, 1e-05
  %v8616 = vadd.f32 %v8552, 1e-05
  %v8617 = vadd.f32 %v8553, 1e-05
  %v8618 = vadd.f32 %v8554, 1e-05
  %v8619 = vadd.f32 %v8555, 1e-05
  %v8620 = vadd.f32 %v8556, 1e-05
  %v8621 = vadd.f32 %v8557, 1e-05
  %v8622 = vadd.f32 %v8558, 1e-05
  %v8623 = vadd.f32 %v8559, 1e-05
  %v8624 = vadd.f32 %v8560, 1e-05
  %v8625 = vadd.f32 %v8561, 1e-05
  %v8626 = vadd.f32 %v8562, 1e-05
  %v8627 = vadd.f32 %v8563, 1e-05
  %v8628 = vadd.f32 %v8564, 1e-05
  %v8629 = vadd.f32 %v8565, 1e-05
  %v8630 = vadd.f32 %v8566, 1e-05
  %v8631 = vadd.f32 %v8567, 1e-05
  %v8632 = vadd.f32 %v8568, 1e-05
  %v8633 = vadd.f32 %v8569, 1e-05
  %v8634 = vadd.f32 %v8570, 1e-05
  %v8635 = vadd.f32 %v8571, 1e-05
  %v8636 = vadd.f32 %v8572, 1e-05
  %v8637 = vadd.f32 %v8573, 1e-05
  %v8638 = vadd.f32 %v8574, 1e-05
  %v8639 = vadd.f32 %v8575, 1e-05
  %v8640 = vadd.f32 %v8576, 1e-05
  %v8641 = vadd.f32 %v8577, 1e-05
  %v8642 = vadd.f32 %v8578, 1e-05
  %v8643 = vadd.f32 %v8579, 1e-05
  %v8644 = vadd.f32 %v8580, 1e-05
  %v8645 = vadd.f32 %v8581, 1e-05
  %v8646 = vadd.f32 %v8582, 1e-05
  %v8647 = vadd.f32 %v8583, 1e-05
  %v8648 = vrsqrt.pop %v8584
  %v8649 = vrsqrt.pop %v8585
  %v8650 = vrsqrt.pop %v8586
  %v8651 = vrsqrt.pop %v8587
  %v8652 = vrsqrt.pop %v8588
  %v8653 = vrsqrt.pop %v8589
  %v8654 = vrsqrt.pop %v8590
  %v8655 = vrsqrt.pop %v8591
  %v8656 = vrsqrt.pop %v8592
  %v8657 = vrsqrt.pop %v8593
  %v8658 = vrsqrt.pop %v8594
  %v8659 = vrsqrt.pop %v8595
  %v8660 = vrsqrt.pop %v8596
  %v8661 = vrsqrt.pop %v8597
  %v8662 = vrsqrt.pop %v8598
  %v8663 = vrsqrt.pop %v8599
  %v8664 = vrsqrt.pop %v8600
  %v8665 = vrsqrt.pop %v8601
  %v8666 = vrsqrt.pop %v8602
  %v8667 = vrsqrt.pop %v8603
  %v8668 = vrsqrt.pop %v8604
  %v8669 = vrsqrt.pop %v8605
  %v8670 = vrsqrt.pop %v8606
  %v8671 = vrsqrt.pop %v8607
  %v8672 = vrsqrt.pop %v8608
  %v8673 = vrsqrt.pop %v8609
  %v8674 = vrsqrt.pop %v8610
  %v8675 = vrsqrt.pop %v8611
  %v8676 = vrsqrt.pop %v8612
  %v8677 = vrsqrt.pop %v8613
  %v8678 = vrsqrt.pop %v8614
  %v8679 = vrsqrt.pop %v8615
  %v8680 = vrsqrt.pop %v8616
  %v8681 = vrsqrt.pop %v8617
  %v8682 = vrsqrt.pop %v8618
  %v8683 = vrsqrt.pop %v8619
  %v8684 = vrsqrt.pop %v8620
  %v8685 = vrsqrt.pop %v8621
  %v8686 = vrsqrt.pop %v8622
  %v8687 = vrsqrt.pop %v8623
  %v8688 = vrsqrt.pop %v8624
  %v8689 = vrsqrt.pop %v8625
  %v8690 = vrsqrt.pop %v8626
  %v8691 = vrsqrt.pop %v8627
  %v8692 = vrsqrt.pop %v8628
  %v8693 = vrsqrt.pop %v8629
  %v8694 = vrsqrt.pop %v8630
  %v8695 = vrsqrt.pop %v8631
  %v8696 = vrsqrt.pop %v8632
  %v8697 = vrsqrt.pop %v8633
  %v8698 = vrsqrt.pop %v8634
  %v8699 = vrsqrt.pop %v8635
  %v8700 = vrsqrt.pop %v8636
  %v8701 = vrsqrt.pop %v8637
  %v8702 = vrsqrt.pop %v8638
  %v8703 = vrsqrt.pop %v8639
  %v8704 = vrsqrt.pop %v8640
  %v8705 = vrsqrt.pop %v8641
  %v8706 = vrsqrt.pop %v8642
  %v8707 = vrsqrt.pop %v8643
  %v8708 = vrsqrt.pop %v8644
  %v8709 = vrsqrt.pop %v8645
  %v8710 = vrsqrt.pop %v8646
  %v8711 = vrsqrt.pop %v8647
  %v8712 = vmul.f32 %v8200, %v8648
  %v8713 = vmul.f32 %v8201, %v8649
  %v8714 = vmul.f32 %v8202, %v8650
  %v8715 = vmul.f32 %v8203, %v8651
  %v8716 = vmul.f32 %v8204, %v8652
  %v8717 = vmul.f32 %v8205, %v8653
  %v8718 = vmul.f32 %v8206, %v8654
  %v8719 = vmul.f32 %v8207, %v8655
  %v8720 = vmul.f32 %v8208, %v8656
  %v8721 = vmul.f32 %v8209, %v8657
  %v8722 = vmul.f32 %v8210, %v8658
  %v8723 = vmul.f32 %v8211, %v8659
  %v8724 = vmul.f32 %v8212, %v8660
  %v8725 = vmul.f32 %v8213, %v8661
  %v8726 = vmul.f32 %v8214, %v8662
  %v8727 = vmul.f32 %v8215, %v8663
  %v8728 = vmul.f32 %v8216, %v8664
  %v8729 = vmul.f32 %v8217, %v8665
  %v8730 = vmul.f32 %v8218, %v8666
  %v8731 = vmul.f32 %v8219, %v8667
  %v8732 = vmul.f32 %v8220, %v8668
  %v8733 = vmul.f32 %v8221, %v8669
  %v8734 = vmul.f32 %v8222, %v8670
  %v8735 = vmul.f32 %v8223, %v8671
  %v8736 = vmul.f32 %v8224, %v8672
  %v8737 = vmul.f32 %v8225, %v8673
  %v8738 = vmul.f32 %v8226, %v8674
  %v8739 = vmul.f32 %v8227, %v8675
  %v8740 = vmul.f32 %v8228, %v8676
  %v8741 = vmul.f32 %v8229, %v8677
  %v8742 = vmul.f32 %v8230, %v8678
  %v8743 = vmul.f32 %v8231, %v8679
  %v8744 = vmul.f32 %v8232, %v8680
  %v8745 = vmul.f32 %v8233, %v8681
  %v8746 = vmul.f32 %v8234, %v8682
  %v8747 = vmul.f32 %v8235, %v8683
  %v8748 = vmul.f32 %v8236, %v8684
  %v8749 = vmul.f32 %v8237, %v8685
  %v8750 = vmul.f32 %v8238, %v8686
  %v8751 = vmul.f32 %v8239, %v8687
  %v8752 = vmul.f32 %v8240, %v8688
  %v8753 = vmul.f32 %v8241, %v8689
  %v8754 = vmul.f32 %v8242, %v8690
  %v8755 = vmul.f32 %v8243, %v8691
  %v8756 = vmul.f32 %v8244, %v8692
  %v8757 = vmul.f32 %v8245, %v8693
  %v8758 = vmul.f32 %v8246, %v8694
  %v8759 = vmul.f32 %v8247, %v8695
  %v8760 = vmul.f32 %v8248, %v8696
  %v8761 = vmul.f32 %v8249, %v8697
  %v8762 = vmul.f32 %v8250, %v8698
  %v8763 = vmul.f32 %v8251, %v8699
  %v8764 = vmul.f32 %v8252, %v8700
  %v8765 = vmul.f32 %v8253, %v8701
  %v8766 = vmul.f32 %v8254, %v8702
  %v8767 = vmul.f32 %v8255, %v8703
  %v8768 = vmul.f32 %v8256, %v8704
  %v8769 = vmul.f32 %v8257, %v8705
  %v8770 = vmul.f32 %v8258, %v8706
  %v8771 = vmul.f32 %v8259, %v8707
  %v8772 = vmul.f32 %v8260, %v8708
  %v8773 = vmul.f32 %v8261, %v8709
  %v8774 = vmul.f32 %v8262, %v8710
  %v8775 = vmul.f32 %v8263, %v8711
  %v8776 = vlaneseq
  %v8777 = vshrl.u32 %v8776, 7
  %v8778 = vsub.s32 0, %v8777
  %v8779 = vrot.slane %v92, %v8778
  %v8780 = vmul.f32 %v8712, %v8779
  %v8781 = vmul.f32 %v8713, %v8779
  %v8782 = vmul.f32 %v8714, %v8779
  %v8783 = vmul.f32 %v8715, %v8779
  %v8784 = vmul.f32 %v8716, %v8779
  %v8785 = vmul.f32 %v8717, %v8779
  %v8786 = vmul.f32 %v8718, %v8779
  %v8787 = vmul.f32 %v8719, %v8779
  %v8788 = vmul.f32 %v8720, %v8779
  %v8789 = vmul.f32 %v8721, %v8779
  %v8790 = vmul.f32 %v8722, %v8779
  %v8791 = vmul.f32 %v8723, %v8779
  %v8792 = vmul.f32 %v8724, %v8779
  %v8793 = vmul.f32 %v8725, %v8779
  %v8794 = vmul.f32 %v8726, %v8779
  %v8795 = vmul.f32 %v8727, %v8779
  %v8796 = vmul.f32 %v8728, %v8779
  %v8797 = vmul.f32 %v8729, %v8779
  %v8798 = vmul.f32 %v8730, %v8779
  %v8799 = vmul.f32 %v8731, %v8779
  %v8800 = vmul.f32 %v8732, %v8779
  %v8801 = vmul.f32 %v8733, %v8779
  %v8802 = vmul.f32 %v8734, %v8779
  %v8803 = vmul.f32 %v8735, %v8779
  %v8804 = vmul.f32 %v8736, %v8779
  %v8805 = vmul.f32 %v8737, %v8779
  %v8806 = vmul.f32 %v8738, %v8779
  %v8807 = vmul.f32 %v8739, %v8779
  %v8808 = vmul.f32 %v8740, %v8779
  %v8809 = vmul.f32 %v8741, %v8779
  %v8810 = vmul.f32 %v8742, %v8779
  %v8811 = vmul.f32 %v8743, %v8779
  %v8812 = vmul.f32 %v8744, %v8779
  %v8813 = vmul.f32 %v8745, %v8779
  %v8814 = vmul.f32 %v8746, %v8779
  %v8815 = vmul.f32 %v8747, %v8779
  %v8816 = vmul.f32 %v8748, %v8779
  %v8817 = vmul.f32 %v8749, %v8779
  %v8818 = vmul.f32 %v8750, %v8779
  %v8819 = vmul.f32 %v8751, %v8779
  %v8820 = vmul.f32 %v8752, %v8779
  %v8821 = vmul.f32 %v8753, %v8779
  %v8822 = vmul.f32 %v8754, %v8779
  %v8823 = vmul.f32 %v8755, %v8779
  %v8824 = vmul.f32 %v8756, %v8779
  %v8825 = vmul.f32 %v8757, %v8779
  %v8826 = vmul.f32 %v8758, %v8779
  %v8827 = vmul.f32 %v8759, %v8779
  %v8828 = vmul.f32 %v8760, %v8779
  %v8829 = vmul.f32 %v8761, %v8779
  %v8830 = vmul.f32 %v8762, %v8779
  %v8831 = vmul.f32 %v8763, %v8779
  %v8832 = vmul.f32 %v8764, %v8779
  %v8833 = vmul.f32 %v8765, %v8779
  %v8834 = vmul.f32 %v8766, %v8779
  %v8835 = vmul.f32 %v8767, %v8779
  %v8836 = vmul.f32 %v8768, %v8779
  %v8837 = vmul.f32 %v8769, %v8779
  %v8838 = vmul.f32 %v8770, %v8779
  %v8839 = vmul.f32 %v8771, %v8779
  %v8840 = vmul.f32 %v8772, %v8779
  %v8841 = vmul.f32 %v8773, %v8779
  %v8842 = vmul.f32 %v8774, %v8779
  %v8843 = vmul.f32 %v8775, %v8779
  %v8844 = vlaneseq
  %v8845 = vshrl.u32 %v8844, 7
  %v8846 = vsub.s32 0, %v8845
  %v8847 = vrot.slane %v93, %v8846
  %v8848 = vadd.f32 %v8780, %v8847
  %v8849 = vadd.f32 %v8781, %v8847
  %v8850 = vadd.f32 %v8782, %v8847
  %v8851 = vadd.f32 %v8783, %v8847
  %v8852 = vadd.f32 %v8784, %v8847
  %v8853 = vadd.f32 %v8785, %v8847
  %v8854 = vadd.f32 %v8786, %v8847
  %v8855 = vadd.f32 %v8787, %v8847
  %v8856 = vadd.f32 %v8788, %v8847
  %v8857 = vadd.f32 %v8789, %v8847
  %v8858 = vadd.f32 %v8790, %v8847
  %v8859 = vadd.f32 %v8791, %v8847
  %v8860 = vadd.f32 %v8792, %v8847
  %v8861 = vadd.f32 %v8793, %v8847
  %v8862 = vadd.f32 %v8794, %v8847
  %v8863 = vadd.f32 %v8795, %v8847
  %v8864 = vadd.f32 %v8796, %v8847
  %v8865 = vadd.f32 %v8797, %v8847
  %v8866 = vadd.f32 %v8798, %v8847
  %v8867 = vadd.f32 %v8799, %v8847
  %v8868 = vadd.f32 %v8800, %v8847
  %v8869 = vadd.f32 %v8801, %v8847
  %v8870 = vadd.f32 %v8802, %v8847
  %v8871 = vadd.f32 %v8803, %v8847
  %v8872 = vadd.f32 %v8804, %v8847
  %v8873 = vadd.f32 %v8805, %v8847
  %v8874 = vadd.f32 %v8806, %v8847
  %v8875 = vadd.f32 %v8807, %v8847
  %v8876 = vadd.f32 %v8808, %v8847
  %v8877 = vadd.f32 %v8809, %v8847
  %v8878 = vadd.f32 %v8810, %v8847
  %v8879 = vadd.f32 %v8811, %v8847
  %v8880 = vadd.f32 %v8812, %v8847
  %v8881 = vadd.f32 %v8813, %v8847
  %v8882 = vadd.f32 %v8814, %v8847
  %v8883 = vadd.f32 %v8815, %v8847
  %v8884 = vadd.f32 %v8816, %v8847
  %v8885 = vadd.f32 %v8817, %v8847
  %v8886 = vadd.f32 %v8818, %v8847
  %v8887 = vadd.f32 %v8819, %v8847
  %v8888 = vadd.f32 %v8820, %v8847
  %v8889 = vadd.f32 %v8821, %v8847
  %v8890 = vadd.f32 %v8822, %v8847
  %v8891 = vadd.f32 %v8823, %v8847
  %v8892 = vadd.f32 %v8824, %v8847
  %v8893 = vadd.f32 %v8825, %v8847
  %v8894 = vadd.f32 %v8826, %v8847
  %v8895 = vadd.f32 %v8827, %v8847
  %v8896 = vadd.f32 %v8828, %v8847
  %v8897 = vadd.f32 %v8829, %v8847
  %v8898 = vadd.f32 %v8830, %v8847
  %v8899 = vadd.f32 %v8831, %v8847
  %v8900 = vadd.f32 %v8832, %v8847
  %v8901 = vadd.f32 %v8833, %v8847
  %v8902 = vadd.f32 %v8834, %v8847
  %v8903 = vadd.f32 %v8835, %v8847
  %v8904 = vadd.f32 %v8836, %v8847
  %v8905 = vadd.f32 %v8837, %v8847
  %v8906 = vadd.f32 %v8838, %v8847
  %v8907 = vadd.f32 %v8839, %v8847
  %v8908 = vadd.f32 %v8840, %v8847
  %v8909 = vadd.f32 %v8841, %v8847
  %v8910 = vadd.f32 %v8842, %v8847
  %v8911 = vadd.f32 %v8843, %v8847
  %v8912 = vld [vmem:[%s4] sm:$0xff]
  %v8913 = vld [vmem:[%s4 + $0x8] sm:$0xff]
  %v8914 = vld [vmem:[%s4 + $0x10] sm:$0xff]
  %v8915 = vld [vmem:[%s4 + $0x18] sm:$0xff]
  %v8916 = vlaneseq
  %v8917 = vshrl.u32 %v8916, 7
  %v8918 = vsub.s32 0, %v8917
  %v8919 = vrot.slane %v96, %v8918
  %v8921 = vsel %vm98, %v8848, 0
  %v8924 = vsel %vm98, %v8849, 0
  %v8927 = vsel %vm98, %v8850, 0
  %v8930 = vsel %vm98, %v8851, 0
  %v8933 = vsel %vm98, %v8852, 0
  %v8936 = vsel %vm98, %v8853, 0
  %v8939 = vsel %vm98, %v8854, 0
  %v8942 = vsel %vm98, %v8855, 0
  %v8945 = vsel %vm98, %v8856, 0
  %v8948 = vsel %vm98, %v8857, 0
  %v8951 = vsel %vm98, %v8858, 0
  %v8954 = vsel %vm98, %v8859, 0
  %v8957 = vsel %vm98, %v8860, 0
  %v8960 = vsel %vm98, %v8861, 0
  %v8963 = vsel %vm98, %v8862, 0
  %v8966 = vsel %vm98, %v8863, 0
  %v8969 = vsel %vm98, %v8864, 0
  %v8972 = vsel %vm98, %v8865, 0
  %v8975 = vsel %vm98, %v8866, 0
  %v8978 = vsel %vm98, %v8867, 0
  %v8981 = vsel %vm98, %v8868, 0
  %v8984 = vsel %vm98, %v8869, 0
  %v8987 = vsel %vm98, %v8870, 0
  %v8990 = vsel %vm98, %v8871, 0
  %v8993 = vsel %vm98, %v8872, 0
  %v8996 = vsel %vm98, %v8873, 0
  %v8999 = vsel %vm98, %v8874, 0
  %v9002 = vsel %vm98, %v8875, 0
  %v9005 = vsel %vm98, %v8876, 0
  %v9008 = vsel %vm98, %v8877, 0
  %v9011 = vsel %vm98, %v8878, 0
  %v9014 = vsel %vm98, %v8879, 0
  %v9017 = vsel %vm98, %v8880, 0
  %v9020 = vsel %vm98, %v8881, 0
  %v9023 = vsel %vm98, %v8882, 0
  %v9026 = vsel %vm98, %v8883, 0
  %v9029 = vsel %vm98, %v8884, 0
  %v9032 = vsel %vm98, %v8885, 0
  %v9035 = vsel %vm98, %v8886, 0
  %v9038 = vsel %vm98, %v8887, 0
  %v9041 = vsel %vm98, %v8888, 0
  %v9044 = vsel %vm98, %v8889, 0
  %v9047 = vsel %vm98, %v8890, 0
  %v9050 = vsel %vm98, %v8891, 0
  %v9053 = vsel %vm98, %v8892, 0
  %v9056 = vsel %vm98, %v8893, 0
  %v9059 = vsel %vm98, %v8894, 0
  %v9062 = vsel %vm98, %v8895, 0
  %v9065 = vsel %vm98, %v8896, 0
  %v9068 = vsel %vm98, %v8897, 0
  %v9071 = vsel %vm98, %v8898, 0
  %v9074 = vsel %vm98, %v8899, 0
  %v9077 = vsel %vm98, %v8900, 0
  %v9080 = vsel %vm98, %v8901, 0
  %v9083 = vsel %vm98, %v8902, 0
  %v9086 = vsel %vm98, %v8903, 0
  %v9089 = vsel %vm98, %v8904, 0
  %v9092 = vsel %vm98, %v8905, 0
  %v9095 = vsel %vm98, %v8906, 0
  %v9098 = vsel %vm98, %v8907, 0
  %v9101 = vsel %vm98, %v8908, 0
  %v9104 = vsel %vm98, %v8909, 0
  %v9107 = vsel %vm98, %v8910, 0
  %v9110 = vsel %vm98, %v8911, 0
  %9112 = vmatprep.subr.mxu0 0.0
  %9113 = vmatpush1.msra.mxu0 %v8912
  %9114 = vmatprep.subr.mxu0 0.0
  %9115 = vmatpush1.msra.mxu0 %v8913
  %9116 = vmatprep.subr.mxu0 0.0
  %9117 = vmatpush1.msra.mxu0 %v8914
  %9118 = vmatprep.subr.mxu0 0.0
  %9119 = vmatpush1.msra.mxu0 %v8915
  %9120 = vmatprep.subr.mxu0 0.0
  %9121 = vmatpush1.msra.mxu0 0.0
  %9122 = vmatprep.subr.mxu0 0.0
  %9123 = vmatpush1.msra.mxu0 0.0
  %9124 = vmatprep.subr.mxu0 0.0
  %9125 = vmatpush1.msra.mxu0 0.0
  %9126 = vmatprep.subr.mxu0 0.0
  %9127 = vmatpush1.msra.mxu0 0.0
  %9128 = vmatprep.subr.mxu0 0.0
  %9129 = vmatpush1.msra.mxu0 0.0
  %9130 = vmatprep.subr.mxu0 0.0
  %9131 = vmatpush1.msra.mxu0 0.0
  %9132 = vmatprep.subr.mxu0 0.0
  %9133 = vmatpush1.msra.mxu0 0.0
  %9134 = vmatprep.subr.mxu0 0.0
  %9135 = vmatpush1.msra.mxu0 0.0
  %9136 = vmatprep.subr.mxu0 0.0
  %9137 = vmatpush1.msra.mxu0 0.0
  %9138 = vmatprep.subr.mxu0 0.0
  %9139 = vmatpush1.msra.mxu0 0.0
  %9140 = vmatprep.subr.mxu0 0.0
  %9141 = vmatpush1.msra.mxu0 0.0
  %9142 = vmatprep.subr.mxu0 0.0
  %9143 = vmatpush1.msra.mxu0 0.0
  %9144 = vmatprep.subr.mxu0 0.0
  %9145 = vmatpush1.msra.mxu0 0.0
  %9146 = vmatprep.subr.mxu0 0.0
  %9147 = vmatpush1.msra.mxu0 0.0
  %9148 = vmatprep.subr.mxu0 0.0
  %9149 = vmatpush1.msra.mxu0 0.0
  %9150 = vmatprep.subr.mxu0 0.0
  %9151 = vmatpush1.msra.mxu0 0.0
  %9152 = vmatprep.subr.mxu0 0.0
  %9153 = vmatpush1.msra.mxu0 0.0
  %9154 = vmatprep.subr.mxu0 0.0
  %9155 = vmatpush1.msra.mxu0 0.0
  %9156 = vmatprep.subr.mxu0 0.0
  %9157 = vmatpush1.msra.mxu0 0.0
  %9158 = vmatprep.subr.mxu0 0.0
  %9159 = vmatpush1.msra.mxu0 0.0
  %9160 = vmatprep.subr.mxu0 0.0
  %9161 = vmatpush1.msra.mxu0 0.0
  %9162 = vmatprep.subr.mxu0 0.0
  %9163 = vmatpush1.msra.mxu0 0.0
  %9164 = vmatprep.subr.mxu0 0.0
  %9165 = vmatpush1.msra.mxu0 0.0
  %9166 = vmatprep.subr.mxu0 0.0
  %9167 = vmatpush1.msra.mxu0 0.0
  %9168 = vmatprep.subr.mxu0 0.0
  %9169 = vmatpush1.msra.mxu0 0.0
  %9170 = vmatprep.subr.mxu0 0.0
  %9171 = vmatpush1.msra.mxu0 0.0
  %9172 = vmatprep.subr.mxu0 0.0
  %9173 = vmatpush1.msra.mxu0 0.0
  %9174 = vmatprep.subr.mxu0 0.0
  %9175 = vmatpush1.msra.mxu0 0.0
  %9176 = vmatprep.mubr.f32.mxu0 0.0
  %9177 = vmatmul.mubr.f32.gmra.mrb[0].mxu0 %v8921
  %v9178 = vpop.f32.mrb[0].mxu0
  %v9179 = vadd.f32 %v8919, %v9178
  %v9180 = vpop.f32.mrb[0].mxu0
  %9181 = vmatprep.mubr.f32.mxu0 0.0
  %9182 = vmatmul.mubr.f32.gmra.mrb[0].mxu0 %v8924
  %v9183 = vpop.f32.mrb[0].mxu0
  %v9184 = vadd.f32 %v8919, %v9183
  %v9185 = vpop.f32.mrb[0].mxu0
  %9186 = vmatprep.mubr.f32.mxu0 0.0
  %9187 = vmatmul.mubr.f32.gmra.mrb[0].mxu0 %v8927
  %v9188 = vpop.f32.mrb[0].mxu0
  %v9189 = vadd.f32 %v8919, %v9188
  %v9190 = vpop.f32.mrb[0].mxu0
  %9191 = vmatprep.mubr.f32.mxu0 0.0
  %9192 = vmatmul.mubr.f32.gmra.mrb[0].mxu0 %v8930
  %v9193 = vpop.f32.mrb[0].mxu0
  %v9194 = vadd.f32 %v8919, %v9193
  %v9195 = vpop.f32.mrb[0].mxu0
  %9196 = vmatprep.mubr.f32.mxu0 0.0
  %9197 = vmatmul.mubr.f32.gmra.mrb[0].mxu0 %v8933
  %v9198 = vpop.f32.mrb[0].mxu0
  %v9199 = vadd.f32 %v8919, %v9198
  %v9200 = vpop.f32.mrb[0].mxu0
  %9201 = vmatprep.mubr.f32.mxu0 0.0
  %9202 = vmatmul.mubr.f32.gmra.mrb[0].mxu0 %v8936
  %v9203 = vpop.f32.mrb[0].mxu0
  %v9204 = vadd.f32 %v8919, %v9203
  %v9205 = vpop.f32.mrb[0].mxu0
  %9206 = vmatprep.mubr.f32.mxu0 0.0
  %9207 = vmatmul.mubr.f32.gmra.mrb[0].mxu0 %v8939
  %v9208 = vpop.f32.mrb[0].mxu0
  %v9209 = vadd.f32 %v8919, %v9208
  %v9210 = vpop.f32.mrb[0].mxu0
  %9211 = vmatprep.mubr.f32.mxu0 0.0
  %9212 = vmatmul.mubr.f32.gmra.mrb[0].mxu0 %v8942
  %v9213 = vpop.f32.mrb[0].mxu0
  %v9214 = vadd.f32 %v8919, %v9213
  %v9215 = vpop.f32.mrb[0].mxu0
  %9216 = vmatprep.mubr.f32.mxu0 0.0
  %9217 = vmatmul.mubr.f32.gmra.mrb[0].mxu0 %v8945
  %v9218 = vpop.f32.mrb[0].mxu0
  %v9219 = vadd.f32 %v8919, %v9218
  %v9220 = vpop.f32.mrb[0].mxu0
  %9221 = vmatprep.mubr.f32.mxu0 0.0
  %9222 = vmatmul.mubr.f32.gmra.mrb[0].mxu0 %v8948
  %v9223 = vpop.f32.mrb[0].mxu0
  %v9224 = vadd.f32 %v8919, %v9223
  %v9225 = vpop.f32.mrb[0].mxu0
  %9226 = vmatprep.mubr.f32.mxu0 0.0
  %9227 = vmatmul.mubr.f32.gmra.mrb[0].mxu0 %v8951
  %v9228 = vpop.f32.mrb[0].mxu0
  %v9229 = vadd.f32 %v8919, %v9228
  %v9230 = vpop.f32.mrb[0].mxu0
  %9231 = vmatprep.mubr.f32.mxu0 0.0
  %9232 = vmatmul.mubr.f32.gmra.mrb[0].mxu0 %v8954
  %v9233 = vpop.f32.mrb[0].mxu0
  %v9234 = vadd.f32 %v8919, %v9233
  %v9235 = vpop.f32.mrb[0].mxu0
  %9236 = vmatprep.mubr.f32.mxu0 0.0
  %9237 = vmatmul.mubr.f32.gmra.mrb[0].mxu0 %v8957
  %v9238 = vpop.f32.mrb[0].mxu0
  %v9239 = vadd.f32 %v8919, %v9238
  %v9240 = vpop.f32.mrb[0].mxu0
  %9241 = vmatprep.mubr.f32.mxu0 0.0
  %9242 = vmatmul.mubr.f32.gmra.mrb[0].mxu0 %v8960
  %v9243 = vpop.f32.mrb[0].mxu0
  %v9244 = vadd.f32 %v8919, %v9243
  %v9245 = vpop.f32.mrb[0].mxu0
  %9246 = vmatprep.mubr.f32.mxu0 0.0
  %9247 = vmatmul.mubr.f32.gmra.mrb[0].mxu0 %v8963
  %v9248 = vpop.f32.mrb[0].mxu0
  %v9249 = vadd.f32 %v8919, %v9248
  %v9250 = vpop.f32.mrb[0].mxu0
  %9251 = vmatprep.mubr.f32.mxu0 0.0
  %9252 = vmatmul.mubr.f32.gmra.mrb[0].mxu0 %v8966
  %v9253 = vpop.f32.mrb[0].mxu0
  %v9254 = vadd.f32 %v8919, %v9253
  %v9255 = vpop.f32.mrb[0].mxu0
  %9256 = vmatprep.mubr.f32.mxu0 0.0
  %9257 = vmatmul.mubr.f32.gmra.mrb[0].mxu0 %v8969
  %v9258 = vpop.f32.mrb[0].mxu0
  %v9259 = vadd.f32 %v8919, %v9258
  %v9260 = vpop.f32.mrb[0].mxu0
  %9261 = vmatprep.mubr.f32.mxu0 0.0
  %9262 = vmatmul.mubr.f32.gmra.mrb[0].mxu0 %v8972
  %v9263 = vpop.f32.mrb[0].mxu0
  %v9264 = vadd.f32 %v8919, %v9263
  %v9265 = vpop.f32.mrb[0].mxu0
  %9266 = vmatprep.mubr.f32.mxu0 0.0
  %9267 = vmatmul.mubr.f32.gmra.mrb[0].mxu0 %v8975
  %v9268 = vpop.f32.mrb[0].mxu0
  %v9269 = vadd.f32 %v8919, %v9268
  %v9270 = vpop.f32.mrb[0].mxu0
  %9271 = vmatprep.mubr.f32.mxu0 0.0
  %9272 = vmatmul.mubr.f32.gmra.mrb[0].mxu0 %v8978
  %v9273 = vpop.f32.mrb[0].mxu0
  %v9274 = vadd.f32 %v8919, %v9273
  %v9275 = vpop.f32.mrb[0].mxu0
  %9276 = vmatprep.mubr.f32.mxu0 0.0
  %9277 = vmatmul.mubr.f32.gmra.mrb[0].mxu0 %v8981
  %v9278 = vpop.f32.mrb[0].mxu0
  %v9279 = vadd.f32 %v8919, %v9278
  %v9280 = vpop.f32.mrb[0].mxu0
  %9281 = vmatprep.mubr.f32.mxu0 0.0
  %9282 = vmatmul.mubr.f32.gmra.mrb[0].mxu0 %v8984
  %v9283 = vpop.f32.mrb[0].mxu0
  %v9284 = vadd.f32 %v8919, %v9283
  %v9285 = vpop.f32.mrb[0].mxu0
  %9286 = vmatprep.mubr.f32.mxu0 0.0
  %9287 = vmatmul.mubr.f32.gmra.mrb[0].mxu0 %v8987
  %v9288 = vpop.f32.mrb[0].mxu0
  %v9289 = vadd.f32 %v8919, %v9288
  %v9290 = vpop.f32.mrb[0].mxu0
  %9291 = vmatprep.mubr.f32.mxu0 0.0
  %9292 = vmatmul.mubr.f32.gmra.mrb[0].mxu0 %v8990
  %v9293 = vpop.f32.mrb[0].mxu0
  %v9294 = vadd.f32 %v8919, %v9293
  %v9295 = vpop.f32.mrb[0].mxu0
  %9296 = vmatprep.mubr.f32.mxu0 0.0
  %9297 = vmatmul.mubr.f32.gmra.mrb[0].mxu0 %v8993
  %v9298 = vpop.f32.mrb[0].mxu0
  %v9299 = vadd.f32 %v8919, %v9298
  %v9300 = vpop.f32.mrb[0].mxu0
  %9301 = vmatprep.mubr.f32.mxu0 0.0
  %9302 = vmatmul.mubr.f32.gmra.mrb[0].mxu0 %v8996
  %v9303 = vpop.f32.mrb[0].mxu0
  %v9304 = vadd.f32 %v8919, %v9303
  %v9305 = vpop.f32.mrb[0].mxu0
  %9306 = vmatprep.mubr.f32.mxu0 0.0
  %9307 = vmatmul.mubr.f32.gmra.mrb[0].mxu0 %v8999
  %v9308 = vpop.f32.mrb[0].mxu0
  %v9309 = vadd.f32 %v8919, %v9308
  %v9310 = vpop.f32.mrb[0].mxu0
  %9311 = vmatprep.mubr.f32.mxu0 0.0
  %9312 = vmatmul.mubr.f32.gmra.mrb[0].mxu0 %v9002
  %v9313 = vpop.f32.mrb[0].mxu0
  %v9314 = vadd.f32 %v8919, %v9313
  %v9315 = vpop.f32.mrb[0].mxu0
  %9316 = vmatprep.mubr.f32.mxu0 0.0
  %9317 = vmatmul.mubr.f32.gmra.mrb[0].mxu0 %v9005
  %v9318 = vpop.f32.mrb[0].mxu0
  %v9319 = vadd.f32 %v8919, %v9318
  %v9320 = vpop.f32.mrb[0].mxu0
  %9321 = vmatprep.mubr.f32.mxu0 0.0
  %9322 = vmatmul.mubr.f32.gmra.mrb[0].mxu0 %v9008
  %v9323 = vpop.f32.mrb[0].mxu0
  %v9324 = vadd.f32 %v8919, %v9323
  %v9325 = vpop.f32.mrb[0].mxu0
  %9326 = vmatprep.mubr.f32.mxu0 0.0
  %9327 = vmatmul.mubr.f32.gmra.mrb[0].mxu0 %v9011
  %v9328 = vpop.f32.mrb[0].mxu0
  %v9329 = vadd.f32 %v8919, %v9328
  %v9330 = vpop.f32.mrb[0].mxu0
  %9331 = vmatprep.mubr.f32.mxu0 0.0
  %9332 = vmatmul.mubr.f32.gmra.mrb[0].mxu0 %v9014
  %v9333 = vpop.f32.mrb[0].mxu0
  %v9334 = vadd.f32 %v8919, %v9333
  %v9335 = vpop.f32.mrb[0].mxu0
  %9336 = vmatprep.mubr.f32.mxu0 0.0
  %9337 = vmatmul.mubr.f32.gmra.mrb[0].mxu0 %v9017
  %v9338 = vpop.f32.mrb[0].mxu0
  %v9339 = vadd.f32 %v8919, %v9338
  %v9340 = vpop.f32.mrb[0].mxu0
  %9341 = vmatprep.mubr.f32.mxu0 0.0
  %9342 = vmatmul.mubr.f32.gmra.mrb[0].mxu0 %v9020
  %v9343 = vpop.f32.mrb[0].mxu0
  %v9344 = vadd.f32 %v8919, %v9343
  %v9345 = vpop.f32.mrb[0].mxu0
  %9346 = vmatprep.mubr.f32.mxu0 0.0
  %9347 = vmatmul.mubr.f32.gmra.mrb[0].mxu0 %v9023
  %v9348 = vpop.f32.mrb[0].mxu0
  %v9349 = vadd.f32 %v8919, %v9348
  %v9350 = vpop.f32.mrb[0].mxu0
  %9351 = vmatprep.mubr.f32.mxu0 0.0
  %9352 = vmatmul.mubr.f32.gmra.mrb[0].mxu0 %v9026
  %v9353 = vpop.f32.mrb[0].mxu0
  %v9354 = vadd.f32 %v8919, %v9353
  %v9355 = vpop.f32.mrb[0].mxu0
  %9356 = vmatprep.mubr.f32.mxu0 0.0
  %9357 = vmatmul.mubr.f32.gmra.mrb[0].mxu0 %v9029
  %v9358 = vpop.f32.mrb[0].mxu0
  %v9359 = vadd.f32 %v8919, %v9358
  %v9360 = vpop.f32.mrb[0].mxu0
  %9361 = vmatprep.mubr.f32.mxu0 0.0
  %9362 = vmatmul.mubr.f32.gmra.mrb[0].mxu0 %v9032
  %v9363 = vpop.f32.mrb[0].mxu0
  %v9364 = vadd.f32 %v8919, %v9363
  %v9365 = vpop.f32.mrb[0].mxu0
  %9366 = vmatprep.mubr.f32.mxu0 0.0
  %9367 = vmatmul.mubr.f32.gmra.mrb[0].mxu0 %v9035
  %v9368 = vpop.f32.mrb[0].mxu0
  %v9369 = vadd.f32 %v8919, %v9368
  %v9370 = vpop.f32.mrb[0].mxu0
  %9371 = vmatprep.mubr.f32.mxu0 0.0
  %9372 = vmatmul.mubr.f32.gmra.mrb[0].mxu0 %v9038
  %v9373 = vpop.f32.mrb[0].mxu0
  %v9374 = vadd.f32 %v8919, %v9373
  %v9375 = vpop.f32.mrb[0].mxu0
  %9376 = vmatprep.mubr.f32.mxu0 0.0
  %9377 = vmatmul.mubr.f32.gmra.mrb[0].mxu0 %v9041
  %v9378 = vpop.f32.mrb[0].mxu0
  %v9379 = vadd.f32 %v8919, %v9378
  %v9380 = vpop.f32.mrb[0].mxu0
  %9381 = vmatprep.mubr.f32.mxu0 0.0
  %9382 = vmatmul.mubr.f32.gmra.mrb[0].mxu0 %v9044
  %v9383 = vpop.f32.mrb[0].mxu0
  %v9384 = vadd.f32 %v8919, %v9383
  %v9385 = vpop.f32.mrb[0].mxu0
  %9386 = vmatprep.mubr.f32.mxu0 0.0
  %9387 = vmatmul.mubr.f32.gmra.mrb[0].mxu0 %v9047
  %v9388 = vpop.f32.mrb[0].mxu0
  %v9389 = vadd.f32 %v8919, %v9388
  %v9390 = vpop.f32.mrb[0].mxu0
  %9391 = vmatprep.mubr.f32.mxu0 0.0
  %9392 = vmatmul.mubr.f32.gmra.mrb[0].mxu0 %v9050
  %v9393 = vpop.f32.mrb[0].mxu0
  %v9394 = vadd.f32 %v8919, %v9393
  %v9395 = vpop.f32.mrb[0].mxu0
  %9396 = vmatprep.mubr.f32.mxu0 0.0
  %9397 = vmatmul.mubr.f32.gmra.mrb[0].mxu0 %v9053
  %v9398 = vpop.f32.mrb[0].mxu0
  %v9399 = vadd.f32 %v8919, %v9398
  %v9400 = vpop.f32.mrb[0].mxu0
  %9401 = vmatprep.mubr.f32.mxu0 0.0
  %9402 = vmatmul.mubr.f32.gmra.mrb[0].mxu0 %v9056
  %v9403 = vpop.f32.mrb[0].mxu0
  %v9404 = vadd.f32 %v8919, %v9403
  %v9405 = vpop.f32.mrb[0].mxu0
  %9406 = vmatprep.mubr.f32.mxu0 0.0
  %9407 = vmatmul.mubr.f32.gmra.mrb[0].mxu0 %v9059
  %v9408 = vpop.f32.mrb[0].mxu0
  %v9409 = vadd.f32 %v8919, %v9408
  %v9410 = vpop.f32.mrb[0].mxu0
  %9411 = vmatprep.mubr.f32.mxu0 0.0
  %9412 = vmatmul.mubr.f32.gmra.mrb[0].mxu0 %v9062
  %v9413 = vpop.f32.mrb[0].mxu0
  %v9414 = vadd.f32 %v8919, %v9413
  %v9415 = vpop.f32.mrb[0].mxu0
  %9416 = vmatprep.mubr.f32.mxu0 0.0
  %9417 = vmatmul.mubr.f32.gmra.mrb[0].mxu0 %v9065
  %v9418 = vpop.f32.mrb[0].mxu0
  %v9419 = vadd.f32 %v8919, %v9418
  %v9420 = vpop.f32.mrb[0].mxu0
  %9421 = vmatprep.mubr.f32.mxu0 0.0
  %9422 = vmatmul.mubr.f32.gmra.mrb[0].mxu0 %v9068
  %v9423 = vpop.f32.mrb[0].mxu0
  %v9424 = vadd.f32 %v8919, %v9423
  %v9425 = vpop.f32.mrb[0].mxu0
  %9426 = vmatprep.mubr.f32.mxu0 0.0
  %9427 = vmatmul.mubr.f32.gmra.mrb[0].mxu0 %v9071
  %v9428 = vpop.f32.mrb[0].mxu0
  %v9429 = vadd.f32 %v8919, %v9428
  %v9430 = vpop.f32.mrb[0].mxu0
  %9431 = vmatprep.mubr.f32.mxu0 0.0
  %9432 = vmatmul.mubr.f32.gmra.mrb[0].mxu0 %v9074
  %v9433 = vpop.f32.mrb[0].mxu0
  %v9434 = vadd.f32 %v8919, %v9433
  %v9435 = vpop.f32.mrb[0].mxu0
  %9436 = vmatprep.mubr.f32.mxu0 0.0
  %9437 = vmatmul.mubr.f32.gmra.mrb[0].mxu0 %v9077
  %v9438 = vpop.f32.mrb[0].mxu0
  %v9439 = vadd.f32 %v8919, %v9438
  %v9440 = vpop.f32.mrb[0].mxu0
  %9441 = vmatprep.mubr.f32.mxu0 0.0
  %9442 = vmatmul.mubr.f32.gmra.mrb[0].mxu0 %v9080
  %v9443 = vpop.f32.mrb[0].mxu0
  %v9444 = vadd.f32 %v8919, %v9443
  %v9445 = vpop.f32.mrb[0].mxu0
  %9446 = vmatprep.mubr.f32.mxu0 0.0
  %9447 = vmatmul.mubr.f32.gmra.mrb[0].mxu0 %v9083
  %v9448 = vpop.f32.mrb[0].mxu0
  %v9449 = vadd.f32 %v8919, %v9448
  %v9450 = vpop.f32.mrb[0].mxu0
  %9451 = vmatprep.mubr.f32.mxu0 0.0
  %9452 = vmatmul.mubr.f32.gmra.mrb[0].mxu0 %v9086
  %v9453 = vpop.f32.mrb[0].mxu0
  %v9454 = vadd.f32 %v8919, %v9453
  %v9455 = vpop.f32.mrb[0].mxu0
  %9456 = vmatprep.mubr.f32.mxu0 0.0
  %9457 = vmatmul.mubr.f32.gmra.mrb[0].mxu0 %v9089
  %v9458 = vpop.f32.mrb[0].mxu0
  %v9459 = vadd.f32 %v8919, %v9458
  %v9460 = vpop.f32.mrb[0].mxu0
  %9461 = vmatprep.mubr.f32.mxu0 0.0
  %9462 = vmatmul.mubr.f32.gmra.mrb[0].mxu0 %v9092
  %v9463 = vpop.f32.mrb[0].mxu0
  %v9464 = vadd.f32 %v8919, %v9463
  %v9465 = vpop.f32.mrb[0].mxu0
  %9466 = vmatprep.mubr.f32.mxu0 0.0
  %9467 = vmatmul.mubr.f32.gmra.mrb[0].mxu0 %v9095
  %v9468 = vpop.f32.mrb[0].mxu0
  %v9469 = vadd.f32 %v8919, %v9468
  %v9470 = vpop.f32.mrb[0].mxu0
  %9471 = vmatprep.mubr.f32.mxu0 0.0
  %9472 = vmatmul.mubr.f32.gmra.mrb[0].mxu0 %v9098
  %v9473 = vpop.f32.mrb[0].mxu0
  %v9474 = vadd.f32 %v8919, %v9473
  %v9475 = vpop.f32.mrb[0].mxu0
  %9476 = vmatprep.mubr.f32.mxu0 0.0
  %9477 = vmatmul.mubr.f32.gmra.mrb[0].mxu0 %v9101
  %v9478 = vpop.f32.mrb[0].mxu0
  %v9479 = vadd.f32 %v8919, %v9478
  %v9480 = vpop.f32.mrb[0].mxu0
  %9481 = vmatprep.mubr.f32.mxu0 0.0
  %9482 = vmatmul.mubr.f32.gmra.mrb[0].mxu0 %v9104
  %v9483 = vpop.f32.mrb[0].mxu0
  %v9484 = vadd.f32 %v8919, %v9483
  %v9485 = vpop.f32.mrb[0].mxu0
  %9486 = vmatprep.mubr.f32.mxu0 0.0
  %9487 = vmatmul.mubr.f32.gmra.mrb[0].mxu0 %v9107
  %v9488 = vpop.f32.mrb[0].mxu0
  %v9489 = vadd.f32 %v8919, %v9488
  %v9490 = vpop.f32.mrb[0].mxu0
  %9491 = vmatprep.mubr.f32.mxu0 0.0
  %9492 = vmatmul.mubr.f32.gmra.mrb[0].mxu0 %v9110
  %v9493 = vpop.f32.mrb[0].mxu0
  %v9494 = vadd.f32 %v8919, %v9493
  %v9495 = vpop.f32.mrb[0].mxu0
  %9496 = vdwg.mxu0
  %v9497 = vmul.f32 %v9179, 0.5
  %v9498 = vmul.f32 %v9184, 0.5
  %v9499 = vmul.f32 %v9189, 0.5
  %v9500 = vmul.f32 %v9194, 0.5
  %v9501 = vmul.f32 %v9199, 0.5
  %v9502 = vmul.f32 %v9204, 0.5
  %v9503 = vmul.f32 %v9209, 0.5
  %v9504 = vmul.f32 %v9214, 0.5
  %v9505 = vmul.f32 %v9219, 0.5
  %v9506 = vmul.f32 %v9224, 0.5
  %v9507 = vmul.f32 %v9229, 0.5
  %v9508 = vmul.f32 %v9234, 0.5
  %v9509 = vmul.f32 %v9239, 0.5
  %v9510 = vmul.f32 %v9244, 0.5
  %v9511 = vmul.f32 %v9249, 0.5
  %v9512 = vmul.f32 %v9254, 0.5
  %v9513 = vmul.f32 %v9259, 0.5
  %v9514 = vmul.f32 %v9264, 0.5
  %v9515 = vmul.f32 %v9269, 0.5
  %v9516 = vmul.f32 %v9274, 0.5
  %v9517 = vmul.f32 %v9279, 0.5
  %v9518 = vmul.f32 %v9284, 0.5
  %v9519 = vmul.f32 %v9289, 0.5
  %v9520 = vmul.f32 %v9294, 0.5
  %v9521 = vmul.f32 %v9299, 0.5
  %v9522 = vmul.f32 %v9304, 0.5
  %v9523 = vmul.f32 %v9309, 0.5
  %v9524 = vmul.f32 %v9314, 0.5
  %v9525 = vmul.f32 %v9319, 0.5
  %v9526 = vmul.f32 %v9324, 0.5
  %v9527 = vmul.f32 %v9329, 0.5
  %v9528 = vmul.f32 %v9334, 0.5
  %v9529 = vmul.f32 %v9339, 0.5
  %v9530 = vmul.f32 %v9344, 0.5
  %v9531 = vmul.f32 %v9349, 0.5
  %v9532 = vmul.f32 %v9354, 0.5
  %v9533 = vmul.f32 %v9359, 0.5
  %v9534 = vmul.f32 %v9364, 0.5
  %v9535 = vmul.f32 %v9369, 0.5
  %v9536 = vmul.f32 %v9374, 0.5
  %v9537 = vmul.f32 %v9379, 0.5
  %v9538 = vmul.f32 %v9384, 0.5
  %v9539 = vmul.f32 %v9389, 0.5
  %v9540 = vmul.f32 %v9394, 0.5
  %v9541 = vmul.f32 %v9399, 0.5
  %v9542 = vmul.f32 %v9404, 0.5
  %v9543 = vmul.f32 %v9409, 0.5
  %v9544 = vmul.f32 %v9414, 0.5
  %v9545 = vmul.f32 %v9419, 0.5
  %v9546 = vmul.f32 %v9424, 0.5
  %v9547 = vmul.f32 %v9429, 0.5
  %v9548 = vmul.f32 %v9434, 0.5
  %v9549 = vmul.f32 %v9439, 0.5
  %v9550 = vmul.f32 %v9444, 0.5
  %v9551 = vmul.f32 %v9449, 0.5
  %v9552 = vmul.f32 %v9454, 0.5
  %v9553 = vmul.f32 %v9459, 0.5
  %v9554 = vmul.f32 %v9464, 0.5
  %v9555 = vmul.f32 %v9469, 0.5
  %v9556 = vmul.f32 %v9474, 0.5
  %v9557 = vmul.f32 %v9479, 0.5
  %v9558 = vmul.f32 %v9484, 0.5
  %v9559 = vmul.f32 %v9489, 0.5
  %v9560 = vmul.f32 %v9494, 0.5
  %v9561 = vmul.f32 %v9179, 0.70710677
  %v9562 = vmul.f32 %v9184, 0.70710677
  %v9563 = vmul.f32 %v9189, 0.70710677
  %v9564 = vmul.f32 %v9194, 0.70710677
  %v9565 = vmul.f32 %v9199, 0.70710677
  %v9566 = vmul.f32 %v9204, 0.70710677
  %v9567 = vmul.f32 %v9209, 0.70710677
  %v9568 = vmul.f32 %v9214, 0.70710677
  %v9569 = vmul.f32 %v9219, 0.70710677
  %v9570 = vmul.f32 %v9224, 0.70710677
  %v9571 = vmul.f32 %v9229, 0.70710677
  %v9572 = vmul.f32 %v9234, 0.70710677
  %v9573 = vmul.f32 %v9239, 0.70710677
  %v9574 = vmul.f32 %v9244, 0.70710677
  %v9575 = vmul.f32 %v9249, 0.70710677
  %v9576 = vmul.f32 %v9254, 0.70710677
  %v9577 = vmul.f32 %v9259, 0.70710677
  %v9578 = vmul.f32 %v9264, 0.70710677
  %v9579 = vmul.f32 %v9269, 0.70710677
  %v9580 = vmul.f32 %v9274, 0.70710677
  %v9581 = vmul.f32 %v9279, 0.70710677
  %v9582 = vmul.f32 %v9284, 0.70710677
  %v9583 = vmul.f32 %v9289, 0.70710677
  %v9584 = vmul.f32 %v9294, 0.70710677
  %v9585 = vmul.f32 %v9299, 0.70710677
  %v9586 = vmul.f32 %v9304, 0.70710677
  %v9587 = vmul.f32 %v9309, 0.70710677
  %v9588 = vmul.f32 %v9314, 0.70710677
  %v9589 = vmul.f32 %v9319, 0.70710677
  %v9590 = vmul.f32 %v9324, 0.70710677
  %v9591 = vmul.f32 %v9329, 0.70710677
  %v9592 = vmul.f32 %v9334, 0.70710677
  %v9593 = vmul.f32 %v9339, 0.70710677
  %v9594 = vmul.f32 %v9344, 0.70710677
  %v9595 = vmul.f32 %v9349, 0.70710677
  %v9596 = vmul.f32 %v9354, 0.70710677
  %v9597 = vmul.f32 %v9359, 0.70710677
  %v9598 = vmul.f32 %v9364, 0.70710677
  %v9599 = vmul.f32 %v9369, 0.70710677
  %v9600 = vmul.f32 %v9374, 0.70710677
  %v9601 = vmul.f32 %v9379, 0.70710677
  %v9602 = vmul.f32 %v9384, 0.70710677
  %v9603 = vmul.f32 %v9389, 0.70710677
  %v9604 = vmul.f32 %v9394, 0.70710677
  %v9605 = vmul.f32 %v9399, 0.70710677
  %v9606 = vmul.f32 %v9404, 0.70710677
  %v9607 = vmul.f32 %v9409, 0.70710677
  %v9608 = vmul.f32 %v9414, 0.70710677
  %v9609 = vmul.f32 %v9419, 0.70710677
  %v9610 = vmul.f32 %v9424, 0.70710677
  %v9611 = vmul.f32 %v9429, 0.70710677
  %v9612 = vmul.f32 %v9434, 0.70710677
  %v9613 = vmul.f32 %v9439, 0.70710677
  %v9614 = vmul.f32 %v9444, 0.70710677
  %v9615 = vmul.f32 %v9449, 0.70710677
  %v9616 = vmul.f32 %v9454, 0.70710677
  %v9617 = vmul.f32 %v9459, 0.70710677
  %v9618 = vmul.f32 %v9464, 0.70710677
  %v9619 = vmul.f32 %v9469, 0.70710677
  %v9620 = vmul.f32 %v9474, 0.70710677
  %v9621 = vmul.f32 %v9479, 0.70710677
  %v9622 = vmul.f32 %v9484, 0.70710677
  %v9623 = vmul.f32 %v9489, 0.70710677
  %v9624 = vmul.f32 %v9494, 0.70710677
  %v9625 = verf.f32.pop %v9561
  %v9626 = verf.f32.pop %v9562
  %v9627 = verf.f32.pop %v9563
  %v9628 = verf.f32.pop %v9564
  %v9629 = verf.f32.pop %v9565
  %v9630 = verf.f32.pop %v9566
  %v9631 = verf.f32.pop %v9567
  %v9632 = verf.f32.pop %v9568
  %v9633 = verf.f32.pop %v9569
  %v9634 = verf.f32.pop %v9570
  %v9635 = verf.f32.pop %v9571
  %v9636 = verf.f32.pop %v9572
  %v9637 = verf.f32.pop %v9573
  %v9638 = verf.f32.pop %v9574
  %v9639 = verf.f32.pop %v9575
  %v9640 = verf.f32.pop %v9576
  %v9641 = verf.f32.pop %v9577
  %v9642 = verf.f32.pop %v9578
  %v9643 = verf.f32.pop %v9579
  %v9644 = verf.f32.pop %v9580
  %v9645 = verf.f32.pop %v9581
  %v9646 = verf.f32.pop %v9582
  %v9647 = verf.f32.pop %v9583
  %v9648 = verf.f32.pop %v9584
  %v9649 = verf.f32.pop %v9585
  %v9650 = verf.f32.pop %v9586
  %v9651 = verf.f32.pop %v9587
  %v9652 = verf.f32.pop %v9588
  %v9653 = verf.f32.pop %v9589
  %v9654 = verf.f32.pop %v9590
  %v9655 = verf.f32.pop %v9591
  %v9656 = verf.f32.pop %v9592
  %v9657 = verf.f32.pop %v9593
  %v9658 = verf.f32.pop %v9594
  %v9659 = verf.f32.pop %v9595
  %v9660 = verf.f32.pop %v9596
  %v9661 = verf.f32.pop %v9597
  %v9662 = verf.f32.pop %v9598
  %v9663 = verf.f32.pop %v9599
  %v9664 = verf.f32.pop %v9600
  %v9665 = verf.f32.pop %v9601
  %v9666 = verf.f32.pop %v9602
  %v9667 = verf.f32.pop %v9603
  %v9668 = verf.f32.pop %v9604
  %v9669 = verf.f32.pop %v9605
  %v9670 = verf.f32.pop %v9606
  %v9671 = verf.f32.pop %v9607
  %v9672 = verf.f32.pop %v9608
  %v9673 = verf.f32.pop %v9609
  %v9674 = verf.f32.pop %v9610
  %v9675 = verf.f32.pop %v9611
  %v9676 = verf.f32.pop %v9612
  %v9677 = verf.f32.pop %v9613
  %v9678 = verf.f32.pop %v9614
  %v9679 = verf.f32.pop %v9615
  %v9680 = verf.f32.pop %v9616
  %v9681 = verf.f32.pop %v9617
  %v9682 = verf.f32.pop %v9618
  %v9683 = verf.f32.pop %v9619
  %v9684 = verf.f32.pop %v9620
  %v9685 = verf.f32.pop %v9621
  %v9686 = verf.f32.pop %v9622
  %v9687 = verf.f32.pop %v9623
  %v9688 = verf.f32.pop %v9624
  %v9689 = vadd.f32 %v9625, 1.0
  %v9690 = vadd.f32 %v9626, 1.0
  %v9691 = vadd.f32 %v9627, 1.0
  %v9692 = vadd.f32 %v9628, 1.0
  %v9693 = vadd.f32 %v9629, 1.0
  %v9694 = vadd.f32 %v9630, 1.0
  %v9695 = vadd.f32 %v9631, 1.0
  %v9696 = vadd.f32 %v9632, 1.0
  %v9697 = vadd.f32 %v9633, 1.0
  %v9698 = vadd.f32 %v9634, 1.0
  %v9699 = vadd.f32 %v9635, 1.0
  %v9700 = vadd.f32 %v9636, 1.0
  %v9701 = vadd.f32 %v9637, 1.0
  %v9702 = vadd.f32 %v9638, 1.0
  %v9703 = vadd.f32 %v9639, 1.0
  %v9704 = vadd.f32 %v9640, 1.0
  %v9705 = vadd.f32 %v9641, 1.0
  %v9706 = vadd.f32 %v9642, 1.0
  %v9707 = vadd.f32 %v9643, 1.0
  %v9708 = vadd.f32 %v9644, 1.0
  %v9709 = vadd.f32 %v9645, 1.0
  %v9710 = vadd.f32 %v9646, 1.0
  %v9711 = vadd.f32 %v9647, 1.0
  %v9712 = vadd.f32 %v9648, 1.0
  %v9713 = vadd.f32 %v9649, 1.0
  %v9714 = vadd.f32 %v9650, 1.0
  %v9715 = vadd.f32 %v9651, 1.0
  %v9716 = vadd.f32 %v9652, 1.0
  %v9717 = vadd.f32 %v9653, 1.0
  %v9718 = vadd.f32 %v9654, 1.0
  %v9719 = vadd.f32 %v9655, 1.0
  %v9720 = vadd.f32 %v9656, 1.0
  %v9721 = vadd.f32 %v9657, 1.0
  %v9722 = vadd.f32 %v9658, 1.0
  %v9723 = vadd.f32 %v9659, 1.0
  %v9724 = vadd.f32 %v9660, 1.0
  %v9725 = vadd.f32 %v9661, 1.0
  %v9726 = vadd.f32 %v9662, 1.0
  %v9727 = vadd.f32 %v9663, 1.0
  %v9728 = vadd.f32 %v9664, 1.0
  %v9729 = vadd.f32 %v9665, 1.0
  %v9730 = vadd.f32 %v9666, 1.0
  %v9731 = vadd.f32 %v9667, 1.0
  %v9732 = vadd.f32 %v9668, 1.0
  %v9733 = vadd.f32 %v9669, 1.0
  %v9734 = vadd.f32 %v9670, 1.0
  %v9735 = vadd.f32 %v9671, 1.0
  %v9736 = vadd.f32 %v9672, 1.0
  %v9737 = vadd.f32 %v9673, 1.0
  %v9738 = vadd.f32 %v9674, 1.0
  %v9739 = vadd.f32 %v9675, 1.0
  %v9740 = vadd.f32 %v9676, 1.0
  %v9741 = vadd.f32 %v9677, 1.0
  %v9742 = vadd.f32 %v9678, 1.0
  %v9743 = vadd.f32 %v9679, 1.0
  %v9744 = vadd.f32 %v9680, 1.0
  %v9745 = vadd.f32 %v9681, 1.0
  %v9746 = vadd.f32 %v9682, 1.0
  %v9747 = vadd.f32 %v9683, 1.0
  %v9748 = vadd.f32 %v9684, 1.0
  %v9749 = vadd.f32 %v9685, 1.0
  %v9750 = vadd.f32 %v9686, 1.0
  %v9751 = vadd.f32 %v9687, 1.0
  %v9752 = vadd.f32 %v9688, 1.0
  %v9753 = vmul.f32 %v9497, %v9689
  %v9754 = vmul.f32 %v9498, %v9690
  %v9755 = vmul.f32 %v9499, %v9691
  %v9756 = vmul.f32 %v9500, %v9692
  %v9757 = vmul.f32 %v9501, %v9693
  %v9758 = vmul.f32 %v9502, %v9694
  %v9759 = vmul.f32 %v9503, %v9695
  %v9760 = vmul.f32 %v9504, %v9696
  %v9761 = vmul.f32 %v9505, %v9697
  %v9762 = vmul.f32 %v9506, %v9698
  %v9763 = vmul.f32 %v9507, %v9699
  %v9764 = vmul.f32 %v9508, %v9700
  %v9765 = vmul.f32 %v9509, %v9701
  %v9766 = vmul.f32 %v9510, %v9702
  %v9767 = vmul.f32 %v9511, %v9703
  %v9768 = vmul.f32 %v9512, %v9704
  %v9769 = vmul.f32 %v9513, %v9705
  %v9770 = vmul.f32 %v9514, %v9706
  %v9771 = vmul.f32 %v9515, %v9707
  %v9772 = vmul.f32 %v9516, %v9708
  %v9773 = vmul.f32 %v9517, %v9709
  %v9774 = vmul.f32 %v9518, %v9710
  %v9775 = vmul.f32 %v9519, %v9711
  %v9776 = vmul.f32 %v9520, %v9712
  %v9777 = vmul.f32 %v9521, %v9713
  %v9778 = vmul.f32 %v9522, %v9714
  %v9779 = vmul.f32 %v9523, %v9715
  %v9780 = vmul.f32 %v9524, %v9716
  %v9781 = vmul.f32 %v9525, %v9717
  %v9782 = vmul.f32 %v9526, %v9718
  %v9783 = vmul.f32 %v9527, %v9719
  %v9784 = vmul.f32 %v9528, %v9720
  %v9785 = vmul.f32 %v9529, %v9721
  %v9786 = vmul.f32 %v9530, %v9722
  %v9787 = vmul.f32 %v9531, %v9723
  %v9788 = vmul.f32 %v9532, %v9724
  %v9789 = vmul.f32 %v9533, %v9725
  %v9790 = vmul.f32 %v9534, %v9726
  %v9791 = vmul.f32 %v9535, %v9727
  %v9792 = vmul.f32 %v9536, %v9728
  %v9793 = vmul.f32 %v9537, %v9729
  %v9794 = vmul.f32 %v9538, %v9730
  %v9795 = vmul.f32 %v9539, %v9731
  %v9796 = vmul.f32 %v9540, %v9732
  %v9797 = vmul.f32 %v9541, %v9733
  %v9798 = vmul.f32 %v9542, %v9734
  %v9799 = vmul.f32 %v9543, %v9735
  %v9800 = vmul.f32 %v9544, %v9736
  %v9801 = vmul.f32 %v9545, %v9737
  %v9802 = vmul.f32 %v9546, %v9738
  %v9803 = vmul.f32 %v9547, %v9739
  %v9804 = vmul.f32 %v9548, %v9740
  %v9805 = vmul.f32 %v9549, %v9741
  %v9806 = vmul.f32 %v9550, %v9742
  %v9807 = vmul.f32 %v9551, %v9743
  %v9808 = vmul.f32 %v9552, %v9744
  %v9809 = vmul.f32 %v9553, %v9745
  %v9810 = vmul.f32 %v9554, %v9746
  %v9811 = vmul.f32 %v9555, %v9747
  %v9812 = vmul.f32 %v9556, %v9748
  %v9813 = vmul.f32 %v9557, %v9749
  %v9814 = vmul.f32 %v9558, %v9750
  %v9815 = vmul.f32 %v9559, %v9751
  %v9816 = vmul.f32 %v9560, %v9752
  %v9817 = vld [vmem:[%s5] sm:$0xff]
  %v9818 = vld [vmem:[%s5 + $0x8] sm:$0xff]
  %v9819 = vld [vmem:[%s5 + $0x10] sm:$0xff]
  %v9820 = vld [vmem:[%s5 + $0x18] sm:$0xff]
  %v9821 = vld [vmem:[%s5 + $0x20] sm:$0xff]
  %v9822 = vld [vmem:[%s5 + $0x28] sm:$0xff]
  %v9823 = vld [vmem:[%s5 + $0x30] sm:$0xff]
  %v9824 = vld [vmem:[%s5 + $0x38] sm:$0xff]
  %v9825 = vld [vmem:[%s5 + $0x40] sm:$0xff]
  %v9826 = vld [vmem:[%s5 + $0x48] sm:$0xff]
  %v9827 = vld [vmem:[%s5 + $0x50] sm:$0xff]
  %v9828 = vld [vmem:[%s5 + $0x58] sm:$0xff]
  %v9829 = vld [vmem:[%s5 + $0x60] sm:$0xff]
  %v9830 = vld [vmem:[%s5 + $0x68] sm:$0xff]
  %v9831 = vld [vmem:[%s5 + $0x70] sm:$0xff]
  %v9832 = vld [vmem:[%s5 + $0x78] sm:$0xff]
  %v9833 = vlaneseq
  %v9834 = vshrl.u32 %v9833, 7
  %v9835 = vsub.s32 0, %v9834
  %v9836 = vrot.slane %v97, %v9835
  %9837 = vmatprep.subr.mxu0 0.0
  %9838 = vmatpush1.msra.mxu0 %v9817
  %9839 = vmatprep.subr.mxu0 0.0
  %9840 = vmatpush1.msra.mxu0 %v9818
  %9841 = vmatprep.subr.mxu0 0.0
  %9842 = vmatpush1.msra.mxu0 %v9819
  %9843 = vmatprep.subr.mxu0 0.0
  %9844 = vmatpush1.msra.mxu0 %v9820
  %9845 = vmatprep.subr.mxu0 0.0
  %9846 = vmatpush1.msra.mxu0 %v9821
  %9847 = vmatprep.subr.mxu0 0.0
  %9848 = vmatpush1.msra.mxu0 %v9822
  %9849 = vmatprep.subr.mxu0 0.0
  %9850 = vmatpush1.msra.mxu0 %v9823
  %9851 = vmatprep.subr.mxu0 0.0
  %9852 = vmatpush1.msra.mxu0 %v9824
  %9853 = vmatprep.subr.mxu0 0.0
  %9854 = vmatpush1.msra.mxu0 %v9825
  %9855 = vmatprep.subr.mxu0 0.0
  %9856 = vmatpush1.msra.mxu0 %v9826
  %9857 = vmatprep.subr.mxu0 0.0
  %9858 = vmatpush1.msra.mxu0 %v9827
  %9859 = vmatprep.subr.mxu0 0.0
  %9860 = vmatpush1.msra.mxu0 %v9828
  %9861 = vmatprep.subr.mxu0 0.0
  %9862 = vmatpush1.msra.mxu0 %v9829
  %9863 = vmatprep.subr.mxu0 0.0
  %9864 = vmatpush1.msra.mxu0 %v9830
  %9865 = vmatprep.subr.mxu0 0.0
  %9866 = vmatpush1.msra.mxu0 %v9831
  %9867 = vmatprep.subr.mxu0 0.0
  %9868 = vmatpush1.msra.mxu0 %v9832
  %9869 = vmatprep.subr.mxu0 0.0
  %9870 = vmatpush1.msra.mxu0 0.0
  %9871 = vmatprep.subr.mxu0 0.0
  %9872 = vmatpush1.msra.mxu0 0.0
  %9873 = vmatprep.subr.mxu0 0.0
  %9874 = vmatpush1.msra.mxu0 0.0
  %9875 = vmatprep.subr.mxu0 0.0
  %9876 = vmatpush1.msra.mxu0 0.0
  %9877 = vmatprep.subr.mxu0 0.0
  %9878 = vmatpush1.msra.mxu0 0.0
  %9879 = vmatprep.subr.mxu0 0.0
  %9880 = vmatpush1.msra.mxu0 0.0
  %9881 = vmatprep.subr.mxu0 0.0
  %9882 = vmatpush1.msra.mxu0 0.0
  %9883 = vmatprep.subr.mxu0 0.0
  %9884 = vmatpush1.msra.mxu0 0.0
  %9885 = vmatprep.subr.mxu0 0.0
  %9886 = vmatpush1.msra.mxu0 0.0
  %9887 = vmatprep.subr.mxu0 0.0
  %9888 = vmatpush1.msra.mxu0 0.0
  %9889 = vmatprep.subr.mxu0 0.0
  %9890 = vmatpush1.msra.mxu0 0.0
  %9891 = vmatprep.subr.mxu0 0.0
  %9892 = vmatpush1.msra.mxu0 0.0
  %9893 = vmatprep.subr.mxu0 0.0
  %9894 = vmatpush1.msra.mxu0 0.0
  %9895 = vmatprep.subr.mxu0 0.0
  %9896 = vmatpush1.msra.mxu0 0.0
  %9897 = vmatprep.subr.mxu0 0.0
  %9898 = vmatpush1.msra.mxu0 0.0
  %9899 = vmatprep.subr.mxu0 0.0
  %9900 = vmatpush1.msra.mxu0 0.0
  %9901 = vmatprep.mubr.f32.mxu0 0.0
  %9902 = vmatmul.mubr.f32.gmra.mrb[0].mxu0 %v9753
  %v9903 = vpop.f32.mrb[0].mxu0
  %v9904 = vadd.f32 %v9836, %v9903
  %v9905 = vpop.f32.mrb[0].mxu0
  %9906 = vmatprep.mubr.f32.mxu0 0.0
  %9907 = vmatmul.mubr.f32.gmra.mrb[0].mxu0 %v9754
  %v9908 = vpop.f32.mrb[0].mxu0
  %v9909 = vadd.f32 %v9836, %v9908
  %v9910 = vpop.f32.mrb[0].mxu0
  %9911 = vmatprep.mubr.f32.mxu0 0.0
  %9912 = vmatmul.mubr.f32.gmra.mrb[0].mxu0 %v9755
  %v9913 = vpop.f32.mrb[0].mxu0
  %v9914 = vadd.f32 %v9836, %v9913
  %v9915 = vpop.f32.mrb[0].mxu0
  %9916 = vmatprep.mubr.f32.mxu0 0.0
  %9917 = vmatmul.mubr.f32.gmra.mrb[0].mxu0 %v9756
  %v9918 = vpop.f32.mrb[0].mxu0
  %v9919 = vadd.f32 %v9836, %v9918
  %v9920 = vpop.f32.mrb[0].mxu0
  %9921 = vmatprep.mubr.f32.mxu0 0.0
  %9922 = vmatmul.mubr.f32.gmra.mrb[0].mxu0 %v9757
  %v9923 = vpop.f32.mrb[0].mxu0
  %v9924 = vadd.f32 %v9836, %v9923
  %v9925 = vpop.f32.mrb[0].mxu0
  %9926 = vmatprep.mubr.f32.mxu0 0.0
  %9927 = vmatmul.mubr.f32.gmra.mrb[0].mxu0 %v9758
  %v9928 = vpop.f32.mrb[0].mxu0
  %v9929 = vadd.f32 %v9836, %v9928
  %v9930 = vpop.f32.mrb[0].mxu0
  %9931 = vmatprep.mubr.f32.mxu0 0.0
  %9932 = vmatmul.mubr.f32.gmra.mrb[0].mxu0 %v9759
  %v9933 = vpop.f32.mrb[0].mxu0
  %v9934 = vadd.f32 %v9836, %v9933
  %v9935 = vpop.f32.mrb[0].mxu0
  %9936 = vmatprep.mubr.f32.mxu0 0.0
  %9937 = vmatmul.mubr.f32.gmra.mrb[0].mxu0 %v9760
  %v9938 = vpop.f32.mrb[0].mxu0
  %v9939 = vadd.f32 %v9836, %v9938
  %v9940 = vpop.f32.mrb[0].mxu0
  %9941 = vmatprep.mubr.f32.mxu0 0.0
  %9942 = vmatmul.mubr.f32.gmra.mrb[0].mxu0 %v9761
  %v9943 = vpop.f32.mrb[0].mxu0
  %v9944 = vadd.f32 %v9836, %v9943
  %v9945 = vpop.f32.mrb[0].mxu0
  %9946 = vmatprep.mubr.f32.mxu0 0.0
  %9947 = vmatmul.mubr.f32.gmra.mrb[0].mxu0 %v9762
  %v9948 = vpop.f32.mrb[0].mxu0
  %v9949 = vadd.f32 %v9836, %v9948
  %v9950 = vpop.f32.mrb[0].mxu0
  %9951 = vmatprep.mubr.f32.mxu0 0.0
  %9952 = vmatmul.mubr.f32.gmra.mrb[0].mxu0 %v9763
  %v9953 = vpop.f32.mrb[0].mxu0
  %v9954 = vadd.f32 %v9836, %v9953
  %v9955 = vpop.f32.mrb[0].mxu0
  %9956 = vmatprep.mubr.f32.mxu0 0.0
  %9957 = vmatmul.mubr.f32.gmra.mrb[0].mxu0 %v9764
  %v9958 = vpop.f32.mrb[0].mxu0
  %v9959 = vadd.f32 %v9836, %v9958
  %v9960 = vpop.f32.mrb[0].mxu0
  %9961 = vmatprep.mubr.f32.mxu0 0.0
  %9962 = vmatmul.mubr.f32.gmra.mrb[0].mxu0 %v9765
  %v9963 = vpop.f32.mrb[0].mxu0
  %v9964 = vadd.f32 %v9836, %v9963
  %v9965 = vpop.f32.mrb[0].mxu0
  %9966 = vmatprep.mubr.f32.mxu0 0.0
  %9967 = vmatmul.mubr.f32.gmra.mrb[0].mxu0 %v9766
  %v9968 = vpop.f32.mrb[0].mxu0
  %v9969 = vadd.f32 %v9836, %v9968
  %v9970 = vpop.f32.mrb[0].mxu0
  %9971 = vmatprep.mubr.f32.mxu0 0.0
  %9972 = vmatmul.mubr.f32.gmra.mrb[0].mxu0 %v9767
  %v9973 = vpop.f32.mrb[0].mxu0
  %v9974 = vadd.f32 %v9836, %v9973
  %v9975 = vpop.f32.mrb[0].mxu0
  %9976 = vmatprep.mubr.f32.mxu0 0.0
  %9977 = vmatmul.mubr.f32.gmra.mrb[0].mxu0 %v9768
  %v9978 = vpop.f32.mrb[0].mxu0
  %v9979 = vadd.f32 %v9836, %v9978
  %v9980 = vpop.f32.mrb[0].mxu0
  %9981 = vmatprep.mubr.f32.mxu0 0.0
  %9982 = vmatmul.mubr.f32.gmra.mrb[0].mxu0 %v9769
  %v9983 = vpop.f32.mrb[0].mxu0
  %v9984 = vadd.f32 %v9836, %v9983
  %v9985 = vpop.f32.mrb[0].mxu0
  %9986 = vmatprep.mubr.f32.mxu0 0.0
  %9987 = vmatmul.mubr.f32.gmra.mrb[0].mxu0 %v9770
  %v9988 = vpop.f32.mrb[0].mxu0
  %v9989 = vadd.f32 %v9836, %v9988
  %v9990 = vpop.f32.mrb[0].mxu0
  %9991 = vmatprep.mubr.f32.mxu0 0.0
  %9992 = vmatmul.mubr.f32.gmra.mrb[0].mxu0 %v9771
  %v9993 = vpop.f32.mrb[0].mxu0
  %v9994 = vadd.f32 %v9836, %v9993
  %v9995 = vpop.f32.mrb[0].mxu0
  %9996 = vmatprep.mubr.f32.mxu0 0.0
  %9997 = vmatmul.mubr.f32.gmra.mrb[0].mxu0 %v9772
  %v9998 = vpop.f32.mrb[0].mxu0
  %v9999 = vadd.f32 %v9836, %v9998
  %v10000 = vpop.f32.mrb[0].mxu0
  %10001 = vmatprep.mubr.f32.mxu0 0.0
  %10002 = vmatmul.mubr.f32.gmra.mrb[0].mxu0 %v9773
  %v10003 = vpop.f32.mrb[0].mxu0
  %v10004 = vadd.f32 %v9836, %v10003
  %v10005 = vpop.f32.mrb[0].mxu0
  %10006 = vmatprep.mubr.f32.mxu0 0.0
  %10007 = vmatmul.mubr.f32.gmra.mrb[0].mxu0 %v9774
  %v10008 = vpop.f32.mrb[0].mxu0
  %v10009 = vadd.f32 %v9836, %v10008
  %v10010 = vpop.f32.mrb[0].mxu0
  %10011 = vmatprep.mubr.f32.mxu0 0.0
  %10012 = vmatmul.mubr.f32.gmra.mrb[0].mxu0 %v9775
  %v10013 = vpop.f32.mrb[0].mxu0
  %v10014 = vadd.f32 %v9836, %v10013
  %v10015 = vpop.f32.mrb[0].mxu0
  %10016 = vmatprep.mubr.f32.mxu0 0.0
  %10017 = vmatmul.mubr.f32.gmra.mrb[0].mxu0 %v9776
  %v10018 = vpop.f32.mrb[0].mxu0
  %v10019 = vadd.f32 %v9836, %v10018
  %v10020 = vpop.f32.mrb[0].mxu0
  %10021 = vmatprep.mubr.f32.mxu0 0.0
  %10022 = vmatmul.mubr.f32.gmra.mrb[0].mxu0 %v9777
  %v10023 = vpop.f32.mrb[0].mxu0
  %v10024 = vadd.f32 %v9836, %v10023
  %v10025 = vpop.f32.mrb[0].mxu0
  %10026 = vmatprep.mubr.f32.mxu0 0.0
  %10027 = vmatmul.mubr.f32.gmra.mrb[0].mxu0 %v9778
  %v10028 = vpop.f32.mrb[0].mxu0
  %v10029 = vadd.f32 %v9836, %v10028
  %v10030 = vpop.f32.mrb[0].mxu0
  %10031 = vmatprep.mubr.f32.mxu0 0.0
  %10032 = vmatmul.mubr.f32.gmra.mrb[0].mxu0 %v9779
  %v10033 = vpop.f32.mrb[0].mxu0
  %v10034 = vadd.f32 %v9836, %v10033
  %v10035 = vpop.f32.mrb[0].mxu0
  %10036 = vmatprep.mubr.f32.mxu0 0.0
  %10037 = vmatmul.mubr.f32.gmra.mrb[0].mxu0 %v9780
  %v10038 = vpop.f32.mrb[0].mxu0
  %v10039 = vadd.f32 %v9836, %v10038
  %v10040 = vpop.f32.mrb[0].mxu0
  %10041 = vmatprep.mubr.f32.mxu0 0.0
  %10042 = vmatmul.mubr.f32.gmra.mrb[0].mxu0 %v9781
  %v10043 = vpop.f32.mrb[0].mxu0
  %v10044 = vadd.f32 %v9836, %v10043
  %v10045 = vpop.f32.mrb[0].mxu0
  %10046 = vmatprep.mubr.f32.mxu0 0.0
  %10047 = vmatmul.mubr.f32.gmra.mrb[0].mxu0 %v9782
  %v10048 = vpop.f32.mrb[0].mxu0
  %v10049 = vadd.f32 %v9836, %v10048
  %v10050 = vpop.f32.mrb[0].mxu0
  %10051 = vmatprep.mubr.f32.mxu0 0.0
  %10052 = vmatmul.mubr.f32.gmra.mrb[0].mxu0 %v9783
  %v10053 = vpop.f32.mrb[0].mxu0
  %v10054 = vadd.f32 %v9836, %v10053
  %v10055 = vpop.f32.mrb[0].mxu0
  %10056 = vmatprep.mubr.f32.mxu0 0.0
  %10057 = vmatmul.mubr.f32.gmra.mrb[0].mxu0 %v9784
  %v10058 = vpop.f32.mrb[0].mxu0
  %v10059 = vadd.f32 %v9836, %v10058
  %v10060 = vpop.f32.mrb[0].mxu0
  %10061 = vmatprep.mubr.f32.mxu0 0.0
  %10062 = vmatmul.mubr.f32.gmra.mrb[0].mxu0 %v9785
  %v10063 = vpop.f32.mrb[0].mxu0
  %v10064 = vadd.f32 %v9836, %v10063
  %v10065 = vpop.f32.mrb[0].mxu0
  %10066 = vmatprep.mubr.f32.mxu0 0.0
  %10067 = vmatmul.mubr.f32.gmra.mrb[0].mxu0 %v9786
  %v10068 = vpop.f32.mrb[0].mxu0
  %v10069 = vadd.f32 %v9836, %v10068
  %v10070 = vpop.f32.mrb[0].mxu0
  %10071 = vmatprep.mubr.f32.mxu0 0.0
  %10072 = vmatmul.mubr.f32.gmra.mrb[0].mxu0 %v9787
  %v10073 = vpop.f32.mrb[0].mxu0
  %v10074 = vadd.f32 %v9836, %v10073
  %v10075 = vpop.f32.mrb[0].mxu0
  %10076 = vmatprep.mubr.f32.mxu0 0.0
  %10077 = vmatmul.mubr.f32.gmra.mrb[0].mxu0 %v9788
  %v10078 = vpop.f32.mrb[0].mxu0
  %v10079 = vadd.f32 %v9836, %v10078
  %v10080 = vpop.f32.mrb[0].mxu0
  %10081 = vmatprep.mubr.f32.mxu0 0.0
  %10082 = vmatmul.mubr.f32.gmra.mrb[0].mxu0 %v9789
  %v10083 = vpop.f32.mrb[0].mxu0
  %v10084 = vadd.f32 %v9836, %v10083
  %v10085 = vpop.f32.mrb[0].mxu0
  %10086 = vmatprep.mubr.f32.mxu0 0.0
  %10087 = vmatmul.mubr.f32.gmra.mrb[0].mxu0 %v9790
  %v10088 = vpop.f32.mrb[0].mxu0
  %v10089 = vadd.f32 %v9836, %v10088
  %v10090 = vpop.f32.mrb[0].mxu0
  %10091 = vmatprep.mubr.f32.mxu0 0.0
  %10092 = vmatmul.mubr.f32.gmra.mrb[0].mxu0 %v9791
  %v10093 = vpop.f32.mrb[0].mxu0
  %v10094 = vadd.f32 %v9836, %v10093
  %v10095 = vpop.f32.mrb[0].mxu0
  %10096 = vmatprep.mubr.f32.mxu0 0.0
  %10097 = vmatmul.mubr.f32.gmra.mrb[0].mxu0 %v9792
  %v10098 = vpop.f32.mrb[0].mxu0
  %v10099 = vadd.f32 %v9836, %v10098
  %v10100 = vpop.f32.mrb[0].mxu0
  %10101 = vmatprep.mubr.f32.mxu0 0.0
  %10102 = vmatmul.mubr.f32.gmra.mrb[0].mxu0 %v9793
  %v10103 = vpop.f32.mrb[0].mxu0
  %v10104 = vadd.f32 %v9836, %v10103
  %v10105 = vpop.f32.mrb[0].mxu0
  %10106 = vmatprep.mubr.f32.mxu0 0.0
  %10107 = vmatmul.mubr.f32.gmra.mrb[0].mxu0 %v9794
  %v10108 = vpop.f32.mrb[0].mxu0
  %v10109 = vadd.f32 %v9836, %v10108
  %v10110 = vpop.f32.mrb[0].mxu0
  %10111 = vmatprep.mubr.f32.mxu0 0.0
  %10112 = vmatmul.mubr.f32.gmra.mrb[0].mxu0 %v9795
  %v10113 = vpop.f32.mrb[0].mxu0
  %v10114 = vadd.f32 %v9836, %v10113
  %v10115 = vpop.f32.mrb[0].mxu0
  %10116 = vmatprep.mubr.f32.mxu0 0.0
  %10117 = vmatmul.mubr.f32.gmra.mrb[0].mxu0 %v9796
  %v10118 = vpop.f32.mrb[0].mxu0
  %v10119 = vadd.f32 %v9836, %v10118
  %v10120 = vpop.f32.mrb[0].mxu0
  %10121 = vmatprep.mubr.f32.mxu0 0.0
  %10122 = vmatmul.mubr.f32.gmra.mrb[0].mxu0 %v9797
  %v10123 = vpop.f32.mrb[0].mxu0
  %v10124 = vadd.f32 %v9836, %v10123
  %v10125 = vpop.f32.mrb[0].mxu0
  %10126 = vmatprep.mubr.f32.mxu0 0.0
  %10127 = vmatmul.mubr.f32.gmra.mrb[0].mxu0 %v9798
  %v10128 = vpop.f32.mrb[0].mxu0
  %v10129 = vadd.f32 %v9836, %v10128
  %v10130 = vpop.f32.mrb[0].mxu0
  %10131 = vmatprep.mubr.f32.mxu0 0.0
  %10132 = vmatmul.mubr.f32.gmra.mrb[0].mxu0 %v9799
  %v10133 = vpop.f32.mrb[0].mxu0
  %v10134 = vadd.f32 %v9836, %v10133
  %v10135 = vpop.f32.mrb[0].mxu0
  %10136 = vmatprep.mubr.f32.mxu0 0.0
  %10137 = vmatmul.mubr.f32.gmra.mrb[0].mxu0 %v9800
  %v10138 = vpop.f32.mrb[0].mxu0
  %v10139 = vadd.f32 %v9836, %v10138
  %v10140 = vpop.f32.mrb[0].mxu0
  %10141 = vmatprep.mubr.f32.mxu0 0.0
  %10142 = vmatmul.mubr.f32.gmra.mrb[0].mxu0 %v9801
  %v10143 = vpop.f32.mrb[0].mxu0
  %v10144 = vadd.f32 %v9836, %v10143
  %v10145 = vpop.f32.mrb[0].mxu0
  %10146 = vmatprep.mubr.f32.mxu0 0.0
  %10147 = vmatmul.mubr.f32.gmra.mrb[0].mxu0 %v9802
  %v10148 = vpop.f32.mrb[0].mxu0
  %v10149 = vadd.f32 %v9836, %v10148
  %v10150 = vpop.f32.mrb[0].mxu0
  %10151 = vmatprep.mubr.f32.mxu0 0.0
  %10152 = vmatmul.mubr.f32.gmra.mrb[0].mxu0 %v9803
  %v10153 = vpop.f32.mrb[0].mxu0
  %v10154 = vadd.f32 %v9836, %v10153
  %v10155 = vpop.f32.mrb[0].mxu0
  %10156 = vmatprep.mubr.f32.mxu0 0.0
  %10157 = vmatmul.mubr.f32.gmra.mrb[0].mxu0 %v9804
  %v10158 = vpop.f32.mrb[0].mxu0
  %v10159 = vadd.f32 %v9836, %v10158
  %v10160 = vpop.f32.mrb[0].mxu0
  %10161 = vmatprep.mubr.f32.mxu0 0.0
  %10162 = vmatmul.mubr.f32.gmra.mrb[0].mxu0 %v9805
  %v10163 = vpop.f32.mrb[0].mxu0
  %v10164 = vadd.f32 %v9836, %v10163
  %v10165 = vpop.f32.mrb[0].mxu0
  %10166 = vmatprep.mubr.f32.mxu0 0.0
  %10167 = vmatmul.mubr.f32.gmra.mrb[0].mxu0 %v9806
  %v10168 = vpop.f32.mrb[0].mxu0
  %v10169 = vadd.f32 %v9836, %v10168
  %v10170 = vpop.f32.mrb[0].mxu0
  %10171 = vmatprep.mubr.f32.mxu0 0.0
  %10172 = vmatmul.mubr.f32.gmra.mrb[0].mxu0 %v9807
  %v10173 = vpop.f32.mrb[0].mxu0
  %v10174 = vadd.f32 %v9836, %v10173
  %v10175 = vpop.f32.mrb[0].mxu0
  %10176 = vmatprep.mubr.f32.mxu0 0.0
  %10177 = vmatmul.mubr.f32.gmra.mrb[0].mxu0 %v9808
  %v10178 = vpop.f32.mrb[0].mxu0
  %v10179 = vadd.f32 %v9836, %v10178
  %v10180 = vpop.f32.mrb[0].mxu0
  %10181 = vmatprep.mubr.f32.mxu0 0.0
  %10182 = vmatmul.mubr.f32.gmra.mrb[0].mxu0 %v9809
  %v10183 = vpop.f32.mrb[0].mxu0
  %v10184 = vadd.f32 %v9836, %v10183
  %v10185 = vpop.f32.mrb[0].mxu0
  %10186 = vmatprep.mubr.f32.mxu0 0.0
  %10187 = vmatmul.mubr.f32.gmra.mrb[0].mxu0 %v9810
  %v10188 = vpop.f32.mrb[0].mxu0
  %v10189 = vadd.f32 %v9836, %v10188
  %v10190 = vpop.f32.mrb[0].mxu0
  %10191 = vmatprep.mubr.f32.mxu0 0.0
  %10192 = vmatmul.mubr.f32.gmra.mrb[0].mxu0 %v9811
  %v10193 = vpop.f32.mrb[0].mxu0
  %v10194 = vadd.f32 %v9836, %v10193
  %v10195 = vpop.f32.mrb[0].mxu0
  %10196 = vmatprep.mubr.f32.mxu0 0.0
  %10197 = vmatmul.mubr.f32.gmra.mrb[0].mxu0 %v9812
  %v10198 = vpop.f32.mrb[0].mxu0
  %v10199 = vadd.f32 %v9836, %v10198
  %v10200 = vpop.f32.mrb[0].mxu0
  %10201 = vmatprep.mubr.f32.mxu0 0.0
  %10202 = vmatmul.mubr.f32.gmra.mrb[0].mxu0 %v9813
  %v10203 = vpop.f32.mrb[0].mxu0
  %v10204 = vadd.f32 %v9836, %v10203
  %v10205 = vpop.f32.mrb[0].mxu0
  %10206 = vmatprep.mubr.f32.mxu0 0.0
  %10207 = vmatmul.mubr.f32.gmra.mrb[0].mxu0 %v9814
  %v10208 = vpop.f32.mrb[0].mxu0
  %v10209 = vadd.f32 %v9836, %v10208
  %v10210 = vpop.f32.mrb[0].mxu0
  %10211 = vmatprep.mubr.f32.mxu0 0.0
  %10212 = vmatmul.mubr.f32.gmra.mrb[0].mxu0 %v9815
  %v10213 = vpop.f32.mrb[0].mxu0
  %v10214 = vadd.f32 %v9836, %v10213
  %v10215 = vpop.f32.mrb[0].mxu0
  %10216 = vmatprep.mubr.f32.mxu0 0.0
  %10217 = vmatmul.mubr.f32.gmra.mrb[0].mxu0 %v9816
  %v10218 = vpop.f32.mrb[0].mxu0
  %v10219 = vadd.f32 %v9836, %v10218
  %v10220 = vpop.f32.mrb[0].mxu0
  %10221 = vdwg.mxu0
  %v10222 = vadd.f32 %v7880, %v9904
  %v10223 = vadd.f32 %v7881, %v9909
  %v10224 = vadd.f32 %v7882, %v9914
  %v10225 = vadd.f32 %v7883, %v9919
  %v10226 = vadd.f32 %v7884, %v9924
  %v10227 = vadd.f32 %v7885, %v9929
  %v10228 = vadd.f32 %v7886, %v9934
  %v10229 = vadd.f32 %v7887, %v9939
  %v10230 = vadd.f32 %v7888, %v9944
  %v10231 = vadd.f32 %v7889, %v9949
  %v10232 = vadd.f32 %v7890, %v9954
  %v10233 = vadd.f32 %v7891, %v9959
  %v10234 = vadd.f32 %v7892, %v9964
  %v10235 = vadd.f32 %v7893, %v9969
  %v10236 = vadd.f32 %v7894, %v9974
  %v10237 = vadd.f32 %v7895, %v9979
  %v10238 = vadd.f32 %v7896, %v9984
  %v10239 = vadd.f32 %v7897, %v9989
  %v10240 = vadd.f32 %v7898, %v9994
  %v10241 = vadd.f32 %v7899, %v9999
  %v10242 = vadd.f32 %v7900, %v10004
  %v10243 = vadd.f32 %v7901, %v10009
  %v10244 = vadd.f32 %v7902, %v10014
  %v10245 = vadd.f32 %v7903, %v10019
  %v10246 = vadd.f32 %v7904, %v10024
  %v10247 = vadd.f32 %v7905, %v10029
  %v10248 = vadd.f32 %v7906, %v10034
  %v10249 = vadd.f32 %v7907, %v10039
  %v10250 = vadd.f32 %v7908, %v10044
  %v10251 = vadd.f32 %v7909, %v10049
  %v10252 = vadd.f32 %v7910, %v10054
  %v10253 = vadd.f32 %v7911, %v10059
  %v10254 = vadd.f32 %v7912, %v10064
  %v10255 = vadd.f32 %v7913, %v10069
  %v10256 = vadd.f32 %v7914, %v10074
  %v10257 = vadd.f32 %v7915, %v10079
  %v10258 = vadd.f32 %v7916, %v10084
  %v10259 = vadd.f32 %v7917, %v10089
  %v10260 = vadd.f32 %v7918, %v10094
  %v10261 = vadd.f32 %v7919, %v10099
  %v10262 = vadd.f32 %v7920, %v10104
  %v10263 = vadd.f32 %v7921, %v10109
  %v10264 = vadd.f32 %v7922, %v10114
  %v10265 = vadd.f32 %v7923, %v10119
  %v10266 = vadd.f32 %v7924, %v10124
  %v10267 = vadd.f32 %v7925, %v10129
  %v10268 = vadd.f32 %v7926, %v10134
  %v10269 = vadd.f32 %v7927, %v10139
  %v10270 = vadd.f32 %v7928, %v10144
  %v10271 = vadd.f32 %v7929, %v10149
  %v10272 = vadd.f32 %v7930, %v10154
  %v10273 = vadd.f32 %v7931, %v10159
  %v10274 = vadd.f32 %v7932, %v10164
  %v10275 = vadd.f32 %v7933, %v10169
  %v10276 = vadd.f32 %v7934, %v10174
  %v10277 = vadd.f32 %v7935, %v10179
  %v10278 = vadd.f32 %v7936, %v10184
  %v10279 = vadd.f32 %v7937, %v10189
  %v10280 = vadd.f32 %v7938, %v10194
  %v10281 = vadd.f32 %v7939, %v10199
  %v10282 = vadd.f32 %v7940, %v10204
  %v10283 = vadd.f32 %v7941, %v10209
  %v10284 = vadd.f32 %v7942, %v10214
  %v10285 = vadd.f32 %v7943, %v10219
  %10286 = vst.msk [vmem:[%s7] sm:$0xff] %vm98, %v10222
  %10287 = vst.msk [vmem:[%s7 + $0x8] sm:$0xff] %vm98, %v10223
  %10288 = vst.msk [vmem:[%s7 + $0x10] sm:$0xff] %vm98, %v10224
  %10289 = vst.msk [vmem:[%s7 + $0x18] sm:$0xff] %vm98, %v10225
  %10290 = vst.msk [vmem:[%s7 + $0x20] sm:$0xff] %vm98, %v10226
  %10291 = vst.msk [vmem:[%s7 + $0x28] sm:$0xff] %vm98, %v10227
  %10292 = vst.msk [vmem:[%s7 + $0x30] sm:$0xff] %vm98, %v10228
  %10293 = vst.msk [vmem:[%s7 + $0x38] sm:$0xff] %vm98, %v10229
  %10294 = vst.msk [vmem:[%s7 + $0x40] sm:$0xff] %vm98, %v10230
  %10295 = vst.msk [vmem:[%s7 + $0x48] sm:$0xff] %vm98, %v10231
  %10296 = vst.msk [vmem:[%s7 + $0x50] sm:$0xff] %vm98, %v10232
  %10297 = vst.msk [vmem:[%s7 + $0x58] sm:$0xff] %vm98, %v10233
  %10298 = vst.msk [vmem:[%s7 + $0x60] sm:$0xff] %vm98, %v10234
  %10299 = vst.msk [vmem:[%s7 + $0x68] sm:$0xff] %vm98, %v10235
  %10300 = vst.msk [vmem:[%s7 + $0x70] sm:$0xff] %vm98, %v10236
  %10301 = vst.msk [vmem:[%s7 + $0x78] sm:$0xff] %vm98, %v10237
  %10302 = vst.msk [vmem:[%s7 + $0x80] sm:$0xff] %vm98, %v10238
  %10303 = vst.msk [vmem:[%s7 + $0x88] sm:$0xff] %vm98, %v10239
  %10304 = vst.msk [vmem:[%s7 + $0x90] sm:$0xff] %vm98, %v10240
  %10305 = vst.msk [vmem:[%s7 + $0x98] sm:$0xff] %vm98, %v10241
  %10306 = vst.msk [vmem:[%s7 + $0xa0] sm:$0xff] %vm98, %v10242
  %10307 = vst.msk [vmem:[%s7 + $0xa8] sm:$0xff] %vm98, %v10243
  %10308 = vst.msk [vmem:[%s7 + $0xb0] sm:$0xff] %vm98, %v10244
  %10309 = vst.msk [vmem:[%s7 + $0xb8] sm:$0xff] %vm98, %v10245
  %10310 = vst.msk [vmem:[%s7 + $0xc0] sm:$0xff] %vm98, %v10246
  %10311 = vst.msk [vmem:[%s7 + $0xc8] sm:$0xff] %vm98, %v10247
  %10312 = vst.msk [vmem:[%s7 + $0xd0] sm:$0xff] %vm98, %v10248
  %10313 = vst.msk [vmem:[%s7 + $0xd8] sm:$0xff] %vm98, %v10249
  %10314 = vst.msk [vmem:[%s7 + $0xe0] sm:$0xff] %vm98, %v10250
  %10315 = vst.msk [vmem:[%s7 + $0xe8] sm:$0xff] %vm98, %v10251
  %10316 = vst.msk [vmem:[%s7 + $0xf0] sm:$0xff] %vm98, %v10252
  %10317 = vst.msk [vmem:[%s7 + $0xf8] sm:$0xff] %vm98, %v10253
  %10318 = vst.msk [vmem:[%s7 + $0x100] sm:$0xff] %vm98, %v10254
  %10319 = vst.msk [vmem:[%s7 + $0x108] sm:$0xff] %vm98, %v10255
  %10320 = vst.msk [vmem:[%s7 + $0x110] sm:$0xff] %vm98, %v10256
  %10321 = vst.msk [vmem:[%s7 + $0x118] sm:$0xff] %vm98, %v10257
  %10322 = vst.msk [vmem:[%s7 + $0x120] sm:$0xff] %vm98, %v10258
  %10323 = vst.msk [vmem:[%s7 + $0x128] sm:$0xff] %vm98, %v10259
  %10324 = vst.msk [vmem:[%s7 + $0x130] sm:$0xff] %vm98, %v10260
  %10325 = vst.msk [vmem:[%s7 + $0x138] sm:$0xff] %vm98, %v10261
  %10326 = vst.msk [vmem:[%s7 + $0x140] sm:$0xff] %vm98, %v10262
  %10327 = vst.msk [vmem:[%s7 + $0x148] sm:$0xff] %vm98, %v10263
  %10328 = vst.msk [vmem:[%s7 + $0x150] sm:$0xff] %vm98, %v10264
  %10329 = vst.msk [vmem:[%s7 + $0x158] sm:$0xff] %vm98, %v10265
  %10330 = vst.msk [vmem:[%s7 + $0x160] sm:$0xff] %vm98, %v10266
  %10331 = vst.msk [vmem:[%s7 + $0x168] sm:$0xff] %vm98, %v10267
  %10332 = vst.msk [vmem:[%s7 + $0x170] sm:$0xff] %vm98, %v10268
  %10333 = vst.msk [vmem:[%s7 + $0x178] sm:$0xff] %vm98, %v10269
  %10334 = vst.msk [vmem:[%s7 + $0x180] sm:$0xff] %vm98, %v10270
  %10335 = vst.msk [vmem:[%s7 + $0x188] sm:$0xff] %vm98, %v10271
  %10336 = vst.msk [vmem:[%s7 + $0x190] sm:$0xff] %vm98, %v10272
  %10337 = vst.msk [vmem:[%s7 + $0x198] sm:$0xff] %vm98, %v10273
  %10338 = vst.msk [vmem:[%s7 + $0x1a0] sm:$0xff] %vm98, %v10274
  %10339 = vst.msk [vmem:[%s7 + $0x1a8] sm:$0xff] %vm98, %v10275
  %10340 = vst.msk [vmem:[%s7 + $0x1b0] sm:$0xff] %vm98, %v10276
  %10341 = vst.msk [vmem:[%s7 + $0x1b8] sm:$0xff] %vm98, %v10277
  %10342 = vst.msk [vmem:[%s7 + $0x1c0] sm:$0xff] %vm98, %v10278
  %10343 = vst.msk [vmem:[%s7 + $0x1c8] sm:$0xff] %vm98, %v10279
  %10344 = vst.msk [vmem:[%s7 + $0x1d0] sm:$0xff] %vm98, %v10280
  %10345 = vst.msk [vmem:[%s7 + $0x1d8] sm:$0xff] %vm98, %v10281
  %10346 = vst.msk [vmem:[%s7 + $0x1e0] sm:$0xff] %vm98, %v10282
  %10347 = vst.msk [vmem:[%s7 + $0x1e8] sm:$0xff] %vm98, %v10283
  %10348 = vst.msk [vmem:[%s7 + $0x1f0] sm:$0xff] %vm98, %v10284
  %10349 = vst.msk [vmem:[%s7 + $0x1f8] sm:$0xff] %vm98, %v10285
  // Predicated region
  $region30: #{swin_block_pallas.1} parent=0 // pred_check
    _
  $region31: #{swin_block_pallas.1} parent=0 // pred_check_branch
    %10351 = sbr.rel (0) target = $region33
  $region32: #{swin_block_pallas.1} parent=0 // pred_region
    _
  $region33: #{swin_block_pallas.1} parent=0 // pred_fallthru
    _
  // Predicated region
  $region34: #{swin_block_pallas.1} parent=0 // pred_check
    _
  $region35: #{swin_block_pallas.1} parent=0 // pred_check_branch
    %10353 = sbr.rel (0) target = $region37
  $region36: #{swin_block_pallas.1} parent=0 // pred_region
    _
  $region37: #{swin_block_pallas.1} parent=0 // pred_fallthru
    _

</llo_original>
